<compile_context>
chip_gen: v6e
topology: v6e:2x2x1
jax: 0.10.0
libtpu: 0.0.40
codegen_flags: <defaults>
</compile_context>

<pallas_src>
import math

import jax
import jax.numpy as jnp
from jax import lax
from jax.experimental import pallas as pl
from jax.experimental.pallas import tpu as pltpu

EPS = 1.1920928955078125e-07  # torch.finfo(torch.float32).eps (F.rms_norm default eps)


def _vmem_limit():
    """Per-generation VMEM limit with ~25% headroom (48 MiB v7x, 96 MiB v5e/v6e)."""
    cap = 128 * 1024 * 1024
    try:
        cap = int(getattr(pltpu.get_tpu_info(), "vmem_capacity_bytes", cap))
    except Exception:
        pass
    return (cap * 3) // 4


def _rms_norm(x):
    return x * lax.rsqrt(jnp.mean(jnp.square(x), axis=-1, keepdims=True) + EPS)


def _batch_block(B, T, target=256):
    """Whole batch elements per M tile so each matmul sees bb*T >= ~target rows."""
    bb = max(1, min(B, max(1, target // T)))
    while B % bb:
        bb -= 1
    if (bb * T) % 8 and bb != B:   # (8,128) rule: block rows multiple of 8 or full dim
        bb = B
    return bb


def _m_tile(M, target=256):
    if M <= target:
        return M
    for t in range(target, 7, -8):
        if M % t == 0:
            return t
    return M


def _kv_tile(T, cap=512):
    if T <= cap:
        return T
    for t in range(cap, 127, -128):
        if T % t == 0:
            return t
    return T


def _vocab_tile(V_pad):
    for tv in (2048, 1024, 512, 256, 128):
        if V_pad % tv == 0:
            return tv
    return V_pad


# ----------------------------- kernels ---------------------------------------


def make_block_kernel(bb, T, C, H, hd, lamb, lam0, lam1, is_first, is_last, kv_tile):
    """One fused transformer Block (attn + MLP); bb*T rows (bb batch elems) per grid step."""
    d = hd // 2
    nkv = T // kv_tile
    inv_sqrt_hd = 1.0 / math.sqrt(hd)

    def swap_halves(t):
        # Per-head half swap [x1|x2] -> [x2|x1] for all heads at once; when
        # d = hd/2 is a multiple of 128 every slice offset is lane-aligned so this
        # lowers to vreg permutes / lane rotates (no MXU permutation matmul).
        parts = []
        for h in range(H):
            lo = h * hd
            parts.append(t[:, lo + d:lo + hd])
            parts.append(t[:, lo:lo + d])
        return jnp.concatenate(parts, axis=-1)

    def attn_mlp(x, v1, wqkv, wo, wfc, wp2, cos_c, sin_c):
        # x, v1, cos_c, sin_c are f32 (bb*T, C); weights bf16; accumulate f32.
        xn = _rms_norm(x)
        qkv = jnp.dot(xn.astype(jnp.bfloat16), wqkv,
                      preferred_element_type=jnp.float32)              # (bb*T, 3C)
        q, k, v = qkv[:, :C], qkv[:, C:2 * C], qkv[:, 2 * C:]

        # value residual: the first block's v feeds later blocks
        if is_first:
            v_mix, v_out = v, v          # v1 is None -> v1 = v -> (1-lamb)*v + lamb*v == v
        else:
            v_mix, v_out = (1.0 - lamb) * v + lamb * v1, None

        # per-head rms norm of q/k; fold the 1/sqrt(hd) attention scale into q
        qn_parts, kn_parts = [], []
        for h in range(H):
            lo, hi = h * hd, (h + 1) * hd
            qh, kh = q[:, lo:hi], k[:, lo:hi]
            qi = lax.rsqrt(jnp.mean(jnp.square(qh), axis=-1, keepdims=True) + EPS)
            ki = lax.rsqrt(jnp.mean(jnp.square(kh), axis=-1, keepdims=True) + EPS)
            qn_parts.append(qh * (qi * inv_sqrt_hd))
            kn_parts.append(kh * ki)
        qn = jnp.concatenate(qn_parts, axis=-1)                        # (bb*T, C)
        kn = jnp.concatenate(kn_parts, axis=-1)

        # rotary for all heads at once (lane-dense FMA):
        # cos_c = [cos|cos] per head, sin_c = [sin|-sin] per head (pre-broadcast host-side)
        qr = (qn * cos_c + swap_halves(qn) * sin_c).astype(jnp.bfloat16)
        kr = (kn * cos_c + swap_halves(kn) * sin_c).astype(jnp.bfloat16)
        vb = v_mix.astype(jnp.bfloat16)

        # flash-style causal attention: online softmax over KV tiles, per (batch, head)
        row = lax.broadcasted_iota(jnp.int32, (T, kv_tile), 0)
        col = lax.broadcasted_iota(jnp.int32, (T, kv_tile), 1)
        y_rows = []
        for e in range(bb):
            r0 = e * T
            y_parts = []
            for h in range(H):
                lo, hi = h * hd, (h + 1) * hd
                qe = qr[r0:r0 + T, lo:hi]
                m_i = jnp.full((T, 1), -jnp.inf, jnp.float32)
                l_i = jnp.zeros((T, 1), jnp.float32)
                acc = jnp.zeros((T, hd), jnp.float32)
                for kv in range(nkv):
                    c0 = kv * kv_tile
                    ke = kr[r0 + c0:r0 + c0 + kv_tile, lo:hi]
                    ve = vb[r0 + c0:r0 + c0 + kv_tile, lo:hi]
                    s = lax.dot_general(qe, ke, (((1,), (1,)), ((), ())),
                                        preferred_element_type=jnp.float32)
                    s = jnp.where(row >= col + c0, s, -jnp.inf)
                    m_new = jnp.maximum(m_i, jnp.max(s, axis=-1, keepdims=True))
                    p = jnp.exp(s - m_new)
                    alpha = jnp.exp(m_i - m_new)
                    l_i = alpha * l_i + jnp.sum(p, axis=-1, keepdims=True)
                    acc = alpha * acc + jnp.dot(p.astype(jnp.bfloat16), ve,
                                                preferred_element_type=jnp.float32)
                    m_i = m_new
                y_parts.append(acc / l_i)      # exact normalization (F.softmax parity)
            y_rows.append(jnp.concatenate(y_parts, axis=-1))
        y = jnp.concatenate(y_rows, axis=0)    # (bb*T, C), lane-dense

        x = x + jnp.dot(y.astype(jnp.bfloat16), wo, preferred_element_type=jnp.float32)

        # MLP: relu(x @ Wfc)^2 @ Wproj
        h2 = jnp.dot(_rms_norm(x).astype(jnp.bfloat16), wfc,
                     preferred_element_type=jnp.float32)
        h2 = jnp.square(jnp.maximum(h2, 0.0))
        x = x + jnp.dot(h2.astype(jnp.bfloat16), wp2, preferred_element_type=jnp.float32)
        return x, v_out

    def finalize(x_out):
        # the last block emits the already-rms-normed activation for the lm_head
        return (_rms_norm(x_out) if is_last else x_out).astype(jnp.bfloat16)

    if is_first:
        # Layer 0: fuses the initial rms_norm of the embeddings; emits x (or xn), x0, v1.
        def kernel(xemb_ref, wqkv_ref, wo_ref, wfc_ref, wp2_ref, cos_ref, sin_ref,
                   xout_ref, x0out_ref, vout_ref):
            x0 = _rms_norm(xemb_ref[...])
            # NOTE: x == x0 at the first block, so lam0*x + lam1*x0 == (lam0+lam1)*x0.
            x = (lam0 + lam1) * x0
            x_out, v = attn_mlp(x, None, wqkv_ref[...], wo_ref[...], wfc_ref[...],
                                wp2_ref[...], cos_ref[...].astype(jnp.float32),
                                sin_ref[...].astype(jnp.float32))
            xout_ref[...] = finalize(x_out)
            x0out_ref[...] = x0.astype(jnp.bfloat16)
            vout_ref[...] = v.astype(jnp.bfloat16)
    else:
        def kernel(x_ref, x0_ref, v1_ref, wqkv_ref, wo_ref, wfc_ref, wp2_ref,
                   cos_ref, sin_ref, xout_ref):
            x = (lam0 * x_ref[...].astype(jnp.float32)
                 + lam1 * x0_ref[...].astype(jnp.float32))
            x_out, _ = attn_mlp(x, v1_ref[...].astype(jnp.float32),
                                wqkv_ref[...], wo_ref[...], wfc_ref[...], wp2_ref[...],
                                cos_ref[...].astype(jnp.float32),
                                sin_ref[...].astype(jnp.float32))
            xout_ref[...] = finalize(x_out)

    return kernel


def head_kernel(xn_ref, w_ref, o_ref):
    # one (M-tile, vocab-tile) block of lm_head + soft cap 30*tanh(logits/30);
    # the final rms_norm was hoisted into the last block kernel (xn is bf16).
    logits = jnp.dot(xn_ref[...], w_ref[...], preferred_element_type=jnp.float32)
    o_ref[...] = 30.0 * jnp.tanh(logits * (1.0 / 30.0))


# ----------------------------- wrapper ----------------------------------------


def _rotary_tables(T, C, H, hd, bb):
    """bf16 (bb*T, C) cos / signed-sin tables pre-broadcast over heads and batch block."""
    inv_freq = 1.0 / (10000.0 ** (jnp.arange(0, hd, 2, dtype=jnp.float32) / hd))
    freqs = jnp.outer(jnp.arange(T, dtype=jnp.float32), inv_freq)        # (T, hd/2)
    cos_h = jnp.concatenate([jnp.cos(freqs), jnp.cos(freqs)], axis=-1)   # [cos | cos]
    sin_h = jnp.concatenate([jnp.sin(freqs), -jnp.sin(freqs)], axis=-1)  # [sin | -sin]
    # bf16 storage mirrors PyTorch's .bfloat16() rotary cache and halves DMA traffic
    return (jnp.tile(cos_h, (bb, H)).astype(jnp.bfloat16),
            jnp.tile(sin_h, (bb, H)).astype(jnp.bfloat16))


def gpt_forward(idx, params, cfg):
    B, T = idx.shape
    C, H, V, L = cfg["n_embd"], cfg["n_head"], cfg["vocab_size"], cfg["n_layer"]
    hd = C // H
    assert C % H == 0

    vmem_limit = _vmem_limit()
    bb = _batch_block(B, T)          # batch elements per M tile
    tm = bb * T                      # matmul M rows per grid step
    nm = B // bb
    M = B * T
    kv_tile = _kv_tile(T)

    cos_t, sin_t = _rotary_tables(T, C, H, hd, bb)

    def act_spec():
        return pl.BlockSpec((tm, C), lambda i: (i, 0))

    def const_spec(r, c):
        # constant block index across the M grid -> weights/tables DMA'd once per call
        # TODO(synk): at realistic C, tile wfc/wp2 (and the QKV output columns) over a
        # grid axis and/or use pl.Buffered(1) on these specs so a layer's weights fit
        # v7x's 64 MiB VMEM; also add a second parallel axis for v7x's 2 TCs when B is small.
        return pl.BlockSpec((r, c), lambda i: (0, 0))

    block_params = pltpu.CompilerParams(dimension_semantics=("parallel",),
                                        vmem_limit_bytes=vmem_limit)
    act_bf16 = jax.ShapeDtypeStruct((M, C), jnp.bfloat16)

    # token-embedding gather stays in plain JAX glue (f32, read once by layer 0)
    x_emb = jnp.take(params["wte"], idx, axis=0).reshape(M, C)

    weight_specs = [const_spec(C, 3 * C), const_spec(C, C),
                    const_spec(C, 4 * C), const_spec(4 * C, C),
                    const_spec(tm, C), const_spec(tm, C)]

    # ---- layer 0: fused initial rms_norm; emits x (or xn if last), x0, v1 ----
    # TODO(synk): hide per-layer weight DMA via cross-call prefetch (P10) for deep models.
    l0 = params["layers"][0]
    k0 = make_block_kernel(bb, T, C, H, hd, lamb=l0["lamb"], lam0=l0["lambdas"][0],
                           lam1=l0["lambdas"][1], is_first=True, is_last=(L == 1),
                           kv_tile=kv_tile)
    x, x0, v1 = pl.pallas_call(
        k0,
        out_shape=(act_bf16, act_bf16, act_bf16),
        grid=(nm,),
        in_specs=[act_spec()] + weight_specs,
        out_specs=(act_spec(), act_spec(), act_spec()),
        compiler_params=block_params,
    )(x_emb, l0["wqkv"], l0["wo"], l0["wfc"], l0["wp2"], cos_t, sin_t)

    # ---- layers 1..L-1 (consume bf16 x, x0 and the layer-0 value residual v1) ----
    for li in range(1, L):
        layer = params["layers"][li]
        kl = make_block_kernel(bb, T, C, H, hd, lamb=layer["lamb"],
                               lam0=layer["lambdas"][0], lam1=layer["lambdas"][1],
                               is_first=False, is_last=(li == L - 1), kv_tile=kv_tile)
        x = pl.pallas_call(
            kl,
            out_shape=act_bf16,
            grid=(nm,),
            in_specs=[act_spec(), act_spec(), act_spec()] + weight_specs,
            out_specs=act_spec(),
            compiler_params=block_params,
        )(x, x0, v1, layer["wqkv"], layer["wo"], layer["wfc"], layer["wp2"],
          cos_t, sin_t)

    # ---- lm head: matmul + soft-cap; vocab axis OUTER so each (C, tv) weight tile is
    # streamed exactly once; B*T folded into the M dimension; vocab padded to 256 ----
    V_pad = ((V + 255) // 256) * 256
    lm_w = params["lm_head"]
    if V_pad != V:
        lm_w = jnp.pad(lm_w, ((0, 0), (0, V_pad - V)))
    tv = _vocab_tile(V_pad)
    nv = V_pad // tv
    tmh = _m_tile(M)
    nmh = M // tmh
    logits = pl.pallas_call(
        head_kernel,
        out_shape=jax.ShapeDtypeStruct((M, V_pad), jnp.float32),
        grid=(nv, nmh),
        in_specs=[pl.BlockSpec((tmh, C), lambda j, i: (i, 0)),
                  pl.BlockSpec((C, tv), lambda j, i: (0, j))],
        out_specs=pl.BlockSpec((tmh, tv), lambda j, i: (i, j)),
        compiler_params=pltpu.CompilerParams(
            dimension_semantics=("parallel", "parallel"),
            vmem_limit_bytes=vmem_limit),
    )(x, lm_w)

    logits = logits[:, :V].reshape(B, T, V)
    # TODO(synk): cross-entropy loss branch (target/labels path) not implemented;
    # this reproduces the inference path (target=None -> {'logits': logits}).
    return {"logits": logits}


# ----------------------------- deterministic init ------------------------------


def init_params(key, cfg):
    V, C, L = cfg["vocab_size"], cfg["n_embd"], cfg["n_layer"]
    keys = iter(jax.random.split(key, 2 + 4 * L))

    def nrm(shape, std, dtype=jnp.float32):
        return (std * jax.random.normal(next(keys), shape, dtype=jnp.float32)).astype(dtype)

    proj_std = 0.02 / math.sqrt(2 * L)  # c_proj.weight re-init in GPT.__init__
    params = {
        "wte": nrm((V, C), 0.02),                       # embedding table, f32
        "lm_head": nrm((C, V), 0.02, jnp.bfloat16),     # stored transposed (in, out), bf16
        "layers": [],
    }
    for _ in range(L):
        params["layers"].append(dict(
            wqkv=nrm((C, 3 * C), 0.02, jnp.bfloat16),   # fused [Wq | Wk | Wv]
            wo=nrm((C, C), proj_std, jnp.bfloat16),
            wfc=nrm((C, 4 * C), 0.02, jnp.bfloat16),
            wp2=nrm((4 * C, C), proj_std, jnp.bfloat16),
            lamb=0.5,              # CausalSelfAttention.lamb init
            lambdas=(1.0, 0.0),    # Block.lambdas init
        ))
    return params


if __name__ == "__main__":
    # Small but lane-aligned demo config: head_dim/2 = 128 so the rotary half-swap is a
    # pure vreg move; vocab is a multiple of 256 so lm_head tiles are lane-dense.
    cfg = dict(vocab_size=1024, n_embd=512, n_head=2, n_layer=2)
    key = jax.random.PRNGKey(0)
    pkey, ikey = jax.random.split(key)
    params = init_params(pkey, cfg)

    B, T = 2, 16
    idx = jax.random.randint(ikey, (B, T), 0, cfg["vocab_size"], dtype=jnp.int32)

    out = gpt_forward(idx, params, cfg)
    logits = jax.block_until_ready(out["logits"])
    assert logits.shape == (B, T, cfg["vocab_size"])
    assert logits.dtype == jnp.float32
    assert bool(jnp.all(jnp.isfinite(logits)))
    print("KERNEL_OK")
</pallas_src>

<mosaic_0001>
module attributes {stable_mosaic.version = 11 : i64} {
  func.func @kernel(%arg0: i32, %arg1: memref<32x512xf32, #tpu.memory_space<vmem>>, %arg2: memref<512x1536xbf16, #tpu.memory_space<vmem>>, %arg3: memref<512x512xbf16, #tpu.memory_space<vmem>>, %arg4: memref<512x2048xbf16, #tpu.memory_space<vmem>>, %arg5: memref<2048x512xbf16, #tpu.memory_space<vmem>>, %arg6: memref<32x512xbf16, #tpu.memory_space<vmem>>, %arg7: memref<32x512xbf16, #tpu.memory_space<vmem>>, %arg8: memref<32x512xbf16, #tpu.memory_space<vmem>>, %arg9: memref<32x512xbf16, #tpu.memory_space<vmem>>, %arg10: memref<32x512xbf16, #tpu.memory_space<vmem>>) attributes {dimension_semantics = [#tpu.dimension_semantics<parallel>], iteration_bounds = array<i64: 1>, scalar_prefetch = 0 : i64, scratch_operands = 0 : i64, tpu.core_type = #tpu.core_type<tc>, window_params = [{transform_indices = @transform_0, window_bounds = array<i64: 32, 512>}, {pipeline_mode = #tpu.pipeline_mode<synchronous>, transform_indices = @transform_1, window_bounds = array<i64: 512, 1536>}, {pipeline_mode = #tpu.pipeline_mode<synchronous>, transform_indices = @transform_2, window_bounds = array<i64: 512, 512>}, {pipeline_mode = #tpu.pipeline_mode<synchronous>, transform_indices = @transform_3, window_bounds = array<i64: 512, 2048>}, {pipeline_mode = #tpu.pipeline_mode<synchronous>, transform_indices = @transform_4, window_bounds = array<i64: 2048, 512>}, {pipeline_mode = #tpu.pipeline_mode<synchronous>, transform_indices = @transform_5, window_bounds = array<i64: 32, 512>}, {pipeline_mode = #tpu.pipeline_mode<synchronous>, transform_indices = @transform_6, window_bounds = array<i64: 32, 512>}, {transform_indices = @transform_7, window_bounds = array<i64: 32, 512>}, {transform_indices = @transform_8, window_bounds = array<i64: 32, 512>}, {transform_indices = @transform_9, window_bounds = array<i64: 32, 512>}]} {
    %c0 = arith.constant 0 : index
    %c0_0 = arith.constant 0 : index
    %0 = vector.load %arg1[%c0, %c0_0] : memref<32x512xf32, #tpu.memory_space<vmem>>, vector<32x512xf32>
    %1 = arith.mulf %0, %0 : vector<32x512xf32>
    %cst = arith.constant dense<0.000000e+00> : vector<32xf32>
    %2 = vector.multi_reduction <add>, %1, %cst [1] : vector<32x512xf32> to vector<32xf32>
    %3 = vector.shape_cast %2 : vector<32xf32> to vector<32x1xf32>
    %cst_1 = arith.constant 5.120000e+02 : f32
    %4 = vector.broadcast %cst_1 : f32 to vector<32x1xf32>
    %5 = arith.divf %3, %4 : vector<32x1xf32>
    %cst_2 = arith.constant 1.1920929E-7 : f32
    %6 = vector.broadcast %cst_2 : f32 to vector<32x1xf32>
    %7 = arith.addf %5, %6 : vector<32x1xf32>
    %8 = math.rsqrt %7 : vector<32x1xf32>
    %9 = vector.broadcast %8 : vector<32x1xf32> to vector<32x512xf32>
    %10 = arith.mulf %0, %9 : vector<32x512xf32>
    %cst_3 = arith.constant 1.000000e+00 : f32
    %11 = vector.broadcast %cst_3 : f32 to vector<32x512xf32>
    %12 = arith.mulf %11, %10 : vector<32x512xf32>
    %c0_4 = arith.constant 0 : index
    %c0_5 = arith.constant 0 : index
    %13 = vector.load %arg2[%c0_4, %c0_5] : memref<512x1536xbf16, #tpu.memory_space<vmem>>, vector<512x1536xbf16>
    %c0_6 = arith.constant 0 : index
    %c0_7 = arith.constant 0 : index
    %14 = vector.load %arg3[%c0_6, %c0_7] : memref<512x512xbf16, #tpu.memory_space<vmem>>, vector<512x512xbf16>
    %c0_8 = arith.constant 0 : index
    %c0_9 = arith.constant 0 : index
    %15 = vector.load %arg4[%c0_8, %c0_9] : memref<512x2048xbf16, #tpu.memory_space<vmem>>, vector<512x2048xbf16>
    %c0_10 = arith.constant 0 : index
    %c0_11 = arith.constant 0 : index
    %16 = vector.load %arg5[%c0_10, %c0_11] : memref<2048x512xbf16, #tpu.memory_space<vmem>>, vector<2048x512xbf16>
    %c0_12 = arith.constant 0 : index
    %c0_13 = arith.constant 0 : index
    %17 = vector.load %arg6[%c0_12, %c0_13] : memref<32x512xbf16, #tpu.memory_space<vmem>>, vector<32x512xbf16>
    %18 = arith.extf %17 : vector<32x512xbf16> to vector<32x512xf32>
    %c0_14 = arith.constant 0 : index
    %c0_15 = arith.constant 0 : index
    %19 = vector.load %arg7[%c0_14, %c0_15] : memref<32x512xbf16, #tpu.memory_space<vmem>>, vector<32x512xbf16>
    %20 = arith.extf %19 : vector<32x512xbf16> to vector<32x512xf32>
    %21 = arith.mulf %12, %12 : vector<32x512xf32>
    %cst_16 = arith.constant dense<0.000000e+00> : vector<32xf32>
    %22 = vector.multi_reduction <add>, %21, %cst_16 [1] : vector<32x512xf32> to vector<32xf32>
    %23 = vector.shape_cast %22 : vector<32xf32> to vector<32x1xf32>
    %cst_17 = arith.constant 5.120000e+02 : f32
    %24 = vector.broadcast %cst_17 : f32 to vector<32x1xf32>
    %25 = arith.divf %23, %24 : vector<32x1xf32>
    %cst_18 = arith.constant 1.1920929E-7 : f32
    %26 = vector.broadcast %cst_18 : f32 to vector<32x1xf32>
    %27 = arith.addf %25, %26 : vector<32x1xf32>
    %28 = math.rsqrt %27 : vector<32x1xf32>
    %29 = vector.broadcast %28 : vector<32x1xf32> to vector<32x512xf32>
    %30 = arith.mulf %12, %29 : vector<32x512xf32>
    %31 = arith.truncf %30 : vector<32x512xf32> to vector<32x512xbf16>
    %cst_19 = arith.constant dense<0.000000e+00> : vector<32x1536xf32>
    %32 = tpu.matmul %31, %13, %cst_19 {dimension_numbers = #tpu.dot_dimension_numbers<[1], [0], [0], [1], [0, 0, 1, 1], [], []>} : vector<32x512xbf16>, vector<512x1536xbf16>, vector<32x1536xf32> -> vector<32x1536xf32>
    %33 = vector.extract_strided_slice %32 {offsets = [0, 0], sizes = [32, 512], strides = [1, 1]} : vector<32x1536xf32> to vector<32x512xf32>
    %34 = vector.extract_strided_slice %32 {offsets = [0, 512], sizes = [32, 512], strides = [1, 1]} : vector<32x1536xf32> to vector<32x512xf32>
    %35 = vector.extract_strided_slice %32 {offsets = [0, 1024], sizes = [32, 512], strides = [1, 1]} : vector<32x1536xf32> to vector<32x512xf32>
    %36 = vector.extract_strided_slice %33 {offsets = [0, 0], sizes = [32, 256], strides = [1, 1]} : vector<32x512xf32> to vector<32x256xf32>
    %37 = vector.extract_strided_slice %34 {offsets = [0, 0], sizes = [32, 256], strides = [1, 1]} : vector<32x512xf32> to vector<32x256xf32>
    %38 = arith.mulf %36, %36 : vector<32x256xf32>
    %cst_20 = arith.constant dense<0.000000e+00> : vector<32xf32>
    %39 = vector.multi_reduction <add>, %38, %cst_20 [1] : vector<32x256xf32> to vector<32xf32>
    %40 = vector.shape_cast %39 : vector<32xf32> to vector<32x1xf32>
    %cst_21 = arith.constant 2.560000e+02 : f32
    %41 = vector.broadcast %cst_21 : f32 to vector<32x1xf32>
    %42 = arith.divf %40, %41 : vector<32x1xf32>
    %cst_22 = arith.constant 1.1920929E-7 : f32
    %43 = vector.broadcast %cst_22 : f32 to vector<32x1xf32>
    %44 = arith.addf %42, %43 : vector<32x1xf32>
    %45 = math.rsqrt %44 : vector<32x1xf32>
    %46 = arith.mulf %37, %37 : vector<32x256xf32>
    %cst_23 = arith.constant dense<0.000000e+00> : vector<32xf32>
    %47 = vector.multi_reduction <add>, %46, %cst_23 [1] : vector<32x256xf32> to vector<32xf32>
    %48 = vector.shape_cast %47 : vector<32xf32> to vector<32x1xf32>
    %cst_24 = arith.constant 2.560000e+02 : f32
    %49 = vector.broadcast %cst_24 : f32 to vector<32x1xf32>
    %50 = arith.divf %48, %49 : vector<32x1xf32>
    %cst_25 = arith.constant 1.1920929E-7 : f32
    %51 = vector.broadcast %cst_25 : f32 to vector<32x1xf32>
    %52 = arith.addf %50, %51 : vector<32x1xf32>
    %53 = math.rsqrt %52 : vector<32x1xf32>
    %cst_26 = arith.constant 6.250000e-02 : f32
    %54 = vector.broadcast %cst_26 : f32 to vector<32x1xf32>
    %55 = arith.mulf %45, %54 : vector<32x1xf32>
    %56 = vector.broadcast %55 : vector<32x1xf32> to vector<32x256xf32>
    %57 = arith.mulf %36, %56 : vector<32x256xf32>
    %58 = vector.broadcast %53 : vector<32x1xf32> to vector<32x256xf32>
    %59 = arith.mulf %37, %58 : vector<32x256xf32>
    %60 = vector.extract_strided_slice %33 {offsets = [0, 256], sizes = [32, 256], strides = [1, 1]} : vector<32x512xf32> to vector<32x256xf32>
    %61 = vector.extract_strided_slice %34 {offsets = [0, 256], sizes = [32, 256], strides = [1, 1]} : vector<32x512xf32> to vector<32x256xf32>
    %62 = arith.mulf %60, %60 : vector<32x256xf32>
    %cst_27 = arith.constant dense<0.000000e+00> : vector<32xf32>
    %63 = vector.multi_reduction <add>, %62, %cst_27 [1] : vector<32x256xf32> to vector<32xf32>
    %64 = vector.shape_cast %63 : vector<32xf32> to vector<32x1xf32>
    %cst_28 = arith.constant 2.560000e+02 : f32
    %65 = vector.broadcast %cst_28 : f32 to vector<32x1xf32>
    %66 = arith.divf %64, %65 : vector<32x1xf32>
    %cst_29 = arith.constant 1.1920929E-7 : f32
    %67 = vector.broadcast %cst_29 : f32 to vector<32x1xf32>
    %68 = arith.addf %66, %67 : vector<32x1xf32>
    %69 = math.rsqrt %68 : vector<32x1xf32>
    %70 = arith.mulf %61, %61 : vector<32x256xf32>
    %cst_30 = arith.constant dense<0.000000e+00> : vector<32xf32>
    %71 = vector.multi_reduction <add>, %70, %cst_30 [1] : vector<32x256xf32> to vector<32xf32>
    %72 = vector.shape_cast %71 : vector<32xf32> to vector<32x1xf32>
    %cst_31 = arith.constant 2.560000e+02 : f32
    %73 = vector.broadcast %cst_31 : f32 to vector<32x1xf32>
    %74 = arith.divf %72, %73 : vector<32x1xf32>
    %cst_32 = arith.constant 1.1920929E-7 : f32
    %75 = vector.broadcast %cst_32 : f32 to vector<32x1xf32>
    %76 = arith.addf %74, %75 : vector<32x1xf32>
    %77 = math.rsqrt %76 : vector<32x1xf32>
    %cst_33 = arith.constant 6.250000e-02 : f32
    %78 = vector.broadcast %cst_33 : f32 to vector<32x1xf32>
    %79 = arith.mulf %69, %78 : vector<32x1xf32>
    %80 = vector.broadcast %79 : vector<32x1xf32> to vector<32x256xf32>
    %81 = arith.mulf %60, %80 : vector<32x256xf32>
    %82 = vector.broadcast %77 : vector<32x1xf32> to vector<32x256xf32>
    %83 = arith.mulf %61, %82 : vector<32x256xf32>
    %84 = tpu.concatenate %57, %81 in 1 : vector<32x256xf32>, vector<32x256xf32> -> vector<32x512xf32>
    %85 = tpu.concatenate %59, %83 in 1 : vector<32x256xf32>, vector<32x256xf32> -> vector<32x512xf32>
    %86 = arith.mulf %84, %18 : vector<32x512xf32>
    %87 = vector.extract_strided_slice %84 {offsets = [0, 128], sizes = [32, 128], strides = [1, 1]} : vector<32x512xf32> to vector<32x128xf32>
    %88 = vector.extract_strided_slice %84 {offsets = [0, 0], sizes = [32, 128], strides = [1, 1]} : vector<32x512xf32> to vector<32x128xf32>
    %89 = vector.extract_strided_slice %84 {offsets = [0, 384], sizes = [32, 128], strides = [1, 1]} : vector<32x512xf32> to vector<32x128xf32>
    %90 = vector.extract_strided_slice %84 {offsets = [0, 256], sizes = [32, 128], strides = [1, 1]} : vector<32x512xf32> to vector<32x128xf32>
    %91 = tpu.concatenate %87, %88, %89, %90 in 1 : vector<32x128xf32>, vector<32x128xf32>, vector<32x128xf32>, vector<32x128xf32> -> vector<32x512xf32>
    %92 = arith.mulf %91, %20 : vector<32x512xf32>
    %93 = arith.addf %86, %92 : vector<32x512xf32>
    %94 = arith.truncf %93 : vector<32x512xf32> to vector<32x512xbf16>
    %95 = arith.mulf %85, %18 : vector<32x512xf32>
    %96 = vector.extract_strided_slice %85 {offsets = [0, 128], sizes = [32, 128], strides = [1, 1]} : vector<32x512xf32> to vector<32x128xf32>
    %97 = vector.extract_strided_slice %85 {offsets = [0, 0], sizes = [32, 128], strides = [1, 1]} : vector<32x512xf32> to vector<32x128xf32>
    %98 = vector.extract_strided_slice %85 {offsets = [0, 384], sizes = [32, 128], strides = [1, 1]} : vector<32x512xf32> to vector<32x128xf32>
    %99 = vector.extract_strided_slice %85 {offsets = [0, 256], sizes = [32, 128], strides = [1, 1]} : vector<32x512xf32> to vector<32x128xf32>
    %100 = tpu.concatenate %96, %97, %98, %99 in 1 : vector<32x128xf32>, vector<32x128xf32>, vector<32x128xf32>, vector<32x128xf32> -> vector<32x512xf32>
    %101 = arith.mulf %100, %20 : vector<32x512xf32>
    %102 = arith.addf %95, %101 : vector<32x512xf32>
    %103 = arith.truncf %102 : vector<32x512xf32> to vector<32x512xbf16>
    %104 = arith.truncf %35 : vector<32x512xf32> to vector<32x512xbf16>
    %105 = tpu.iota {dimensions = array<i32: 0>} : vector<16x16xi32>
    %106 = tpu.iota {dimensions = array<i32: 1>} : vector<16x16xi32>
    %107 = vector.extract_strided_slice %94 {offsets = [0, 0], sizes = [16, 256], strides = [1, 1]} : vector<32x512xbf16> to vector<16x256xbf16>
    %cst_34 = arith.constant 0xFF800000 : f32
    %108 = vector.broadcast %cst_34 : f32 to vector<16x1xf32>
    %cst_35 = arith.constant 0.000000e+00 : f32
    %109 = vector.broadcast %cst_35 : f32 to vector<16x1xf32>
    %cst_36 = arith.constant 0.000000e+00 : f32
    %110 = vector.broadcast %cst_36 : f32 to vector<16x256xf32>
    %111 = vector.extract_strided_slice %103 {offsets = [0, 0], sizes = [16, 256], strides = [1, 1]} : vector<32x512xbf16> to vector<16x256xbf16>
    %112 = vector.extract_strided_slice %104 {offsets = [0, 0], sizes = [16, 256], strides = [1, 1]} : vector<32x512xbf16> to vector<16x256xbf16>
    %cst_37 = arith.constant dense<0.000000e+00> : vector<16x16xf32>
    %113 = tpu.matmul %107, %111, %cst_37 {dimension_numbers = #tpu.dot_dimension_numbers<[1], [1], [0], [0], [0, 0, 1, 0], [], []>} : vector<16x256xbf16>, vector<16x256xbf16>, vector<16x16xf32> -> vector<16x16xf32>
    %c0_i32 = arith.constant 0 : i32
    %114 = vector.broadcast %c0_i32 : i32 to vector<16x16xi32>
    %115 = arith.addi %106, %114 : vector<16x16xi32>
    %116 = arith.cmpi sge, %105, %115 : vector<16x16xi32>
    %cst_38 = arith.constant 0xFF800000 : f32
    %117 = vector.broadcast %cst_38 : f32 to vector<16x16xf32>
    %118 = arith.select %116, %113, %117 : vector<16x16xi1>, vector<16x16xf32>
    %cst_39 = arith.constant dense<0xFF800000> : vector<16xf32>
    %119 = vector.multi_reduction <maximumf>, %118, %cst_39 [1] : vector<16x16xf32> to vector<16xf32>
    %120 = vector.shape_cast %119 : vector<16xf32> to vector<16x1xf32>
    %121 = arith.maximumf %108, %120 : vector<16x1xf32>
    %122 = vector.broadcast %121 : vector<16x1xf32> to vector<16x16xf32>
    %123 = arith.subf %118, %122 : vector<16x16xf32>
    %124 = math.exp %123 : vector<16x16xf32>
    %125 = arith.subf %108, %121 : vector<16x1xf32>
    %126 = math.exp %125 : vector<16x1xf32>
    %127 = arith.mulf %126, %109 : vector<16x1xf32>
    %cst_40 = arith.constant dense<0.000000e+00> : vector<16xf32>
    %128 = vector.multi_reduction <add>, %124, %cst_40 [1] : vector<16x16xf32> to vector<16xf32>
    %129 = vector.shape_cast %128 : vector<16xf32> to vector<16x1xf32>
    %130 = arith.addf %127, %129 : vector<16x1xf32>
    %131 = vector.broadcast %126 : vector<16x1xf32> to vector<16x256xf32>
    %132 = arith.mulf %131, %110 : vector<16x256xf32>
    %133 = arith.truncf %124 : vector<16x16xf32> to vector<16x16xbf16>
    %cst_41 = arith.constant dense<0.000000e+00> : vector<16x256xf32>
    %134 = tpu.matmul %133, %112, %cst_41 {dimension_numbers = #tpu.dot_dimension_numbers<[1], [0], [0], [1], [0, 0, 1, 1], [], []>} : vector<16x16xbf16>, vector<16x256xbf16>, vector<16x256xf32> -> vector<16x256xf32>
    %135 = arith.addf %132, %134 : vector<16x256xf32>
    %136 = vector.broadcast %130 : vector<16x1xf32> to vector<16x256xf32>
    %137 = arith.divf %135, %136 : vector<16x256xf32>
    %138 = vector.extract_strided_slice %94 {offsets = [0, 256], sizes = [16, 256], strides = [1, 1]} : vector<32x512xbf16> to vector<16x256xbf16>
    %cst_42 = arith.constant 0xFF800000 : f32
    %139 = vector.broadcast %cst_42 : f32 to vector<16x1xf32>
    %cst_43 = arith.constant 0.000000e+00 : f32
    %140 = vector.broadcast %cst_43 : f32 to vector<16x1xf32>
    %cst_44 = arith.constant 0.000000e+00 : f32
    %141 = vector.broadcast %cst_44 : f32 to vector<16x256xf32>
    %142 = vector.extract_strided_slice %103 {offsets = [0, 256], sizes = [16, 256], strides = [1, 1]} : vector<32x512xbf16> to vector<16x256xbf16>
    %143 = vector.extract_strided_slice %104 {offsets = [0, 256], sizes = [16, 256], strides = [1, 1]} : vector<32x512xbf16> to vector<16x256xbf16>
    %cst_45 = arith.constant dense<0.000000e+00> : vector<16x16xf32>
    %144 = tpu.matmul %138, %142, %cst_45 {dimension_numbers = #tpu.dot_dimension_numbers<[1], [1], [0], [0], [0, 0, 1, 0], [], []>} : vector<16x256xbf16>, vector<16x256xbf16>, vector<16x16xf32> -> vector<16x16xf32>
    %c0_i32_46 = arith.constant 0 : i32
    %145 = vector.broadcast %c0_i32_46 : i32 to vector<16x16xi32>
    %146 = arith.addi %106, %145 : vector<16x16xi32>
    %147 = arith.cmpi sge, %105, %146 : vector<16x16xi32>
    %cst_47 = arith.constant 0xFF800000 : f32
    %148 = vector.broadcast %cst_47 : f32 to vector<16x16xf32>
    %149 = arith.select %147, %144, %148 : vector<16x16xi1>, vector<16x16xf32>
    %cst_48 = arith.constant dense<0xFF800000> : vector<16xf32>
    %150 = vector.multi_reduction <maximumf>, %149, %cst_48 [1] : vector<16x16xf32> to vector<16xf32>
    %151 = vector.shape_cast %150 : vector<16xf32> to vector<16x1xf32>
    %152 = arith.maximumf %139, %151 : vector<16x1xf32>
    %153 = vector.broadcast %152 : vector<16x1xf32> to vector<16x16xf32>
    %154 = arith.subf %149, %153 : vector<16x16xf32>
    %155 = math.exp %154 : vector<16x16xf32>
    %156 = arith.subf %139, %152 : vector<16x1xf32>
    %157 = math.exp %156 : vector<16x1xf32>
    %158 = arith.mulf %157, %140 : vector<16x1xf32>
    %cst_49 = arith.constant dense<0.000000e+00> : vector<16xf32>
    %159 = vector.multi_reduction <add>, %155, %cst_49 [1] : vector<16x16xf32> to vector<16xf32>
    %160 = vector.shape_cast %159 : vector<16xf32> to vector<16x1xf32>
    %161 = arith.addf %158, %160 : vector<16x1xf32>
    %162 = vector.broadcast %157 : vector<16x1xf32> to vector<16x256xf32>
    %163 = arith.mulf %162, %141 : vector<16x256xf32>
    %164 = arith.truncf %155 : vector<16x16xf32> to vector<16x16xbf16>
    %cst_50 = arith.constant dense<0.000000e+00> : vector<16x256xf32>
    %165 = tpu.matmul %164, %143, %cst_50 {dimension_numbers = #tpu.dot_dimension_numbers<[1], [0], [0], [1], [0, 0, 1, 1], [], []>} : vector<16x16xbf16>, vector<16x256xbf16>, vector<16x256xf32> -> vector<16x256xf32>
    %166 = arith.addf %163, %165 : vector<16x256xf32>
    %167 = vector.broadcast %161 : vector<16x1xf32> to vector<16x256xf32>
    %168 = arith.divf %166, %167 : vector<16x256xf32>
    %169 = tpu.concatenate %137, %168 in 1 : vector<16x256xf32>, vector<16x256xf32> -> vector<16x512xf32>
    %170 = vector.extract_strided_slice %94 {offsets = [16, 0], sizes = [16, 256], strides = [1, 1]} : vector<32x512xbf16> to vector<16x256xbf16>
    %cst_51 = arith.constant 0xFF800000 : f32
    %171 = vector.broadcast %cst_51 : f32 to vector<16x1xf32>
    %cst_52 = arith.constant 0.000000e+00 : f32
    %172 = vector.broadcast %cst_52 : f32 to vector<16x1xf32>
    %cst_53 = arith.constant 0.000000e+00 : f32
    %173 = vector.broadcast %cst_53 : f32 to vector<16x256xf32>
    %174 = vector.extract_strided_slice %103 {offsets = [16, 0], sizes = [16, 256], strides = [1, 1]} : vector<32x512xbf16> to vector<16x256xbf16>
    %175 = vector.extract_strided_slice %104 {offsets = [16, 0], sizes = [16, 256], strides = [1, 1]} : vector<32x512xbf16> to vector<16x256xbf16>
    %cst_54 = arith.constant dense<0.000000e+00> : vector<16x16xf32>
    %176 = tpu.matmul %170, %174, %cst_54 {dimension_numbers = #tpu.dot_dimension_numbers<[1], [1], [0], [0], [0, 0, 1, 0], [], []>} : vector<16x256xbf16>, vector<16x256xbf16>, vector<16x16xf32> -> vector<16x16xf32>
    %c0_i32_55 = arith.constant 0 : i32
    %177 = vector.broadcast %c0_i32_55 : i32 to vector<16x16xi32>
    %178 = arith.addi %106, %177 : vector<16x16xi32>
    %179 = arith.cmpi sge, %105, %178 : vector<16x16xi32>
    %cst_56 = arith.constant 0xFF800000 : f32
    %180 = vector.broadcast %cst_56 : f32 to vector<16x16xf32>
    %181 = arith.select %179, %176, %180 : vector<16x16xi1>, vector<16x16xf32>
    %cst_57 = arith.constant dense<0xFF800000> : vector<16xf32>
    %182 = vector.multi_reduction <maximumf>, %181, %cst_57 [1] : vector<16x16xf32> to vector<16xf32>
    %183 = vector.shape_cast %182 : vector<16xf32> to vector<16x1xf32>
    %184 = arith.maximumf %171, %183 : vector<16x1xf32>
    %185 = vector.broadcast %184 : vector<16x1xf32> to vector<16x16xf32>
    %186 = arith.subf %181, %185 : vector<16x16xf32>
    %187 = math.exp %186 : vector<16x16xf32>
    %188 = arith.subf %171, %184 : vector<16x1xf32>
    %189 = math.exp %188 : vector<16x1xf32>
    %190 = arith.mulf %189, %172 : vector<16x1xf32>
    %cst_58 = arith.constant dense<0.000000e+00> : vector<16xf32>
    %191 = vector.multi_reduction <add>, %187, %cst_58 [1] : vector<16x16xf32> to vector<16xf32>
    %192 = vector.shape_cast %191 : vector<16xf32> to vector<16x1xf32>
    %193 = arith.addf %190, %192 : vector<16x1xf32>
    %194 = vector.broadcast %189 : vector<16x1xf32> to vector<16x256xf32>
    %195 = arith.mulf %194, %173 : vector<16x256xf32>
    %196 = arith.truncf %187 : vector<16x16xf32> to vector<16x16xbf16>
    %cst_59 = arith.constant dense<0.000000e+00> : vector<16x256xf32>
    %197 = tpu.matmul %196, %175, %cst_59 {dimension_numbers = #tpu.dot_dimension_numbers<[1], [0], [0], [1], [0, 0, 1, 1], [], []>} : vector<16x16xbf16>, vector<16x256xbf16>, vector<16x256xf32> -> vector<16x256xf32>
    %198 = arith.addf %195, %197 : vector<16x256xf32>
    %199 = vector.broadcast %193 : vector<16x1xf32> to vector<16x256xf32>
    %200 = arith.divf %198, %199 : vector<16x256xf32>
    %201 = vector.extract_strided_slice %94 {offsets = [16, 256], sizes = [16, 256], strides = [1, 1]} : vector<32x512xbf16> to vector<16x256xbf16>
    %cst_60 = arith.constant 0xFF800000 : f32
    %202 = vector.broadcast %cst_60 : f32 to vector<16x1xf32>
    %cst_61 = arith.constant 0.000000e+00 : f32
    %203 = vector.broadcast %cst_61 : f32 to vector<16x1xf32>
    %cst_62 = arith.constant 0.000000e+00 : f32
    %204 = vector.broadcast %cst_62 : f32 to vector<16x256xf32>
    %205 = vector.extract_strided_slice %103 {offsets = [16, 256], sizes = [16, 256], strides = [1, 1]} : vector<32x512xbf16> to vector<16x256xbf16>
    %206 = vector.extract_strided_slice %104 {offsets = [16, 256], sizes = [16, 256], strides = [1, 1]} : vector<32x512xbf16> to vector<16x256xbf16>
    %cst_63 = arith.constant dense<0.000000e+00> : vector<16x16xf32>
    %207 = tpu.matmul %201, %205, %cst_63 {dimension_numbers = #tpu.dot_dimension_numbers<[1], [1], [0], [0], [0, 0, 1, 0], [], []>} : vector<16x256xbf16>, vector<16x256xbf16>, vector<16x16xf32> -> vector<16x16xf32>
    %c0_i32_64 = arith.constant 0 : i32
    %208 = vector.broadcast %c0_i32_64 : i32 to vector<16x16xi32>
    %209 = arith.addi %106, %208 : vector<16x16xi32>
    %210 = arith.cmpi sge, %105, %209 : vector<16x16xi32>
    %cst_65 = arith.constant 0xFF800000 : f32
    %211 = vector.broadcast %cst_65 : f32 to vector<16x16xf32>
    %212 = arith.select %210, %207, %211 : vector<16x16xi1>, vector<16x16xf32>
    %cst_66 = arith.constant dense<0xFF800000> : vector<16xf32>
    %213 = vector.multi_reduction <maximumf>, %212, %cst_66 [1] : vector<16x16xf32> to vector<16xf32>
    %214 = vector.shape_cast %213 : vector<16xf32> to vector<16x1xf32>
    %215 = arith.maximumf %202, %214 : vector<16x1xf32>
    %216 = vector.broadcast %215 : vector<16x1xf32> to vector<16x16xf32>
    %217 = arith.subf %212, %216 : vector<16x16xf32>
    %218 = math.exp %217 : vector<16x16xf32>
    %219 = arith.subf %202, %215 : vector<16x1xf32>
    %220 = math.exp %219 : vector<16x1xf32>
    %221 = arith.mulf %220, %203 : vector<16x1xf32>
    %cst_67 = arith.constant dense<0.000000e+00> : vector<16xf32>
    %222 = vector.multi_reduction <add>, %218, %cst_67 [1] : vector<16x16xf32> to vector<16xf32>
    %223 = vector.shape_cast %222 : vector<16xf32> to vector<16x1xf32>
    %224 = arith.addf %221, %223 : vector<16x1xf32>
    %225 = vector.broadcast %220 : vector<16x1xf32> to vector<16x256xf32>
    %226 = arith.mulf %225, %204 : vector<16x256xf32>
    %227 = arith.truncf %218 : vector<16x16xf32> to vector<16x16xbf16>
    %cst_68 = arith.constant dense<0.000000e+00> : vector<16x256xf32>
    %228 = tpu.matmul %227, %206, %cst_68 {dimension_numbers = #tpu.dot_dimension_numbers<[1], [0], [0], [1], [0, 0, 1, 1], [], []>} : vector<16x16xbf16>, vector<16x256xbf16>, vector<16x256xf32> -> vector<16x256xf32>
    %229 = arith.addf %226, %228 : vector<16x256xf32>
    %230 = vector.broadcast %224 : vector<16x1xf32> to vector<16x256xf32>
    %231 = arith.divf %229, %230 : vector<16x256xf32>
    %232 = tpu.concatenate %200, %231 in 1 : vector<16x256xf32>, vector<16x256xf32> -> vector<16x512xf32>
    %233 = tpu.concatenate %169, %232 in 0 : vector<16x512xf32>, vector<16x512xf32> -> vector<32x512xf32>
    %234 = arith.truncf %233 : vector<32x512xf32> to vector<32x512xbf16>
    %cst_69 = arith.constant dense<0.000000e+00> : vector<32x512xf32>
    %235 = tpu.matmul %234, %14, %cst_69 {dimension_numbers = #tpu.dot_dimension_numbers<[1], [0], [0], [1], [0, 0, 1, 1], [], []>} : vector<32x512xbf16>, vector<512x512xbf16>, vector<32x512xf32> -> vector<32x512xf32>
    %236 = arith.addf %12, %235 : vector<32x512xf32>
    %237 = arith.mulf %236, %236 : vector<32x512xf32>
    %cst_70 = arith.constant dense<0.000000e+00> : vector<32xf32>
    %238 = vector.multi_reduction <add>, %237, %cst_70 [1] : vector<32x512xf32> to vector<32xf32>
    %239 = vector.shape_cast %238 : vector<32xf32> to vector<32x1xf32>
    %cst_71 = arith.constant 5.120000e+02 : f32
    %240 = vector.broadcast %cst_71 : f32 to vector<32x1xf32>
    %241 = arith.divf %239, %240 : vector<32x1xf32>
    %cst_72 = arith.constant 1.1920929E-7 : f32
    %242 = vector.broadcast %cst_72 : f32 to vector<32x1xf32>
    %243 = arith.addf %241, %242 : vector<32x1xf32>
    %244 = math.rsqrt %243 : vector<32x1xf32>
    %245 = vector.broadcast %244 : vector<32x1xf32> to vector<32x512xf32>
    %246 = arith.mulf %236, %245 : vector<32x512xf32>
    %247 = arith.truncf %246 : vector<32x512xf32> to vector<32x512xbf16>
    %cst_73 = arith.constant dense<0.000000e+00> : vector<32x2048xf32>
    %248 = tpu.matmul %247, %15, %cst_73 {dimension_numbers = #tpu.dot_dimension_numbers<[1], [0], [0], [1], [0, 0, 1, 1], [], []>} : vector<32x512xbf16>, vector<512x2048xbf16>, vector<32x2048xf32> -> vector<32x2048xf32>
    %cst_74 = arith.constant 0.000000e+00 : f32
    %249 = vector.broadcast %cst_74 : f32 to vector<32x2048xf32>
    %250 = arith.maximumf %248, %249 : vector<32x2048xf32>
    %251 = arith.mulf %250, %250 : vector<32x2048xf32>
    %252 = arith.truncf %251 : vector<32x2048xf32> to vector<32x2048xbf16>
    %cst_75 = arith.constant dense<0.000000e+00> : vector<32x512xf32>
    %253 = tpu.matmul %252, %16, %cst_75 {dimension_numbers = #tpu.dot_dimension_numbers<[1], [0], [0], [1], [0, 0, 1, 1], [], []>} : vector<32x2048xbf16>, vector<2048x512xbf16>, vector<32x512xf32> -> vector<32x512xf32>
    %254 = arith.addf %236, %253 : vector<32x512xf32>
    %255 = arith.truncf %254 : vector<32x512xf32> to vector<32x512xbf16>
    %c0_76 = arith.constant 0 : index
    %c0_77 = arith.constant 0 : index
    %256 = vector.load %arg8[%c0_76, %c0_77] : memref<32x512xbf16, #tpu.memory_space<vmem>>, vector<32x512xbf16>
    tpu.vector_store %arg8[%c0_76, %c0_77], %255 {strides = array<i32>} : memref<32x512xbf16, #tpu.memory_space<vmem>>, vector<32x512xbf16>,
    %257 = arith.truncf %10 : vector<32x512xf32> to vector<32x512xbf16>
    %c0_78 = arith.constant 0 : index
    %c0_79 = arith.constant 0 : index
    %258 = vector.load %arg9[%c0_78, %c0_79] : memref<32x512xbf16, #tpu.memory_space<vmem>>, vector<32x512xbf16>
    tpu.vector_store %arg9[%c0_78, %c0_79], %257 {strides = array<i32>} : memref<32x512xbf16, #tpu.memory_space<vmem>>, vector<32x512xbf16>,
    %259 = arith.truncf %35 : vector<32x512xf32> to vector<32x512xbf16>
    %c0_80 = arith.constant 0 : index
    %c0_81 = arith.constant 0 : index
    %260 = vector.load %arg10[%c0_80, %c0_81] : memref<32x512xbf16, #tpu.memory_space<vmem>>, vector<32x512xbf16>
    tpu.vector_store %arg10[%c0_80, %c0_81], %259 {strides = array<i32>} : memref<32x512xbf16, #tpu.memory_space<vmem>>, vector<32x512xbf16>,
    return
  }
  func.func @transform_0(%arg0: i32) -> (i32, i32) {
    %c0_i32 = arith.constant 0 : i32
    %c0_i32_0 = arith.constant 0 : i32
    return %arg0, %c0_i32 : i32, i32
  }
  func.func @transform_1(%arg0: i32) -> (i32, i32) {
    %c0_i32 = arith.constant 0 : i32
    %c0_i32_0 = arith.constant 0 : i32
    %c0_i32_1 = arith.constant 0 : i32
    return %c0_i32, %c0_i32_0 : i32, i32
  }
  func.func @transform_2(%arg0: i32) -> (i32, i32) {
    %c0_i32 = arith.constant 0 : i32
    %c0_i32_0 = arith.constant 0 : i32
    %c0_i32_1 = arith.constant 0 : i32
    return %c0_i32, %c0_i32_0 : i32, i32
  }
  func.func @transform_3(%arg0: i32) -> (i32, i32) {
    %c0_i32 = arith.constant 0 : i32
    %c0_i32_0 = arith.constant 0 : i32
    %c0_i32_1 = arith.constant 0 : i32
    return %c0_i32, %c0_i32_0 : i32, i32
  }
  func.func @transform_4(%arg0: i32) -> (i32, i32) {
    %c0_i32 = arith.constant 0 : i32
    %c0_i32_0 = arith.constant 0 : i32
    %c0_i32_1 = arith.constant 0 : i32
    return %c0_i32, %c0_i32_0 : i32, i32
  }
  func.func @transform_5(%arg0: i32) -> (i32, i32) {
    %c0_i32 = arith.constant 0 : i32
    %c0_i32_0 = arith.constant 0 : i32
    %c0_i32_1 = arith.constant 0 : i32
    return %c0_i32, %c0_i32_0 : i32, i32
  }
  func.func @transform_6(%arg0: i32) -> (i32, i32) {
    %c0_i32 = arith.constant 0 : i32
    %c0_i32_0 = arith.constant 0 : i32
    %c0_i32_1 = arith.constant 0 : i32
    return %c0_i32, %c0_i32_0 : i32, i32
  }
  func.func @transform_7(%arg0: i32) -> (i32, i32) {
    %c0_i32 = arith.constant 0 : i32
    %c0_i32_0 = arith.constant 0 : i32
    return %arg0, %c0_i32 : i32, i32
  }
  func.func @transform_8(%arg0: i32) -> (i32, i32) {
    %c0_i32 = arith.constant 0 : i32
    %c0_i32_0 = arith.constant 0 : i32
    return %arg0, %c0_i32 : i32, i32
  }
  func.func @transform_9(%arg0: i32) -> (i32, i32) {
    %c0_i32 = arith.constant 0 : i32
    %c0_i32_0 = arith.constant 0 : i32
    return %arg0, %c0_i32 : i32, i32
  }
}

</mosaic_0001>

<llo_original>
// kernel: tpu_custom_call.1
$region0: #{tpu_custom_call.1}
  #allocation0 [shape = 'u32[]', space=smem, size = 0x4, offset = 0x4, fixed_abs, tag = 'smem constant byte address 0x4 - core index']
  #allocation1 [shape = 'u32[144,128]{1,0:T(1,128)}', space=vmem, size = 0x12000, scoped, tag = 'internal scratch']
  %s0 = inlined_call_operand.hbm [shape: f32[32,512], index: 0, kind: input, shape index: {}]
  %s1 = inlined_call_operand.hbm [shape: bf16[512,1536], index: 1, kind: input, shape index: {}]
  %s2 = inlined_call_operand.hbm [shape: bf16[512,512], index: 2, kind: input, shape index: {}]
  %s3 = inlined_call_operand.hbm [shape: bf16[512,2048], index: 3, kind: input, shape index: {}]
  %s4 = inlined_call_operand.hbm [shape: bf16[2048,512], index: 4, kind: input, shape index: {}]
  %s5 = inlined_call_operand.hbm [shape: bf16[32,512], index: 5, kind: input, shape index: {}]
  %s6 = inlined_call_operand.hbm [shape: bf16[32,512], index: 6, kind: input, shape index: {}]
  %s7 = inlined_call_operand.hbm [shape: bf16[32,512], index: 7, kind: output, shape index: {0}]
  %s8 = inlined_call_operand.hbm [shape: bf16[32,512], index: 8, kind: output, shape index: {1}]
  %s9 = inlined_call_operand.hbm [shape: bf16[32,512], index: 9, kind: output, shape index: {2}]
  %10 = xla_tuple %s7, %s8, %s9
  %s11 = sld [smem:[#allocation0]]
  $region82: #{tpu_custom_call.1} parent=0
    _
  %s13 = ssub.s32 1, %s11
  %s14 = scalar_select 0, %s13, %s11
  $region1: #{tpu_custom_call.1} parent=0
    #allocation2 [shape = 'u8[65536]{0}', space=vmem, size = 0x10000, scoped, tag = 'input window, operand 0, single buffered']
    #allocation3 [shape = 's32[1]{0}', space=sflag, size = 0x4, scoped, tag = 'scoped memory for tpu_custom_call.1']
    #allocation4 [shape = 's32[1]{0}', space=sflag, size = 0x4, scoped, tag = 'scoped memory for tpu_custom_call.1']
    #allocation5 [shape = 'u8[1572864]{0}', space=vmem, size = 0x180000, scoped, tag = 'input window, operand 1, single buffered']
    #allocation6 [shape = 's32[1]{0}', space=sflag, size = 0x4, scoped, tag = 'scoped memory for tpu_custom_call.1']
    #allocation7 [shape = 'u8[524288]{0}', space=vmem, size = 0x80000, scoped, tag = 'input window, operand 2, single buffered']
    #allocation8 [shape = 'u8[2097152]{0}', space=vmem, size = 0x200000, scoped, tag = 'input window, operand 3, single buffered']
    #allocation9 [shape = 's32[1]{0}', space=sflag, size = 0x4, scoped, tag = 'scoped memory for tpu_custom_call.1']
    #allocation10 [shape = 'u8[2097152]{0}', space=vmem, size = 0x200000, scoped, tag = 'input window, operand 4, single buffered']
    #allocation11 [shape = 'u8[32768]{0}', space=vmem, size = 0x8000, scoped, tag = 'input window, operand 5, single buffered']
    #allocation12 [shape = 's32[1]{0}', space=sflag, size = 0x4, scoped, tag = 'scoped memory for tpu_custom_call.1']
    #allocation13 [shape = 'u8[32768]{0}', space=vmem, size = 0x8000, scoped, tag = 'input window, operand 6, single buffered']
    #allocation14 [shape = 'u8[32768]{0}', space=vmem, size = 0x8000, scoped, tag = 'output window, operand 0, single buffered']
    #allocation15 [shape = 'u8[32768]{0}', space=vmem, size = 0x8000, scoped, tag = 'output window, operand 1, single buffered']
    #allocation16 [shape = 's32[1]{0}', space=sflag, size = 0x4, scoped, tag = 'scoped memory for tpu_custom_call.1']
    #allocation17 [shape = 'u8[32768]{0}', space=vmem, size = 0x8000, scoped, tag = 'output window, operand 2, single buffered']
    %15 = vsyncpa [#allocation3], 0
    %16 = vsyncpa [#allocation6], 0
    %17 = vsyncpa [#allocation9], 0
    %18 = vsyncpa [#allocation12], 0
    %19 = vsyncpa [#allocation4], 0
    %20 = vsyncpa [#allocation16], 0
    // Predicated region
    $region2: #{tpu_custom_call.1} parent=1 // pred_check
      _
    $region3: #{tpu_custom_call.1} parent=1 // pred_check_branch
      %22 = sbr.rel (0) target = $region5
    $region4: #{tpu_custom_call.1} parent=1 // pred_region
      %s24 = ssub.s32 2048, 2048
      %25 = vsyncadd [#allocation3], %s24
      %s26 = sshll.u32 [#allocation2], 4
      %s27 = int_to_ptr.vmem [resolvable:$true] %s26
      %32 = dma.hbm_to_vmem [thread:$0]  %s0, 2048, %s27, [#allocation3], 512, 512, 32
    $region5: #{tpu_custom_call.1} parent=1 // pred_fallthru
      _
    // Predicated region
    $region6: #{tpu_custom_call.1} parent=1 // pred_check
      _
    $region7: #{tpu_custom_call.1} parent=1 // pred_check_branch
      %34 = sbr.rel (0) target = $region9
    $region8: #{tpu_custom_call.1} parent=1 // pred_region
      %s36 = ssub.s32 49152, 49152
      %37 = vsyncadd [#allocation6], %s36
      %s38 = sshll.u32 [#allocation5], 4
      %s39 = int_to_ptr.vmem [resolvable:$true] %s38
      %44 = dma.hbm_to_vmem [thread:$0]  %s1, 49152, %s39, [#allocation6], 768, 768, 48
    $region9: #{tpu_custom_call.1} parent=1 // pred_fallthru
      _
    // Predicated region
    $region10: #{tpu_custom_call.1} parent=1 // pred_check
      _
    $region11: #{tpu_custom_call.1} parent=1 // pred_check_branch
      %46 = sbr.rel (0) target = $region13
    $region12: #{tpu_custom_call.1} parent=1 // pred_region
      %s48 = ssub.s32 16384, 16384
      %49 = vsyncadd [#allocation6], %s48
      %s50 = sshll.u32 [#allocation7], 4
      %s51 = int_to_ptr.vmem [resolvable:$true] %s50
      %56 = dma.hbm_to_vmem [thread:$0]  %s2, 16384, %s51, [#allocation6], 256, 256, 16
    $region13: #{tpu_custom_call.1} parent=1 // pred_fallthru
      _
    // Predicated region
    $region14: #{tpu_custom_call.1} parent=1 // pred_check
      _
    $region15: #{tpu_custom_call.1} parent=1 // pred_check_branch
      %58 = sbr.rel (0) target = $region17
    $region16: #{tpu_custom_call.1} parent=1 // pred_region
      %s60 = ssub.s32 65536, 65536
      %61 = vsyncadd [#allocation9], %s60
      %s62 = sshll.u32 [#allocation8], 4
      %s63 = int_to_ptr.vmem [resolvable:$true] %s62
      %68 = dma.hbm_to_vmem [thread:$0]  %s3, 65536, %s63, [#allocation9], 1024, 1024, 64
    $region17: #{tpu_custom_call.1} parent=1 // pred_fallthru
      _
    // Predicated region
    $region18: #{tpu_custom_call.1} parent=1 // pred_check
      _
    $region19: #{tpu_custom_call.1} parent=1 // pred_check_branch
      %70 = sbr.rel (0) target = $region21
    $region20: #{tpu_custom_call.1} parent=1 // pred_region
      %s72 = ssub.s32 65536, 65536
      %73 = vsyncadd [#allocation9], %s72
      %s74 = sshll.u32 [#allocation10], 4
      %s75 = int_to_ptr.vmem [resolvable:$true] %s74
      %80 = dma.hbm_to_vmem [thread:$0]  %s4, 65536, %s75, [#allocation9], 256, 256, 16
    $region21: #{tpu_custom_call.1} parent=1 // pred_fallthru
      _
    // Predicated region
    $region22: #{tpu_custom_call.1} parent=1 // pred_check
      _
    $region23: #{tpu_custom_call.1} parent=1 // pred_check_branch
      %82 = sbr.rel (0) target = $region25
    $region24: #{tpu_custom_call.1} parent=1 // pred_region
      %s84 = ssub.s32 1024, 1024
      %85 = vsyncadd [#allocation12], %s84
      %s86 = sshll.u32 [#allocation11], 4
      %s87 = int_to_ptr.vmem [resolvable:$true] %s86
      %92 = dma.hbm_to_vmem [thread:$0]  %s5, 1024, %s87, [#allocation12], 256, 256, 16
    $region25: #{tpu_custom_call.1} parent=1 // pred_fallthru
      _
    // Predicated region
    $region26: #{tpu_custom_call.1} parent=1 // pred_check
      _
    $region27: #{tpu_custom_call.1} parent=1 // pred_check_branch
      %94 = sbr.rel (0) target = $region29
    $region28: #{tpu_custom_call.1} parent=1 // pred_region
      %s96 = ssub.s32 1024, 1024
      %97 = vsyncadd [#allocation12], %s96
      %s98 = sshll.u32 [#allocation13], 4
      %s99 = int_to_ptr.vmem [resolvable:$true] %s98
      %104 = dma.hbm_to_vmem [thread:$0]  %s6, 1024, %s99, [#allocation12], 256, 256, 16
    $region29: #{tpu_custom_call.1} parent=1 // pred_fallthru
      _
    // Predicated region
    $region30: #{tpu_custom_call.1} parent=1 // pred_check
      _
    $region31: #{tpu_custom_call.1} parent=1 // pred_check_branch
      %106 = sbr.rel (0) target = $region33
    $region32: #{tpu_custom_call.1} parent=1 // pred_region
      %107 = dma.done [#allocation3], 2048
    $region33: #{tpu_custom_call.1} parent=1 // pred_fallthru
      _
    // Predicated region
    $region34: #{tpu_custom_call.1} parent=1 // pred_check
      _
    $region35: #{tpu_custom_call.1} parent=1 // pred_check_branch
      %109 = sbr.rel (0) target = $region37
    $region36: #{tpu_custom_call.1} parent=1 // pred_region
      %110 = dma.done [#allocation6], 49152
    $region37: #{tpu_custom_call.1} parent=1 // pred_fallthru
      _
    // Predicated region
    $region38: #{tpu_custom_call.1} parent=1 // pred_check
      _
    $region39: #{tpu_custom_call.1} parent=1 // pred_check_branch
      %112 = sbr.rel (0) target = $region41
    $region40: #{tpu_custom_call.1} parent=1 // pred_region
      %113 = dma.done [#allocation6], 16384
    $region41: #{tpu_custom_call.1} parent=1 // pred_fallthru
      _
    // Predicated region
    $region42: #{tpu_custom_call.1} parent=1 // pred_check
      _
    $region43: #{tpu_custom_call.1} parent=1 // pred_check_branch
      %115 = sbr.rel (0) target = $region45
    $region44: #{tpu_custom_call.1} parent=1 // pred_region
      %116 = dma.done [#allocation9], 65536
    $region45: #{tpu_custom_call.1} parent=1 // pred_fallthru
      _
    // Predicated region
    $region46: #{tpu_custom_call.1} parent=1 // pred_check
      _
    $region47: #{tpu_custom_call.1} parent=1 // pred_check_branch
      %118 = sbr.rel (0) target = $region49
    $region48: #{tpu_custom_call.1} parent=1 // pred_region
      %119 = dma.done [#allocation9], 65536
    $region49: #{tpu_custom_call.1} parent=1 // pred_fallthru
      _
    // Predicated region
    $region50: #{tpu_custom_call.1} parent=1 // pred_check
      _
    $region51: #{tpu_custom_call.1} parent=1 // pred_check_branch
      %121 = sbr.rel (0) target = $region53
    $region52: #{tpu_custom_call.1} parent=1 // pred_region
      %122 = dma.done [#allocation12], 1024
    $region53: #{tpu_custom_call.1} parent=1 // pred_fallthru
      _
    // Predicated region
    $region54: #{tpu_custom_call.1} parent=1 // pred_check
      _
    $region55: #{tpu_custom_call.1} parent=1 // pred_check_branch
      %124 = sbr.rel (0) target = $region57
    $region56: #{tpu_custom_call.1} parent=1 // pred_region
      %125 = dma.done [#allocation12], 1024
    $region57: #{tpu_custom_call.1} parent=1 // pred_fallthru
      _
    %v127 = vld [vmem:[#allocation2] sm:$0xff]
    %v128 = vld [vmem:[#allocation2 + $0x8] sm:$0xff]
    %v129 = vld [vmem:[#allocation2 + $0x10] sm:$0xff]
    %v130 = vld [vmem:[#allocation2 + $0x18] sm:$0xff]
    %v131 = vld [vmem:[#allocation2 + $0x20] sm:$0xff]
    %v132 = vld [vmem:[#allocation2 + $0x28] sm:$0xff]
    %v133 = vld [vmem:[#allocation2 + $0x30] sm:$0xff]
    %v134 = vld [vmem:[#allocation2 + $0x38] sm:$0xff]
    %v135 = vld [vmem:[#allocation2 + $0x40] sm:$0xff]
    %v136 = vld [vmem:[#allocation2 + $0x48] sm:$0xff]
    %v137 = vld [vmem:[#allocation2 + $0x50] sm:$0xff]
    %v138 = vld [vmem:[#allocation2 + $0x58] sm:$0xff]
    %v139 = vld [vmem:[#allocation2 + $0x60] sm:$0xff]
    %v140 = vld [vmem:[#allocation2 + $0x68] sm:$0xff]
    %v141 = vld [vmem:[#allocation2 + $0x70] sm:$0xff]
    %v142 = vld [vmem:[#allocation2 + $0x78] sm:$0xff]
    %v143 = vmul.f32 %v127, %v127
    %v144 = vmul.f32 %v128, %v128
    %v145 = vmul.f32 %v129, %v129
    %v146 = vmul.f32 %v130, %v130
    %v147 = vmul.f32 %v131, %v131
    %v148 = vmul.f32 %v132, %v132
    %v149 = vmul.f32 %v133, %v133
    %v150 = vmul.f32 %v134, %v134
    %v151 = vmul.f32 %v135, %v135
    %v152 = vmul.f32 %v136, %v136
    %v153 = vmul.f32 %v137, %v137
    %v154 = vmul.f32 %v138, %v138
    %v155 = vmul.f32 %v139, %v139
    %v156 = vmul.f32 %v140, %v140
    %v157 = vmul.f32 %v141, %v141
    %v158 = vmul.f32 %v142, %v142
    %v159 = vadd.f32 %v143, %v144
    %v160 = vadd.f32 %v159, %v145
    %v161 = vadd.f32 %v160, %v146
    %162 = vadd.xlane.f32.xlu0 %v161
    %v163 = vpop.xlane.xlu0 %162
    %v164 = vadd.f32 %v147, %v148
    %v165 = vadd.f32 %v164, %v149
    %v166 = vadd.f32 %v165, %v150
    %167 = vadd.xlane.f32.xlu0 %v166
    %v168 = vpop.xlane.xlu0 %167
    %v169 = vadd.f32 %v151, %v152
    %v170 = vadd.f32 %v169, %v153
    %v171 = vadd.f32 %v170, %v154
    %172 = vadd.xlane.f32.xlu0 %v171
    %v173 = vpop.xlane.xlu0 %172
    %v174 = vadd.f32 %v155, %v156
    %v175 = vadd.f32 %v174, %v157
    %v176 = vadd.f32 %v175, %v158
    %177 = vadd.xlane.f32.xlu0 %v176
    %v178 = vpop.xlane.xlu0 %177
    %v179 = vrcp.pop 512.0
    %v180 = vmul.f32 %v163, %v179
    %v181 = vmul.f32 %v168, %v179
    %v182 = vmul.f32 %v173, %v179
    %v183 = vmul.f32 %v178, %v179
    %v184 = vadd.f32 %v180, 1.1920929e-07
    %v185 = vadd.f32 %v181, 1.1920929e-07
    %v186 = vadd.f32 %v182, 1.1920929e-07
    %v187 = vadd.f32 %v183, 1.1920929e-07
    %v188 = vrsqrt.pop %v184
    %v189 = vrsqrt.pop %v185
    %v190 = vrsqrt.pop %v186
    %v191 = vrsqrt.pop %v187
    %v192 = vmul.f32 %v127, %v188
    %v193 = vmul.f32 %v128, %v188
    %v194 = vmul.f32 %v129, %v188
    %v195 = vmul.f32 %v130, %v188
    %v196 = vmul.f32 %v131, %v189
    %v197 = vmul.f32 %v132, %v189
    %v198 = vmul.f32 %v133, %v189
    %v199 = vmul.f32 %v134, %v189
    %v200 = vmul.f32 %v135, %v190
    %v201 = vmul.f32 %v136, %v190
    %v202 = vmul.f32 %v137, %v190
    %v203 = vmul.f32 %v138, %v190
    %v204 = vmul.f32 %v139, %v191
    %v205 = vmul.f32 %v140, %v191
    %v206 = vmul.f32 %v141, %v191
    %v207 = vmul.f32 %v142, %v191
    %v208 = vld [vmem:[#allocation5] sm:$0xff]
    %v209 = vld [vmem:[#allocation5 + $0x8] sm:$0xff]
    %v210 = vld [vmem:[#allocation5 + $0x10] sm:$0xff]
    %v211 = vld [vmem:[#allocation5 + $0x18] sm:$0xff]
    %v212 = vld [vmem:[#allocation5 + $0x20] sm:$0xff]
    %v213 = vld [vmem:[#allocation5 + $0x28] sm:$0xff]
    %v214 = vld [vmem:[#allocation5 + $0x30] sm:$0xff]
    %v215 = vld [vmem:[#allocation5 + $0x38] sm:$0xff]
    %v216 = vld [vmem:[#allocation5 + $0x40] sm:$0xff]
    %v217 = vld [vmem:[#allocation5 + $0x48] sm:$0xff]
    %v218 = vld [vmem:[#allocation5 + $0x50] sm:$0xff]
    %v219 = vld [vmem:[#allocation5 + $0x58] sm:$0xff]
    %v220 = vld [vmem:[#allocation5 + $0x60] sm:$0xff]
    %v221 = vld [vmem:[#allocation5 + $0x68] sm:$0xff]
    %v222 = vld [vmem:[#allocation5 + $0x70] sm:$0xff]
    %v223 = vld [vmem:[#allocation5 + $0x78] sm:$0xff]
    %v224 = vld [vmem:[#allocation5 + $0x80] sm:$0xff]
    %v225 = vld [vmem:[#allocation5 + $0x88] sm:$0xff]
    %v226 = vld [vmem:[#allocation5 + $0x90] sm:$0xff]
    %v227 = vld [vmem:[#allocation5 + $0x98] sm:$0xff]
    %v228 = vld [vmem:[#allocation5 + $0xa0] sm:$0xff]
    %v229 = vld [vmem:[#allocation5 + $0xa8] sm:$0xff]
    %v230 = vld [vmem:[#allocation5 + $0xb0] sm:$0xff]
    %v231 = vld [vmem:[#allocation5 + $0xb8] sm:$0xff]
    %v232 = vld [vmem:[#allocation5 + $0xc0] sm:$0xff]
    %v233 = vld [vmem:[#allocation5 + $0xc8] sm:$0xff]
    %v234 = vld [vmem:[#allocation5 + $0xd0] sm:$0xff]
    %v235 = vld [vmem:[#allocation5 + $0xd8] sm:$0xff]
    %v236 = vld [vmem:[#allocation5 + $0xe0] sm:$0xff]
    %v237 = vld [vmem:[#allocation5 + $0xe8] sm:$0xff]
    %v238 = vld [vmem:[#allocation5 + $0xf0] sm:$0xff]
    %v239 = vld [vmem:[#allocation5 + $0xf8] sm:$0xff]
    %v240 = vld [vmem:[#allocation5 + $0x100] sm:$0xff]
    %v241 = vld [vmem:[#allocation5 + $0x108] sm:$0xff]
    %v242 = vld [vmem:[#allocation5 + $0x110] sm:$0xff]
    %v243 = vld [vmem:[#allocation5 + $0x118] sm:$0xff]
    %v244 = vld [vmem:[#allocation5 + $0x120] sm:$0xff]
    %v245 = vld [vmem:[#allocation5 + $0x128] sm:$0xff]
    %v246 = vld [vmem:[#allocation5 + $0x130] sm:$0xff]
    %v247 = vld [vmem:[#allocation5 + $0x138] sm:$0xff]
    %v248 = vld [vmem:[#allocation5 + $0x140] sm:$0xff]
    %v249 = vld [vmem:[#allocation5 + $0x148] sm:$0xff]
    %v250 = vld [vmem:[#allocation5 + $0x150] sm:$0xff]
    %v251 = vld [vmem:[#allocation5 + $0x158] sm:$0xff]
    %v252 = vld [vmem:[#allocation5 + $0x160] sm:$0xff]
    %v253 = vld [vmem:[#allocation5 + $0x168] sm:$0xff]
    %v254 = vld [vmem:[#allocation5 + $0x170] sm:$0xff]
    %v255 = vld [vmem:[#allocation5 + $0x178] sm:$0xff]
    %v256 = vld [vmem:[#allocation5 + $0x180] sm:$0xff]
    %v257 = vld [vmem:[#allocation5 + $0x188] sm:$0xff]
    %v258 = vld [vmem:[#allocation5 + $0x190] sm:$0xff]
    %v259 = vld [vmem:[#allocation5 + $0x198] sm:$0xff]
    %v260 = vld [vmem:[#allocation5 + $0x1a0] sm:$0xff]
    %v261 = vld [vmem:[#allocation5 + $0x1a8] sm:$0xff]
    %v262 = vld [vmem:[#allocation5 + $0x1b0] sm:$0xff]
    %v263 = vld [vmem:[#allocation5 + $0x1b8] sm:$0xff]
    %v264 = vld [vmem:[#allocation5 + $0x1c0] sm:$0xff]
    %v265 = vld [vmem:[#allocation5 + $0x1c8] sm:$0xff]
    %v266 = vld [vmem:[#allocation5 + $0x1d0] sm:$0xff]
    %v267 = vld [vmem:[#allocation5 + $0x1d8] sm:$0xff]
    %v268 = vld [vmem:[#allocation5 + $0x1e0] sm:$0xff]
    %v269 = vld [vmem:[#allocation5 + $0x1e8] sm:$0xff]
    %v270 = vld [vmem:[#allocation5 + $0x1f0] sm:$0xff]
    %v271 = vld [vmem:[#allocation5 + $0x1f8] sm:$0xff]
    %v272 = vld [vmem:[#allocation5 + $0x200] sm:$0xff]
    %v273 = vld [vmem:[#allocation5 + $0x208] sm:$0xff]
    %v274 = vld [vmem:[#allocation5 + $0x210] sm:$0xff]
    %v275 = vld [vmem:[#allocation5 + $0x218] sm:$0xff]
    %v276 = vld [vmem:[#allocation5 + $0x220] sm:$0xff]
    %v277 = vld [vmem:[#allocation5 + $0x228] sm:$0xff]
    %v278 = vld [vmem:[#allocation5 + $0x230] sm:$0xff]
    %v279 = vld [vmem:[#allocation5 + $0x238] sm:$0xff]
    %v280 = vld [vmem:[#allocation5 + $0x240] sm:$0xff]
    %v281 = vld [vmem:[#allocation5 + $0x248] sm:$0xff]
    %v282 = vld [vmem:[#allocation5 + $0x250] sm:$0xff]
    %v283 = vld [vmem:[#allocation5 + $0x258] sm:$0xff]
    %v284 = vld [vmem:[#allocation5 + $0x260] sm:$0xff]
    %v285 = vld [vmem:[#allocation5 + $0x268] sm:$0xff]
    %v286 = vld [vmem:[#allocation5 + $0x270] sm:$0xff]
    %v287 = vld [vmem:[#allocation5 + $0x278] sm:$0xff]
    %v288 = vld [vmem:[#allocation5 + $0x280] sm:$0xff]
    %v289 = vld [vmem:[#allocation5 + $0x288] sm:$0xff]
    %v290 = vld [vmem:[#allocation5 + $0x290] sm:$0xff]
    %v291 = vld [vmem:[#allocation5 + $0x298] sm:$0xff]
    %v292 = vld [vmem:[#allocation5 + $0x2a0] sm:$0xff]
    %v293 = vld [vmem:[#allocation5 + $0x2a8] sm:$0xff]
    %v294 = vld [vmem:[#allocation5 + $0x2b0] sm:$0xff]
    %v295 = vld [vmem:[#allocation5 + $0x2b8] sm:$0xff]
    %v296 = vld [vmem:[#allocation5 + $0x2c0] sm:$0xff]
    %v297 = vld [vmem:[#allocation5 + $0x2c8] sm:$0xff]
    %v298 = vld [vmem:[#allocation5 + $0x2d0] sm:$0xff]
    %v299 = vld [vmem:[#allocation5 + $0x2d8] sm:$0xff]
    %v300 = vld [vmem:[#allocation5 + $0x2e0] sm:$0xff]
    %v301 = vld [vmem:[#allocation5 + $0x2e8] sm:$0xff]
    %v302 = vld [vmem:[#allocation5 + $0x2f0] sm:$0xff]
    %v303 = vld [vmem:[#allocation5 + $0x2f8] sm:$0xff]
    %v304 = vld [vmem:[#allocation5 + $0x300] sm:$0xff]
    %v305 = vld [vmem:[#allocation5 + $0x308] sm:$0xff]
    %v306 = vld [vmem:[#allocation5 + $0x310] sm:$0xff]
    %v307 = vld [vmem:[#allocation5 + $0x318] sm:$0xff]
    %v308 = vld [vmem:[#allocation5 + $0x320] sm:$0xff]
    %v309 = vld [vmem:[#allocation5 + $0x328] sm:$0xff]
    %v310 = vld [vmem:[#allocation5 + $0x330] sm:$0xff]
    %v311 = vld [vmem:[#allocation5 + $0x338] sm:$0xff]
    %v312 = vld [vmem:[#allocation5 + $0x340] sm:$0xff]
    %v313 = vld [vmem:[#allocation5 + $0x348] sm:$0xff]
    %v314 = vld [vmem:[#allocation5 + $0x350] sm:$0xff]
    %v315 = vld [vmem:[#allocation5 + $0x358] sm:$0xff]
    %v316 = vld [vmem:[#allocation5 + $0x360] sm:$0xff]
    %v317 = vld [vmem:[#allocation5 + $0x368] sm:$0xff]
    %v318 = vld [vmem:[#allocation5 + $0x370] sm:$0xff]
    %v319 = vld [vmem:[#allocation5 + $0x378] sm:$0xff]
    %v320 = vld [vmem:[#allocation5 + $0x380] sm:$0xff]
    %v321 = vld [vmem:[#allocation5 + $0x388] sm:$0xff]
    %v322 = vld [vmem:[#allocation5 + $0x390] sm:$0xff]
    %v323 = vld [vmem:[#allocation5 + $0x398] sm:$0xff]
    %v324 = vld [vmem:[#allocation5 + $0x3a0] sm:$0xff]
    %v325 = vld [vmem:[#allocation5 + $0x3a8] sm:$0xff]
    %v326 = vld [vmem:[#allocation5 + $0x3b0] sm:$0xff]
    %v327 = vld [vmem:[#allocation5 + $0x3b8] sm:$0xff]
    %v328 = vld [vmem:[#allocation5 + $0x3c0] sm:$0xff]
    %v329 = vld [vmem:[#allocation5 + $0x3c8] sm:$0xff]
    %v330 = vld [vmem:[#allocation5 + $0x3d0] sm:$0xff]
    %v331 = vld [vmem:[#allocation5 + $0x3d8] sm:$0xff]
    %v332 = vld [vmem:[#allocation5 + $0x3e0] sm:$0xff]
    %v333 = vld [vmem:[#allocation5 + $0x3e8] sm:$0xff]
    %v334 = vld [vmem:[#allocation5 + $0x3f0] sm:$0xff]
    %v335 = vld [vmem:[#allocation5 + $0x3f8] sm:$0xff]
    %v336 = vld [vmem:[#allocation5 + $0x400] sm:$0xff]
    %v337 = vld [vmem:[#allocation5 + $0x408] sm:$0xff]
    %v338 = vld [vmem:[#allocation5 + $0x410] sm:$0xff]
    %v339 = vld [vmem:[#allocation5 + $0x418] sm:$0xff]
    %v340 = vld [vmem:[#allocation5 + $0x420] sm:$0xff]
    %v341 = vld [vmem:[#allocation5 + $0x428] sm:$0xff]
    %v342 = vld [vmem:[#allocation5 + $0x430] sm:$0xff]
    %v343 = vld [vmem:[#allocation5 + $0x438] sm:$0xff]
    %v344 = vld [vmem:[#allocation5 + $0x440] sm:$0xff]
    %v345 = vld [vmem:[#allocation5 + $0x448] sm:$0xff]
    %v346 = vld [vmem:[#allocation5 + $0x450] sm:$0xff]
    %v347 = vld [vmem:[#allocation5 + $0x458] sm:$0xff]
    %v348 = vld [vmem:[#allocation5 + $0x460] sm:$0xff]
    %v349 = vld [vmem:[#allocation5 + $0x468] sm:$0xff]
    %v350 = vld [vmem:[#allocation5 + $0x470] sm:$0xff]
    %v351 = vld [vmem:[#allocation5 + $0x478] sm:$0xff]
    %v352 = vld [vmem:[#allocation5 + $0x480] sm:$0xff]
    %v353 = vld [vmem:[#allocation5 + $0x488] sm:$0xff]
    %v354 = vld [vmem:[#allocation5 + $0x490] sm:$0xff]
    %v355 = vld [vmem:[#allocation5 + $0x498] sm:$0xff]
    %v356 = vld [vmem:[#allocation5 + $0x4a0] sm:$0xff]
    %v357 = vld [vmem:[#allocation5 + $0x4a8] sm:$0xff]
    %v358 = vld [vmem:[#allocation5 + $0x4b0] sm:$0xff]
    %v359 = vld [vmem:[#allocation5 + $0x4b8] sm:$0xff]
    %v360 = vld [vmem:[#allocation5 + $0x4c0] sm:$0xff]
    %v361 = vld [vmem:[#allocation5 + $0x4c8] sm:$0xff]
    %v362 = vld [vmem:[#allocation5 + $0x4d0] sm:$0xff]
    %v363 = vld [vmem:[#allocation5 + $0x4d8] sm:$0xff]
    %v364 = vld [vmem:[#allocation5 + $0x4e0] sm:$0xff]
    %v365 = vld [vmem:[#allocation5 + $0x4e8] sm:$0xff]
    %v366 = vld [vmem:[#allocation5 + $0x4f0] sm:$0xff]
    %v367 = vld [vmem:[#allocation5 + $0x4f8] sm:$0xff]
    %v368 = vld [vmem:[#allocation5 + $0x500] sm:$0xff]
    %v369 = vld [vmem:[#allocation5 + $0x508] sm:$0xff]
    %v370 = vld [vmem:[#allocation5 + $0x510] sm:$0xff]
    %v371 = vld [vmem:[#allocation5 + $0x518] sm:$0xff]
    %v372 = vld [vmem:[#allocation5 + $0x520] sm:$0xff]
    %v373 = vld [vmem:[#allocation5 + $0x528] sm:$0xff]
    %v374 = vld [vmem:[#allocation5 + $0x530] sm:$0xff]
    %v375 = vld [vmem:[#allocation5 + $0x538] sm:$0xff]
    %v376 = vld [vmem:[#allocation5 + $0x540] sm:$0xff]
    %v377 = vld [vmem:[#allocation5 + $0x548] sm:$0xff]
    %v378 = vld [vmem:[#allocation5 + $0x550] sm:$0xff]
    %v379 = vld [vmem:[#allocation5 + $0x558] sm:$0xff]
    %v380 = vld [vmem:[#allocation5 + $0x560] sm:$0xff]
    %v381 = vld [vmem:[#allocation5 + $0x568] sm:$0xff]
    %v382 = vld [vmem:[#allocation5 + $0x570] sm:$0xff]
    %v383 = vld [vmem:[#allocation5 + $0x578] sm:$0xff]
    %v384 = vld [vmem:[#allocation5 + $0x580] sm:$0xff]
    %v385 = vld [vmem:[#allocation5 + $0x588] sm:$0xff]
    %v386 = vld [vmem:[#allocation5 + $0x590] sm:$0xff]
    %v387 = vld [vmem:[#allocation5 + $0x598] sm:$0xff]
    %v388 = vld [vmem:[#allocation5 + $0x5a0] sm:$0xff]
    %v389 = vld [vmem:[#allocation5 + $0x5a8] sm:$0xff]
    %v390 = vld [vmem:[#allocation5 + $0x5b0] sm:$0xff]
    %v391 = vld [vmem:[#allocation5 + $0x5b8] sm:$0xff]
    %v392 = vld [vmem:[#allocation5 + $0x5c0] sm:$0xff]
    %v393 = vld [vmem:[#allocation5 + $0x5c8] sm:$0xff]
    %v394 = vld [vmem:[#allocation5 + $0x5d0] sm:$0xff]
    %v395 = vld [vmem:[#allocation5 + $0x5d8] sm:$0xff]
    %v396 = vld [vmem:[#allocation5 + $0x5e0] sm:$0xff]
    %v397 = vld [vmem:[#allocation5 + $0x5e8] sm:$0xff]
    %v398 = vld [vmem:[#allocation5 + $0x5f0] sm:$0xff]
    %v399 = vld [vmem:[#allocation5 + $0x5f8] sm:$0xff]
    %v400 = vld [vmem:[#allocation5 + $0x600] sm:$0xff]
    %v401 = vld [vmem:[#allocation5 + $0x608] sm:$0xff]
    %v402 = vld [vmem:[#allocation5 + $0x610] sm:$0xff]
    %v403 = vld [vmem:[#allocation5 + $0x618] sm:$0xff]
    %v404 = vld [vmem:[#allocation5 + $0x620] sm:$0xff]
    %v405 = vld [vmem:[#allocation5 + $0x628] sm:$0xff]
    %v406 = vld [vmem:[#allocation5 + $0x630] sm:$0xff]
    %v407 = vld [vmem:[#allocation5 + $0x638] sm:$0xff]
    %v408 = vld [vmem:[#allocation5 + $0x640] sm:$0xff]
    %v409 = vld [vmem:[#allocation5 + $0x648] sm:$0xff]
    %v410 = vld [vmem:[#allocation5 + $0x650] sm:$0xff]
    %v411 = vld [vmem:[#allocation5 + $0x658] sm:$0xff]
    %v412 = vld [vmem:[#allocation5 + $0x660] sm:$0xff]
    %v413 = vld [vmem:[#allocation5 + $0x668] sm:$0xff]
    %v414 = vld [vmem:[#allocation5 + $0x670] sm:$0xff]
    %v415 = vld [vmem:[#allocation5 + $0x678] sm:$0xff]
    %v416 = vld [vmem:[#allocation5 + $0x680] sm:$0xff]
    %v417 = vld [vmem:[#allocation5 + $0x688] sm:$0xff]
    %v418 = vld [vmem:[#allocation5 + $0x690] sm:$0xff]
    %v419 = vld [vmem:[#allocation5 + $0x698] sm:$0xff]
    %v420 = vld [vmem:[#allocation5 + $0x6a0] sm:$0xff]
    %v421 = vld [vmem:[#allocation5 + $0x6a8] sm:$0xff]
    %v422 = vld [vmem:[#allocation5 + $0x6b0] sm:$0xff]
    %v423 = vld [vmem:[#allocation5 + $0x6b8] sm:$0xff]
    %v424 = vld [vmem:[#allocation5 + $0x6c0] sm:$0xff]
    %v425 = vld [vmem:[#allocation5 + $0x6c8] sm:$0xff]
    %v426 = vld [vmem:[#allocation5 + $0x6d0] sm:$0xff]
    %v427 = vld [vmem:[#allocation5 + $0x6d8] sm:$0xff]
    %v428 = vld [vmem:[#allocation5 + $0x6e0] sm:$0xff]
    %v429 = vld [vmem:[#allocation5 + $0x6e8] sm:$0xff]
    %v430 = vld [vmem:[#allocation5 + $0x6f0] sm:$0xff]
    %v431 = vld [vmem:[#allocation5 + $0x6f8] sm:$0xff]
    %v432 = vld [vmem:[#allocation5 + $0x700] sm:$0xff]
    %v433 = vld [vmem:[#allocation5 + $0x708] sm:$0xff]
    %v434 = vld [vmem:[#allocation5 + $0x710] sm:$0xff]
    %v435 = vld [vmem:[#allocation5 + $0x718] sm:$0xff]
    %v436 = vld [vmem:[#allocation5 + $0x720] sm:$0xff]
    %v437 = vld [vmem:[#allocation5 + $0x728] sm:$0xff]
    %v438 = vld [vmem:[#allocation5 + $0x730] sm:$0xff]
    %v439 = vld [vmem:[#allocation5 + $0x738] sm:$0xff]
    %v440 = vld [vmem:[#allocation5 + $0x740] sm:$0xff]
    %v441 = vld [vmem:[#allocation5 + $0x748] sm:$0xff]
    %v442 = vld [vmem:[#allocation5 + $0x750] sm:$0xff]
    %v443 = vld [vmem:[#allocation5 + $0x758] sm:$0xff]
    %v444 = vld [vmem:[#allocation5 + $0x760] sm:$0xff]
    %v445 = vld [vmem:[#allocation5 + $0x768] sm:$0xff]
    %v446 = vld [vmem:[#allocation5 + $0x770] sm:$0xff]
    %v447 = vld [vmem:[#allocation5 + $0x778] sm:$0xff]
    %v448 = vld [vmem:[#allocation5 + $0x780] sm:$0xff]
    %v449 = vld [vmem:[#allocation5 + $0x788] sm:$0xff]
    %v450 = vld [vmem:[#allocation5 + $0x790] sm:$0xff]
    %v451 = vld [vmem:[#allocation5 + $0x798] sm:$0xff]
    %v452 = vld [vmem:[#allocation5 + $0x7a0] sm:$0xff]
    %v453 = vld [vmem:[#allocation5 + $0x7a8] sm:$0xff]
    %v454 = vld [vmem:[#allocation5 + $0x7b0] sm:$0xff]
    %v455 = vld [vmem:[#allocation5 + $0x7b8] sm:$0xff]
    %v456 = vld [vmem:[#allocation5 + $0x7c0] sm:$0xff]
    %v457 = vld [vmem:[#allocation5 + $0x7c8] sm:$0xff]
    %v458 = vld [vmem:[#allocation5 + $0x7d0] sm:$0xff]
    %v459 = vld [vmem:[#allocation5 + $0x7d8] sm:$0xff]
    %v460 = vld [vmem:[#allocation5 + $0x7e0] sm:$0xff]
    %v461 = vld [vmem:[#allocation5 + $0x7e8] sm:$0xff]
    %v462 = vld [vmem:[#allocation5 + $0x7f0] sm:$0xff]
    %v463 = vld [vmem:[#allocation5 + $0x7f8] sm:$0xff]
    %v464 = vld [vmem:[#allocation5 + $0x800] sm:$0xff]
    %v465 = vld [vmem:[#allocation5 + $0x808] sm:$0xff]
    %v466 = vld [vmem:[#allocation5 + $0x810] sm:$0xff]
    %v467 = vld [vmem:[#allocation5 + $0x818] sm:$0xff]
    %v468 = vld [vmem:[#allocation5 + $0x820] sm:$0xff]
    %v469 = vld [vmem:[#allocation5 + $0x828] sm:$0xff]
    %v470 = vld [vmem:[#allocation5 + $0x830] sm:$0xff]
    %v471 = vld [vmem:[#allocation5 + $0x838] sm:$0xff]
    %v472 = vld [vmem:[#allocation5 + $0x840] sm:$0xff]
    %v473 = vld [vmem:[#allocation5 + $0x848] sm:$0xff]
    %v474 = vld [vmem:[#allocation5 + $0x850] sm:$0xff]
    %v475 = vld [vmem:[#allocation5 + $0x858] sm:$0xff]
    %v476 = vld [vmem:[#allocation5 + $0x860] sm:$0xff]
    %v477 = vld [vmem:[#allocation5 + $0x868] sm:$0xff]
    %v478 = vld [vmem:[#allocation5 + $0x870] sm:$0xff]
    %v479 = vld [vmem:[#allocation5 + $0x878] sm:$0xff]
    %v480 = vld [vmem:[#allocation5 + $0x880] sm:$0xff]
    %v481 = vld [vmem:[#allocation5 + $0x888] sm:$0xff]
    %v482 = vld [vmem:[#allocation5 + $0x890] sm:$0xff]
    %v483 = vld [vmem:[#allocation5 + $0x898] sm:$0xff]
    %v484 = vld [vmem:[#allocation5 + $0x8a0] sm:$0xff]
    %v485 = vld [vmem:[#allocation5 + $0x8a8] sm:$0xff]
    %v486 = vld [vmem:[#allocation5 + $0x8b0] sm:$0xff]
    %v487 = vld [vmem:[#allocation5 + $0x8b8] sm:$0xff]
    %v488 = vld [vmem:[#allocation5 + $0x8c0] sm:$0xff]
    %v489 = vld [vmem:[#allocation5 + $0x8c8] sm:$0xff]
    %v490 = vld [vmem:[#allocation5 + $0x8d0] sm:$0xff]
    %v491 = vld [vmem:[#allocation5 + $0x8d8] sm:$0xff]
    %v492 = vld [vmem:[#allocation5 + $0x8e0] sm:$0xff]
    %v493 = vld [vmem:[#allocation5 + $0x8e8] sm:$0xff]
    %v494 = vld [vmem:[#allocation5 + $0x8f0] sm:$0xff]
    %v495 = vld [vmem:[#allocation5 + $0x8f8] sm:$0xff]
    %v496 = vld [vmem:[#allocation5 + $0x900] sm:$0xff]
    %v497 = vld [vmem:[#allocation5 + $0x908] sm:$0xff]
    %v498 = vld [vmem:[#allocation5 + $0x910] sm:$0xff]
    %v499 = vld [vmem:[#allocation5 + $0x918] sm:$0xff]
    %v500 = vld [vmem:[#allocation5 + $0x920] sm:$0xff]
    %v501 = vld [vmem:[#allocation5 + $0x928] sm:$0xff]
    %v502 = vld [vmem:[#allocation5 + $0x930] sm:$0xff]
    %v503 = vld [vmem:[#allocation5 + $0x938] sm:$0xff]
    %v504 = vld [vmem:[#allocation5 + $0x940] sm:$0xff]
    %v505 = vld [vmem:[#allocation5 + $0x948] sm:$0xff]
    %v506 = vld [vmem:[#allocation5 + $0x950] sm:$0xff]
    %v507 = vld [vmem:[#allocation5 + $0x958] sm:$0xff]
    %v508 = vld [vmem:[#allocation5 + $0x960] sm:$0xff]
    %v509 = vld [vmem:[#allocation5 + $0x968] sm:$0xff]
    %v510 = vld [vmem:[#allocation5 + $0x970] sm:$0xff]
    %v511 = vld [vmem:[#allocation5 + $0x978] sm:$0xff]
    %v512 = vld [vmem:[#allocation5 + $0x980] sm:$0xff]
    %v513 = vld [vmem:[#allocation5 + $0x988] sm:$0xff]
    %v514 = vld [vmem:[#allocation5 + $0x990] sm:$0xff]
    %v515 = vld [vmem:[#allocation5 + $0x998] sm:$0xff]
    %v516 = vld [vmem:[#allocation5 + $0x9a0] sm:$0xff]
    %v517 = vld [vmem:[#allocation5 + $0x9a8] sm:$0xff]
    %v518 = vld [vmem:[#allocation5 + $0x9b0] sm:$0xff]
    %v519 = vld [vmem:[#allocation5 + $0x9b8] sm:$0xff]
    %v520 = vld [vmem:[#allocation5 + $0x9c0] sm:$0xff]
    %v521 = vld [vmem:[#allocation5 + $0x9c8] sm:$0xff]
    %v522 = vld [vmem:[#allocation5 + $0x9d0] sm:$0xff]
    %v523 = vld [vmem:[#allocation5 + $0x9d8] sm:$0xff]
    %v524 = vld [vmem:[#allocation5 + $0x9e0] sm:$0xff]
    %v525 = vld [vmem:[#allocation5 + $0x9e8] sm:$0xff]
    %v526 = vld [vmem:[#allocation5 + $0x9f0] sm:$0xff]
    %v527 = vld [vmem:[#allocation5 + $0x9f8] sm:$0xff]
    %v528 = vld [vmem:[#allocation5 + $0xa00] sm:$0xff]
    %v529 = vld [vmem:[#allocation5 + $0xa08] sm:$0xff]
    %v530 = vld [vmem:[#allocation5 + $0xa10] sm:$0xff]
    %v531 = vld [vmem:[#allocation5 + $0xa18] sm:$0xff]
    %v532 = vld [vmem:[#allocation5 + $0xa20] sm:$0xff]
    %v533 = vld [vmem:[#allocation5 + $0xa28] sm:$0xff]
    %v534 = vld [vmem:[#allocation5 + $0xa30] sm:$0xff]
    %v535 = vld [vmem:[#allocation5 + $0xa38] sm:$0xff]
    %v536 = vld [vmem:[#allocation5 + $0xa40] sm:$0xff]
    %v537 = vld [vmem:[#allocation5 + $0xa48] sm:$0xff]
    %v538 = vld [vmem:[#allocation5 + $0xa50] sm:$0xff]
    %v539 = vld [vmem:[#allocation5 + $0xa58] sm:$0xff]
    %v540 = vld [vmem:[#allocation5 + $0xa60] sm:$0xff]
    %v541 = vld [vmem:[#allocation5 + $0xa68] sm:$0xff]
    %v542 = vld [vmem:[#allocation5 + $0xa70] sm:$0xff]
    %v543 = vld [vmem:[#allocation5 + $0xa78] sm:$0xff]
    %v544 = vld [vmem:[#allocation5 + $0xa80] sm:$0xff]
    %v545 = vld [vmem:[#allocation5 + $0xa88] sm:$0xff]
    %v546 = vld [vmem:[#allocation5 + $0xa90] sm:$0xff]
    %v547 = vld [vmem:[#allocation5 + $0xa98] sm:$0xff]
    %v548 = vld [vmem:[#allocation5 + $0xaa0] sm:$0xff]
    %v549 = vld [vmem:[#allocation5 + $0xaa8] sm:$0xff]
    %v550 = vld [vmem:[#allocation5 + $0xab0] sm:$0xff]
    %v551 = vld [vmem:[#allocation5 + $0xab8] sm:$0xff]
    %v552 = vld [vmem:[#allocation5 + $0xac0] sm:$0xff]
    %v553 = vld [vmem:[#allocation5 + $0xac8] sm:$0xff]
    %v554 = vld [vmem:[#allocation5 + $0xad0] sm:$0xff]
    %v555 = vld [vmem:[#allocation5 + $0xad8] sm:$0xff]
    %v556 = vld [vmem:[#allocation5 + $0xae0] sm:$0xff]
    %v557 = vld [vmem:[#allocation5 + $0xae8] sm:$0xff]
    %v558 = vld [vmem:[#allocation5 + $0xaf0] sm:$0xff]
    %v559 = vld [vmem:[#allocation5 + $0xaf8] sm:$0xff]
    %v560 = vld [vmem:[#allocation5 + $0xb00] sm:$0xff]
    %v561 = vld [vmem:[#allocation5 + $0xb08] sm:$0xff]
    %v562 = vld [vmem:[#allocation5 + $0xb10] sm:$0xff]
    %v563 = vld [vmem:[#allocation5 + $0xb18] sm:$0xff]
    %v564 = vld [vmem:[#allocation5 + $0xb20] sm:$0xff]
    %v565 = vld [vmem:[#allocation5 + $0xb28] sm:$0xff]
    %v566 = vld [vmem:[#allocation5 + $0xb30] sm:$0xff]
    %v567 = vld [vmem:[#allocation5 + $0xb38] sm:$0xff]
    %v568 = vld [vmem:[#allocation5 + $0xb40] sm:$0xff]
    %v569 = vld [vmem:[#allocation5 + $0xb48] sm:$0xff]
    %v570 = vld [vmem:[#allocation5 + $0xb50] sm:$0xff]
    %v571 = vld [vmem:[#allocation5 + $0xb58] sm:$0xff]
    %v572 = vld [vmem:[#allocation5 + $0xb60] sm:$0xff]
    %v573 = vld [vmem:[#allocation5 + $0xb68] sm:$0xff]
    %v574 = vld [vmem:[#allocation5 + $0xb70] sm:$0xff]
    %v575 = vld [vmem:[#allocation5 + $0xb78] sm:$0xff]
    %v576 = vld [vmem:[#allocation5 + $0xb80] sm:$0xff]
    %v577 = vld [vmem:[#allocation5 + $0xb88] sm:$0xff]
    %v578 = vld [vmem:[#allocation5 + $0xb90] sm:$0xff]
    %v579 = vld [vmem:[#allocation5 + $0xb98] sm:$0xff]
    %v580 = vld [vmem:[#allocation5 + $0xba0] sm:$0xff]
    %v581 = vld [vmem:[#allocation5 + $0xba8] sm:$0xff]
    %v582 = vld [vmem:[#allocation5 + $0xbb0] sm:$0xff]
    %v583 = vld [vmem:[#allocation5 + $0xbb8] sm:$0xff]
    %v584 = vld [vmem:[#allocation5 + $0xbc0] sm:$0xff]
    %v585 = vld [vmem:[#allocation5 + $0xbc8] sm:$0xff]
    %v586 = vld [vmem:[#allocation5 + $0xbd0] sm:$0xff]
    %v587 = vld [vmem:[#allocation5 + $0xbd8] sm:$0xff]
    %v588 = vld [vmem:[#allocation5 + $0xbe0] sm:$0xff]
    %v589 = vld [vmem:[#allocation5 + $0xbe8] sm:$0xff]
    %v590 = vld [vmem:[#allocation5 + $0xbf0] sm:$0xff]
    %v591 = vld [vmem:[#allocation5 + $0xbf8] sm:$0xff]
    %v592 = vld [vmem:[#allocation7] sm:$0xff]
    %v593 = vld [vmem:[#allocation7 + $0x8] sm:$0xff]
    %v594 = vld [vmem:[#allocation7 + $0x10] sm:$0xff]
    %v595 = vld [vmem:[#allocation7 + $0x18] sm:$0xff]
    %v596 = vld [vmem:[#allocation7 + $0x20] sm:$0xff]
    %v597 = vld [vmem:[#allocation7 + $0x28] sm:$0xff]
    %v598 = vld [vmem:[#allocation7 + $0x30] sm:$0xff]
    %v599 = vld [vmem:[#allocation7 + $0x38] sm:$0xff]
    %v600 = vld [vmem:[#allocation7 + $0x40] sm:$0xff]
    %v601 = vld [vmem:[#allocation7 + $0x48] sm:$0xff]
    %v602 = vld [vmem:[#allocation7 + $0x50] sm:$0xff]
    %v603 = vld [vmem:[#allocation7 + $0x58] sm:$0xff]
    %v604 = vld [vmem:[#allocation7 + $0x60] sm:$0xff]
    %v605 = vld [vmem:[#allocation7 + $0x68] sm:$0xff]
    %v606 = vld [vmem:[#allocation7 + $0x70] sm:$0xff]
    %v607 = vld [vmem:[#allocation7 + $0x78] sm:$0xff]
    %v608 = vld [vmem:[#allocation7 + $0x80] sm:$0xff]
    %v609 = vld [vmem:[#allocation7 + $0x88] sm:$0xff]
    %v610 = vld [vmem:[#allocation7 + $0x90] sm:$0xff]
    %v611 = vld [vmem:[#allocation7 + $0x98] sm:$0xff]
    %v612 = vld [vmem:[#allocation7 + $0xa0] sm:$0xff]
    %v613 = vld [vmem:[#allocation7 + $0xa8] sm:$0xff]
    %v614 = vld [vmem:[#allocation7 + $0xb0] sm:$0xff]
    %v615 = vld [vmem:[#allocation7 + $0xb8] sm:$0xff]
    %v616 = vld [vmem:[#allocation7 + $0xc0] sm:$0xff]
    %v617 = vld [vmem:[#allocation7 + $0xc8] sm:$0xff]
    %v618 = vld [vmem:[#allocation7 + $0xd0] sm:$0xff]
    %v619 = vld [vmem:[#allocation7 + $0xd8] sm:$0xff]
    %v620 = vld [vmem:[#allocation7 + $0xe0] sm:$0xff]
    %v621 = vld [vmem:[#allocation7 + $0xe8] sm:$0xff]
    %v622 = vld [vmem:[#allocation7 + $0xf0] sm:$0xff]
    %v623 = vld [vmem:[#allocation7 + $0xf8] sm:$0xff]
    %v624 = vld [vmem:[#allocation7 + $0x100] sm:$0xff]
    %v625 = vld [vmem:[#allocation7 + $0x108] sm:$0xff]
    %v626 = vld [vmem:[#allocation7 + $0x110] sm:$0xff]
    %v627 = vld [vmem:[#allocation7 + $0x118] sm:$0xff]
    %v628 = vld [vmem:[#allocation7 + $0x120] sm:$0xff]
    %v629 = vld [vmem:[#allocation7 + $0x128] sm:$0xff]
    %v630 = vld [vmem:[#allocation7 + $0x130] sm:$0xff]
    %v631 = vld [vmem:[#allocation7 + $0x138] sm:$0xff]
    %v632 = vld [vmem:[#allocation7 + $0x140] sm:$0xff]
    %v633 = vld [vmem:[#allocation7 + $0x148] sm:$0xff]
    %v634 = vld [vmem:[#allocation7 + $0x150] sm:$0xff]
    %v635 = vld [vmem:[#allocation7 + $0x158] sm:$0xff]
    %v636 = vld [vmem:[#allocation7 + $0x160] sm:$0xff]
    %v637 = vld [vmem:[#allocation7 + $0x168] sm:$0xff]
    %v638 = vld [vmem:[#allocation7 + $0x170] sm:$0xff]
    %v639 = vld [vmem:[#allocation7 + $0x178] sm:$0xff]
    %v640 = vld [vmem:[#allocation7 + $0x180] sm:$0xff]
    %v641 = vld [vmem:[#allocation7 + $0x188] sm:$0xff]
    %v642 = vld [vmem:[#allocation7 + $0x190] sm:$0xff]
    %v643 = vld [vmem:[#allocation7 + $0x198] sm:$0xff]
    %v644 = vld [vmem:[#allocation7 + $0x1a0] sm:$0xff]
    %v645 = vld [vmem:[#allocation7 + $0x1a8] sm:$0xff]
    %v646 = vld [vmem:[#allocation7 + $0x1b0] sm:$0xff]
    %v647 = vld [vmem:[#allocation7 + $0x1b8] sm:$0xff]
    %v648 = vld [vmem:[#allocation7 + $0x1c0] sm:$0xff]
    %v649 = vld [vmem:[#allocation7 + $0x1c8] sm:$0xff]
    %v650 = vld [vmem:[#allocation7 + $0x1d0] sm:$0xff]
    %v651 = vld [vmem:[#allocation7 + $0x1d8] sm:$0xff]
    %v652 = vld [vmem:[#allocation7 + $0x1e0] sm:$0xff]
    %v653 = vld [vmem:[#allocation7 + $0x1e8] sm:$0xff]
    %v654 = vld [vmem:[#allocation7 + $0x1f0] sm:$0xff]
    %v655 = vld [vmem:[#allocation7 + $0x1f8] sm:$0xff]
    %v656 = vld [vmem:[#allocation7 + $0x200] sm:$0xff]
    %v657 = vld [vmem:[#allocation7 + $0x208] sm:$0xff]
    %v658 = vld [vmem:[#allocation7 + $0x210] sm:$0xff]
    %v659 = vld [vmem:[#allocation7 + $0x218] sm:$0xff]
    %v660 = vld [vmem:[#allocation7 + $0x220] sm:$0xff]
    %v661 = vld [vmem:[#allocation7 + $0x228] sm:$0xff]
    %v662 = vld [vmem:[#allocation7 + $0x230] sm:$0xff]
    %v663 = vld [vmem:[#allocation7 + $0x238] sm:$0xff]
    %v664 = vld [vmem:[#allocation7 + $0x240] sm:$0xff]
    %v665 = vld [vmem:[#allocation7 + $0x248] sm:$0xff]
    %v666 = vld [vmem:[#allocation7 + $0x250] sm:$0xff]
    %v667 = vld [vmem:[#allocation7 + $0x258] sm:$0xff]
    %v668 = vld [vmem:[#allocation7 + $0x260] sm:$0xff]
    %v669 = vld [vmem:[#allocation7 + $0x268] sm:$0xff]
    %v670 = vld [vmem:[#allocation7 + $0x270] sm:$0xff]
    %v671 = vld [vmem:[#allocation7 + $0x278] sm:$0xff]
    %v672 = vld [vmem:[#allocation7 + $0x280] sm:$0xff]
    %v673 = vld [vmem:[#allocation7 + $0x288] sm:$0xff]
    %v674 = vld [vmem:[#allocation7 + $0x290] sm:$0xff]
    %v675 = vld [vmem:[#allocation7 + $0x298] sm:$0xff]
    %v676 = vld [vmem:[#allocation7 + $0x2a0] sm:$0xff]
    %v677 = vld [vmem:[#allocation7 + $0x2a8] sm:$0xff]
    %v678 = vld [vmem:[#allocation7 + $0x2b0] sm:$0xff]
    %v679 = vld [vmem:[#allocation7 + $0x2b8] sm:$0xff]
    %v680 = vld [vmem:[#allocation7 + $0x2c0] sm:$0xff]
    %v681 = vld [vmem:[#allocation7 + $0x2c8] sm:$0xff]
    %v682 = vld [vmem:[#allocation7 + $0x2d0] sm:$0xff]
    %v683 = vld [vmem:[#allocation7 + $0x2d8] sm:$0xff]
    %v684 = vld [vmem:[#allocation7 + $0x2e0] sm:$0xff]
    %v685 = vld [vmem:[#allocation7 + $0x2e8] sm:$0xff]
    %v686 = vld [vmem:[#allocation7 + $0x2f0] sm:$0xff]
    %v687 = vld [vmem:[#allocation7 + $0x2f8] sm:$0xff]
    %v688 = vld [vmem:[#allocation7 + $0x300] sm:$0xff]
    %v689 = vld [vmem:[#allocation7 + $0x308] sm:$0xff]
    %v690 = vld [vmem:[#allocation7 + $0x310] sm:$0xff]
    %v691 = vld [vmem:[#allocation7 + $0x318] sm:$0xff]
    %v692 = vld [vmem:[#allocation7 + $0x320] sm:$0xff]
    %v693 = vld [vmem:[#allocation7 + $0x328] sm:$0xff]
    %v694 = vld [vmem:[#allocation7 + $0x330] sm:$0xff]
    %v695 = vld [vmem:[#allocation7 + $0x338] sm:$0xff]
    %v696 = vld [vmem:[#allocation7 + $0x340] sm:$0xff]
    %v697 = vld [vmem:[#allocation7 + $0x348] sm:$0xff]
    %v698 = vld [vmem:[#allocation7 + $0x350] sm:$0xff]
    %v699 = vld [vmem:[#allocation7 + $0x358] sm:$0xff]
    %v700 = vld [vmem:[#allocation7 + $0x360] sm:$0xff]
    %v701 = vld [vmem:[#allocation7 + $0x368] sm:$0xff]
    %v702 = vld [vmem:[#allocation7 + $0x370] sm:$0xff]
    %v703 = vld [vmem:[#allocation7 + $0x378] sm:$0xff]
    %v704 = vld [vmem:[#allocation7 + $0x380] sm:$0xff]
    %v705 = vld [vmem:[#allocation7 + $0x388] sm:$0xff]
    %v706 = vld [vmem:[#allocation7 + $0x390] sm:$0xff]
    %v707 = vld [vmem:[#allocation7 + $0x398] sm:$0xff]
    %v708 = vld [vmem:[#allocation7 + $0x3a0] sm:$0xff]
    %v709 = vld [vmem:[#allocation7 + $0x3a8] sm:$0xff]
    %v710 = vld [vmem:[#allocation7 + $0x3b0] sm:$0xff]
    %v711 = vld [vmem:[#allocation7 + $0x3b8] sm:$0xff]
    %v712 = vld [vmem:[#allocation7 + $0x3c0] sm:$0xff]
    %v713 = vld [vmem:[#allocation7 + $0x3c8] sm:$0xff]
    %v714 = vld [vmem:[#allocation7 + $0x3d0] sm:$0xff]
    %v715 = vld [vmem:[#allocation7 + $0x3d8] sm:$0xff]
    %v716 = vld [vmem:[#allocation7 + $0x3e0] sm:$0xff]
    %v717 = vld [vmem:[#allocation7 + $0x3e8] sm:$0xff]
    %v718 = vld [vmem:[#allocation7 + $0x3f0] sm:$0xff]
    %v719 = vld [vmem:[#allocation7 + $0x3f8] sm:$0xff]
    %v720 = vld [vmem:[#allocation8] sm:$0xff]
    %v721 = vld [vmem:[#allocation8 + $0x8] sm:$0xff]
    %v722 = vld [vmem:[#allocation8 + $0x10] sm:$0xff]
    %v723 = vld [vmem:[#allocation8 + $0x18] sm:$0xff]
    %v724 = vld [vmem:[#allocation8 + $0x20] sm:$0xff]
    %v725 = vld [vmem:[#allocation8 + $0x28] sm:$0xff]
    %v726 = vld [vmem:[#allocation8 + $0x30] sm:$0xff]
    %v727 = vld [vmem:[#allocation8 + $0x38] sm:$0xff]
    %v728 = vld [vmem:[#allocation8 + $0x40] sm:$0xff]
    %v729 = vld [vmem:[#allocation8 + $0x48] sm:$0xff]
    %v730 = vld [vmem:[#allocation8 + $0x50] sm:$0xff]
    %v731 = vld [vmem:[#allocation8 + $0x58] sm:$0xff]
    %v732 = vld [vmem:[#allocation8 + $0x60] sm:$0xff]
    %v733 = vld [vmem:[#allocation8 + $0x68] sm:$0xff]
    %v734 = vld [vmem:[#allocation8 + $0x70] sm:$0xff]
    %v735 = vld [vmem:[#allocation8 + $0x78] sm:$0xff]
    %v736 = vld [vmem:[#allocation8 + $0x80] sm:$0xff]
    %v737 = vld [vmem:[#allocation8 + $0x88] sm:$0xff]
    %v738 = vld [vmem:[#allocation8 + $0x90] sm:$0xff]
    %v739 = vld [vmem:[#allocation8 + $0x98] sm:$0xff]
    %v740 = vld [vmem:[#allocation8 + $0xa0] sm:$0xff]
    %v741 = vld [vmem:[#allocation8 + $0xa8] sm:$0xff]
    %v742 = vld [vmem:[#allocation8 + $0xb0] sm:$0xff]
    %v743 = vld [vmem:[#allocation8 + $0xb8] sm:$0xff]
    %v744 = vld [vmem:[#allocation8 + $0xc0] sm:$0xff]
    %v745 = vld [vmem:[#allocation8 + $0xc8] sm:$0xff]
    %v746 = vld [vmem:[#allocation8 + $0xd0] sm:$0xff]
    %v747 = vld [vmem:[#allocation8 + $0xd8] sm:$0xff]
    %v748 = vld [vmem:[#allocation8 + $0xe0] sm:$0xff]
    %v749 = vld [vmem:[#allocation8 + $0xe8] sm:$0xff]
    %v750 = vld [vmem:[#allocation8 + $0xf0] sm:$0xff]
    %v751 = vld [vmem:[#allocation8 + $0xf8] sm:$0xff]
    %v752 = vld [vmem:[#allocation8 + $0x100] sm:$0xff]
    %v753 = vld [vmem:[#allocation8 + $0x108] sm:$0xff]
    %v754 = vld [vmem:[#allocation8 + $0x110] sm:$0xff]
    %v755 = vld [vmem:[#allocation8 + $0x118] sm:$0xff]
    %v756 = vld [vmem:[#allocation8 + $0x120] sm:$0xff]
    %v757 = vld [vmem:[#allocation8 + $0x128] sm:$0xff]
    %v758 = vld [vmem:[#allocation8 + $0x130] sm:$0xff]
    %v759 = vld [vmem:[#allocation8 + $0x138] sm:$0xff]
    %v760 = vld [vmem:[#allocation8 + $0x140] sm:$0xff]
    %v761 = vld [vmem:[#allocation8 + $0x148] sm:$0xff]
    %v762 = vld [vmem:[#allocation8 + $0x150] sm:$0xff]
    %v763 = vld [vmem:[#allocation8 + $0x158] sm:$0xff]
    %v764 = vld [vmem:[#allocation8 + $0x160] sm:$0xff]
    %v765 = vld [vmem:[#allocation8 + $0x168] sm:$0xff]
    %v766 = vld [vmem:[#allocation8 + $0x170] sm:$0xff]
    %v767 = vld [vmem:[#allocation8 + $0x178] sm:$0xff]
    %v768 = vld [vmem:[#allocation8 + $0x180] sm:$0xff]
    %v769 = vld [vmem:[#allocation8 + $0x188] sm:$0xff]
    %v770 = vld [vmem:[#allocation8 + $0x190] sm:$0xff]
    %v771 = vld [vmem:[#allocation8 + $0x198] sm:$0xff]
    %v772 = vld [vmem:[#allocation8 + $0x1a0] sm:$0xff]
    %v773 = vld [vmem:[#allocation8 + $0x1a8] sm:$0xff]
    %v774 = vld [vmem:[#allocation8 + $0x1b0] sm:$0xff]
    %v775 = vld [vmem:[#allocation8 + $0x1b8] sm:$0xff]
    %v776 = vld [vmem:[#allocation8 + $0x1c0] sm:$0xff]
    %v777 = vld [vmem:[#allocation8 + $0x1c8] sm:$0xff]
    %v778 = vld [vmem:[#allocation8 + $0x1d0] sm:$0xff]
    %v779 = vld [vmem:[#allocation8 + $0x1d8] sm:$0xff]
    %v780 = vld [vmem:[#allocation8 + $0x1e0] sm:$0xff]
    %v781 = vld [vmem:[#allocation8 + $0x1e8] sm:$0xff]
    %v782 = vld [vmem:[#allocation8 + $0x1f0] sm:$0xff]
    %v783 = vld [vmem:[#allocation8 + $0x1f8] sm:$0xff]
    %v784 = vld [vmem:[#allocation8 + $0x200] sm:$0xff]
    %v785 = vld [vmem:[#allocation8 + $0x208] sm:$0xff]
    %v786 = vld [vmem:[#allocation8 + $0x210] sm:$0xff]
    %v787 = vld [vmem:[#allocation8 + $0x218] sm:$0xff]
    %v788 = vld [vmem:[#allocation8 + $0x220] sm:$0xff]
    %v789 = vld [vmem:[#allocation8 + $0x228] sm:$0xff]
    %v790 = vld [vmem:[#allocation8 + $0x230] sm:$0xff]
    %v791 = vld [vmem:[#allocation8 + $0x238] sm:$0xff]
    %v792 = vld [vmem:[#allocation8 + $0x240] sm:$0xff]
    %v793 = vld [vmem:[#allocation8 + $0x248] sm:$0xff]
    %v794 = vld [vmem:[#allocation8 + $0x250] sm:$0xff]
    %v795 = vld [vmem:[#allocation8 + $0x258] sm:$0xff]
    %v796 = vld [vmem:[#allocation8 + $0x260] sm:$0xff]
    %v797 = vld [vmem:[#allocation8 + $0x268] sm:$0xff]
    %v798 = vld [vmem:[#allocation8 + $0x270] sm:$0xff]
    %v799 = vld [vmem:[#allocation8 + $0x278] sm:$0xff]
    %v800 = vld [vmem:[#allocation8 + $0x280] sm:$0xff]
    %v801 = vld [vmem:[#allocation8 + $0x288] sm:$0xff]
    %v802 = vld [vmem:[#allocation8 + $0x290] sm:$0xff]
    %v803 = vld [vmem:[#allocation8 + $0x298] sm:$0xff]
    %v804 = vld [vmem:[#allocation8 + $0x2a0] sm:$0xff]
    %v805 = vld [vmem:[#allocation8 + $0x2a8] sm:$0xff]
    %v806 = vld [vmem:[#allocation8 + $0x2b0] sm:$0xff]
    %v807 = vld [vmem:[#allocation8 + $0x2b8] sm:$0xff]
    %v808 = vld [vmem:[#allocation8 + $0x2c0] sm:$0xff]
    %v809 = vld [vmem:[#allocation8 + $0x2c8] sm:$0xff]
    %v810 = vld [vmem:[#allocation8 + $0x2d0] sm:$0xff]
    %v811 = vld [vmem:[#allocation8 + $0x2d8] sm:$0xff]
    %v812 = vld [vmem:[#allocation8 + $0x2e0] sm:$0xff]
    %v813 = vld [vmem:[#allocation8 + $0x2e8] sm:$0xff]
    %v814 = vld [vmem:[#allocation8 + $0x2f0] sm:$0xff]
    %v815 = vld [vmem:[#allocation8 + $0x2f8] sm:$0xff]
    %v816 = vld [vmem:[#allocation8 + $0x300] sm:$0xff]
    %v817 = vld [vmem:[#allocation8 + $0x308] sm:$0xff]
    %v818 = vld [vmem:[#allocation8 + $0x310] sm:$0xff]
    %v819 = vld [vmem:[#allocation8 + $0x318] sm:$0xff]
    %v820 = vld [vmem:[#allocation8 + $0x320] sm:$0xff]
    %v821 = vld [vmem:[#allocation8 + $0x328] sm:$0xff]
    %v822 = vld [vmem:[#allocation8 + $0x330] sm:$0xff]
    %v823 = vld [vmem:[#allocation8 + $0x338] sm:$0xff]
    %v824 = vld [vmem:[#allocation8 + $0x340] sm:$0xff]
    %v825 = vld [vmem:[#allocation8 + $0x348] sm:$0xff]
    %v826 = vld [vmem:[#allocation8 + $0x350] sm:$0xff]
    %v827 = vld [vmem:[#allocation8 + $0x358] sm:$0xff]
    %v828 = vld [vmem:[#allocation8 + $0x360] sm:$0xff]
    %v829 = vld [vmem:[#allocation8 + $0x368] sm:$0xff]
    %v830 = vld [vmem:[#allocation8 + $0x370] sm:$0xff]
    %v831 = vld [vmem:[#allocation8 + $0x378] sm:$0xff]
    %v832 = vld [vmem:[#allocation8 + $0x380] sm:$0xff]
    %v833 = vld [vmem:[#allocation8 + $0x388] sm:$0xff]
    %v834 = vld [vmem:[#allocation8 + $0x390] sm:$0xff]
    %v835 = vld [vmem:[#allocation8 + $0x398] sm:$0xff]
    %v836 = vld [vmem:[#allocation8 + $0x3a0] sm:$0xff]
    %v837 = vld [vmem:[#allocation8 + $0x3a8] sm:$0xff]
    %v838 = vld [vmem:[#allocation8 + $0x3b0] sm:$0xff]
    %v839 = vld [vmem:[#allocation8 + $0x3b8] sm:$0xff]
    %v840 = vld [vmem:[#allocation8 + $0x3c0] sm:$0xff]
    %v841 = vld [vmem:[#allocation8 + $0x3c8] sm:$0xff]
    %v842 = vld [vmem:[#allocation8 + $0x3d0] sm:$0xff]
    %v843 = vld [vmem:[#allocation8 + $0x3d8] sm:$0xff]
    %v844 = vld [vmem:[#allocation8 + $0x3e0] sm:$0xff]
    %v845 = vld [vmem:[#allocation8 + $0x3e8] sm:$0xff]
    %v846 = vld [vmem:[#allocation8 + $0x3f0] sm:$0xff]
    %v847 = vld [vmem:[#allocation8 + $0x3f8] sm:$0xff]
    %v848 = vld [vmem:[#allocation8 + $0x400] sm:$0xff]
    %v849 = vld [vmem:[#allocation8 + $0x408] sm:$0xff]
    %v850 = vld [vmem:[#allocation8 + $0x410] sm:$0xff]
    %v851 = vld [vmem:[#allocation8 + $0x418] sm:$0xff]
    %v852 = vld [vmem:[#allocation8 + $0x420] sm:$0xff]
    %v853 = vld [vmem:[#allocation8 + $0x428] sm:$0xff]
    %v854 = vld [vmem:[#allocation8 + $0x430] sm:$0xff]
    %v855 = vld [vmem:[#allocation8 + $0x438] sm:$0xff]
    %v856 = vld [vmem:[#allocation8 + $0x440] sm:$0xff]
    %v857 = vld [vmem:[#allocation8 + $0x448] sm:$0xff]
    %v858 = vld [vmem:[#allocation8 + $0x450] sm:$0xff]
    %v859 = vld [vmem:[#allocation8 + $0x458] sm:$0xff]
    %v860 = vld [vmem:[#allocation8 + $0x460] sm:$0xff]
    %v861 = vld [vmem:[#allocation8 + $0x468] sm:$0xff]
    %v862 = vld [vmem:[#allocation8 + $0x470] sm:$0xff]
    %v863 = vld [vmem:[#allocation8 + $0x478] sm:$0xff]
    %v864 = vld [vmem:[#allocation8 + $0x480] sm:$0xff]
    %v865 = vld [vmem:[#allocation8 + $0x488] sm:$0xff]
    %v866 = vld [vmem:[#allocation8 + $0x490] sm:$0xff]
    %v867 = vld [vmem:[#allocation8 + $0x498] sm:$0xff]
    %v868 = vld [vmem:[#allocation8 + $0x4a0] sm:$0xff]
    %v869 = vld [vmem:[#allocation8 + $0x4a8] sm:$0xff]
    %v870 = vld [vmem:[#allocation8 + $0x4b0] sm:$0xff]
    %v871 = vld [vmem:[#allocation8 + $0x4b8] sm:$0xff]
    %v872 = vld [vmem:[#allocation8 + $0x4c0] sm:$0xff]
    %v873 = vld [vmem:[#allocation8 + $0x4c8] sm:$0xff]
    %v874 = vld [vmem:[#allocation8 + $0x4d0] sm:$0xff]
    %v875 = vld [vmem:[#allocation8 + $0x4d8] sm:$0xff]
    %v876 = vld [vmem:[#allocation8 + $0x4e0] sm:$0xff]
    %v877 = vld [vmem:[#allocation8 + $0x4e8] sm:$0xff]
    %v878 = vld [vmem:[#allocation8 + $0x4f0] sm:$0xff]
    %v879 = vld [vmem:[#allocation8 + $0x4f8] sm:$0xff]
    %v880 = vld [vmem:[#allocation8 + $0x500] sm:$0xff]
    %v881 = vld [vmem:[#allocation8 + $0x508] sm:$0xff]
    %v882 = vld [vmem:[#allocation8 + $0x510] sm:$0xff]
    %v883 = vld [vmem:[#allocation8 + $0x518] sm:$0xff]
    %v884 = vld [vmem:[#allocation8 + $0x520] sm:$0xff]
    %v885 = vld [vmem:[#allocation8 + $0x528] sm:$0xff]
    %v886 = vld [vmem:[#allocation8 + $0x530] sm:$0xff]
    %v887 = vld [vmem:[#allocation8 + $0x538] sm:$0xff]
    %v888 = vld [vmem:[#allocation8 + $0x540] sm:$0xff]
    %v889 = vld [vmem:[#allocation8 + $0x548] sm:$0xff]
    %v890 = vld [vmem:[#allocation8 + $0x550] sm:$0xff]
    %v891 = vld [vmem:[#allocation8 + $0x558] sm:$0xff]
    %v892 = vld [vmem:[#allocation8 + $0x560] sm:$0xff]
    %v893 = vld [vmem:[#allocation8 + $0x568] sm:$0xff]
    %v894 = vld [vmem:[#allocation8 + $0x570] sm:$0xff]
    %v895 = vld [vmem:[#allocation8 + $0x578] sm:$0xff]
    %v896 = vld [vmem:[#allocation8 + $0x580] sm:$0xff]
    %v897 = vld [vmem:[#allocation8 + $0x588] sm:$0xff]
    %v898 = vld [vmem:[#allocation8 + $0x590] sm:$0xff]
    %v899 = vld [vmem:[#allocation8 + $0x598] sm:$0xff]
    %v900 = vld [vmem:[#allocation8 + $0x5a0] sm:$0xff]
    %v901 = vld [vmem:[#allocation8 + $0x5a8] sm:$0xff]
    %v902 = vld [vmem:[#allocation8 + $0x5b0] sm:$0xff]
    %v903 = vld [vmem:[#allocation8 + $0x5b8] sm:$0xff]
    %v904 = vld [vmem:[#allocation8 + $0x5c0] sm:$0xff]
    %v905 = vld [vmem:[#allocation8 + $0x5c8] sm:$0xff]
    %v906 = vld [vmem:[#allocation8 + $0x5d0] sm:$0xff]
    %v907 = vld [vmem:[#allocation8 + $0x5d8] sm:$0xff]
    %v908 = vld [vmem:[#allocation8 + $0x5e0] sm:$0xff]
    %v909 = vld [vmem:[#allocation8 + $0x5e8] sm:$0xff]
    %v910 = vld [vmem:[#allocation8 + $0x5f0] sm:$0xff]
    %v911 = vld [vmem:[#allocation8 + $0x5f8] sm:$0xff]
    %v912 = vld [vmem:[#allocation8 + $0x600] sm:$0xff]
    %v913 = vld [vmem:[#allocation8 + $0x608] sm:$0xff]
    %v914 = vld [vmem:[#allocation8 + $0x610] sm:$0xff]
    %v915 = vld [vmem:[#allocation8 + $0x618] sm:$0xff]
    %v916 = vld [vmem:[#allocation8 + $0x620] sm:$0xff]
    %v917 = vld [vmem:[#allocation8 + $0x628] sm:$0xff]
    %v918 = vld [vmem:[#allocation8 + $0x630] sm:$0xff]
    %v919 = vld [vmem:[#allocation8 + $0x638] sm:$0xff]
    %v920 = vld [vmem:[#allocation8 + $0x640] sm:$0xff]
    %v921 = vld [vmem:[#allocation8 + $0x648] sm:$0xff]
    %v922 = vld [vmem:[#allocation8 + $0x650] sm:$0xff]
    %v923 = vld [vmem:[#allocation8 + $0x658] sm:$0xff]
    %v924 = vld [vmem:[#allocation8 + $0x660] sm:$0xff]
    %v925 = vld [vmem:[#allocation8 + $0x668] sm:$0xff]
    %v926 = vld [vmem:[#allocation8 + $0x670] sm:$0xff]
    %v927 = vld [vmem:[#allocation8 + $0x678] sm:$0xff]
    %v928 = vld [vmem:[#allocation8 + $0x680] sm:$0xff]
    %v929 = vld [vmem:[#allocation8 + $0x688] sm:$0xff]
    %v930 = vld [vmem:[#allocation8 + $0x690] sm:$0xff]
    %v931 = vld [vmem:[#allocation8 + $0x698] sm:$0xff]
    %v932 = vld [vmem:[#allocation8 + $0x6a0] sm:$0xff]
    %v933 = vld [vmem:[#allocation8 + $0x6a8] sm:$0xff]
    %v934 = vld [vmem:[#allocation8 + $0x6b0] sm:$0xff]
    %v935 = vld [vmem:[#allocation8 + $0x6b8] sm:$0xff]
    %v936 = vld [vmem:[#allocation8 + $0x6c0] sm:$0xff]
    %v937 = vld [vmem:[#allocation8 + $0x6c8] sm:$0xff]
    %v938 = vld [vmem:[#allocation8 + $0x6d0] sm:$0xff]
    %v939 = vld [vmem:[#allocation8 + $0x6d8] sm:$0xff]
    %v940 = vld [vmem:[#allocation8 + $0x6e0] sm:$0xff]
    %v941 = vld [vmem:[#allocation8 + $0x6e8] sm:$0xff]
    %v942 = vld [vmem:[#allocation8 + $0x6f0] sm:$0xff]
    %v943 = vld [vmem:[#allocation8 + $0x6f8] sm:$0xff]
    %v944 = vld [vmem:[#allocation8 + $0x700] sm:$0xff]
    %v945 = vld [vmem:[#allocation8 + $0x708] sm:$0xff]
    %v946 = vld [vmem:[#allocation8 + $0x710] sm:$0xff]
    %v947 = vld [vmem:[#allocation8 + $0x718] sm:$0xff]
    %v948 = vld [vmem:[#allocation8 + $0x720] sm:$0xff]
    %v949 = vld [vmem:[#allocation8 + $0x728] sm:$0xff]
    %v950 = vld [vmem:[#allocation8 + $0x730] sm:$0xff]
    %v951 = vld [vmem:[#allocation8 + $0x738] sm:$0xff]
    %v952 = vld [vmem:[#allocation8 + $0x740] sm:$0xff]
    %v953 = vld [vmem:[#allocation8 + $0x748] sm:$0xff]
    %v954 = vld [vmem:[#allocation8 + $0x750] sm:$0xff]
    %v955 = vld [vmem:[#allocation8 + $0x758] sm:$0xff]
    %v956 = vld [vmem:[#allocation8 + $0x760] sm:$0xff]
    %v957 = vld [vmem:[#allocation8 + $0x768] sm:$0xff]
    %v958 = vld [vmem:[#allocation8 + $0x770] sm:$0xff]
    %v959 = vld [vmem:[#allocation8 + $0x778] sm:$0xff]
    %v960 = vld [vmem:[#allocation8 + $0x780] sm:$0xff]
    %v961 = vld [vmem:[#allocation8 + $0x788] sm:$0xff]
    %v962 = vld [vmem:[#allocation8 + $0x790] sm:$0xff]
    %v963 = vld [vmem:[#allocation8 + $0x798] sm:$0xff]
    %v964 = vld [vmem:[#allocation8 + $0x7a0] sm:$0xff]
    %v965 = vld [vmem:[#allocation8 + $0x7a8] sm:$0xff]
    %v966 = vld [vmem:[#allocation8 + $0x7b0] sm:$0xff]
    %v967 = vld [vmem:[#allocation8 + $0x7b8] sm:$0xff]
    %v968 = vld [vmem:[#allocation8 + $0x7c0] sm:$0xff]
    %v969 = vld [vmem:[#allocation8 + $0x7c8] sm:$0xff]
    %v970 = vld [vmem:[#allocation8 + $0x7d0] sm:$0xff]
    %v971 = vld [vmem:[#allocation8 + $0x7d8] sm:$0xff]
    %v972 = vld [vmem:[#allocation8 + $0x7e0] sm:$0xff]
    %v973 = vld [vmem:[#allocation8 + $0x7e8] sm:$0xff]
    %v974 = vld [vmem:[#allocation8 + $0x7f0] sm:$0xff]
    %v975 = vld [vmem:[#allocation8 + $0x7f8] sm:$0xff]
    %v976 = vld [vmem:[#allocation8 + $0x800] sm:$0xff]
    %v977 = vld [vmem:[#allocation8 + $0x808] sm:$0xff]
    %v978 = vld [vmem:[#allocation8 + $0x810] sm:$0xff]
    %v979 = vld [vmem:[#allocation8 + $0x818] sm:$0xff]
    %v980 = vld [vmem:[#allocation8 + $0x820] sm:$0xff]
    %v981 = vld [vmem:[#allocation8 + $0x828] sm:$0xff]
    %v982 = vld [vmem:[#allocation8 + $0x830] sm:$0xff]
    %v983 = vld [vmem:[#allocation8 + $0x838] sm:$0xff]
    %v984 = vld [vmem:[#allocation8 + $0x840] sm:$0xff]
    %v985 = vld [vmem:[#allocation8 + $0x848] sm:$0xff]
    %v986 = vld [vmem:[#allocation8 + $0x850] sm:$0xff]
    %v987 = vld [vmem:[#allocation8 + $0x858] sm:$0xff]
    %v988 = vld [vmem:[#allocation8 + $0x860] sm:$0xff]
    %v989 = vld [vmem:[#allocation8 + $0x868] sm:$0xff]
    %v990 = vld [vmem:[#allocation8 + $0x870] sm:$0xff]
    %v991 = vld [vmem:[#allocation8 + $0x878] sm:$0xff]
    %v992 = vld [vmem:[#allocation8 + $0x880] sm:$0xff]
    %v993 = vld [vmem:[#allocation8 + $0x888] sm:$0xff]
    %v994 = vld [vmem:[#allocation8 + $0x890] sm:$0xff]
    %v995 = vld [vmem:[#allocation8 + $0x898] sm:$0xff]
    %v996 = vld [vmem:[#allocation8 + $0x8a0] sm:$0xff]
    %v997 = vld [vmem:[#allocation8 + $0x8a8] sm:$0xff]
    %v998 = vld [vmem:[#allocation8 + $0x8b0] sm:$0xff]
    %v999 = vld [vmem:[#allocation8 + $0x8b8] sm:$0xff]
    %v1000 = vld [vmem:[#allocation8 + $0x8c0] sm:$0xff]
    %v1001 = vld [vmem:[#allocation8 + $0x8c8] sm:$0xff]
    %v1002 = vld [vmem:[#allocation8 + $0x8d0] sm:$0xff]
    %v1003 = vld [vmem:[#allocation8 + $0x8d8] sm:$0xff]
    %v1004 = vld [vmem:[#allocation8 + $0x8e0] sm:$0xff]
    %v1005 = vld [vmem:[#allocation8 + $0x8e8] sm:$0xff]
    %v1006 = vld [vmem:[#allocation8 + $0x8f0] sm:$0xff]
    %v1007 = vld [vmem:[#allocation8 + $0x8f8] sm:$0xff]
    %v1008 = vld [vmem:[#allocation8 + $0x900] sm:$0xff]
    %v1009 = vld [vmem:[#allocation8 + $0x908] sm:$0xff]
    %v1010 = vld [vmem:[#allocation8 + $0x910] sm:$0xff]
    %v1011 = vld [vmem:[#allocation8 + $0x918] sm:$0xff]
    %v1012 = vld [vmem:[#allocation8 + $0x920] sm:$0xff]
    %v1013 = vld [vmem:[#allocation8 + $0x928] sm:$0xff]
    %v1014 = vld [vmem:[#allocation8 + $0x930] sm:$0xff]
    %v1015 = vld [vmem:[#allocation8 + $0x938] sm:$0xff]
    %v1016 = vld [vmem:[#allocation8 + $0x940] sm:$0xff]
    %v1017 = vld [vmem:[#allocation8 + $0x948] sm:$0xff]
    %v1018 = vld [vmem:[#allocation8 + $0x950] sm:$0xff]
    %v1019 = vld [vmem:[#allocation8 + $0x958] sm:$0xff]
    %v1020 = vld [vmem:[#allocation8 + $0x960] sm:$0xff]
    %v1021 = vld [vmem:[#allocation8 + $0x968] sm:$0xff]
    %v1022 = vld [vmem:[#allocation8 + $0x970] sm:$0xff]
    %v1023 = vld [vmem:[#allocation8 + $0x978] sm:$0xff]
    %v1024 = vld [vmem:[#allocation8 + $0x980] sm:$0xff]
    %v1025 = vld [vmem:[#allocation8 + $0x988] sm:$0xff]
    %v1026 = vld [vmem:[#allocation8 + $0x990] sm:$0xff]
    %v1027 = vld [vmem:[#allocation8 + $0x998] sm:$0xff]
    %v1028 = vld [vmem:[#allocation8 + $0x9a0] sm:$0xff]
    %v1029 = vld [vmem:[#allocation8 + $0x9a8] sm:$0xff]
    %v1030 = vld [vmem:[#allocation8 + $0x9b0] sm:$0xff]
    %v1031 = vld [vmem:[#allocation8 + $0x9b8] sm:$0xff]
    %v1032 = vld [vmem:[#allocation8 + $0x9c0] sm:$0xff]
    %v1033 = vld [vmem:[#allocation8 + $0x9c8] sm:$0xff]
    %v1034 = vld [vmem:[#allocation8 + $0x9d0] sm:$0xff]
    %v1035 = vld [vmem:[#allocation8 + $0x9d8] sm:$0xff]
    %v1036 = vld [vmem:[#allocation8 + $0x9e0] sm:$0xff]
    %v1037 = vld [vmem:[#allocation8 + $0x9e8] sm:$0xff]
    %v1038 = vld [vmem:[#allocation8 + $0x9f0] sm:$0xff]
    %v1039 = vld [vmem:[#allocation8 + $0x9f8] sm:$0xff]
    %v1040 = vld [vmem:[#allocation8 + $0xa00] sm:$0xff]
    %v1041 = vld [vmem:[#allocation8 + $0xa08] sm:$0xff]
    %v1042 = vld [vmem:[#allocation8 + $0xa10] sm:$0xff]
    %v1043 = vld [vmem:[#allocation8 + $0xa18] sm:$0xff]
    %v1044 = vld [vmem:[#allocation8 + $0xa20] sm:$0xff]
    %v1045 = vld [vmem:[#allocation8 + $0xa28] sm:$0xff]
    %v1046 = vld [vmem:[#allocation8 + $0xa30] sm:$0xff]
    %v1047 = vld [vmem:[#allocation8 + $0xa38] sm:$0xff]
    %v1048 = vld [vmem:[#allocation8 + $0xa40] sm:$0xff]
    %v1049 = vld [vmem:[#allocation8 + $0xa48] sm:$0xff]
    %v1050 = vld [vmem:[#allocation8 + $0xa50] sm:$0xff]
    %v1051 = vld [vmem:[#allocation8 + $0xa58] sm:$0xff]
    %v1052 = vld [vmem:[#allocation8 + $0xa60] sm:$0xff]
    %v1053 = vld [vmem:[#allocation8 + $0xa68] sm:$0xff]
    %v1054 = vld [vmem:[#allocation8 + $0xa70] sm:$0xff]
    %v1055 = vld [vmem:[#allocation8 + $0xa78] sm:$0xff]
    %v1056 = vld [vmem:[#allocation8 + $0xa80] sm:$0xff]
    %v1057 = vld [vmem:[#allocation8 + $0xa88] sm:$0xff]
    %v1058 = vld [vmem:[#allocation8 + $0xa90] sm:$0xff]
    %v1059 = vld [vmem:[#allocation8 + $0xa98] sm:$0xff]
    %v1060 = vld [vmem:[#allocation8 + $0xaa0] sm:$0xff]
    %v1061 = vld [vmem:[#allocation8 + $0xaa8] sm:$0xff]
    %v1062 = vld [vmem:[#allocation8 + $0xab0] sm:$0xff]
    %v1063 = vld [vmem:[#allocation8 + $0xab8] sm:$0xff]
    %v1064 = vld [vmem:[#allocation8 + $0xac0] sm:$0xff]
    %v1065 = vld [vmem:[#allocation8 + $0xac8] sm:$0xff]
    %v1066 = vld [vmem:[#allocation8 + $0xad0] sm:$0xff]
    %v1067 = vld [vmem:[#allocation8 + $0xad8] sm:$0xff]
    %v1068 = vld [vmem:[#allocation8 + $0xae0] sm:$0xff]
    %v1069 = vld [vmem:[#allocation8 + $0xae8] sm:$0xff]
    %v1070 = vld [vmem:[#allocation8 + $0xaf0] sm:$0xff]
    %v1071 = vld [vmem:[#allocation8 + $0xaf8] sm:$0xff]
    %v1072 = vld [vmem:[#allocation8 + $0xb00] sm:$0xff]
    %v1073 = vld [vmem:[#allocation8 + $0xb08] sm:$0xff]
    %v1074 = vld [vmem:[#allocation8 + $0xb10] sm:$0xff]
    %v1075 = vld [vmem:[#allocation8 + $0xb18] sm:$0xff]
    %v1076 = vld [vmem:[#allocation8 + $0xb20] sm:$0xff]
    %v1077 = vld [vmem:[#allocation8 + $0xb28] sm:$0xff]
    %v1078 = vld [vmem:[#allocation8 + $0xb30] sm:$0xff]
    %v1079 = vld [vmem:[#allocation8 + $0xb38] sm:$0xff]
    %v1080 = vld [vmem:[#allocation8 + $0xb40] sm:$0xff]
    %v1081 = vld [vmem:[#allocation8 + $0xb48] sm:$0xff]
    %v1082 = vld [vmem:[#allocation8 + $0xb50] sm:$0xff]
    %v1083 = vld [vmem:[#allocation8 + $0xb58] sm:$0xff]
    %v1084 = vld [vmem:[#allocation8 + $0xb60] sm:$0xff]
    %v1085 = vld [vmem:[#allocation8 + $0xb68] sm:$0xff]
    %v1086 = vld [vmem:[#allocation8 + $0xb70] sm:$0xff]
    %v1087 = vld [vmem:[#allocation8 + $0xb78] sm:$0xff]
    %v1088 = vld [vmem:[#allocation8 + $0xb80] sm:$0xff]
    %v1089 = vld [vmem:[#allocation8 + $0xb88] sm:$0xff]
    %v1090 = vld [vmem:[#allocation8 + $0xb90] sm:$0xff]
    %v1091 = vld [vmem:[#allocation8 + $0xb98] sm:$0xff]
    %v1092 = vld [vmem:[#allocation8 + $0xba0] sm:$0xff]
    %v1093 = vld [vmem:[#allocation8 + $0xba8] sm:$0xff]
    %v1094 = vld [vmem:[#allocation8 + $0xbb0] sm:$0xff]
    %v1095 = vld [vmem:[#allocation8 + $0xbb8] sm:$0xff]
    %v1096 = vld [vmem:[#allocation8 + $0xbc0] sm:$0xff]
    %v1097 = vld [vmem:[#allocation8 + $0xbc8] sm:$0xff]
    %v1098 = vld [vmem:[#allocation8 + $0xbd0] sm:$0xff]
    %v1099 = vld [vmem:[#allocation8 + $0xbd8] sm:$0xff]
    %v1100 = vld [vmem:[#allocation8 + $0xbe0] sm:$0xff]
    %v1101 = vld [vmem:[#allocation8 + $0xbe8] sm:$0xff]
    %v1102 = vld [vmem:[#allocation8 + $0xbf0] sm:$0xff]
    %v1103 = vld [vmem:[#allocation8 + $0xbf8] sm:$0xff]
    %v1104 = vld [vmem:[#allocation8 + $0xc00] sm:$0xff]
    %v1105 = vld [vmem:[#allocation8 + $0xc08] sm:$0xff]
    %v1106 = vld [vmem:[#allocation8 + $0xc10] sm:$0xff]
    %v1107 = vld [vmem:[#allocation8 + $0xc18] sm:$0xff]
    %v1108 = vld [vmem:[#allocation8 + $0xc20] sm:$0xff]
    %v1109 = vld [vmem:[#allocation8 + $0xc28] sm:$0xff]
    %v1110 = vld [vmem:[#allocation8 + $0xc30] sm:$0xff]
    %v1111 = vld [vmem:[#allocation8 + $0xc38] sm:$0xff]
    %v1112 = vld [vmem:[#allocation8 + $0xc40] sm:$0xff]
    %v1113 = vld [vmem:[#allocation8 + $0xc48] sm:$0xff]
    %v1114 = vld [vmem:[#allocation8 + $0xc50] sm:$0xff]
    %v1115 = vld [vmem:[#allocation8 + $0xc58] sm:$0xff]
    %v1116 = vld [vmem:[#allocation8 + $0xc60] sm:$0xff]
    %v1117 = vld [vmem:[#allocation8 + $0xc68] sm:$0xff]
    %v1118 = vld [vmem:[#allocation8 + $0xc70] sm:$0xff]
    %v1119 = vld [vmem:[#allocation8 + $0xc78] sm:$0xff]
    %v1120 = vld [vmem:[#allocation8 + $0xc80] sm:$0xff]
    %v1121 = vld [vmem:[#allocation8 + $0xc88] sm:$0xff]
    %v1122 = vld [vmem:[#allocation8 + $0xc90] sm:$0xff]
    %v1123 = vld [vmem:[#allocation8 + $0xc98] sm:$0xff]
    %v1124 = vld [vmem:[#allocation8 + $0xca0] sm:$0xff]
    %v1125 = vld [vmem:[#allocation8 + $0xca8] sm:$0xff]
    %v1126 = vld [vmem:[#allocation8 + $0xcb0] sm:$0xff]
    %v1127 = vld [vmem:[#allocation8 + $0xcb8] sm:$0xff]
    %v1128 = vld [vmem:[#allocation8 + $0xcc0] sm:$0xff]
    %v1129 = vld [vmem:[#allocation8 + $0xcc8] sm:$0xff]
    %v1130 = vld [vmem:[#allocation8 + $0xcd0] sm:$0xff]
    %v1131 = vld [vmem:[#allocation8 + $0xcd8] sm:$0xff]
    %v1132 = vld [vmem:[#allocation8 + $0xce0] sm:$0xff]
    %v1133 = vld [vmem:[#allocation8 + $0xce8] sm:$0xff]
    %v1134 = vld [vmem:[#allocation8 + $0xcf0] sm:$0xff]
    %v1135 = vld [vmem:[#allocation8 + $0xcf8] sm:$0xff]
    %v1136 = vld [vmem:[#allocation8 + $0xd00] sm:$0xff]
    %v1137 = vld [vmem:[#allocation8 + $0xd08] sm:$0xff]
    %v1138 = vld [vmem:[#allocation8 + $0xd10] sm:$0xff]
    %v1139 = vld [vmem:[#allocation8 + $0xd18] sm:$0xff]
    %v1140 = vld [vmem:[#allocation8 + $0xd20] sm:$0xff]
    %v1141 = vld [vmem:[#allocation8 + $0xd28] sm:$0xff]
    %v1142 = vld [vmem:[#allocation8 + $0xd30] sm:$0xff]
    %v1143 = vld [vmem:[#allocation8 + $0xd38] sm:$0xff]
    %v1144 = vld [vmem:[#allocation8 + $0xd40] sm:$0xff]
    %v1145 = vld [vmem:[#allocation8 + $0xd48] sm:$0xff]
    %v1146 = vld [vmem:[#allocation8 + $0xd50] sm:$0xff]
    %v1147 = vld [vmem:[#allocation8 + $0xd58] sm:$0xff]
    %v1148 = vld [vmem:[#allocation8 + $0xd60] sm:$0xff]
    %v1149 = vld [vmem:[#allocation8 + $0xd68] sm:$0xff]
    %v1150 = vld [vmem:[#allocation8 + $0xd70] sm:$0xff]
    %v1151 = vld [vmem:[#allocation8 + $0xd78] sm:$0xff]
    %v1152 = vld [vmem:[#allocation8 + $0xd80] sm:$0xff]
    %v1153 = vld [vmem:[#allocation8 + $0xd88] sm:$0xff]
    %v1154 = vld [vmem:[#allocation8 + $0xd90] sm:$0xff]
    %v1155 = vld [vmem:[#allocation8 + $0xd98] sm:$0xff]
    %v1156 = vld [vmem:[#allocation8 + $0xda0] sm:$0xff]
    %v1157 = vld [vmem:[#allocation8 + $0xda8] sm:$0xff]
    %v1158 = vld [vmem:[#allocation8 + $0xdb0] sm:$0xff]
    %v1159 = vld [vmem:[#allocation8 + $0xdb8] sm:$0xff]
    %v1160 = vld [vmem:[#allocation8 + $0xdc0] sm:$0xff]
    %v1161 = vld [vmem:[#allocation8 + $0xdc8] sm:$0xff]
    %v1162 = vld [vmem:[#allocation8 + $0xdd0] sm:$0xff]
    %v1163 = vld [vmem:[#allocation8 + $0xdd8] sm:$0xff]
    %v1164 = vld [vmem:[#allocation8 + $0xde0] sm:$0xff]
    %v1165 = vld [vmem:[#allocation8 + $0xde8] sm:$0xff]
    %v1166 = vld [vmem:[#allocation8 + $0xdf0] sm:$0xff]
    %v1167 = vld [vmem:[#allocation8 + $0xdf8] sm:$0xff]
    %v1168 = vld [vmem:[#allocation8 + $0xe00] sm:$0xff]
    %v1169 = vld [vmem:[#allocation8 + $0xe08] sm:$0xff]
    %v1170 = vld [vmem:[#allocation8 + $0xe10] sm:$0xff]
    %v1171 = vld [vmem:[#allocation8 + $0xe18] sm:$0xff]
    %v1172 = vld [vmem:[#allocation8 + $0xe20] sm:$0xff]
    %v1173 = vld [vmem:[#allocation8 + $0xe28] sm:$0xff]
    %v1174 = vld [vmem:[#allocation8 + $0xe30] sm:$0xff]
    %v1175 = vld [vmem:[#allocation8 + $0xe38] sm:$0xff]
    %v1176 = vld [vmem:[#allocation8 + $0xe40] sm:$0xff]
    %v1177 = vld [vmem:[#allocation8 + $0xe48] sm:$0xff]
    %v1178 = vld [vmem:[#allocation8 + $0xe50] sm:$0xff]
    %v1179 = vld [vmem:[#allocation8 + $0xe58] sm:$0xff]
    %v1180 = vld [vmem:[#allocation8 + $0xe60] sm:$0xff]
    %v1181 = vld [vmem:[#allocation8 + $0xe68] sm:$0xff]
    %v1182 = vld [vmem:[#allocation8 + $0xe70] sm:$0xff]
    %v1183 = vld [vmem:[#allocation8 + $0xe78] sm:$0xff]
    %v1184 = vld [vmem:[#allocation8 + $0xe80] sm:$0xff]
    %v1185 = vld [vmem:[#allocation8 + $0xe88] sm:$0xff]
    %v1186 = vld [vmem:[#allocation8 + $0xe90] sm:$0xff]
    %v1187 = vld [vmem:[#allocation8 + $0xe98] sm:$0xff]
    %v1188 = vld [vmem:[#allocation8 + $0xea0] sm:$0xff]
    %v1189 = vld [vmem:[#allocation8 + $0xea8] sm:$0xff]
    %v1190 = vld [vmem:[#allocation8 + $0xeb0] sm:$0xff]
    %v1191 = vld [vmem:[#allocation8 + $0xeb8] sm:$0xff]
    %v1192 = vld [vmem:[#allocation8 + $0xec0] sm:$0xff]
    %v1193 = vld [vmem:[#allocation8 + $0xec8] sm:$0xff]
    %v1194 = vld [vmem:[#allocation8 + $0xed0] sm:$0xff]
    %v1195 = vld [vmem:[#allocation8 + $0xed8] sm:$0xff]
    %v1196 = vld [vmem:[#allocation8 + $0xee0] sm:$0xff]
    %v1197 = vld [vmem:[#allocation8 + $0xee8] sm:$0xff]
    %v1198 = vld [vmem:[#allocation8 + $0xef0] sm:$0xff]
    %v1199 = vld [vmem:[#allocation8 + $0xef8] sm:$0xff]
    %v1200 = vld [vmem:[#allocation8 + $0xf00] sm:$0xff]
    %v1201 = vld [vmem:[#allocation8 + $0xf08] sm:$0xff]
    %v1202 = vld [vmem:[#allocation8 + $0xf10] sm:$0xff]
    %v1203 = vld [vmem:[#allocation8 + $0xf18] sm:$0xff]
    %v1204 = vld [vmem:[#allocation8 + $0xf20] sm:$0xff]
    %v1205 = vld [vmem:[#allocation8 + $0xf28] sm:$0xff]
    %v1206 = vld [vmem:[#allocation8 + $0xf30] sm:$0xff]
    %v1207 = vld [vmem:[#allocation8 + $0xf38] sm:$0xff]
    %v1208 = vld [vmem:[#allocation8 + $0xf40] sm:$0xff]
    %v1209 = vld [vmem:[#allocation8 + $0xf48] sm:$0xff]
    %v1210 = vld [vmem:[#allocation8 + $0xf50] sm:$0xff]
    %v1211 = vld [vmem:[#allocation8 + $0xf58] sm:$0xff]
    %v1212 = vld [vmem:[#allocation8 + $0xf60] sm:$0xff]
    %v1213 = vld [vmem:[#allocation8 + $0xf68] sm:$0xff]
    %v1214 = vld [vmem:[#allocation8 + $0xf70] sm:$0xff]
    %v1215 = vld [vmem:[#allocation8 + $0xf78] sm:$0xff]
    %v1216 = vld [vmem:[#allocation8 + $0xf80] sm:$0xff]
    %v1217 = vld [vmem:[#allocation8 + $0xf88] sm:$0xff]
    %v1218 = vld [vmem:[#allocation8 + $0xf90] sm:$0xff]
    %v1219 = vld [vmem:[#allocation8 + $0xf98] sm:$0xff]
    %v1220 = vld [vmem:[#allocation8 + $0xfa0] sm:$0xff]
    %v1221 = vld [vmem:[#allocation8 + $0xfa8] sm:$0xff]
    %v1222 = vld [vmem:[#allocation8 + $0xfb0] sm:$0xff]
    %v1223 = vld [vmem:[#allocation8 + $0xfb8] sm:$0xff]
    %v1224 = vld [vmem:[#allocation8 + $0xfc0] sm:$0xff]
    %v1225 = vld [vmem:[#allocation8 + $0xfc8] sm:$0xff]
    %v1226 = vld [vmem:[#allocation8 + $0xfd0] sm:$0xff]
    %v1227 = vld [vmem:[#allocation8 + $0xfd8] sm:$0xff]
    %v1228 = vld [vmem:[#allocation8 + $0xfe0] sm:$0xff]
    %v1229 = vld [vmem:[#allocation8 + $0xfe8] sm:$0xff]
    %v1230 = vld [vmem:[#allocation8 + $0xff0] sm:$0xff]
    %v1231 = vld [vmem:[#allocation8 + $0xff8] sm:$0xff]
    %v1232 = vld [vmem:[#allocation10] sm:$0xff]
    %v1233 = vld [vmem:[#allocation10 + $0x8] sm:$0xff]
    %v1234 = vld [vmem:[#allocation10 + $0x10] sm:$0xff]
    %v1235 = vld [vmem:[#allocation10 + $0x18] sm:$0xff]
    %v1236 = vld [vmem:[#allocation10 + $0x20] sm:$0xff]
    %v1237 = vld [vmem:[#allocation10 + $0x28] sm:$0xff]
    %v1238 = vld [vmem:[#allocation10 + $0x30] sm:$0xff]
    %v1239 = vld [vmem:[#allocation10 + $0x38] sm:$0xff]
    %v1240 = vld [vmem:[#allocation10 + $0x40] sm:$0xff]
    %v1241 = vld [vmem:[#allocation10 + $0x48] sm:$0xff]
    %v1242 = vld [vmem:[#allocation10 + $0x50] sm:$0xff]
    %v1243 = vld [vmem:[#allocation10 + $0x58] sm:$0xff]
    %v1244 = vld [vmem:[#allocation10 + $0x60] sm:$0xff]
    %v1245 = vld [vmem:[#allocation10 + $0x68] sm:$0xff]
    %v1246 = vld [vmem:[#allocation10 + $0x70] sm:$0xff]
    %v1247 = vld [vmem:[#allocation10 + $0x78] sm:$0xff]
    %v1248 = vld [vmem:[#allocation10 + $0x80] sm:$0xff]
    %v1249 = vld [vmem:[#allocation10 + $0x88] sm:$0xff]
    %v1250 = vld [vmem:[#allocation10 + $0x90] sm:$0xff]
    %v1251 = vld [vmem:[#allocation10 + $0x98] sm:$0xff]
    %v1252 = vld [vmem:[#allocation10 + $0xa0] sm:$0xff]
    %v1253 = vld [vmem:[#allocation10 + $0xa8] sm:$0xff]
    %v1254 = vld [vmem:[#allocation10 + $0xb0] sm:$0xff]
    %v1255 = vld [vmem:[#allocation10 + $0xb8] sm:$0xff]
    %v1256 = vld [vmem:[#allocation10 + $0xc0] sm:$0xff]
    %v1257 = vld [vmem:[#allocation10 + $0xc8] sm:$0xff]
    %v1258 = vld [vmem:[#allocation10 + $0xd0] sm:$0xff]
    %v1259 = vld [vmem:[#allocation10 + $0xd8] sm:$0xff]
    %v1260 = vld [vmem:[#allocation10 + $0xe0] sm:$0xff]
    %v1261 = vld [vmem:[#allocation10 + $0xe8] sm:$0xff]
    %v1262 = vld [vmem:[#allocation10 + $0xf0] sm:$0xff]
    %v1263 = vld [vmem:[#allocation10 + $0xf8] sm:$0xff]
    %v1264 = vld [vmem:[#allocation10 + $0x100] sm:$0xff]
    %v1265 = vld [vmem:[#allocation10 + $0x108] sm:$0xff]
    %v1266 = vld [vmem:[#allocation10 + $0x110] sm:$0xff]
    %v1267 = vld [vmem:[#allocation10 + $0x118] sm:$0xff]
    %v1268 = vld [vmem:[#allocation10 + $0x120] sm:$0xff]
    %v1269 = vld [vmem:[#allocation10 + $0x128] sm:$0xff]
    %v1270 = vld [vmem:[#allocation10 + $0x130] sm:$0xff]
    %v1271 = vld [vmem:[#allocation10 + $0x138] sm:$0xff]
    %v1272 = vld [vmem:[#allocation10 + $0x140] sm:$0xff]
    %v1273 = vld [vmem:[#allocation10 + $0x148] sm:$0xff]
    %v1274 = vld [vmem:[#allocation10 + $0x150] sm:$0xff]
    %v1275 = vld [vmem:[#allocation10 + $0x158] sm:$0xff]
    %v1276 = vld [vmem:[#allocation10 + $0x160] sm:$0xff]
    %v1277 = vld [vmem:[#allocation10 + $0x168] sm:$0xff]
    %v1278 = vld [vmem:[#allocation10 + $0x170] sm:$0xff]
    %v1279 = vld [vmem:[#allocation10 + $0x178] sm:$0xff]
    %v1280 = vld [vmem:[#allocation10 + $0x180] sm:$0xff]
    %v1281 = vld [vmem:[#allocation10 + $0x188] sm:$0xff]
    %v1282 = vld [vmem:[#allocation10 + $0x190] sm:$0xff]
    %v1283 = vld [vmem:[#allocation10 + $0x198] sm:$0xff]
    %v1284 = vld [vmem:[#allocation10 + $0x1a0] sm:$0xff]
    %v1285 = vld [vmem:[#allocation10 + $0x1a8] sm:$0xff]
    %v1286 = vld [vmem:[#allocation10 + $0x1b0] sm:$0xff]
    %v1287 = vld [vmem:[#allocation10 + $0x1b8] sm:$0xff]
    %v1288 = vld [vmem:[#allocation10 + $0x1c0] sm:$0xff]
    %v1289 = vld [vmem:[#allocation10 + $0x1c8] sm:$0xff]
    %v1290 = vld [vmem:[#allocation10 + $0x1d0] sm:$0xff]
    %v1291 = vld [vmem:[#allocation10 + $0x1d8] sm:$0xff]
    %v1292 = vld [vmem:[#allocation10 + $0x1e0] sm:$0xff]
    %v1293 = vld [vmem:[#allocation10 + $0x1e8] sm:$0xff]
    %v1294 = vld [vmem:[#allocation10 + $0x1f0] sm:$0xff]
    %v1295 = vld [vmem:[#allocation10 + $0x1f8] sm:$0xff]
    %v1296 = vld [vmem:[#allocation10 + $0x200] sm:$0xff]
    %v1297 = vld [vmem:[#allocation10 + $0x208] sm:$0xff]
    %v1298 = vld [vmem:[#allocation10 + $0x210] sm:$0xff]
    %v1299 = vld [vmem:[#allocation10 + $0x218] sm:$0xff]
    %v1300 = vld [vmem:[#allocation10 + $0x220] sm:$0xff]
    %v1301 = vld [vmem:[#allocation10 + $0x228] sm:$0xff]
    %v1302 = vld [vmem:[#allocation10 + $0x230] sm:$0xff]
    %v1303 = vld [vmem:[#allocation10 + $0x238] sm:$0xff]
    %v1304 = vld [vmem:[#allocation10 + $0x240] sm:$0xff]
    %v1305 = vld [vmem:[#allocation10 + $0x248] sm:$0xff]
    %v1306 = vld [vmem:[#allocation10 + $0x250] sm:$0xff]
    %v1307 = vld [vmem:[#allocation10 + $0x258] sm:$0xff]
    %v1308 = vld [vmem:[#allocation10 + $0x260] sm:$0xff]
    %v1309 = vld [vmem:[#allocation10 + $0x268] sm:$0xff]
    %v1310 = vld [vmem:[#allocation10 + $0x270] sm:$0xff]
    %v1311 = vld [vmem:[#allocation10 + $0x278] sm:$0xff]
    %v1312 = vld [vmem:[#allocation10 + $0x280] sm:$0xff]
    %v1313 = vld [vmem:[#allocation10 + $0x288] sm:$0xff]
    %v1314 = vld [vmem:[#allocation10 + $0x290] sm:$0xff]
    %v1315 = vld [vmem:[#allocation10 + $0x298] sm:$0xff]
    %v1316 = vld [vmem:[#allocation10 + $0x2a0] sm:$0xff]
    %v1317 = vld [vmem:[#allocation10 + $0x2a8] sm:$0xff]
    %v1318 = vld [vmem:[#allocation10 + $0x2b0] sm:$0xff]
    %v1319 = vld [vmem:[#allocation10 + $0x2b8] sm:$0xff]
    %v1320 = vld [vmem:[#allocation10 + $0x2c0] sm:$0xff]
    %v1321 = vld [vmem:[#allocation10 + $0x2c8] sm:$0xff]
    %v1322 = vld [vmem:[#allocation10 + $0x2d0] sm:$0xff]
    %v1323 = vld [vmem:[#allocation10 + $0x2d8] sm:$0xff]
    %v1324 = vld [vmem:[#allocation10 + $0x2e0] sm:$0xff]
    %v1325 = vld [vmem:[#allocation10 + $0x2e8] sm:$0xff]
    %v1326 = vld [vmem:[#allocation10 + $0x2f0] sm:$0xff]
    %v1327 = vld [vmem:[#allocation10 + $0x2f8] sm:$0xff]
    %v1328 = vld [vmem:[#allocation10 + $0x300] sm:$0xff]
    %v1329 = vld [vmem:[#allocation10 + $0x308] sm:$0xff]
    %v1330 = vld [vmem:[#allocation10 + $0x310] sm:$0xff]
    %v1331 = vld [vmem:[#allocation10 + $0x318] sm:$0xff]
    %v1332 = vld [vmem:[#allocation10 + $0x320] sm:$0xff]
    %v1333 = vld [vmem:[#allocation10 + $0x328] sm:$0xff]
    %v1334 = vld [vmem:[#allocation10 + $0x330] sm:$0xff]
    %v1335 = vld [vmem:[#allocation10 + $0x338] sm:$0xff]
    %v1336 = vld [vmem:[#allocation10 + $0x340] sm:$0xff]
    %v1337 = vld [vmem:[#allocation10 + $0x348] sm:$0xff]
    %v1338 = vld [vmem:[#allocation10 + $0x350] sm:$0xff]
    %v1339 = vld [vmem:[#allocation10 + $0x358] sm:$0xff]
    %v1340 = vld [vmem:[#allocation10 + $0x360] sm:$0xff]
    %v1341 = vld [vmem:[#allocation10 + $0x368] sm:$0xff]
    %v1342 = vld [vmem:[#allocation10 + $0x370] sm:$0xff]
    %v1343 = vld [vmem:[#allocation10 + $0x378] sm:$0xff]
    %v1344 = vld [vmem:[#allocation10 + $0x380] sm:$0xff]
    %v1345 = vld [vmem:[#allocation10 + $0x388] sm:$0xff]
    %v1346 = vld [vmem:[#allocation10 + $0x390] sm:$0xff]
    %v1347 = vld [vmem:[#allocation10 + $0x398] sm:$0xff]
    %v1348 = vld [vmem:[#allocation10 + $0x3a0] sm:$0xff]
    %v1349 = vld [vmem:[#allocation10 + $0x3a8] sm:$0xff]
    %v1350 = vld [vmem:[#allocation10 + $0x3b0] sm:$0xff]
    %v1351 = vld [vmem:[#allocation10 + $0x3b8] sm:$0xff]
    %v1352 = vld [vmem:[#allocation10 + $0x3c0] sm:$0xff]
    %v1353 = vld [vmem:[#allocation10 + $0x3c8] sm:$0xff]
    %v1354 = vld [vmem:[#allocation10 + $0x3d0] sm:$0xff]
    %v1355 = vld [vmem:[#allocation10 + $0x3d8] sm:$0xff]
    %v1356 = vld [vmem:[#allocation10 + $0x3e0] sm:$0xff]
    %v1357 = vld [vmem:[#allocation10 + $0x3e8] sm:$0xff]
    %v1358 = vld [vmem:[#allocation10 + $0x3f0] sm:$0xff]
    %v1359 = vld [vmem:[#allocation10 + $0x3f8] sm:$0xff]
    %v1360 = vld [vmem:[#allocation10 + $0x400] sm:$0xff]
    %v1361 = vld [vmem:[#allocation10 + $0x408] sm:$0xff]
    %v1362 = vld [vmem:[#allocation10 + $0x410] sm:$0xff]
    %v1363 = vld [vmem:[#allocation10 + $0x418] sm:$0xff]
    %v1364 = vld [vmem:[#allocation10 + $0x420] sm:$0xff]
    %v1365 = vld [vmem:[#allocation10 + $0x428] sm:$0xff]
    %v1366 = vld [vmem:[#allocation10 + $0x430] sm:$0xff]
    %v1367 = vld [vmem:[#allocation10 + $0x438] sm:$0xff]
    %v1368 = vld [vmem:[#allocation10 + $0x440] sm:$0xff]
    %v1369 = vld [vmem:[#allocation10 + $0x448] sm:$0xff]
    %v1370 = vld [vmem:[#allocation10 + $0x450] sm:$0xff]
    %v1371 = vld [vmem:[#allocation10 + $0x458] sm:$0xff]
    %v1372 = vld [vmem:[#allocation10 + $0x460] sm:$0xff]
    %v1373 = vld [vmem:[#allocation10 + $0x468] sm:$0xff]
    %v1374 = vld [vmem:[#allocation10 + $0x470] sm:$0xff]
    %v1375 = vld [vmem:[#allocation10 + $0x478] sm:$0xff]
    %v1376 = vld [vmem:[#allocation10 + $0x480] sm:$0xff]
    %v1377 = vld [vmem:[#allocation10 + $0x488] sm:$0xff]
    %v1378 = vld [vmem:[#allocation10 + $0x490] sm:$0xff]
    %v1379 = vld [vmem:[#allocation10 + $0x498] sm:$0xff]
    %v1380 = vld [vmem:[#allocation10 + $0x4a0] sm:$0xff]
    %v1381 = vld [vmem:[#allocation10 + $0x4a8] sm:$0xff]
    %v1382 = vld [vmem:[#allocation10 + $0x4b0] sm:$0xff]
    %v1383 = vld [vmem:[#allocation10 + $0x4b8] sm:$0xff]
    %v1384 = vld [vmem:[#allocation10 + $0x4c0] sm:$0xff]
    %v1385 = vld [vmem:[#allocation10 + $0x4c8] sm:$0xff]
    %v1386 = vld [vmem:[#allocation10 + $0x4d0] sm:$0xff]
    %v1387 = vld [vmem:[#allocation10 + $0x4d8] sm:$0xff]
    %v1388 = vld [vmem:[#allocation10 + $0x4e0] sm:$0xff]
    %v1389 = vld [vmem:[#allocation10 + $0x4e8] sm:$0xff]
    %v1390 = vld [vmem:[#allocation10 + $0x4f0] sm:$0xff]
    %v1391 = vld [vmem:[#allocation10 + $0x4f8] sm:$0xff]
    %v1392 = vld [vmem:[#allocation10 + $0x500] sm:$0xff]
    %v1393 = vld [vmem:[#allocation10 + $0x508] sm:$0xff]
    %v1394 = vld [vmem:[#allocation10 + $0x510] sm:$0xff]
    %v1395 = vld [vmem:[#allocation10 + $0x518] sm:$0xff]
    %v1396 = vld [vmem:[#allocation10 + $0x520] sm:$0xff]
    %v1397 = vld [vmem:[#allocation10 + $0x528] sm:$0xff]
    %v1398 = vld [vmem:[#allocation10 + $0x530] sm:$0xff]
    %v1399 = vld [vmem:[#allocation10 + $0x538] sm:$0xff]
    %v1400 = vld [vmem:[#allocation10 + $0x540] sm:$0xff]
    %v1401 = vld [vmem:[#allocation10 + $0x548] sm:$0xff]
    %v1402 = vld [vmem:[#allocation10 + $0x550] sm:$0xff]
    %v1403 = vld [vmem:[#allocation10 + $0x558] sm:$0xff]
    %v1404 = vld [vmem:[#allocation10 + $0x560] sm:$0xff]
    %v1405 = vld [vmem:[#allocation10 + $0x568] sm:$0xff]
    %v1406 = vld [vmem:[#allocation10 + $0x570] sm:$0xff]
    %v1407 = vld [vmem:[#allocation10 + $0x578] sm:$0xff]
    %v1408 = vld [vmem:[#allocation10 + $0x580] sm:$0xff]
    %v1409 = vld [vmem:[#allocation10 + $0x588] sm:$0xff]
    %v1410 = vld [vmem:[#allocation10 + $0x590] sm:$0xff]
    %v1411 = vld [vmem:[#allocation10 + $0x598] sm:$0xff]
    %v1412 = vld [vmem:[#allocation10 + $0x5a0] sm:$0xff]
    %v1413 = vld [vmem:[#allocation10 + $0x5a8] sm:$0xff]
    %v1414 = vld [vmem:[#allocation10 + $0x5b0] sm:$0xff]
    %v1415 = vld [vmem:[#allocation10 + $0x5b8] sm:$0xff]
    %v1416 = vld [vmem:[#allocation10 + $0x5c0] sm:$0xff]
    %v1417 = vld [vmem:[#allocation10 + $0x5c8] sm:$0xff]
    %v1418 = vld [vmem:[#allocation10 + $0x5d0] sm:$0xff]
    %v1419 = vld [vmem:[#allocation10 + $0x5d8] sm:$0xff]
    %v1420 = vld [vmem:[#allocation10 + $0x5e0] sm:$0xff]
    %v1421 = vld [vmem:[#allocation10 + $0x5e8] sm:$0xff]
    %v1422 = vld [vmem:[#allocation10 + $0x5f0] sm:$0xff]
    %v1423 = vld [vmem:[#allocation10 + $0x5f8] sm:$0xff]
    %v1424 = vld [vmem:[#allocation10 + $0x600] sm:$0xff]
    %v1425 = vld [vmem:[#allocation10 + $0x608] sm:$0xff]
    %v1426 = vld [vmem:[#allocation10 + $0x610] sm:$0xff]
    %v1427 = vld [vmem:[#allocation10 + $0x618] sm:$0xff]
    %v1428 = vld [vmem:[#allocation10 + $0x620] sm:$0xff]
    %v1429 = vld [vmem:[#allocation10 + $0x628] sm:$0xff]
    %v1430 = vld [vmem:[#allocation10 + $0x630] sm:$0xff]
    %v1431 = vld [vmem:[#allocation10 + $0x638] sm:$0xff]
    %v1432 = vld [vmem:[#allocation10 + $0x640] sm:$0xff]
    %v1433 = vld [vmem:[#allocation10 + $0x648] sm:$0xff]
    %v1434 = vld [vmem:[#allocation10 + $0x650] sm:$0xff]
    %v1435 = vld [vmem:[#allocation10 + $0x658] sm:$0xff]
    %v1436 = vld [vmem:[#allocation10 + $0x660] sm:$0xff]
    %v1437 = vld [vmem:[#allocation10 + $0x668] sm:$0xff]
    %v1438 = vld [vmem:[#allocation10 + $0x670] sm:$0xff]
    %v1439 = vld [vmem:[#allocation10 + $0x678] sm:$0xff]
    %v1440 = vld [vmem:[#allocation10 + $0x680] sm:$0xff]
    %v1441 = vld [vmem:[#allocation10 + $0x688] sm:$0xff]
    %v1442 = vld [vmem:[#allocation10 + $0x690] sm:$0xff]
    %v1443 = vld [vmem:[#allocation10 + $0x698] sm:$0xff]
    %v1444 = vld [vmem:[#allocation10 + $0x6a0] sm:$0xff]
    %v1445 = vld [vmem:[#allocation10 + $0x6a8] sm:$0xff]
    %v1446 = vld [vmem:[#allocation10 + $0x6b0] sm:$0xff]
    %v1447 = vld [vmem:[#allocation10 + $0x6b8] sm:$0xff]
    %v1448 = vld [vmem:[#allocation10 + $0x6c0] sm:$0xff]
    %v1449 = vld [vmem:[#allocation10 + $0x6c8] sm:$0xff]
    %v1450 = vld [vmem:[#allocation10 + $0x6d0] sm:$0xff]
    %v1451 = vld [vmem:[#allocation10 + $0x6d8] sm:$0xff]
    %v1452 = vld [vmem:[#allocation10 + $0x6e0] sm:$0xff]
    %v1453 = vld [vmem:[#allocation10 + $0x6e8] sm:$0xff]
    %v1454 = vld [vmem:[#allocation10 + $0x6f0] sm:$0xff]
    %v1455 = vld [vmem:[#allocation10 + $0x6f8] sm:$0xff]
    %v1456 = vld [vmem:[#allocation10 + $0x700] sm:$0xff]
    %v1457 = vld [vmem:[#allocation10 + $0x708] sm:$0xff]
    %v1458 = vld [vmem:[#allocation10 + $0x710] sm:$0xff]
    %v1459 = vld [vmem:[#allocation10 + $0x718] sm:$0xff]
    %v1460 = vld [vmem:[#allocation10 + $0x720] sm:$0xff]
    %v1461 = vld [vmem:[#allocation10 + $0x728] sm:$0xff]
    %v1462 = vld [vmem:[#allocation10 + $0x730] sm:$0xff]
    %v1463 = vld [vmem:[#allocation10 + $0x738] sm:$0xff]
    %v1464 = vld [vmem:[#allocation10 + $0x740] sm:$0xff]
    %v1465 = vld [vmem:[#allocation10 + $0x748] sm:$0xff]
    %v1466 = vld [vmem:[#allocation10 + $0x750] sm:$0xff]
    %v1467 = vld [vmem:[#allocation10 + $0x758] sm:$0xff]
    %v1468 = vld [vmem:[#allocation10 + $0x760] sm:$0xff]
    %v1469 = vld [vmem:[#allocation10 + $0x768] sm:$0xff]
    %v1470 = vld [vmem:[#allocation10 + $0x770] sm:$0xff]
    %v1471 = vld [vmem:[#allocation10 + $0x778] sm:$0xff]
    %v1472 = vld [vmem:[#allocation10 + $0x780] sm:$0xff]
    %v1473 = vld [vmem:[#allocation10 + $0x788] sm:$0xff]
    %v1474 = vld [vmem:[#allocation10 + $0x790] sm:$0xff]
    %v1475 = vld [vmem:[#allocation10 + $0x798] sm:$0xff]
    %v1476 = vld [vmem:[#allocation10 + $0x7a0] sm:$0xff]
    %v1477 = vld [vmem:[#allocation10 + $0x7a8] sm:$0xff]
    %v1478 = vld [vmem:[#allocation10 + $0x7b0] sm:$0xff]
    %v1479 = vld [vmem:[#allocation10 + $0x7b8] sm:$0xff]
    %v1480 = vld [vmem:[#allocation10 + $0x7c0] sm:$0xff]
    %v1481 = vld [vmem:[#allocation10 + $0x7c8] sm:$0xff]
    %v1482 = vld [vmem:[#allocation10 + $0x7d0] sm:$0xff]
    %v1483 = vld [vmem:[#allocation10 + $0x7d8] sm:$0xff]
    %v1484 = vld [vmem:[#allocation10 + $0x7e0] sm:$0xff]
    %v1485 = vld [vmem:[#allocation10 + $0x7e8] sm:$0xff]
    %v1486 = vld [vmem:[#allocation10 + $0x7f0] sm:$0xff]
    %v1487 = vld [vmem:[#allocation10 + $0x7f8] sm:$0xff]
    %v1488 = vld [vmem:[#allocation10 + $0x800] sm:$0xff]
    %v1489 = vld [vmem:[#allocation10 + $0x808] sm:$0xff]
    %v1490 = vld [vmem:[#allocation10 + $0x810] sm:$0xff]
    %v1491 = vld [vmem:[#allocation10 + $0x818] sm:$0xff]
    %v1492 = vld [vmem:[#allocation10 + $0x820] sm:$0xff]
    %v1493 = vld [vmem:[#allocation10 + $0x828] sm:$0xff]
    %v1494 = vld [vmem:[#allocation10 + $0x830] sm:$0xff]
    %v1495 = vld [vmem:[#allocation10 + $0x838] sm:$0xff]
    %v1496 = vld [vmem:[#allocation10 + $0x840] sm:$0xff]
    %v1497 = vld [vmem:[#allocation10 + $0x848] sm:$0xff]
    %v1498 = vld [vmem:[#allocation10 + $0x850] sm:$0xff]
    %v1499 = vld [vmem:[#allocation10 + $0x858] sm:$0xff]
    %v1500 = vld [vmem:[#allocation10 + $0x860] sm:$0xff]
    %v1501 = vld [vmem:[#allocation10 + $0x868] sm:$0xff]
    %v1502 = vld [vmem:[#allocation10 + $0x870] sm:$0xff]
    %v1503 = vld [vmem:[#allocation10 + $0x878] sm:$0xff]
    %v1504 = vld [vmem:[#allocation10 + $0x880] sm:$0xff]
    %v1505 = vld [vmem:[#allocation10 + $0x888] sm:$0xff]
    %v1506 = vld [vmem:[#allocation10 + $0x890] sm:$0xff]
    %v1507 = vld [vmem:[#allocation10 + $0x898] sm:$0xff]
    %v1508 = vld [vmem:[#allocation10 + $0x8a0] sm:$0xff]
    %v1509 = vld [vmem:[#allocation10 + $0x8a8] sm:$0xff]
    %v1510 = vld [vmem:[#allocation10 + $0x8b0] sm:$0xff]
    %v1511 = vld [vmem:[#allocation10 + $0x8b8] sm:$0xff]
    %v1512 = vld [vmem:[#allocation10 + $0x8c0] sm:$0xff]
    %v1513 = vld [vmem:[#allocation10 + $0x8c8] sm:$0xff]
    %v1514 = vld [vmem:[#allocation10 + $0x8d0] sm:$0xff]
    %v1515 = vld [vmem:[#allocation10 + $0x8d8] sm:$0xff]
    %v1516 = vld [vmem:[#allocation10 + $0x8e0] sm:$0xff]
    %v1517 = vld [vmem:[#allocation10 + $0x8e8] sm:$0xff]
    %v1518 = vld [vmem:[#allocation10 + $0x8f0] sm:$0xff]
    %v1519 = vld [vmem:[#allocation10 + $0x8f8] sm:$0xff]
    %v1520 = vld [vmem:[#allocation10 + $0x900] sm:$0xff]
    %v1521 = vld [vmem:[#allocation10 + $0x908] sm:$0xff]
    %v1522 = vld [vmem:[#allocation10 + $0x910] sm:$0xff]
    %v1523 = vld [vmem:[#allocation10 + $0x918] sm:$0xff]
    %v1524 = vld [vmem:[#allocation10 + $0x920] sm:$0xff]
    %v1525 = vld [vmem:[#allocation10 + $0x928] sm:$0xff]
    %v1526 = vld [vmem:[#allocation10 + $0x930] sm:$0xff]
    %v1527 = vld [vmem:[#allocation10 + $0x938] sm:$0xff]
    %v1528 = vld [vmem:[#allocation10 + $0x940] sm:$0xff]
    %v1529 = vld [vmem:[#allocation10 + $0x948] sm:$0xff]
    %v1530 = vld [vmem:[#allocation10 + $0x950] sm:$0xff]
    %v1531 = vld [vmem:[#allocation10 + $0x958] sm:$0xff]
    %v1532 = vld [vmem:[#allocation10 + $0x960] sm:$0xff]
    %v1533 = vld [vmem:[#allocation10 + $0x968] sm:$0xff]
    %v1534 = vld [vmem:[#allocation10 + $0x970] sm:$0xff]
    %v1535 = vld [vmem:[#allocation10 + $0x978] sm:$0xff]
    %v1536 = vld [vmem:[#allocation10 + $0x980] sm:$0xff]
    %v1537 = vld [vmem:[#allocation10 + $0x988] sm:$0xff]
    %v1538 = vld [vmem:[#allocation10 + $0x990] sm:$0xff]
    %v1539 = vld [vmem:[#allocation10 + $0x998] sm:$0xff]
    %v1540 = vld [vmem:[#allocation10 + $0x9a0] sm:$0xff]
    %v1541 = vld [vmem:[#allocation10 + $0x9a8] sm:$0xff]
    %v1542 = vld [vmem:[#allocation10 + $0x9b0] sm:$0xff]
    %v1543 = vld [vmem:[#allocation10 + $0x9b8] sm:$0xff]
    %v1544 = vld [vmem:[#allocation10 + $0x9c0] sm:$0xff]
    %v1545 = vld [vmem:[#allocation10 + $0x9c8] sm:$0xff]
    %v1546 = vld [vmem:[#allocation10 + $0x9d0] sm:$0xff]
    %v1547 = vld [vmem:[#allocation10 + $0x9d8] sm:$0xff]
    %v1548 = vld [vmem:[#allocation10 + $0x9e0] sm:$0xff]
    %v1549 = vld [vmem:[#allocation10 + $0x9e8] sm:$0xff]
    %v1550 = vld [vmem:[#allocation10 + $0x9f0] sm:$0xff]
    %v1551 = vld [vmem:[#allocation10 + $0x9f8] sm:$0xff]
    %v1552 = vld [vmem:[#allocation10 + $0xa00] sm:$0xff]
    %v1553 = vld [vmem:[#allocation10 + $0xa08] sm:$0xff]
    %v1554 = vld [vmem:[#allocation10 + $0xa10] sm:$0xff]
    %v1555 = vld [vmem:[#allocation10 + $0xa18] sm:$0xff]
    %v1556 = vld [vmem:[#allocation10 + $0xa20] sm:$0xff]
    %v1557 = vld [vmem:[#allocation10 + $0xa28] sm:$0xff]
    %v1558 = vld [vmem:[#allocation10 + $0xa30] sm:$0xff]
    %v1559 = vld [vmem:[#allocation10 + $0xa38] sm:$0xff]
    %v1560 = vld [vmem:[#allocation10 + $0xa40] sm:$0xff]
    %v1561 = vld [vmem:[#allocation10 + $0xa48] sm:$0xff]
    %v1562 = vld [vmem:[#allocation10 + $0xa50] sm:$0xff]
    %v1563 = vld [vmem:[#allocation10 + $0xa58] sm:$0xff]
    %v1564 = vld [vmem:[#allocation10 + $0xa60] sm:$0xff]
    %v1565 = vld [vmem:[#allocation10 + $0xa68] sm:$0xff]
    %v1566 = vld [vmem:[#allocation10 + $0xa70] sm:$0xff]
    %v1567 = vld [vmem:[#allocation10 + $0xa78] sm:$0xff]
    %v1568 = vld [vmem:[#allocation10 + $0xa80] sm:$0xff]
    %v1569 = vld [vmem:[#allocation10 + $0xa88] sm:$0xff]
    %v1570 = vld [vmem:[#allocation10 + $0xa90] sm:$0xff]
    %v1571 = vld [vmem:[#allocation10 + $0xa98] sm:$0xff]
    %v1572 = vld [vmem:[#allocation10 + $0xaa0] sm:$0xff]
    %v1573 = vld [vmem:[#allocation10 + $0xaa8] sm:$0xff]
    %v1574 = vld [vmem:[#allocation10 + $0xab0] sm:$0xff]
    %v1575 = vld [vmem:[#allocation10 + $0xab8] sm:$0xff]
    %v1576 = vld [vmem:[#allocation10 + $0xac0] sm:$0xff]
    %v1577 = vld [vmem:[#allocation10 + $0xac8] sm:$0xff]
    %v1578 = vld [vmem:[#allocation10 + $0xad0] sm:$0xff]
    %v1579 = vld [vmem:[#allocation10 + $0xad8] sm:$0xff]
    %v1580 = vld [vmem:[#allocation10 + $0xae0] sm:$0xff]
    %v1581 = vld [vmem:[#allocation10 + $0xae8] sm:$0xff]
    %v1582 = vld [vmem:[#allocation10 + $0xaf0] sm:$0xff]
    %v1583 = vld [vmem:[#allocation10 + $0xaf8] sm:$0xff]
    %v1584 = vld [vmem:[#allocation10 + $0xb00] sm:$0xff]
    %v1585 = vld [vmem:[#allocation10 + $0xb08] sm:$0xff]
    %v1586 = vld [vmem:[#allocation10 + $0xb10] sm:$0xff]
    %v1587 = vld [vmem:[#allocation10 + $0xb18] sm:$0xff]
    %v1588 = vld [vmem:[#allocation10 + $0xb20] sm:$0xff]
    %v1589 = vld [vmem:[#allocation10 + $0xb28] sm:$0xff]
    %v1590 = vld [vmem:[#allocation10 + $0xb30] sm:$0xff]
    %v1591 = vld [vmem:[#allocation10 + $0xb38] sm:$0xff]
    %v1592 = vld [vmem:[#allocation10 + $0xb40] sm:$0xff]
    %v1593 = vld [vmem:[#allocation10 + $0xb48] sm:$0xff]
    %v1594 = vld [vmem:[#allocation10 + $0xb50] sm:$0xff]
    %v1595 = vld [vmem:[#allocation10 + $0xb58] sm:$0xff]
    %v1596 = vld [vmem:[#allocation10 + $0xb60] sm:$0xff]
    %v1597 = vld [vmem:[#allocation10 + $0xb68] sm:$0xff]
    %v1598 = vld [vmem:[#allocation10 + $0xb70] sm:$0xff]
    %v1599 = vld [vmem:[#allocation10 + $0xb78] sm:$0xff]
    %v1600 = vld [vmem:[#allocation10 + $0xb80] sm:$0xff]
    %v1601 = vld [vmem:[#allocation10 + $0xb88] sm:$0xff]
    %v1602 = vld [vmem:[#allocation10 + $0xb90] sm:$0xff]
    %v1603 = vld [vmem:[#allocation10 + $0xb98] sm:$0xff]
    %v1604 = vld [vmem:[#allocation10 + $0xba0] sm:$0xff]
    %v1605 = vld [vmem:[#allocation10 + $0xba8] sm:$0xff]
    %v1606 = vld [vmem:[#allocation10 + $0xbb0] sm:$0xff]
    %v1607 = vld [vmem:[#allocation10 + $0xbb8] sm:$0xff]
    %v1608 = vld [vmem:[#allocation10 + $0xbc0] sm:$0xff]
    %v1609 = vld [vmem:[#allocation10 + $0xbc8] sm:$0xff]
    %v1610 = vld [vmem:[#allocation10 + $0xbd0] sm:$0xff]
    %v1611 = vld [vmem:[#allocation10 + $0xbd8] sm:$0xff]
    %v1612 = vld [vmem:[#allocation10 + $0xbe0] sm:$0xff]
    %v1613 = vld [vmem:[#allocation10 + $0xbe8] sm:$0xff]
    %v1614 = vld [vmem:[#allocation10 + $0xbf0] sm:$0xff]
    %v1615 = vld [vmem:[#allocation10 + $0xbf8] sm:$0xff]
    %v1616 = vld [vmem:[#allocation10 + $0xc00] sm:$0xff]
    %v1617 = vld [vmem:[#allocation10 + $0xc08] sm:$0xff]
    %v1618 = vld [vmem:[#allocation10 + $0xc10] sm:$0xff]
    %v1619 = vld [vmem:[#allocation10 + $0xc18] sm:$0xff]
    %v1620 = vld [vmem:[#allocation10 + $0xc20] sm:$0xff]
    %v1621 = vld [vmem:[#allocation10 + $0xc28] sm:$0xff]
    %v1622 = vld [vmem:[#allocation10 + $0xc30] sm:$0xff]
    %v1623 = vld [vmem:[#allocation10 + $0xc38] sm:$0xff]
    %v1624 = vld [vmem:[#allocation10 + $0xc40] sm:$0xff]
    %v1625 = vld [vmem:[#allocation10 + $0xc48] sm:$0xff]
    %v1626 = vld [vmem:[#allocation10 + $0xc50] sm:$0xff]
    %v1627 = vld [vmem:[#allocation10 + $0xc58] sm:$0xff]
    %v1628 = vld [vmem:[#allocation10 + $0xc60] sm:$0xff]
    %v1629 = vld [vmem:[#allocation10 + $0xc68] sm:$0xff]
    %v1630 = vld [vmem:[#allocation10 + $0xc70] sm:$0xff]
    %v1631 = vld [vmem:[#allocation10 + $0xc78] sm:$0xff]
    %v1632 = vld [vmem:[#allocation10 + $0xc80] sm:$0xff]
    %v1633 = vld [vmem:[#allocation10 + $0xc88] sm:$0xff]
    %v1634 = vld [vmem:[#allocation10 + $0xc90] sm:$0xff]
    %v1635 = vld [vmem:[#allocation10 + $0xc98] sm:$0xff]
    %v1636 = vld [vmem:[#allocation10 + $0xca0] sm:$0xff]
    %v1637 = vld [vmem:[#allocation10 + $0xca8] sm:$0xff]
    %v1638 = vld [vmem:[#allocation10 + $0xcb0] sm:$0xff]
    %v1639 = vld [vmem:[#allocation10 + $0xcb8] sm:$0xff]
    %v1640 = vld [vmem:[#allocation10 + $0xcc0] sm:$0xff]
    %v1641 = vld [vmem:[#allocation10 + $0xcc8] sm:$0xff]
    %v1642 = vld [vmem:[#allocation10 + $0xcd0] sm:$0xff]
    %v1643 = vld [vmem:[#allocation10 + $0xcd8] sm:$0xff]
    %v1644 = vld [vmem:[#allocation10 + $0xce0] sm:$0xff]
    %v1645 = vld [vmem:[#allocation10 + $0xce8] sm:$0xff]
    %v1646 = vld [vmem:[#allocation10 + $0xcf0] sm:$0xff]
    %v1647 = vld [vmem:[#allocation10 + $0xcf8] sm:$0xff]
    %v1648 = vld [vmem:[#allocation10 + $0xd00] sm:$0xff]
    %v1649 = vld [vmem:[#allocation10 + $0xd08] sm:$0xff]
    %v1650 = vld [vmem:[#allocation10 + $0xd10] sm:$0xff]
    %v1651 = vld [vmem:[#allocation10 + $0xd18] sm:$0xff]
    %v1652 = vld [vmem:[#allocation10 + $0xd20] sm:$0xff]
    %v1653 = vld [vmem:[#allocation10 + $0xd28] sm:$0xff]
    %v1654 = vld [vmem:[#allocation10 + $0xd30] sm:$0xff]
    %v1655 = vld [vmem:[#allocation10 + $0xd38] sm:$0xff]
    %v1656 = vld [vmem:[#allocation10 + $0xd40] sm:$0xff]
    %v1657 = vld [vmem:[#allocation10 + $0xd48] sm:$0xff]
    %v1658 = vld [vmem:[#allocation10 + $0xd50] sm:$0xff]
    %v1659 = vld [vmem:[#allocation10 + $0xd58] sm:$0xff]
    %v1660 = vld [vmem:[#allocation10 + $0xd60] sm:$0xff]
    %v1661 = vld [vmem:[#allocation10 + $0xd68] sm:$0xff]
    %v1662 = vld [vmem:[#allocation10 + $0xd70] sm:$0xff]
    %v1663 = vld [vmem:[#allocation10 + $0xd78] sm:$0xff]
    %v1664 = vld [vmem:[#allocation10 + $0xd80] sm:$0xff]
    %v1665 = vld [vmem:[#allocation10 + $0xd88] sm:$0xff]
    %v1666 = vld [vmem:[#allocation10 + $0xd90] sm:$0xff]
    %v1667 = vld [vmem:[#allocation10 + $0xd98] sm:$0xff]
    %v1668 = vld [vmem:[#allocation10 + $0xda0] sm:$0xff]
    %v1669 = vld [vmem:[#allocation10 + $0xda8] sm:$0xff]
    %v1670 = vld [vmem:[#allocation10 + $0xdb0] sm:$0xff]
    %v1671 = vld [vmem:[#allocation10 + $0xdb8] sm:$0xff]
    %v1672 = vld [vmem:[#allocation10 + $0xdc0] sm:$0xff]
    %v1673 = vld [vmem:[#allocation10 + $0xdc8] sm:$0xff]
    %v1674 = vld [vmem:[#allocation10 + $0xdd0] sm:$0xff]
    %v1675 = vld [vmem:[#allocation10 + $0xdd8] sm:$0xff]
    %v1676 = vld [vmem:[#allocation10 + $0xde0] sm:$0xff]
    %v1677 = vld [vmem:[#allocation10 + $0xde8] sm:$0xff]
    %v1678 = vld [vmem:[#allocation10 + $0xdf0] sm:$0xff]
    %v1679 = vld [vmem:[#allocation10 + $0xdf8] sm:$0xff]
    %v1680 = vld [vmem:[#allocation10 + $0xe00] sm:$0xff]
    %v1681 = vld [vmem:[#allocation10 + $0xe08] sm:$0xff]
    %v1682 = vld [vmem:[#allocation10 + $0xe10] sm:$0xff]
    %v1683 = vld [vmem:[#allocation10 + $0xe18] sm:$0xff]
    %v1684 = vld [vmem:[#allocation10 + $0xe20] sm:$0xff]
    %v1685 = vld [vmem:[#allocation10 + $0xe28] sm:$0xff]
    %v1686 = vld [vmem:[#allocation10 + $0xe30] sm:$0xff]
    %v1687 = vld [vmem:[#allocation10 + $0xe38] sm:$0xff]
    %v1688 = vld [vmem:[#allocation10 + $0xe40] sm:$0xff]
    %v1689 = vld [vmem:[#allocation10 + $0xe48] sm:$0xff]
    %v1690 = vld [vmem:[#allocation10 + $0xe50] sm:$0xff]
    %v1691 = vld [vmem:[#allocation10 + $0xe58] sm:$0xff]
    %v1692 = vld [vmem:[#allocation10 + $0xe60] sm:$0xff]
    %v1693 = vld [vmem:[#allocation10 + $0xe68] sm:$0xff]
    %v1694 = vld [vmem:[#allocation10 + $0xe70] sm:$0xff]
    %v1695 = vld [vmem:[#allocation10 + $0xe78] sm:$0xff]
    %v1696 = vld [vmem:[#allocation10 + $0xe80] sm:$0xff]
    %v1697 = vld [vmem:[#allocation10 + $0xe88] sm:$0xff]
    %v1698 = vld [vmem:[#allocation10 + $0xe90] sm:$0xff]
    %v1699 = vld [vmem:[#allocation10 + $0xe98] sm:$0xff]
    %v1700 = vld [vmem:[#allocation10 + $0xea0] sm:$0xff]
    %v1701 = vld [vmem:[#allocation10 + $0xea8] sm:$0xff]
    %v1702 = vld [vmem:[#allocation10 + $0xeb0] sm:$0xff]
    %v1703 = vld [vmem:[#allocation10 + $0xeb8] sm:$0xff]
    %v1704 = vld [vmem:[#allocation10 + $0xec0] sm:$0xff]
    %v1705 = vld [vmem:[#allocation10 + $0xec8] sm:$0xff]
    %v1706 = vld [vmem:[#allocation10 + $0xed0] sm:$0xff]
    %v1707 = vld [vmem:[#allocation10 + $0xed8] sm:$0xff]
    %v1708 = vld [vmem:[#allocation10 + $0xee0] sm:$0xff]
    %v1709 = vld [vmem:[#allocation10 + $0xee8] sm:$0xff]
    %v1710 = vld [vmem:[#allocation10 + $0xef0] sm:$0xff]
    %v1711 = vld [vmem:[#allocation10 + $0xef8] sm:$0xff]
    %v1712 = vld [vmem:[#allocation10 + $0xf00] sm:$0xff]
    %v1713 = vld [vmem:[#allocation10 + $0xf08] sm:$0xff]
    %v1714 = vld [vmem:[#allocation10 + $0xf10] sm:$0xff]
    %v1715 = vld [vmem:[#allocation10 + $0xf18] sm:$0xff]
    %v1716 = vld [vmem:[#allocation10 + $0xf20] sm:$0xff]
    %v1717 = vld [vmem:[#allocation10 + $0xf28] sm:$0xff]
    %v1718 = vld [vmem:[#allocation10 + $0xf30] sm:$0xff]
    %v1719 = vld [vmem:[#allocation10 + $0xf38] sm:$0xff]
    %v1720 = vld [vmem:[#allocation10 + $0xf40] sm:$0xff]
    %v1721 = vld [vmem:[#allocation10 + $0xf48] sm:$0xff]
    %v1722 = vld [vmem:[#allocation10 + $0xf50] sm:$0xff]
    %v1723 = vld [vmem:[#allocation10 + $0xf58] sm:$0xff]
    %v1724 = vld [vmem:[#allocation10 + $0xf60] sm:$0xff]
    %v1725 = vld [vmem:[#allocation10 + $0xf68] sm:$0xff]
    %v1726 = vld [vmem:[#allocation10 + $0xf70] sm:$0xff]
    %v1727 = vld [vmem:[#allocation10 + $0xf78] sm:$0xff]
    %v1728 = vld [vmem:[#allocation10 + $0xf80] sm:$0xff]
    %v1729 = vld [vmem:[#allocation10 + $0xf88] sm:$0xff]
    %v1730 = vld [vmem:[#allocation10 + $0xf90] sm:$0xff]
    %v1731 = vld [vmem:[#allocation10 + $0xf98] sm:$0xff]
    %v1732 = vld [vmem:[#allocation10 + $0xfa0] sm:$0xff]
    %v1733 = vld [vmem:[#allocation10 + $0xfa8] sm:$0xff]
    %v1734 = vld [vmem:[#allocation10 + $0xfb0] sm:$0xff]
    %v1735 = vld [vmem:[#allocation10 + $0xfb8] sm:$0xff]
    %v1736 = vld [vmem:[#allocation10 + $0xfc0] sm:$0xff]
    %v1737 = vld [vmem:[#allocation10 + $0xfc8] sm:$0xff]
    %v1738 = vld [vmem:[#allocation10 + $0xfd0] sm:$0xff]
    %v1739 = vld [vmem:[#allocation10 + $0xfd8] sm:$0xff]
    %v1740 = vld [vmem:[#allocation10 + $0xfe0] sm:$0xff]
    %v1741 = vld [vmem:[#allocation10 + $0xfe8] sm:$0xff]
    %v1742 = vld [vmem:[#allocation10 + $0xff0] sm:$0xff]
    %v1743 = vld [vmem:[#allocation10 + $0xff8] sm:$0xff]
    %v1744 = vld [vmem:[#allocation11] sm:$0xff]
    %v1745 = vld [vmem:[#allocation11 + $0x8] sm:$0xff]
    %v1746 = vld [vmem:[#allocation11 + $0x10] sm:$0xff]
    %v1747 = vld [vmem:[#allocation11 + $0x18] sm:$0xff]
    %v1748 = vld [vmem:[#allocation11 + $0x20] sm:$0xff]
    %v1749 = vld [vmem:[#allocation11 + $0x28] sm:$0xff]
    %v1750 = vld [vmem:[#allocation11 + $0x30] sm:$0xff]
    %v1751 = vld [vmem:[#allocation11 + $0x38] sm:$0xff]
    %v1752 = vunpack.c.l.bf16 %v1744
    %v1753 = vunpack.c.h.bf16 %v1744
    %v1754 = vunpack.c.l.bf16 %v1745
    %v1755 = vunpack.c.h.bf16 %v1745
    %v1756 = vunpack.c.l.bf16 %v1746
    %v1757 = vunpack.c.h.bf16 %v1746
    %v1758 = vunpack.c.l.bf16 %v1747
    %v1759 = vunpack.c.h.bf16 %v1747
    %v1760 = vunpack.c.l.bf16 %v1748
    %v1761 = vunpack.c.h.bf16 %v1748
    %v1762 = vunpack.c.l.bf16 %v1749
    %v1763 = vunpack.c.h.bf16 %v1749
    %v1764 = vunpack.c.l.bf16 %v1750
    %v1765 = vunpack.c.h.bf16 %v1750
    %v1766 = vunpack.c.l.bf16 %v1751
    %v1767 = vunpack.c.h.bf16 %v1751
    %v1768 = vld [vmem:[#allocation13] sm:$0xff]
    %v1769 = vld [vmem:[#allocation13 + $0x8] sm:$0xff]
    %v1770 = vld [vmem:[#allocation13 + $0x10] sm:$0xff]
    %v1771 = vld [vmem:[#allocation13 + $0x18] sm:$0xff]
    %v1772 = vld [vmem:[#allocation13 + $0x20] sm:$0xff]
    %v1773 = vld [vmem:[#allocation13 + $0x28] sm:$0xff]
    %v1774 = vld [vmem:[#allocation13 + $0x30] sm:$0xff]
    %v1775 = vld [vmem:[#allocation13 + $0x38] sm:$0xff]
    %v1776 = vunpack.c.l.bf16 %v1768
    %v1777 = vunpack.c.h.bf16 %v1768
    %v1778 = vunpack.c.l.bf16 %v1769
    %v1779 = vunpack.c.h.bf16 %v1769
    %v1780 = vunpack.c.l.bf16 %v1770
    %v1781 = vunpack.c.h.bf16 %v1770
    %v1782 = vunpack.c.l.bf16 %v1771
    %v1783 = vunpack.c.h.bf16 %v1771
    %v1784 = vunpack.c.l.bf16 %v1772
    %v1785 = vunpack.c.h.bf16 %v1772
    %v1786 = vunpack.c.l.bf16 %v1773
    %v1787 = vunpack.c.h.bf16 %v1773
    %v1788 = vunpack.c.l.bf16 %v1774
    %v1789 = vunpack.c.h.bf16 %v1774
    %v1790 = vunpack.c.l.bf16 %v1775
    %v1791 = vunpack.c.h.bf16 %v1775
    %v1792 = vmul.f32 %v192, %v192
    %v1793 = vmul.f32 %v193, %v193
    %v1794 = vmul.f32 %v194, %v194
    %v1795 = vmul.f32 %v195, %v195
    %v1796 = vmul.f32 %v196, %v196
    %v1797 = vmul.f32 %v197, %v197
    %v1798 = vmul.f32 %v198, %v198
    %v1799 = vmul.f32 %v199, %v199
    %v1800 = vmul.f32 %v200, %v200
    %v1801 = vmul.f32 %v201, %v201
    %v1802 = vmul.f32 %v202, %v202
    %v1803 = vmul.f32 %v203, %v203
    %v1804 = vmul.f32 %v204, %v204
    %v1805 = vmul.f32 %v205, %v205
    %v1806 = vmul.f32 %v206, %v206
    %v1807 = vmul.f32 %v207, %v207
    %v1808 = vadd.f32 %v1792, %v1793
    %v1809 = vadd.f32 %v1808, %v1794
    %v1810 = vadd.f32 %v1809, %v1795
    %1811 = vadd.xlane.f32.xlu0 %v1810
    %v1812 = vpop.xlane.xlu0 %1811
    %v1813 = vadd.f32 %v1796, %v1797
    %v1814 = vadd.f32 %v1813, %v1798
    %v1815 = vadd.f32 %v1814, %v1799
    %1816 = vadd.xlane.f32.xlu0 %v1815
    %v1817 = vpop.xlane.xlu0 %1816
    %v1818 = vadd.f32 %v1800, %v1801
    %v1819 = vadd.f32 %v1818, %v1802
    %v1820 = vadd.f32 %v1819, %v1803
    %1821 = vadd.xlane.f32.xlu0 %v1820
    %v1822 = vpop.xlane.xlu0 %1821
    %v1823 = vadd.f32 %v1804, %v1805
    %v1824 = vadd.f32 %v1823, %v1806
    %v1825 = vadd.f32 %v1824, %v1807
    %1826 = vadd.xlane.f32.xlu0 %v1825
    %v1827 = vpop.xlane.xlu0 %1826
    %v1828 = vmul.f32 %v1812, %v179
    %v1829 = vmul.f32 %v1817, %v179
    %v1830 = vmul.f32 %v1822, %v179
    %v1831 = vmul.f32 %v1827, %v179
    %v1832 = vadd.f32 %v1828, 1.1920929e-07
    %v1833 = vadd.f32 %v1829, 1.1920929e-07
    %v1834 = vadd.f32 %v1830, 1.1920929e-07
    %v1835 = vadd.f32 %v1831, 1.1920929e-07
    %v1836 = vrsqrt.pop %v1832
    %v1837 = vrsqrt.pop %v1833
    %v1838 = vrsqrt.pop %v1834
    %v1839 = vrsqrt.pop %v1835
    %v1840 = vmul.f32 %v192, %v1836
    %v1841 = vmul.f32 %v193, %v1836
    %v1842 = vmul.f32 %v194, %v1836
    %v1843 = vmul.f32 %v195, %v1836
    %v1844 = vmul.f32 %v196, %v1837
    %v1845 = vmul.f32 %v197, %v1837
    %v1846 = vmul.f32 %v198, %v1837
    %v1847 = vmul.f32 %v199, %v1837
    %v1848 = vmul.f32 %v200, %v1838
    %v1849 = vmul.f32 %v201, %v1838
    %v1850 = vmul.f32 %v202, %v1838
    %v1851 = vmul.f32 %v203, %v1838
    %v1852 = vmul.f32 %v204, %v1839
    %v1853 = vmul.f32 %v205, %v1839
    %v1854 = vmul.f32 %v206, %v1839
    %v1855 = vmul.f32 %v207, %v1839
    %v1856 = vpack.c.bf16 %v1844, %v1840
    %v1857 = vpack.c.bf16 %v1845, %v1841
    %v1858 = vpack.c.bf16 %v1846, %v1842
    %v1859 = vpack.c.bf16 %v1847, %v1843
    %v1860 = vpack.c.bf16 %v1852, %v1848
    %v1861 = vpack.c.bf16 %v1853, %v1849
    %v1862 = vpack.c.bf16 %v1854, %v1850
    %v1863 = vpack.c.bf16 %v1855, %v1851
    %v2248 = vunpack.c.l.b16 %v208
    %v2249 = vunpack.c.h.b16 %v208
    %v2250 = vunpack.c.l.b16 %v209
    %v2251 = vunpack.c.h.b16 %v209
    %v2252 = vunpack.c.l.b16 %v210
    %v2253 = vunpack.c.h.b16 %v210
    %v2254 = vunpack.c.l.b16 %v211
    %v2255 = vunpack.c.h.b16 %v211
    %v2256 = vunpack.c.l.b16 %v212
    %v2257 = vunpack.c.h.b16 %v212
    %v2258 = vunpack.c.l.b16 %v213
    %v2259 = vunpack.c.h.b16 %v213
    %v2260 = vunpack.c.l.b16 %v214
    %v2261 = vunpack.c.h.b16 %v214
    %v2262 = vunpack.c.l.b16 %v215
    %v2263 = vunpack.c.h.b16 %v215
    %v2264 = vunpack.c.l.b16 %v216
    %v2265 = vunpack.c.h.b16 %v216
    %v2266 = vunpack.c.l.b16 %v217
    %v2267 = vunpack.c.h.b16 %v217
    %v2268 = vunpack.c.l.b16 %v218
    %v2269 = vunpack.c.h.b16 %v218
    %v2270 = vunpack.c.l.b16 %v219
    %v2271 = vunpack.c.h.b16 %v219
    %v2272 = vunpack.c.l.b16 %v220
    %v2273 = vunpack.c.h.b16 %v220
    %v2274 = vunpack.c.l.b16 %v221
    %v2275 = vunpack.c.h.b16 %v221
    %v2276 = vunpack.c.l.b16 %v222
    %v2277 = vunpack.c.h.b16 %v222
    %v2278 = vunpack.c.l.b16 %v223
    %v2279 = vunpack.c.h.b16 %v223
    %v2280 = vunpack.c.l.b16 %v224
    %v2281 = vunpack.c.h.b16 %v224
    %v2282 = vunpack.c.l.b16 %v225
    %v2283 = vunpack.c.h.b16 %v225
    %v2284 = vunpack.c.l.b16 %v226
    %v2285 = vunpack.c.h.b16 %v226
    %v2286 = vunpack.c.l.b16 %v227
    %v2287 = vunpack.c.h.b16 %v227
    %v2288 = vunpack.c.l.b16 %v228
    %v2289 = vunpack.c.h.b16 %v228
    %v2290 = vunpack.c.l.b16 %v229
    %v2291 = vunpack.c.h.b16 %v229
    %v2292 = vunpack.c.l.b16 %v230
    %v2293 = vunpack.c.h.b16 %v230
    %v2294 = vunpack.c.l.b16 %v231
    %v2295 = vunpack.c.h.b16 %v231
    %v2296 = vunpack.c.l.b16 %v232
    %v2297 = vunpack.c.h.b16 %v232
    %v2298 = vunpack.c.l.b16 %v233
    %v2299 = vunpack.c.h.b16 %v233
    %v2300 = vunpack.c.l.b16 %v234
    %v2301 = vunpack.c.h.b16 %v234
    %v2302 = vunpack.c.l.b16 %v235
    %v2303 = vunpack.c.h.b16 %v235
    %v2304 = vunpack.c.l.b16 %v236
    %v2305 = vunpack.c.h.b16 %v236
    %v2306 = vunpack.c.l.b16 %v237
    %v2307 = vunpack.c.h.b16 %v237
    %v2308 = vunpack.c.l.b16 %v238
    %v2309 = vunpack.c.h.b16 %v238
    %v2310 = vunpack.c.l.b16 %v239
    %v2311 = vunpack.c.h.b16 %v239
    %v2312 = vunpack.c.l.b16 %v240
    %v2313 = vunpack.c.h.b16 %v240
    %v2314 = vunpack.c.l.b16 %v241
    %v2315 = vunpack.c.h.b16 %v241
    %v2316 = vunpack.c.l.b16 %v242
    %v2317 = vunpack.c.h.b16 %v242
    %v2318 = vunpack.c.l.b16 %v243
    %v2319 = vunpack.c.h.b16 %v243
    %v2320 = vunpack.c.l.b16 %v244
    %v2321 = vunpack.c.h.b16 %v244
    %v2322 = vunpack.c.l.b16 %v245
    %v2323 = vunpack.c.h.b16 %v245
    %v2324 = vunpack.c.l.b16 %v246
    %v2325 = vunpack.c.h.b16 %v246
    %v2326 = vunpack.c.l.b16 %v247
    %v2327 = vunpack.c.h.b16 %v247
    %v2328 = vunpack.c.l.b16 %v248
    %v2329 = vunpack.c.h.b16 %v248
    %v2330 = vunpack.c.l.b16 %v249
    %v2331 = vunpack.c.h.b16 %v249
    %v2332 = vunpack.c.l.b16 %v250
    %v2333 = vunpack.c.h.b16 %v250
    %v2334 = vunpack.c.l.b16 %v251
    %v2335 = vunpack.c.h.b16 %v251
    %v2336 = vunpack.c.l.b16 %v252
    %v2337 = vunpack.c.h.b16 %v252
    %v2338 = vunpack.c.l.b16 %v253
    %v2339 = vunpack.c.h.b16 %v253
    %v2340 = vunpack.c.l.b16 %v254
    %v2341 = vunpack.c.h.b16 %v254
    %v2342 = vunpack.c.l.b16 %v255
    %v2343 = vunpack.c.h.b16 %v255
    %v2344 = vunpack.c.l.b16 %v256
    %v2345 = vunpack.c.h.b16 %v256
    %v2346 = vunpack.c.l.b16 %v257
    %v2347 = vunpack.c.h.b16 %v257
    %v2348 = vunpack.c.l.b16 %v258
    %v2349 = vunpack.c.h.b16 %v258
    %v2350 = vunpack.c.l.b16 %v259
    %v2351 = vunpack.c.h.b16 %v259
    %v2352 = vunpack.c.l.b16 %v260
    %v2353 = vunpack.c.h.b16 %v260
    %v2354 = vunpack.c.l.b16 %v261
    %v2355 = vunpack.c.h.b16 %v261
    %v2356 = vunpack.c.l.b16 %v262
    %v2357 = vunpack.c.h.b16 %v262
    %v2358 = vunpack.c.l.b16 %v263
    %v2359 = vunpack.c.h.b16 %v263
    %v2360 = vunpack.c.l.b16 %v264
    %v2361 = vunpack.c.h.b16 %v264
    %v2362 = vunpack.c.l.b16 %v265
    %v2363 = vunpack.c.h.b16 %v265
    %v2364 = vunpack.c.l.b16 %v266
    %v2365 = vunpack.c.h.b16 %v266
    %v2366 = vunpack.c.l.b16 %v267
    %v2367 = vunpack.c.h.b16 %v267
    %v2368 = vunpack.c.l.b16 %v268
    %v2369 = vunpack.c.h.b16 %v268
    %v2370 = vunpack.c.l.b16 %v269
    %v2371 = vunpack.c.h.b16 %v269
    %v2372 = vunpack.c.l.b16 %v270
    %v2373 = vunpack.c.h.b16 %v270
    %v2374 = vunpack.c.l.b16 %v271
    %v2375 = vunpack.c.h.b16 %v271
    %v2376 = vunpack.c.l.b16 %v272
    %v2377 = vunpack.c.h.b16 %v272
    %v2378 = vunpack.c.l.b16 %v273
    %v2379 = vunpack.c.h.b16 %v273
    %v2380 = vunpack.c.l.b16 %v274
    %v2381 = vunpack.c.h.b16 %v274
    %v2382 = vunpack.c.l.b16 %v275
    %v2383 = vunpack.c.h.b16 %v275
    %v2384 = vunpack.c.l.b16 %v276
    %v2385 = vunpack.c.h.b16 %v276
    %v2386 = vunpack.c.l.b16 %v277
    %v2387 = vunpack.c.h.b16 %v277
    %v2388 = vunpack.c.l.b16 %v278
    %v2389 = vunpack.c.h.b16 %v278
    %v2390 = vunpack.c.l.b16 %v279
    %v2391 = vunpack.c.h.b16 %v279
    %v2392 = vunpack.c.l.b16 %v280
    %v2393 = vunpack.c.h.b16 %v280
    %v2394 = vunpack.c.l.b16 %v281
    %v2395 = vunpack.c.h.b16 %v281
    %v2396 = vunpack.c.l.b16 %v282
    %v2397 = vunpack.c.h.b16 %v282
    %v2398 = vunpack.c.l.b16 %v283
    %v2399 = vunpack.c.h.b16 %v283
    %v2400 = vunpack.c.l.b16 %v284
    %v2401 = vunpack.c.h.b16 %v284
    %v2402 = vunpack.c.l.b16 %v285
    %v2403 = vunpack.c.h.b16 %v285
    %v2404 = vunpack.c.l.b16 %v286
    %v2405 = vunpack.c.h.b16 %v286
    %v2406 = vunpack.c.l.b16 %v287
    %v2407 = vunpack.c.h.b16 %v287
    %v2408 = vunpack.c.l.b16 %v288
    %v2409 = vunpack.c.h.b16 %v288
    %v2410 = vunpack.c.l.b16 %v289
    %v2411 = vunpack.c.h.b16 %v289
    %v2412 = vunpack.c.l.b16 %v290
    %v2413 = vunpack.c.h.b16 %v290
    %v2414 = vunpack.c.l.b16 %v291
    %v2415 = vunpack.c.h.b16 %v291
    %v2416 = vunpack.c.l.b16 %v292
    %v2417 = vunpack.c.h.b16 %v292
    %v2418 = vunpack.c.l.b16 %v293
    %v2419 = vunpack.c.h.b16 %v293
    %v2420 = vunpack.c.l.b16 %v294
    %v2421 = vunpack.c.h.b16 %v294
    %v2422 = vunpack.c.l.b16 %v295
    %v2423 = vunpack.c.h.b16 %v295
    %v2424 = vunpack.c.l.b16 %v296
    %v2425 = vunpack.c.h.b16 %v296
    %v2426 = vunpack.c.l.b16 %v297
    %v2427 = vunpack.c.h.b16 %v297
    %v2428 = vunpack.c.l.b16 %v298
    %v2429 = vunpack.c.h.b16 %v298
    %v2430 = vunpack.c.l.b16 %v299
    %v2431 = vunpack.c.h.b16 %v299
    %v2432 = vunpack.c.l.b16 %v300
    %v2433 = vunpack.c.h.b16 %v300
    %v2434 = vunpack.c.l.b16 %v301
    %v2435 = vunpack.c.h.b16 %v301
    %v2436 = vunpack.c.l.b16 %v302
    %v2437 = vunpack.c.h.b16 %v302
    %v2438 = vunpack.c.l.b16 %v303
    %v2439 = vunpack.c.h.b16 %v303
    %v2440 = vunpack.c.l.b16 %v304
    %v2441 = vunpack.c.h.b16 %v304
    %v2442 = vunpack.c.l.b16 %v305
    %v2443 = vunpack.c.h.b16 %v305
    %v2444 = vunpack.c.l.b16 %v306
    %v2445 = vunpack.c.h.b16 %v306
    %v2446 = vunpack.c.l.b16 %v307
    %v2447 = vunpack.c.h.b16 %v307
    %v2448 = vunpack.c.l.b16 %v308
    %v2449 = vunpack.c.h.b16 %v308
    %v2450 = vunpack.c.l.b16 %v309
    %v2451 = vunpack.c.h.b16 %v309
    %v2452 = vunpack.c.l.b16 %v310
    %v2453 = vunpack.c.h.b16 %v310
    %v2454 = vunpack.c.l.b16 %v311
    %v2455 = vunpack.c.h.b16 %v311
    %v2456 = vunpack.c.l.b16 %v312
    %v2457 = vunpack.c.h.b16 %v312
    %v2458 = vunpack.c.l.b16 %v313
    %v2459 = vunpack.c.h.b16 %v313
    %v2460 = vunpack.c.l.b16 %v314
    %v2461 = vunpack.c.h.b16 %v314
    %v2462 = vunpack.c.l.b16 %v315
    %v2463 = vunpack.c.h.b16 %v315
    %v2464 = vunpack.c.l.b16 %v316
    %v2465 = vunpack.c.h.b16 %v316
    %v2466 = vunpack.c.l.b16 %v317
    %v2467 = vunpack.c.h.b16 %v317
    %v2468 = vunpack.c.l.b16 %v318
    %v2469 = vunpack.c.h.b16 %v318
    %v2470 = vunpack.c.l.b16 %v319
    %v2471 = vunpack.c.h.b16 %v319
    %v2472 = vunpack.c.l.b16 %v320
    %v2473 = vunpack.c.h.b16 %v320
    %v2474 = vunpack.c.l.b16 %v321
    %v2475 = vunpack.c.h.b16 %v321
    %v2476 = vunpack.c.l.b16 %v322
    %v2477 = vunpack.c.h.b16 %v322
    %v2478 = vunpack.c.l.b16 %v323
    %v2479 = vunpack.c.h.b16 %v323
    %v2480 = vunpack.c.l.b16 %v324
    %v2481 = vunpack.c.h.b16 %v324
    %v2482 = vunpack.c.l.b16 %v325
    %v2483 = vunpack.c.h.b16 %v325
    %v2484 = vunpack.c.l.b16 %v326
    %v2485 = vunpack.c.h.b16 %v326
    %v2486 = vunpack.c.l.b16 %v327
    %v2487 = vunpack.c.h.b16 %v327
    %v2488 = vunpack.c.l.b16 %v328
    %v2489 = vunpack.c.h.b16 %v328
    %v2490 = vunpack.c.l.b16 %v329
    %v2491 = vunpack.c.h.b16 %v329
    %v2492 = vunpack.c.l.b16 %v330
    %v2493 = vunpack.c.h.b16 %v330
    %v2494 = vunpack.c.l.b16 %v331
    %v2495 = vunpack.c.h.b16 %v331
    %v2496 = vunpack.c.l.b16 %v332
    %v2497 = vunpack.c.h.b16 %v332
    %v2498 = vunpack.c.l.b16 %v333
    %v2499 = vunpack.c.h.b16 %v333
    %v2500 = vunpack.c.l.b16 %v334
    %v2501 = vunpack.c.h.b16 %v334
    %v2502 = vunpack.c.l.b16 %v335
    %v2503 = vunpack.c.h.b16 %v335
    %v2504 = vunpack.c.l.b16 %v336
    %v2505 = vunpack.c.h.b16 %v336
    %v2506 = vunpack.c.l.b16 %v337
    %v2507 = vunpack.c.h.b16 %v337
    %v2508 = vunpack.c.l.b16 %v338
    %v2509 = vunpack.c.h.b16 %v338
    %v2510 = vunpack.c.l.b16 %v339
    %v2511 = vunpack.c.h.b16 %v339
    %v2512 = vunpack.c.l.b16 %v340
    %v2513 = vunpack.c.h.b16 %v340
    %v2514 = vunpack.c.l.b16 %v341
    %v2515 = vunpack.c.h.b16 %v341
    %v2516 = vunpack.c.l.b16 %v342
    %v2517 = vunpack.c.h.b16 %v342
    %v2518 = vunpack.c.l.b16 %v343
    %v2519 = vunpack.c.h.b16 %v343
    %v2520 = vunpack.c.l.b16 %v344
    %v2521 = vunpack.c.h.b16 %v344
    %v2522 = vunpack.c.l.b16 %v345
    %v2523 = vunpack.c.h.b16 %v345
    %v2524 = vunpack.c.l.b16 %v346
    %v2525 = vunpack.c.h.b16 %v346
    %v2526 = vunpack.c.l.b16 %v347
    %v2527 = vunpack.c.h.b16 %v347
    %v2528 = vunpack.c.l.b16 %v348
    %v2529 = vunpack.c.h.b16 %v348
    %v2530 = vunpack.c.l.b16 %v349
    %v2531 = vunpack.c.h.b16 %v349
    %v2532 = vunpack.c.l.b16 %v350
    %v2533 = vunpack.c.h.b16 %v350
    %v2534 = vunpack.c.l.b16 %v351
    %v2535 = vunpack.c.h.b16 %v351
    %v2536 = vunpack.c.l.b16 %v352
    %v2537 = vunpack.c.h.b16 %v352
    %v2538 = vunpack.c.l.b16 %v353
    %v2539 = vunpack.c.h.b16 %v353
    %v2540 = vunpack.c.l.b16 %v354
    %v2541 = vunpack.c.h.b16 %v354
    %v2542 = vunpack.c.l.b16 %v355
    %v2543 = vunpack.c.h.b16 %v355
    %v2544 = vunpack.c.l.b16 %v356
    %v2545 = vunpack.c.h.b16 %v356
    %v2546 = vunpack.c.l.b16 %v357
    %v2547 = vunpack.c.h.b16 %v357
    %v2548 = vunpack.c.l.b16 %v358
    %v2549 = vunpack.c.h.b16 %v358
    %v2550 = vunpack.c.l.b16 %v359
    %v2551 = vunpack.c.h.b16 %v359
    %v2552 = vunpack.c.l.b16 %v360
    %v2553 = vunpack.c.h.b16 %v360
    %v2554 = vunpack.c.l.b16 %v361
    %v2555 = vunpack.c.h.b16 %v361
    %v2556 = vunpack.c.l.b16 %v362
    %v2557 = vunpack.c.h.b16 %v362
    %v2558 = vunpack.c.l.b16 %v363
    %v2559 = vunpack.c.h.b16 %v363
    %v2560 = vunpack.c.l.b16 %v364
    %v2561 = vunpack.c.h.b16 %v364
    %v2562 = vunpack.c.l.b16 %v365
    %v2563 = vunpack.c.h.b16 %v365
    %v2564 = vunpack.c.l.b16 %v366
    %v2565 = vunpack.c.h.b16 %v366
    %v2566 = vunpack.c.l.b16 %v367
    %v2567 = vunpack.c.h.b16 %v367
    %v2568 = vunpack.c.l.b16 %v368
    %v2569 = vunpack.c.h.b16 %v368
    %v2570 = vunpack.c.l.b16 %v369
    %v2571 = vunpack.c.h.b16 %v369
    %v2572 = vunpack.c.l.b16 %v370
    %v2573 = vunpack.c.h.b16 %v370
    %v2574 = vunpack.c.l.b16 %v371
    %v2575 = vunpack.c.h.b16 %v371
    %v2576 = vunpack.c.l.b16 %v372
    %v2577 = vunpack.c.h.b16 %v372
    %v2578 = vunpack.c.l.b16 %v373
    %v2579 = vunpack.c.h.b16 %v373
    %v2580 = vunpack.c.l.b16 %v374
    %v2581 = vunpack.c.h.b16 %v374
    %v2582 = vunpack.c.l.b16 %v375
    %v2583 = vunpack.c.h.b16 %v375
    %v2584 = vunpack.c.l.b16 %v376
    %v2585 = vunpack.c.h.b16 %v376
    %v2586 = vunpack.c.l.b16 %v377
    %v2587 = vunpack.c.h.b16 %v377
    %v2588 = vunpack.c.l.b16 %v378
    %v2589 = vunpack.c.h.b16 %v378
    %v2590 = vunpack.c.l.b16 %v379
    %v2591 = vunpack.c.h.b16 %v379
    %v2592 = vunpack.c.l.b16 %v380
    %v2593 = vunpack.c.h.b16 %v380
    %v2594 = vunpack.c.l.b16 %v381
    %v2595 = vunpack.c.h.b16 %v381
    %v2596 = vunpack.c.l.b16 %v382
    %v2597 = vunpack.c.h.b16 %v382
    %v2598 = vunpack.c.l.b16 %v383
    %v2599 = vunpack.c.h.b16 %v383
    %v2600 = vunpack.c.l.b16 %v384
    %v2601 = vunpack.c.h.b16 %v384
    %v2602 = vunpack.c.l.b16 %v385
    %v2603 = vunpack.c.h.b16 %v385
    %v2604 = vunpack.c.l.b16 %v386
    %v2605 = vunpack.c.h.b16 %v386
    %v2606 = vunpack.c.l.b16 %v387
    %v2607 = vunpack.c.h.b16 %v387
    %v2608 = vunpack.c.l.b16 %v388
    %v2609 = vunpack.c.h.b16 %v388
    %v2610 = vunpack.c.l.b16 %v389
    %v2611 = vunpack.c.h.b16 %v389
    %v2612 = vunpack.c.l.b16 %v390
    %v2613 = vunpack.c.h.b16 %v390
    %v2614 = vunpack.c.l.b16 %v391
    %v2615 = vunpack.c.h.b16 %v391
    %v2616 = vunpack.c.l.b16 %v392
    %v2617 = vunpack.c.h.b16 %v392
    %v2618 = vunpack.c.l.b16 %v393
    %v2619 = vunpack.c.h.b16 %v393
    %v2620 = vunpack.c.l.b16 %v394
    %v2621 = vunpack.c.h.b16 %v394
    %v2622 = vunpack.c.l.b16 %v395
    %v2623 = vunpack.c.h.b16 %v395
    %v2624 = vunpack.c.l.b16 %v396
    %v2625 = vunpack.c.h.b16 %v396
    %v2626 = vunpack.c.l.b16 %v397
    %v2627 = vunpack.c.h.b16 %v397
    %v2628 = vunpack.c.l.b16 %v398
    %v2629 = vunpack.c.h.b16 %v398
    %v2630 = vunpack.c.l.b16 %v399
    %v2631 = vunpack.c.h.b16 %v399
    %v2632 = vunpack.c.l.b16 %v400
    %v2633 = vunpack.c.h.b16 %v400
    %v2634 = vunpack.c.l.b16 %v401
    %v2635 = vunpack.c.h.b16 %v401
    %v2636 = vunpack.c.l.b16 %v402
    %v2637 = vunpack.c.h.b16 %v402
    %v2638 = vunpack.c.l.b16 %v403
    %v2639 = vunpack.c.h.b16 %v403
    %v2640 = vunpack.c.l.b16 %v404
    %v2641 = vunpack.c.h.b16 %v404
    %v2642 = vunpack.c.l.b16 %v405
    %v2643 = vunpack.c.h.b16 %v405
    %v2644 = vunpack.c.l.b16 %v406
    %v2645 = vunpack.c.h.b16 %v406
    %v2646 = vunpack.c.l.b16 %v407
    %v2647 = vunpack.c.h.b16 %v407
    %v2648 = vunpack.c.l.b16 %v408
    %v2649 = vunpack.c.h.b16 %v408
    %v2650 = vunpack.c.l.b16 %v409
    %v2651 = vunpack.c.h.b16 %v409
    %v2652 = vunpack.c.l.b16 %v410
    %v2653 = vunpack.c.h.b16 %v410
    %v2654 = vunpack.c.l.b16 %v411
    %v2655 = vunpack.c.h.b16 %v411
    %v2656 = vunpack.c.l.b16 %v412
    %v2657 = vunpack.c.h.b16 %v412
    %v2658 = vunpack.c.l.b16 %v413
    %v2659 = vunpack.c.h.b16 %v413
    %v2660 = vunpack.c.l.b16 %v414
    %v2661 = vunpack.c.h.b16 %v414
    %v2662 = vunpack.c.l.b16 %v415
    %v2663 = vunpack.c.h.b16 %v415
    %v2664 = vunpack.c.l.b16 %v416
    %v2665 = vunpack.c.h.b16 %v416
    %v2666 = vunpack.c.l.b16 %v417
    %v2667 = vunpack.c.h.b16 %v417
    %v2668 = vunpack.c.l.b16 %v418
    %v2669 = vunpack.c.h.b16 %v418
    %v2670 = vunpack.c.l.b16 %v419
    %v2671 = vunpack.c.h.b16 %v419
    %v2672 = vunpack.c.l.b16 %v420
    %v2673 = vunpack.c.h.b16 %v420
    %v2674 = vunpack.c.l.b16 %v421
    %v2675 = vunpack.c.h.b16 %v421
    %v2676 = vunpack.c.l.b16 %v422
    %v2677 = vunpack.c.h.b16 %v422
    %v2678 = vunpack.c.l.b16 %v423
    %v2679 = vunpack.c.h.b16 %v423
    %v2680 = vunpack.c.l.b16 %v424
    %v2681 = vunpack.c.h.b16 %v424
    %v2682 = vunpack.c.l.b16 %v425
    %v2683 = vunpack.c.h.b16 %v425
    %v2684 = vunpack.c.l.b16 %v426
    %v2685 = vunpack.c.h.b16 %v426
    %v2686 = vunpack.c.l.b16 %v427
    %v2687 = vunpack.c.h.b16 %v427
    %v2688 = vunpack.c.l.b16 %v428
    %v2689 = vunpack.c.h.b16 %v428
    %v2690 = vunpack.c.l.b16 %v429
    %v2691 = vunpack.c.h.b16 %v429
    %v2692 = vunpack.c.l.b16 %v430
    %v2693 = vunpack.c.h.b16 %v430
    %v2694 = vunpack.c.l.b16 %v431
    %v2695 = vunpack.c.h.b16 %v431
    %v2696 = vunpack.c.l.b16 %v432
    %v2697 = vunpack.c.h.b16 %v432
    %v2698 = vunpack.c.l.b16 %v433
    %v2699 = vunpack.c.h.b16 %v433
    %v2700 = vunpack.c.l.b16 %v434
    %v2701 = vunpack.c.h.b16 %v434
    %v2702 = vunpack.c.l.b16 %v435
    %v2703 = vunpack.c.h.b16 %v435
    %v2704 = vunpack.c.l.b16 %v436
    %v2705 = vunpack.c.h.b16 %v436
    %v2706 = vunpack.c.l.b16 %v437
    %v2707 = vunpack.c.h.b16 %v437
    %v2708 = vunpack.c.l.b16 %v438
    %v2709 = vunpack.c.h.b16 %v438
    %v2710 = vunpack.c.l.b16 %v439
    %v2711 = vunpack.c.h.b16 %v439
    %v2712 = vunpack.c.l.b16 %v440
    %v2713 = vunpack.c.h.b16 %v440
    %v2714 = vunpack.c.l.b16 %v441
    %v2715 = vunpack.c.h.b16 %v441
    %v2716 = vunpack.c.l.b16 %v442
    %v2717 = vunpack.c.h.b16 %v442
    %v2718 = vunpack.c.l.b16 %v443
    %v2719 = vunpack.c.h.b16 %v443
    %v2720 = vunpack.c.l.b16 %v444
    %v2721 = vunpack.c.h.b16 %v444
    %v2722 = vunpack.c.l.b16 %v445
    %v2723 = vunpack.c.h.b16 %v445
    %v2724 = vunpack.c.l.b16 %v446
    %v2725 = vunpack.c.h.b16 %v446
    %v2726 = vunpack.c.l.b16 %v447
    %v2727 = vunpack.c.h.b16 %v447
    %v2728 = vunpack.c.l.b16 %v448
    %v2729 = vunpack.c.h.b16 %v448
    %v2730 = vunpack.c.l.b16 %v449
    %v2731 = vunpack.c.h.b16 %v449
    %v2732 = vunpack.c.l.b16 %v450
    %v2733 = vunpack.c.h.b16 %v450
    %v2734 = vunpack.c.l.b16 %v451
    %v2735 = vunpack.c.h.b16 %v451
    %v2736 = vunpack.c.l.b16 %v452
    %v2737 = vunpack.c.h.b16 %v452
    %v2738 = vunpack.c.l.b16 %v453
    %v2739 = vunpack.c.h.b16 %v453
    %v2740 = vunpack.c.l.b16 %v454
    %v2741 = vunpack.c.h.b16 %v454
    %v2742 = vunpack.c.l.b16 %v455
    %v2743 = vunpack.c.h.b16 %v455
    %v2744 = vunpack.c.l.b16 %v456
    %v2745 = vunpack.c.h.b16 %v456
    %v2746 = vunpack.c.l.b16 %v457
    %v2747 = vunpack.c.h.b16 %v457
    %v2748 = vunpack.c.l.b16 %v458
    %v2749 = vunpack.c.h.b16 %v458
    %v2750 = vunpack.c.l.b16 %v459
    %v2751 = vunpack.c.h.b16 %v459
    %v2752 = vunpack.c.l.b16 %v460
    %v2753 = vunpack.c.h.b16 %v460
    %v2754 = vunpack.c.l.b16 %v461
    %v2755 = vunpack.c.h.b16 %v461
    %v2756 = vunpack.c.l.b16 %v462
    %v2757 = vunpack.c.h.b16 %v462
    %v2758 = vunpack.c.l.b16 %v463
    %v2759 = vunpack.c.h.b16 %v463
    %v2760 = vunpack.c.l.b16 %v464
    %v2761 = vunpack.c.h.b16 %v464
    %v2762 = vunpack.c.l.b16 %v465
    %v2763 = vunpack.c.h.b16 %v465
    %v2764 = vunpack.c.l.b16 %v466
    %v2765 = vunpack.c.h.b16 %v466
    %v2766 = vunpack.c.l.b16 %v467
    %v2767 = vunpack.c.h.b16 %v467
    %v2768 = vunpack.c.l.b16 %v468
    %v2769 = vunpack.c.h.b16 %v468
    %v2770 = vunpack.c.l.b16 %v469
    %v2771 = vunpack.c.h.b16 %v469
    %v2772 = vunpack.c.l.b16 %v470
    %v2773 = vunpack.c.h.b16 %v470
    %v2774 = vunpack.c.l.b16 %v471
    %v2775 = vunpack.c.h.b16 %v471
    %v2776 = vunpack.c.l.b16 %v472
    %v2777 = vunpack.c.h.b16 %v472
    %v2778 = vunpack.c.l.b16 %v473
    %v2779 = vunpack.c.h.b16 %v473
    %v2780 = vunpack.c.l.b16 %v474
    %v2781 = vunpack.c.h.b16 %v474
    %v2782 = vunpack.c.l.b16 %v475
    %v2783 = vunpack.c.h.b16 %v475
    %v2784 = vunpack.c.l.b16 %v476
    %v2785 = vunpack.c.h.b16 %v476
    %v2786 = vunpack.c.l.b16 %v477
    %v2787 = vunpack.c.h.b16 %v477
    %v2788 = vunpack.c.l.b16 %v478
    %v2789 = vunpack.c.h.b16 %v478
    %v2790 = vunpack.c.l.b16 %v479
    %v2791 = vunpack.c.h.b16 %v479
    %v2792 = vunpack.c.l.b16 %v480
    %v2793 = vunpack.c.h.b16 %v480
    %v2794 = vunpack.c.l.b16 %v481
    %v2795 = vunpack.c.h.b16 %v481
    %v2796 = vunpack.c.l.b16 %v482
    %v2797 = vunpack.c.h.b16 %v482
    %v2798 = vunpack.c.l.b16 %v483
    %v2799 = vunpack.c.h.b16 %v483
    %v2800 = vunpack.c.l.b16 %v484
    %v2801 = vunpack.c.h.b16 %v484
    %v2802 = vunpack.c.l.b16 %v485
    %v2803 = vunpack.c.h.b16 %v485
    %v2804 = vunpack.c.l.b16 %v486
    %v2805 = vunpack.c.h.b16 %v486
    %v2806 = vunpack.c.l.b16 %v487
    %v2807 = vunpack.c.h.b16 %v487
    %v2808 = vunpack.c.l.b16 %v488
    %v2809 = vunpack.c.h.b16 %v488
    %v2810 = vunpack.c.l.b16 %v489
    %v2811 = vunpack.c.h.b16 %v489
    %v2812 = vunpack.c.l.b16 %v490
    %v2813 = vunpack.c.h.b16 %v490
    %v2814 = vunpack.c.l.b16 %v491
    %v2815 = vunpack.c.h.b16 %v491
    %v2816 = vunpack.c.l.b16 %v492
    %v2817 = vunpack.c.h.b16 %v492
    %v2818 = vunpack.c.l.b16 %v493
    %v2819 = vunpack.c.h.b16 %v493
    %v2820 = vunpack.c.l.b16 %v494
    %v2821 = vunpack.c.h.b16 %v494
    %v2822 = vunpack.c.l.b16 %v495
    %v2823 = vunpack.c.h.b16 %v495
    %v2824 = vunpack.c.l.b16 %v496
    %v2825 = vunpack.c.h.b16 %v496
    %v2826 = vunpack.c.l.b16 %v497
    %v2827 = vunpack.c.h.b16 %v497
    %v2828 = vunpack.c.l.b16 %v498
    %v2829 = vunpack.c.h.b16 %v498
    %v2830 = vunpack.c.l.b16 %v499
    %v2831 = vunpack.c.h.b16 %v499
    %v2832 = vunpack.c.l.b16 %v500
    %v2833 = vunpack.c.h.b16 %v500
    %v2834 = vunpack.c.l.b16 %v501
    %v2835 = vunpack.c.h.b16 %v501
    %v2836 = vunpack.c.l.b16 %v502
    %v2837 = vunpack.c.h.b16 %v502
    %v2838 = vunpack.c.l.b16 %v503
    %v2839 = vunpack.c.h.b16 %v503
    %v2840 = vunpack.c.l.b16 %v504
    %v2841 = vunpack.c.h.b16 %v504
    %v2842 = vunpack.c.l.b16 %v505
    %v2843 = vunpack.c.h.b16 %v505
    %v2844 = vunpack.c.l.b16 %v506
    %v2845 = vunpack.c.h.b16 %v506
    %v2846 = vunpack.c.l.b16 %v507
    %v2847 = vunpack.c.h.b16 %v507
    %v2848 = vunpack.c.l.b16 %v508
    %v2849 = vunpack.c.h.b16 %v508
    %v2850 = vunpack.c.l.b16 %v509
    %v2851 = vunpack.c.h.b16 %v509
    %v2852 = vunpack.c.l.b16 %v510
    %v2853 = vunpack.c.h.b16 %v510
    %v2854 = vunpack.c.l.b16 %v511
    %v2855 = vunpack.c.h.b16 %v511
    %v2856 = vunpack.c.l.b16 %v512
    %v2857 = vunpack.c.h.b16 %v512
    %v2858 = vunpack.c.l.b16 %v513
    %v2859 = vunpack.c.h.b16 %v513
    %v2860 = vunpack.c.l.b16 %v514
    %v2861 = vunpack.c.h.b16 %v514
    %v2862 = vunpack.c.l.b16 %v515
    %v2863 = vunpack.c.h.b16 %v515
    %v2864 = vunpack.c.l.b16 %v516
    %v2865 = vunpack.c.h.b16 %v516
    %v2866 = vunpack.c.l.b16 %v517
    %v2867 = vunpack.c.h.b16 %v517
    %v2868 = vunpack.c.l.b16 %v518
    %v2869 = vunpack.c.h.b16 %v518
    %v2870 = vunpack.c.l.b16 %v519
    %v2871 = vunpack.c.h.b16 %v519
    %v2872 = vunpack.c.l.b16 %v520
    %v2873 = vunpack.c.h.b16 %v520
    %v2874 = vunpack.c.l.b16 %v521
    %v2875 = vunpack.c.h.b16 %v521
    %v2876 = vunpack.c.l.b16 %v522
    %v2877 = vunpack.c.h.b16 %v522
    %v2878 = vunpack.c.l.b16 %v523
    %v2879 = vunpack.c.h.b16 %v523
    %v2880 = vunpack.c.l.b16 %v524
    %v2881 = vunpack.c.h.b16 %v524
    %v2882 = vunpack.c.l.b16 %v525
    %v2883 = vunpack.c.h.b16 %v525
    %v2884 = vunpack.c.l.b16 %v526
    %v2885 = vunpack.c.h.b16 %v526
    %v2886 = vunpack.c.l.b16 %v527
    %v2887 = vunpack.c.h.b16 %v527
    %v2888 = vunpack.c.l.b16 %v528
    %v2889 = vunpack.c.h.b16 %v528
    %v2890 = vunpack.c.l.b16 %v529
    %v2891 = vunpack.c.h.b16 %v529
    %v2892 = vunpack.c.l.b16 %v530
    %v2893 = vunpack.c.h.b16 %v530
    %v2894 = vunpack.c.l.b16 %v531
    %v2895 = vunpack.c.h.b16 %v531
    %v2896 = vunpack.c.l.b16 %v532
    %v2897 = vunpack.c.h.b16 %v532
    %v2898 = vunpack.c.l.b16 %v533
    %v2899 = vunpack.c.h.b16 %v533
    %v2900 = vunpack.c.l.b16 %v534
    %v2901 = vunpack.c.h.b16 %v534
    %v2902 = vunpack.c.l.b16 %v535
    %v2903 = vunpack.c.h.b16 %v535
    %v2904 = vunpack.c.l.b16 %v536
    %v2905 = vunpack.c.h.b16 %v536
    %v2906 = vunpack.c.l.b16 %v537
    %v2907 = vunpack.c.h.b16 %v537
    %v2908 = vunpack.c.l.b16 %v538
    %v2909 = vunpack.c.h.b16 %v538
    %v2910 = vunpack.c.l.b16 %v539
    %v2911 = vunpack.c.h.b16 %v539
    %v2912 = vunpack.c.l.b16 %v540
    %v2913 = vunpack.c.h.b16 %v540
    %v2914 = vunpack.c.l.b16 %v541
    %v2915 = vunpack.c.h.b16 %v541
    %v2916 = vunpack.c.l.b16 %v542
    %v2917 = vunpack.c.h.b16 %v542
    %v2918 = vunpack.c.l.b16 %v543
    %v2919 = vunpack.c.h.b16 %v543
    %v2920 = vunpack.c.l.b16 %v544
    %v2921 = vunpack.c.h.b16 %v544
    %v2922 = vunpack.c.l.b16 %v545
    %v2923 = vunpack.c.h.b16 %v545
    %v2924 = vunpack.c.l.b16 %v546
    %v2925 = vunpack.c.h.b16 %v546
    %v2926 = vunpack.c.l.b16 %v547
    %v2927 = vunpack.c.h.b16 %v547
    %v2928 = vunpack.c.l.b16 %v548
    %v2929 = vunpack.c.h.b16 %v548
    %v2930 = vunpack.c.l.b16 %v549
    %v2931 = vunpack.c.h.b16 %v549
    %v2932 = vunpack.c.l.b16 %v550
    %v2933 = vunpack.c.h.b16 %v550
    %v2934 = vunpack.c.l.b16 %v551
    %v2935 = vunpack.c.h.b16 %v551
    %v2936 = vunpack.c.l.b16 %v552
    %v2937 = vunpack.c.h.b16 %v552
    %v2938 = vunpack.c.l.b16 %v553
    %v2939 = vunpack.c.h.b16 %v553
    %v2940 = vunpack.c.l.b16 %v554
    %v2941 = vunpack.c.h.b16 %v554
    %v2942 = vunpack.c.l.b16 %v555
    %v2943 = vunpack.c.h.b16 %v555
    %v2944 = vunpack.c.l.b16 %v556
    %v2945 = vunpack.c.h.b16 %v556
    %v2946 = vunpack.c.l.b16 %v557
    %v2947 = vunpack.c.h.b16 %v557
    %v2948 = vunpack.c.l.b16 %v558
    %v2949 = vunpack.c.h.b16 %v558
    %v2950 = vunpack.c.l.b16 %v559
    %v2951 = vunpack.c.h.b16 %v559
    %v2952 = vunpack.c.l.b16 %v560
    %v2953 = vunpack.c.h.b16 %v560
    %v2954 = vunpack.c.l.b16 %v561
    %v2955 = vunpack.c.h.b16 %v561
    %v2956 = vunpack.c.l.b16 %v562
    %v2957 = vunpack.c.h.b16 %v562
    %v2958 = vunpack.c.l.b16 %v563
    %v2959 = vunpack.c.h.b16 %v563
    %v2960 = vunpack.c.l.b16 %v564
    %v2961 = vunpack.c.h.b16 %v564
    %v2962 = vunpack.c.l.b16 %v565
    %v2963 = vunpack.c.h.b16 %v565
    %v2964 = vunpack.c.l.b16 %v566
    %v2965 = vunpack.c.h.b16 %v566
    %v2966 = vunpack.c.l.b16 %v567
    %v2967 = vunpack.c.h.b16 %v567
    %v2968 = vunpack.c.l.b16 %v568
    %v2969 = vunpack.c.h.b16 %v568
    %v2970 = vunpack.c.l.b16 %v569
    %v2971 = vunpack.c.h.b16 %v569
    %v2972 = vunpack.c.l.b16 %v570
    %v2973 = vunpack.c.h.b16 %v570
    %v2974 = vunpack.c.l.b16 %v571
    %v2975 = vunpack.c.h.b16 %v571
    %v2976 = vunpack.c.l.b16 %v572
    %v2977 = vunpack.c.h.b16 %v572
    %v2978 = vunpack.c.l.b16 %v573
    %v2979 = vunpack.c.h.b16 %v573
    %v2980 = vunpack.c.l.b16 %v574
    %v2981 = vunpack.c.h.b16 %v574
    %v2982 = vunpack.c.l.b16 %v575
    %v2983 = vunpack.c.h.b16 %v575
    %v2984 = vunpack.c.l.b16 %v576
    %v2985 = vunpack.c.h.b16 %v576
    %v2986 = vunpack.c.l.b16 %v577
    %v2987 = vunpack.c.h.b16 %v577
    %v2988 = vunpack.c.l.b16 %v578
    %v2989 = vunpack.c.h.b16 %v578
    %v2990 = vunpack.c.l.b16 %v579
    %v2991 = vunpack.c.h.b16 %v579
    %v2992 = vunpack.c.l.b16 %v580
    %v2993 = vunpack.c.h.b16 %v580
    %v2994 = vunpack.c.l.b16 %v581
    %v2995 = vunpack.c.h.b16 %v581
    %v2996 = vunpack.c.l.b16 %v582
    %v2997 = vunpack.c.h.b16 %v582
    %v2998 = vunpack.c.l.b16 %v583
    %v2999 = vunpack.c.h.b16 %v583
    %v3000 = vunpack.c.l.b16 %v584
    %v3001 = vunpack.c.h.b16 %v584
    %v3002 = vunpack.c.l.b16 %v585
    %v3003 = vunpack.c.h.b16 %v585
    %v3004 = vunpack.c.l.b16 %v586
    %v3005 = vunpack.c.h.b16 %v586
    %v3006 = vunpack.c.l.b16 %v587
    %v3007 = vunpack.c.h.b16 %v587
    %v3008 = vunpack.c.l.b16 %v588
    %v3009 = vunpack.c.h.b16 %v588
    %v3010 = vunpack.c.l.b16 %v589
    %v3011 = vunpack.c.h.b16 %v589
    %v3012 = vunpack.c.l.b16 %v590
    %v3013 = vunpack.c.h.b16 %v590
    %v3014 = vunpack.c.l.b16 %v591
    %v3015 = vunpack.c.h.b16 %v591
    %v3016 = vpack.c.b16 %v2260, %v2248
    %v3017 = vpack.c.b16 %v2261, %v2249
    %v3018 = vpack.c.b16 %v2262, %v2250
    %v3019 = vpack.c.b16 %v2263, %v2251
    %v3020 = vpack.c.b16 %v2264, %v2252
    %v3021 = vpack.c.b16 %v2265, %v2253
    %v3022 = vpack.c.b16 %v2266, %v2254
    %v3023 = vpack.c.b16 %v2267, %v2255
    %v3024 = vpack.c.b16 %v2268, %v2256
    %v3025 = vpack.c.b16 %v2269, %v2257
    %v3026 = vpack.c.b16 %v2270, %v2258
    %v3027 = vpack.c.b16 %v2271, %v2259
    %v3028 = vpack.c.b16 %v2284, %v2272
    %v3029 = vpack.c.b16 %v2285, %v2273
    %v3030 = vpack.c.b16 %v2286, %v2274
    %v3031 = vpack.c.b16 %v2287, %v2275
    %v3032 = vpack.c.b16 %v2288, %v2276
    %v3033 = vpack.c.b16 %v2289, %v2277
    %v3034 = vpack.c.b16 %v2290, %v2278
    %v3035 = vpack.c.b16 %v2291, %v2279
    %v3036 = vpack.c.b16 %v2292, %v2280
    %v3037 = vpack.c.b16 %v2293, %v2281
    %v3038 = vpack.c.b16 %v2294, %v2282
    %v3039 = vpack.c.b16 %v2295, %v2283
    %v3040 = vpack.c.b16 %v2308, %v2296
    %v3041 = vpack.c.b16 %v2309, %v2297
    %v3042 = vpack.c.b16 %v2310, %v2298
    %v3043 = vpack.c.b16 %v2311, %v2299
    %v3044 = vpack.c.b16 %v2312, %v2300
    %v3045 = vpack.c.b16 %v2313, %v2301
    %v3046 = vpack.c.b16 %v2314, %v2302
    %v3047 = vpack.c.b16 %v2315, %v2303
    %v3048 = vpack.c.b16 %v2316, %v2304
    %v3049 = vpack.c.b16 %v2317, %v2305
    %v3050 = vpack.c.b16 %v2318, %v2306
    %v3051 = vpack.c.b16 %v2319, %v2307
    %v3052 = vpack.c.b16 %v2332, %v2320
    %v3053 = vpack.c.b16 %v2333, %v2321
    %v3054 = vpack.c.b16 %v2334, %v2322
    %v3055 = vpack.c.b16 %v2335, %v2323
    %v3056 = vpack.c.b16 %v2336, %v2324
    %v3057 = vpack.c.b16 %v2337, %v2325
    %v3058 = vpack.c.b16 %v2338, %v2326
    %v3059 = vpack.c.b16 %v2339, %v2327
    %v3060 = vpack.c.b16 %v2340, %v2328
    %v3061 = vpack.c.b16 %v2341, %v2329
    %v3062 = vpack.c.b16 %v2342, %v2330
    %v3063 = vpack.c.b16 %v2343, %v2331
    %v3064 = vpack.c.b16 %v2356, %v2344
    %v3065 = vpack.c.b16 %v2357, %v2345
    %v3066 = vpack.c.b16 %v2358, %v2346
    %v3067 = vpack.c.b16 %v2359, %v2347
    %v3068 = vpack.c.b16 %v2360, %v2348
    %v3069 = vpack.c.b16 %v2361, %v2349
    %v3070 = vpack.c.b16 %v2362, %v2350
    %v3071 = vpack.c.b16 %v2363, %v2351
    %v3072 = vpack.c.b16 %v2364, %v2352
    %v3073 = vpack.c.b16 %v2365, %v2353
    %v3074 = vpack.c.b16 %v2366, %v2354
    %v3075 = vpack.c.b16 %v2367, %v2355
    %v3076 = vpack.c.b16 %v2380, %v2368
    %v3077 = vpack.c.b16 %v2381, %v2369
    %v3078 = vpack.c.b16 %v2382, %v2370
    %v3079 = vpack.c.b16 %v2383, %v2371
    %v3080 = vpack.c.b16 %v2384, %v2372
    %v3081 = vpack.c.b16 %v2385, %v2373
    %v3082 = vpack.c.b16 %v2386, %v2374
    %v3083 = vpack.c.b16 %v2387, %v2375
    %v3084 = vpack.c.b16 %v2388, %v2376
    %v3085 = vpack.c.b16 %v2389, %v2377
    %v3086 = vpack.c.b16 %v2390, %v2378
    %v3087 = vpack.c.b16 %v2391, %v2379
    %v3088 = vpack.c.b16 %v2404, %v2392
    %v3089 = vpack.c.b16 %v2405, %v2393
    %v3090 = vpack.c.b16 %v2406, %v2394
    %v3091 = vpack.c.b16 %v2407, %v2395
    %v3092 = vpack.c.b16 %v2408, %v2396
    %v3093 = vpack.c.b16 %v2409, %v2397
    %v3094 = vpack.c.b16 %v2410, %v2398
    %v3095 = vpack.c.b16 %v2411, %v2399
    %v3096 = vpack.c.b16 %v2412, %v2400
    %v3097 = vpack.c.b16 %v2413, %v2401
    %v3098 = vpack.c.b16 %v2414, %v2402
    %v3099 = vpack.c.b16 %v2415, %v2403
    %v3100 = vpack.c.b16 %v2428, %v2416
    %v3101 = vpack.c.b16 %v2429, %v2417
    %v3102 = vpack.c.b16 %v2430, %v2418
    %v3103 = vpack.c.b16 %v2431, %v2419
    %v3104 = vpack.c.b16 %v2432, %v2420
    %v3105 = vpack.c.b16 %v2433, %v2421
    %v3106 = vpack.c.b16 %v2434, %v2422
    %v3107 = vpack.c.b16 %v2435, %v2423
    %v3108 = vpack.c.b16 %v2436, %v2424
    %v3109 = vpack.c.b16 %v2437, %v2425
    %v3110 = vpack.c.b16 %v2438, %v2426
    %v3111 = vpack.c.b16 %v2439, %v2427
    %v3112 = vpack.c.b16 %v2452, %v2440
    %v3113 = vpack.c.b16 %v2453, %v2441
    %v3114 = vpack.c.b16 %v2454, %v2442
    %v3115 = vpack.c.b16 %v2455, %v2443
    %v3116 = vpack.c.b16 %v2456, %v2444
    %v3117 = vpack.c.b16 %v2457, %v2445
    %v3118 = vpack.c.b16 %v2458, %v2446
    %v3119 = vpack.c.b16 %v2459, %v2447
    %v3120 = vpack.c.b16 %v2460, %v2448
    %v3121 = vpack.c.b16 %v2461, %v2449
    %v3122 = vpack.c.b16 %v2462, %v2450
    %v3123 = vpack.c.b16 %v2463, %v2451
    %v3124 = vpack.c.b16 %v2476, %v2464
    %v3125 = vpack.c.b16 %v2477, %v2465
    %v3126 = vpack.c.b16 %v2478, %v2466
    %v3127 = vpack.c.b16 %v2479, %v2467
    %v3128 = vpack.c.b16 %v2480, %v2468
    %v3129 = vpack.c.b16 %v2481, %v2469
    %v3130 = vpack.c.b16 %v2482, %v2470
    %v3131 = vpack.c.b16 %v2483, %v2471
    %v3132 = vpack.c.b16 %v2484, %v2472
    %v3133 = vpack.c.b16 %v2485, %v2473
    %v3134 = vpack.c.b16 %v2486, %v2474
    %v3135 = vpack.c.b16 %v2487, %v2475
    %v3136 = vpack.c.b16 %v2500, %v2488
    %v3137 = vpack.c.b16 %v2501, %v2489
    %v3138 = vpack.c.b16 %v2502, %v2490
    %v3139 = vpack.c.b16 %v2503, %v2491
    %v3140 = vpack.c.b16 %v2504, %v2492
    %v3141 = vpack.c.b16 %v2505, %v2493
    %v3142 = vpack.c.b16 %v2506, %v2494
    %v3143 = vpack.c.b16 %v2507, %v2495
    %v3144 = vpack.c.b16 %v2508, %v2496
    %v3145 = vpack.c.b16 %v2509, %v2497
    %v3146 = vpack.c.b16 %v2510, %v2498
    %v3147 = vpack.c.b16 %v2511, %v2499
    %v3148 = vpack.c.b16 %v2524, %v2512
    %v3149 = vpack.c.b16 %v2525, %v2513
    %v3150 = vpack.c.b16 %v2526, %v2514
    %v3151 = vpack.c.b16 %v2527, %v2515
    %v3152 = vpack.c.b16 %v2528, %v2516
    %v3153 = vpack.c.b16 %v2529, %v2517
    %v3154 = vpack.c.b16 %v2530, %v2518
    %v3155 = vpack.c.b16 %v2531, %v2519
    %v3156 = vpack.c.b16 %v2532, %v2520
    %v3157 = vpack.c.b16 %v2533, %v2521
    %v3158 = vpack.c.b16 %v2534, %v2522
    %v3159 = vpack.c.b16 %v2535, %v2523
    %v3160 = vpack.c.b16 %v2548, %v2536
    %v3161 = vpack.c.b16 %v2549, %v2537
    %v3162 = vpack.c.b16 %v2550, %v2538
    %v3163 = vpack.c.b16 %v2551, %v2539
    %v3164 = vpack.c.b16 %v2552, %v2540
    %v3165 = vpack.c.b16 %v2553, %v2541
    %v3166 = vpack.c.b16 %v2554, %v2542
    %v3167 = vpack.c.b16 %v2555, %v2543
    %v3168 = vpack.c.b16 %v2556, %v2544
    %v3169 = vpack.c.b16 %v2557, %v2545
    %v3170 = vpack.c.b16 %v2558, %v2546
    %v3171 = vpack.c.b16 %v2559, %v2547
    %v3172 = vpack.c.b16 %v2572, %v2560
    %v3173 = vpack.c.b16 %v2573, %v2561
    %v3174 = vpack.c.b16 %v2574, %v2562
    %v3175 = vpack.c.b16 %v2575, %v2563
    %v3176 = vpack.c.b16 %v2576, %v2564
    %v3177 = vpack.c.b16 %v2577, %v2565
    %v3178 = vpack.c.b16 %v2578, %v2566
    %v3179 = vpack.c.b16 %v2579, %v2567
    %v3180 = vpack.c.b16 %v2580, %v2568
    %v3181 = vpack.c.b16 %v2581, %v2569
    %v3182 = vpack.c.b16 %v2582, %v2570
    %v3183 = vpack.c.b16 %v2583, %v2571
    %v3184 = vpack.c.b16 %v2596, %v2584
    %v3185 = vpack.c.b16 %v2597, %v2585
    %v3186 = vpack.c.b16 %v2598, %v2586
    %v3187 = vpack.c.b16 %v2599, %v2587
    %v3188 = vpack.c.b16 %v2600, %v2588
    %v3189 = vpack.c.b16 %v2601, %v2589
    %v3190 = vpack.c.b16 %v2602, %v2590
    %v3191 = vpack.c.b16 %v2603, %v2591
    %v3192 = vpack.c.b16 %v2604, %v2592
    %v3193 = vpack.c.b16 %v2605, %v2593
    %v3194 = vpack.c.b16 %v2606, %v2594
    %v3195 = vpack.c.b16 %v2607, %v2595
    %v3196 = vpack.c.b16 %v2620, %v2608
    %v3197 = vpack.c.b16 %v2621, %v2609
    %v3198 = vpack.c.b16 %v2622, %v2610
    %v3199 = vpack.c.b16 %v2623, %v2611
    %v3200 = vpack.c.b16 %v2624, %v2612
    %v3201 = vpack.c.b16 %v2625, %v2613
    %v3202 = vpack.c.b16 %v2626, %v2614
    %v3203 = vpack.c.b16 %v2627, %v2615
    %v3204 = vpack.c.b16 %v2628, %v2616
    %v3205 = vpack.c.b16 %v2629, %v2617
    %v3206 = vpack.c.b16 %v2630, %v2618
    %v3207 = vpack.c.b16 %v2631, %v2619
    %v3208 = vpack.c.b16 %v2644, %v2632
    %v3209 = vpack.c.b16 %v2645, %v2633
    %v3210 = vpack.c.b16 %v2646, %v2634
    %v3211 = vpack.c.b16 %v2647, %v2635
    %v3212 = vpack.c.b16 %v2648, %v2636
    %v3213 = vpack.c.b16 %v2649, %v2637
    %v3214 = vpack.c.b16 %v2650, %v2638
    %v3215 = vpack.c.b16 %v2651, %v2639
    %v3216 = vpack.c.b16 %v2652, %v2640
    %v3217 = vpack.c.b16 %v2653, %v2641
    %v3218 = vpack.c.b16 %v2654, %v2642
    %v3219 = vpack.c.b16 %v2655, %v2643
    %v3220 = vpack.c.b16 %v2668, %v2656
    %v3221 = vpack.c.b16 %v2669, %v2657
    %v3222 = vpack.c.b16 %v2670, %v2658
    %v3223 = vpack.c.b16 %v2671, %v2659
    %v3224 = vpack.c.b16 %v2672, %v2660
    %v3225 = vpack.c.b16 %v2673, %v2661
    %v3226 = vpack.c.b16 %v2674, %v2662
    %v3227 = vpack.c.b16 %v2675, %v2663
    %v3228 = vpack.c.b16 %v2676, %v2664
    %v3229 = vpack.c.b16 %v2677, %v2665
    %v3230 = vpack.c.b16 %v2678, %v2666
    %v3231 = vpack.c.b16 %v2679, %v2667
    %v3232 = vpack.c.b16 %v2692, %v2680
    %v3233 = vpack.c.b16 %v2693, %v2681
    %v3234 = vpack.c.b16 %v2694, %v2682
    %v3235 = vpack.c.b16 %v2695, %v2683
    %v3236 = vpack.c.b16 %v2696, %v2684
    %v3237 = vpack.c.b16 %v2697, %v2685
    %v3238 = vpack.c.b16 %v2698, %v2686
    %v3239 = vpack.c.b16 %v2699, %v2687
    %v3240 = vpack.c.b16 %v2700, %v2688
    %v3241 = vpack.c.b16 %v2701, %v2689
    %v3242 = vpack.c.b16 %v2702, %v2690
    %v3243 = vpack.c.b16 %v2703, %v2691
    %v3244 = vpack.c.b16 %v2716, %v2704
    %v3245 = vpack.c.b16 %v2717, %v2705
    %v3246 = vpack.c.b16 %v2718, %v2706
    %v3247 = vpack.c.b16 %v2719, %v2707
    %v3248 = vpack.c.b16 %v2720, %v2708
    %v3249 = vpack.c.b16 %v2721, %v2709
    %v3250 = vpack.c.b16 %v2722, %v2710
    %v3251 = vpack.c.b16 %v2723, %v2711
    %v3252 = vpack.c.b16 %v2724, %v2712
    %v3253 = vpack.c.b16 %v2725, %v2713
    %v3254 = vpack.c.b16 %v2726, %v2714
    %v3255 = vpack.c.b16 %v2727, %v2715
    %v3256 = vpack.c.b16 %v2740, %v2728
    %v3257 = vpack.c.b16 %v2741, %v2729
    %v3258 = vpack.c.b16 %v2742, %v2730
    %v3259 = vpack.c.b16 %v2743, %v2731
    %v3260 = vpack.c.b16 %v2744, %v2732
    %v3261 = vpack.c.b16 %v2745, %v2733
    %v3262 = vpack.c.b16 %v2746, %v2734
    %v3263 = vpack.c.b16 %v2747, %v2735
    %v3264 = vpack.c.b16 %v2748, %v2736
    %v3265 = vpack.c.b16 %v2749, %v2737
    %v3266 = vpack.c.b16 %v2750, %v2738
    %v3267 = vpack.c.b16 %v2751, %v2739
    %v3268 = vpack.c.b16 %v2764, %v2752
    %v3269 = vpack.c.b16 %v2765, %v2753
    %v3270 = vpack.c.b16 %v2766, %v2754
    %v3271 = vpack.c.b16 %v2767, %v2755
    %v3272 = vpack.c.b16 %v2768, %v2756
    %v3273 = vpack.c.b16 %v2769, %v2757
    %v3274 = vpack.c.b16 %v2770, %v2758
    %v3275 = vpack.c.b16 %v2771, %v2759
    %v3276 = vpack.c.b16 %v2772, %v2760
    %v3277 = vpack.c.b16 %v2773, %v2761
    %v3278 = vpack.c.b16 %v2774, %v2762
    %v3279 = vpack.c.b16 %v2775, %v2763
    %v3280 = vpack.c.b16 %v2788, %v2776
    %v3281 = vpack.c.b16 %v2789, %v2777
    %v3282 = vpack.c.b16 %v2790, %v2778
    %v3283 = vpack.c.b16 %v2791, %v2779
    %v3284 = vpack.c.b16 %v2792, %v2780
    %v3285 = vpack.c.b16 %v2793, %v2781
    %v3286 = vpack.c.b16 %v2794, %v2782
    %v3287 = vpack.c.b16 %v2795, %v2783
    %v3288 = vpack.c.b16 %v2796, %v2784
    %v3289 = vpack.c.b16 %v2797, %v2785
    %v3290 = vpack.c.b16 %v2798, %v2786
    %v3291 = vpack.c.b16 %v2799, %v2787
    %v3292 = vpack.c.b16 %v2812, %v2800
    %v3293 = vpack.c.b16 %v2813, %v2801
    %v3294 = vpack.c.b16 %v2814, %v2802
    %v3295 = vpack.c.b16 %v2815, %v2803
    %v3296 = vpack.c.b16 %v2816, %v2804
    %v3297 = vpack.c.b16 %v2817, %v2805
    %v3298 = vpack.c.b16 %v2818, %v2806
    %v3299 = vpack.c.b16 %v2819, %v2807
    %v3300 = vpack.c.b16 %v2820, %v2808
    %v3301 = vpack.c.b16 %v2821, %v2809
    %v3302 = vpack.c.b16 %v2822, %v2810
    %v3303 = vpack.c.b16 %v2823, %v2811
    %v3304 = vpack.c.b16 %v2836, %v2824
    %v3305 = vpack.c.b16 %v2837, %v2825
    %v3306 = vpack.c.b16 %v2838, %v2826
    %v3307 = vpack.c.b16 %v2839, %v2827
    %v3308 = vpack.c.b16 %v2840, %v2828
    %v3309 = vpack.c.b16 %v2841, %v2829
    %v3310 = vpack.c.b16 %v2842, %v2830
    %v3311 = vpack.c.b16 %v2843, %v2831
    %v3312 = vpack.c.b16 %v2844, %v2832
    %v3313 = vpack.c.b16 %v2845, %v2833
    %v3314 = vpack.c.b16 %v2846, %v2834
    %v3315 = vpack.c.b16 %v2847, %v2835
    %v3316 = vpack.c.b16 %v2860, %v2848
    %v3317 = vpack.c.b16 %v2861, %v2849
    %v3318 = vpack.c.b16 %v2862, %v2850
    %v3319 = vpack.c.b16 %v2863, %v2851
    %v3320 = vpack.c.b16 %v2864, %v2852
    %v3321 = vpack.c.b16 %v2865, %v2853
    %v3322 = vpack.c.b16 %v2866, %v2854
    %v3323 = vpack.c.b16 %v2867, %v2855
    %v3324 = vpack.c.b16 %v2868, %v2856
    %v3325 = vpack.c.b16 %v2869, %v2857
    %v3326 = vpack.c.b16 %v2870, %v2858
    %v3327 = vpack.c.b16 %v2871, %v2859
    %v3328 = vpack.c.b16 %v2884, %v2872
    %v3329 = vpack.c.b16 %v2885, %v2873
    %v3330 = vpack.c.b16 %v2886, %v2874
    %v3331 = vpack.c.b16 %v2887, %v2875
    %v3332 = vpack.c.b16 %v2888, %v2876
    %v3333 = vpack.c.b16 %v2889, %v2877
    %v3334 = vpack.c.b16 %v2890, %v2878
    %v3335 = vpack.c.b16 %v2891, %v2879
    %v3336 = vpack.c.b16 %v2892, %v2880
    %v3337 = vpack.c.b16 %v2893, %v2881
    %v3338 = vpack.c.b16 %v2894, %v2882
    %v3339 = vpack.c.b16 %v2895, %v2883
    %v3340 = vpack.c.b16 %v2908, %v2896
    %v3341 = vpack.c.b16 %v2909, %v2897
    %v3342 = vpack.c.b16 %v2910, %v2898
    %v3343 = vpack.c.b16 %v2911, %v2899
    %v3344 = vpack.c.b16 %v2912, %v2900
    %v3345 = vpack.c.b16 %v2913, %v2901
    %v3346 = vpack.c.b16 %v2914, %v2902
    %v3347 = vpack.c.b16 %v2915, %v2903
    %v3348 = vpack.c.b16 %v2916, %v2904
    %v3349 = vpack.c.b16 %v2917, %v2905
    %v3350 = vpack.c.b16 %v2918, %v2906
    %v3351 = vpack.c.b16 %v2919, %v2907
    %v3352 = vpack.c.b16 %v2932, %v2920
    %v3353 = vpack.c.b16 %v2933, %v2921
    %v3354 = vpack.c.b16 %v2934, %v2922
    %v3355 = vpack.c.b16 %v2935, %v2923
    %v3356 = vpack.c.b16 %v2936, %v2924
    %v3357 = vpack.c.b16 %v2937, %v2925
    %v3358 = vpack.c.b16 %v2938, %v2926
    %v3359 = vpack.c.b16 %v2939, %v2927
    %v3360 = vpack.c.b16 %v2940, %v2928
    %v3361 = vpack.c.b16 %v2941, %v2929
    %v3362 = vpack.c.b16 %v2942, %v2930
    %v3363 = vpack.c.b16 %v2943, %v2931
    %v3364 = vpack.c.b16 %v2956, %v2944
    %v3365 = vpack.c.b16 %v2957, %v2945
    %v3366 = vpack.c.b16 %v2958, %v2946
    %v3367 = vpack.c.b16 %v2959, %v2947
    %v3368 = vpack.c.b16 %v2960, %v2948
    %v3369 = vpack.c.b16 %v2961, %v2949
    %v3370 = vpack.c.b16 %v2962, %v2950
    %v3371 = vpack.c.b16 %v2963, %v2951
    %v3372 = vpack.c.b16 %v2964, %v2952
    %v3373 = vpack.c.b16 %v2965, %v2953
    %v3374 = vpack.c.b16 %v2966, %v2954
    %v3375 = vpack.c.b16 %v2967, %v2955
    %v3376 = vpack.c.b16 %v2980, %v2968
    %v3377 = vpack.c.b16 %v2981, %v2969
    %v3378 = vpack.c.b16 %v2982, %v2970
    %v3379 = vpack.c.b16 %v2983, %v2971
    %v3380 = vpack.c.b16 %v2984, %v2972
    %v3381 = vpack.c.b16 %v2985, %v2973
    %v3382 = vpack.c.b16 %v2986, %v2974
    %v3383 = vpack.c.b16 %v2987, %v2975
    %v3384 = vpack.c.b16 %v2988, %v2976
    %v3385 = vpack.c.b16 %v2989, %v2977
    %v3386 = vpack.c.b16 %v2990, %v2978
    %v3387 = vpack.c.b16 %v2991, %v2979
    %v3388 = vpack.c.b16 %v3004, %v2992
    %v3389 = vpack.c.b16 %v3005, %v2993
    %v3390 = vpack.c.b16 %v3006, %v2994
    %v3391 = vpack.c.b16 %v3007, %v2995
    %v3392 = vpack.c.b16 %v3008, %v2996
    %v3393 = vpack.c.b16 %v3009, %v2997
    %v3394 = vpack.c.b16 %v3010, %v2998
    %v3395 = vpack.c.b16 %v3011, %v2999
    %v3396 = vpack.c.b16 %v3012, %v3000
    %v3397 = vpack.c.b16 %v3013, %v3001
    %v3398 = vpack.c.b16 %v3014, %v3002
    %v3399 = vpack.c.b16 %v3015, %v3003
    %3784 = vmatprep.subr.bf16.mxu0 %v3101
    %3785 = vmatpush1.bf16.msra.mxu0 %v3100
    %3786 = vmatprep.subr.bf16.mxu0 %v3089
    %3787 = vmatpush1.bf16.msra.mxu0 %v3088
    %3788 = vmatprep.subr.bf16.mxu0 %v3077
    %3789 = vmatpush1.bf16.msra.mxu0 %v3076
    %3790 = vmatprep.subr.bf16.mxu0 %v3065
    %3791 = vmatpush1.bf16.msra.mxu0 %v3064
    %3792 = vmatprep.subr.bf16.mxu0 %v3053
    %3793 = vmatpush1.bf16.msra.mxu0 %v3052
    %3794 = vmatprep.subr.bf16.mxu0 %v3041
    %3795 = vmatpush1.bf16.msra.mxu0 %v3040
    %3796 = vmatprep.subr.bf16.mxu0 %v3029
    %3797 = vmatpush1.bf16.msra.mxu0 %v3028
    %3798 = vmatprep.subr.bf16.mxu0 %v3017
    %3799 = vmatpush1.bf16.msra.mxu0 %v3016
    %3800 = vmatprep.subr.bf16.mxu0 %v3197
    %3801 = vmatpush2.bf16.msra.mxu0 %v3196
    %3802 = vmatprep.subr.bf16.mxu0 %v3185
    %3803 = vmatpush2.bf16.msra.mxu0 %v3184
    %3804 = vmatprep.subr.bf16.mxu0 %v3173
    %3805 = vmatpush2.bf16.msra.mxu0 %v3172
    %3806 = vmatprep.subr.bf16.mxu0 %v3161
    %3807 = vmatpush2.bf16.msra.mxu0 %v3160
    %3808 = vmatprep.subr.bf16.mxu0 %v3149
    %3809 = vmatpush2.bf16.msra.mxu0 %v3148
    %3810 = vmatprep.subr.bf16.mxu0 %v3137
    %3811 = vmatpush2.bf16.msra.mxu0 %v3136
    %3812 = vmatprep.subr.bf16.mxu0 %v3125
    %3813 = vmatpush2.bf16.msra.mxu0 %v3124
    %3814 = vmatprep.subr.bf16.mxu0 %v3113
    %3815 = vmatpush2.bf16.msra.mxu0 %v3112
    %3816 = vmatprep.mubr.bf16.mxu0 %v1857
    %3817 = vmatmul.mubr.bf16.gmra.mxu0 %v1856
    %v3818 = vpop.f32.mrf.mxu0
    %v3819 = vadd.f32 0.0, %v3818
    %v3820 = vpop.f32.mrf.mxu0
    %v3821 = vadd.f32 0.0, %v3820
    %v3822 = vpop.f32.mrf.mxu0
    %v3823 = vadd.f32 0.0, %v3822
    %v3824 = vpop.f32.mrf.mxu0
    %v3825 = vadd.f32 0.0, %v3824
    %3826 = vmatprep.mubr.bf16.mxu0 %v1861
    %3827 = vmatmul.mubr.bf16.gmra.mxu0 %v1860
    %v3828 = vpop.f32.mrf.mxu0
    %v3829 = vadd.f32 0.0, %v3828
    %v3830 = vpop.f32.mrf.mxu0
    %v3831 = vadd.f32 0.0, %v3830
    %v3832 = vpop.f32.mrf.mxu0
    %v3833 = vadd.f32 0.0, %v3832
    %v3834 = vpop.f32.mrf.mxu0
    %v3835 = vadd.f32 0.0, %v3834
    %3836 = vdwg.mxu0
    %3837 = vmatprep.subr.bf16.mxu0 %v3293
    %3838 = vmatpush1.bf16.msra.mxu0 %v3292
    %3839 = vmatprep.subr.bf16.mxu0 %v3281
    %3840 = vmatpush1.bf16.msra.mxu0 %v3280
    %3841 = vmatprep.subr.bf16.mxu0 %v3269
    %3842 = vmatpush1.bf16.msra.mxu0 %v3268
    %3843 = vmatprep.subr.bf16.mxu0 %v3257
    %3844 = vmatpush1.bf16.msra.mxu0 %v3256
    %3845 = vmatprep.subr.bf16.mxu0 %v3245
    %3846 = vmatpush1.bf16.msra.mxu0 %v3244
    %3847 = vmatprep.subr.bf16.mxu0 %v3233
    %3848 = vmatpush1.bf16.msra.mxu0 %v3232
    %3849 = vmatprep.subr.bf16.mxu0 %v3221
    %3850 = vmatpush1.bf16.msra.mxu0 %v3220
    %3851 = vmatprep.subr.bf16.mxu0 %v3209
    %3852 = vmatpush1.bf16.msra.mxu0 %v3208
    %3853 = vmatprep.subr.bf16.mxu0 %v3389
    %3854 = vmatpush2.bf16.msra.mxu0 %v3388
    %3855 = vmatprep.subr.bf16.mxu0 %v3377
    %3856 = vmatpush2.bf16.msra.mxu0 %v3376
    %3857 = vmatprep.subr.bf16.mxu0 %v3365
    %3858 = vmatpush2.bf16.msra.mxu0 %v3364
    %3859 = vmatprep.subr.bf16.mxu0 %v3353
    %3860 = vmatpush2.bf16.msra.mxu0 %v3352
    %3861 = vmatprep.subr.bf16.mxu0 %v3341
    %3862 = vmatpush2.bf16.msra.mxu0 %v3340
    %3863 = vmatprep.subr.bf16.mxu0 %v3329
    %3864 = vmatpush2.bf16.msra.mxu0 %v3328
    %3865 = vmatprep.subr.bf16.mxu0 %v3317
    %3866 = vmatpush2.bf16.msra.mxu0 %v3316
    %3867 = vmatprep.subr.bf16.mxu0 %v3305
    %3868 = vmatpush2.bf16.msra.mxu0 %v3304
    %3869 = vmatprep.mubr.bf16.mxu0 %v1859
    %3870 = vmatmul.mubr.bf16.gmra.mxu0 %v1858
    %v3871 = vpop.f32.mrf.mxu0
    %v3872 = vadd.f32 %v3819, %v3871
    %v3873 = vpop.f32.mrf.mxu0
    %v3874 = vadd.f32 %v3821, %v3873
    %v3875 = vpop.f32.mrf.mxu0
    %v3876 = vadd.f32 %v3823, %v3875
    %v3877 = vpop.f32.mrf.mxu0
    %v3878 = vadd.f32 %v3825, %v3877
    %3879 = vmatprep.mubr.bf16.mxu0 %v1863
    %3880 = vmatmul.mubr.bf16.gmra.mxu0 %v1862
    %v3881 = vpop.f32.mrf.mxu0
    %v3882 = vadd.f32 %v3829, %v3881
    %v3883 = vpop.f32.mrf.mxu0
    %v3884 = vadd.f32 %v3831, %v3883
    %v3885 = vpop.f32.mrf.mxu0
    %v3886 = vadd.f32 %v3833, %v3885
    %v3887 = vpop.f32.mrf.mxu0
    %v3888 = vadd.f32 %v3835, %v3887
    %3889 = vdwg.mxu0
    %3890 = vmatprep.subr.bf16.mxu0 %v3103
    %3891 = vmatpush1.bf16.msra.mxu0 %v3102
    %3892 = vmatprep.subr.bf16.mxu0 %v3091
    %3893 = vmatpush1.bf16.msra.mxu0 %v3090
    %3894 = vmatprep.subr.bf16.mxu0 %v3079
    %3895 = vmatpush1.bf16.msra.mxu0 %v3078
    %3896 = vmatprep.subr.bf16.mxu0 %v3067
    %3897 = vmatpush1.bf16.msra.mxu0 %v3066
    %3898 = vmatprep.subr.bf16.mxu0 %v3055
    %3899 = vmatpush1.bf16.msra.mxu0 %v3054
    %3900 = vmatprep.subr.bf16.mxu0 %v3043
    %3901 = vmatpush1.bf16.msra.mxu0 %v3042
    %3902 = vmatprep.subr.bf16.mxu0 %v3031
    %3903 = vmatpush1.bf16.msra.mxu0 %v3030
    %3904 = vmatprep.subr.bf16.mxu0 %v3019
    %3905 = vmatpush1.bf16.msra.mxu0 %v3018
    %3906 = vmatprep.subr.bf16.mxu0 %v3199
    %3907 = vmatpush2.bf16.msra.mxu0 %v3198
    %3908 = vmatprep.subr.bf16.mxu0 %v3187
    %3909 = vmatpush2.bf16.msra.mxu0 %v3186
    %3910 = vmatprep.subr.bf16.mxu0 %v3175
    %3911 = vmatpush2.bf16.msra.mxu0 %v3174
    %3912 = vmatprep.subr.bf16.mxu0 %v3163
    %3913 = vmatpush2.bf16.msra.mxu0 %v3162
    %3914 = vmatprep.subr.bf16.mxu0 %v3151
    %3915 = vmatpush2.bf16.msra.mxu0 %v3150
    %3916 = vmatprep.subr.bf16.mxu0 %v3139
    %3917 = vmatpush2.bf16.msra.mxu0 %v3138
    %3918 = vmatprep.subr.bf16.mxu0 %v3127
    %3919 = vmatpush2.bf16.msra.mxu0 %v3126
    %3920 = vmatprep.subr.bf16.mxu0 %v3115
    %3921 = vmatpush2.bf16.msra.mxu0 %v3114
    %3922 = vmatprep.mubr.bf16.mxu0 %v1857
    %3923 = vmatmul.mubr.bf16.gmra.mxu0 %v1856
    %v3924 = vpop.f32.mrf.mxu0
    %v3925 = vadd.f32 0.0, %v3924
    %v3926 = vpop.f32.mrf.mxu0
    %v3927 = vadd.f32 0.0, %v3926
    %v3928 = vpop.f32.mrf.mxu0
    %v3929 = vadd.f32 0.0, %v3928
    %v3930 = vpop.f32.mrf.mxu0
    %v3931 = vadd.f32 0.0, %v3930
    %3932 = vmatprep.mubr.bf16.mxu0 %v1861
    %3933 = vmatmul.mubr.bf16.gmra.mxu0 %v1860
    %v3934 = vpop.f32.mrf.mxu0
    %v3935 = vadd.f32 0.0, %v3934
    %v3936 = vpop.f32.mrf.mxu0
    %v3937 = vadd.f32 0.0, %v3936
    %v3938 = vpop.f32.mrf.mxu0
    %v3939 = vadd.f32 0.0, %v3938
    %v3940 = vpop.f32.mrf.mxu0
    %v3941 = vadd.f32 0.0, %v3940
    %3942 = vdwg.mxu0
    %3943 = vmatprep.subr.bf16.mxu0 %v3295
    %3944 = vmatpush1.bf16.msra.mxu0 %v3294
    %3945 = vmatprep.subr.bf16.mxu0 %v3283
    %3946 = vmatpush1.bf16.msra.mxu0 %v3282
    %3947 = vmatprep.subr.bf16.mxu0 %v3271
    %3948 = vmatpush1.bf16.msra.mxu0 %v3270
    %3949 = vmatprep.subr.bf16.mxu0 %v3259
    %3950 = vmatpush1.bf16.msra.mxu0 %v3258
    %3951 = vmatprep.subr.bf16.mxu0 %v3247
    %3952 = vmatpush1.bf16.msra.mxu0 %v3246
    %3953 = vmatprep.subr.bf16.mxu0 %v3235
    %3954 = vmatpush1.bf16.msra.mxu0 %v3234
    %3955 = vmatprep.subr.bf16.mxu0 %v3223
    %3956 = vmatpush1.bf16.msra.mxu0 %v3222
    %3957 = vmatprep.subr.bf16.mxu0 %v3211
    %3958 = vmatpush1.bf16.msra.mxu0 %v3210
    %3959 = vmatprep.subr.bf16.mxu0 %v3391
    %3960 = vmatpush2.bf16.msra.mxu0 %v3390
    %3961 = vmatprep.subr.bf16.mxu0 %v3379
    %3962 = vmatpush2.bf16.msra.mxu0 %v3378
    %3963 = vmatprep.subr.bf16.mxu0 %v3367
    %3964 = vmatpush2.bf16.msra.mxu0 %v3366
    %3965 = vmatprep.subr.bf16.mxu0 %v3355
    %3966 = vmatpush2.bf16.msra.mxu0 %v3354
    %3967 = vmatprep.subr.bf16.mxu0 %v3343
    %3968 = vmatpush2.bf16.msra.mxu0 %v3342
    %3969 = vmatprep.subr.bf16.mxu0 %v3331
    %3970 = vmatpush2.bf16.msra.mxu0 %v3330
    %3971 = vmatprep.subr.bf16.mxu0 %v3319
    %3972 = vmatpush2.bf16.msra.mxu0 %v3318
    %3973 = vmatprep.subr.bf16.mxu0 %v3307
    %3974 = vmatpush2.bf16.msra.mxu0 %v3306
    %3975 = vmatprep.mubr.bf16.mxu0 %v1859
    %3976 = vmatmul.mubr.bf16.gmra.mxu0 %v1858
    %v3977 = vpop.f32.mrf.mxu0
    %v3978 = vadd.f32 %v3925, %v3977
    %v3979 = vpop.f32.mrf.mxu0
    %v3980 = vadd.f32 %v3927, %v3979
    %v3981 = vpop.f32.mrf.mxu0
    %v3982 = vadd.f32 %v3929, %v3981
    %v3983 = vpop.f32.mrf.mxu0
    %v3984 = vadd.f32 %v3931, %v3983
    %3985 = vmatprep.mubr.bf16.mxu0 %v1863
    %3986 = vmatmul.mubr.bf16.gmra.mxu0 %v1862
    %v3987 = vpop.f32.mrf.mxu0
    %v3988 = vadd.f32 %v3935, %v3987
    %v3989 = vpop.f32.mrf.mxu0
    %v3990 = vadd.f32 %v3937, %v3989
    %v3991 = vpop.f32.mrf.mxu0
    %v3992 = vadd.f32 %v3939, %v3991
    %v3993 = vpop.f32.mrf.mxu0
    %v3994 = vadd.f32 %v3941, %v3993
    %3995 = vdwg.mxu0
    %3996 = vmatprep.subr.bf16.mxu0 %v3105
    %3997 = vmatpush1.bf16.msra.mxu0 %v3104
    %3998 = vmatprep.subr.bf16.mxu0 %v3093
    %3999 = vmatpush1.bf16.msra.mxu0 %v3092
    %4000 = vmatprep.subr.bf16.mxu0 %v3081
    %4001 = vmatpush1.bf16.msra.mxu0 %v3080
    %4002 = vmatprep.subr.bf16.mxu0 %v3069
    %4003 = vmatpush1.bf16.msra.mxu0 %v3068
    %4004 = vmatprep.subr.bf16.mxu0 %v3057
    %4005 = vmatpush1.bf16.msra.mxu0 %v3056
    %4006 = vmatprep.subr.bf16.mxu0 %v3045
    %4007 = vmatpush1.bf16.msra.mxu0 %v3044
    %4008 = vmatprep.subr.bf16.mxu0 %v3033
    %4009 = vmatpush1.bf16.msra.mxu0 %v3032
    %4010 = vmatprep.subr.bf16.mxu0 %v3021
    %4011 = vmatpush1.bf16.msra.mxu0 %v3020
    %4012 = vmatprep.subr.bf16.mxu0 %v3201
    %4013 = vmatpush2.bf16.msra.mxu0 %v3200
    %4014 = vmatprep.subr.bf16.mxu0 %v3189
    %4015 = vmatpush2.bf16.msra.mxu0 %v3188
    %4016 = vmatprep.subr.bf16.mxu0 %v3177
    %4017 = vmatpush2.bf16.msra.mxu0 %v3176
    %4018 = vmatprep.subr.bf16.mxu0 %v3165
    %4019 = vmatpush2.bf16.msra.mxu0 %v3164
    %4020 = vmatprep.subr.bf16.mxu0 %v3153
    %4021 = vmatpush2.bf16.msra.mxu0 %v3152
    %4022 = vmatprep.subr.bf16.mxu0 %v3141
    %4023 = vmatpush2.bf16.msra.mxu0 %v3140
    %4024 = vmatprep.subr.bf16.mxu0 %v3129
    %4025 = vmatpush2.bf16.msra.mxu0 %v3128
    %4026 = vmatprep.subr.bf16.mxu0 %v3117
    %4027 = vmatpush2.bf16.msra.mxu0 %v3116
    %4028 = vmatprep.mubr.bf16.mxu0 %v1857
    %4029 = vmatmul.mubr.bf16.gmra.mxu0 %v1856
    %v4030 = vpop.f32.mrf.mxu0
    %v4031 = vadd.f32 0.0, %v4030
    %v4032 = vpop.f32.mrf.mxu0
    %v4033 = vadd.f32 0.0, %v4032
    %v4034 = vpop.f32.mrf.mxu0
    %v4035 = vadd.f32 0.0, %v4034
    %v4036 = vpop.f32.mrf.mxu0
    %v4037 = vadd.f32 0.0, %v4036
    %4038 = vmatprep.mubr.bf16.mxu0 %v1861
    %4039 = vmatmul.mubr.bf16.gmra.mxu0 %v1860
    %v4040 = vpop.f32.mrf.mxu0
    %v4041 = vadd.f32 0.0, %v4040
    %v4042 = vpop.f32.mrf.mxu0
    %v4043 = vadd.f32 0.0, %v4042
    %v4044 = vpop.f32.mrf.mxu0
    %v4045 = vadd.f32 0.0, %v4044
    %v4046 = vpop.f32.mrf.mxu0
    %v4047 = vadd.f32 0.0, %v4046
    %4048 = vdwg.mxu0
    %4049 = vmatprep.subr.bf16.mxu0 %v3297
    %4050 = vmatpush1.bf16.msra.mxu0 %v3296
    %4051 = vmatprep.subr.bf16.mxu0 %v3285
    %4052 = vmatpush1.bf16.msra.mxu0 %v3284
    %4053 = vmatprep.subr.bf16.mxu0 %v3273
    %4054 = vmatpush1.bf16.msra.mxu0 %v3272
    %4055 = vmatprep.subr.bf16.mxu0 %v3261
    %4056 = vmatpush1.bf16.msra.mxu0 %v3260
    %4057 = vmatprep.subr.bf16.mxu0 %v3249
    %4058 = vmatpush1.bf16.msra.mxu0 %v3248
    %4059 = vmatprep.subr.bf16.mxu0 %v3237
    %4060 = vmatpush1.bf16.msra.mxu0 %v3236
    %4061 = vmatprep.subr.bf16.mxu0 %v3225
    %4062 = vmatpush1.bf16.msra.mxu0 %v3224
    %4063 = vmatprep.subr.bf16.mxu0 %v3213
    %4064 = vmatpush1.bf16.msra.mxu0 %v3212
    %4065 = vmatprep.subr.bf16.mxu0 %v3393
    %4066 = vmatpush2.bf16.msra.mxu0 %v3392
    %4067 = vmatprep.subr.bf16.mxu0 %v3381
    %4068 = vmatpush2.bf16.msra.mxu0 %v3380
    %4069 = vmatprep.subr.bf16.mxu0 %v3369
    %4070 = vmatpush2.bf16.msra.mxu0 %v3368
    %4071 = vmatprep.subr.bf16.mxu0 %v3357
    %4072 = vmatpush2.bf16.msra.mxu0 %v3356
    %4073 = vmatprep.subr.bf16.mxu0 %v3345
    %4074 = vmatpush2.bf16.msra.mxu0 %v3344
    %4075 = vmatprep.subr.bf16.mxu0 %v3333
    %4076 = vmatpush2.bf16.msra.mxu0 %v3332
    %4077 = vmatprep.subr.bf16.mxu0 %v3321
    %4078 = vmatpush2.bf16.msra.mxu0 %v3320
    %4079 = vmatprep.subr.bf16.mxu0 %v3309
    %4080 = vmatpush2.bf16.msra.mxu0 %v3308
    %4081 = vmatprep.mubr.bf16.mxu0 %v1859
    %4082 = vmatmul.mubr.bf16.gmra.mxu0 %v1858
    %v4083 = vpop.f32.mrf.mxu0
    %v4084 = vadd.f32 %v4031, %v4083
    %v4085 = vpop.f32.mrf.mxu0
    %v4086 = vadd.f32 %v4033, %v4085
    %v4087 = vpop.f32.mrf.mxu0
    %v4088 = vadd.f32 %v4035, %v4087
    %v4089 = vpop.f32.mrf.mxu0
    %v4090 = vadd.f32 %v4037, %v4089
    %4091 = vmatprep.mubr.bf16.mxu0 %v1863
    %4092 = vmatmul.mubr.bf16.gmra.mxu0 %v1862
    %v4093 = vpop.f32.mrf.mxu0
    %v4094 = vadd.f32 %v4041, %v4093
    %v4095 = vpop.f32.mrf.mxu0
    %v4096 = vadd.f32 %v4043, %v4095
    %v4097 = vpop.f32.mrf.mxu0
    %v4098 = vadd.f32 %v4045, %v4097
    %v4099 = vpop.f32.mrf.mxu0
    %v4100 = vadd.f32 %v4047, %v4099
    %4101 = vdwg.mxu0
    %4102 = vmatprep.subr.bf16.mxu0 %v3107
    %4103 = vmatpush1.bf16.msra.mxu0 %v3106
    %4104 = vmatprep.subr.bf16.mxu0 %v3095
    %4105 = vmatpush1.bf16.msra.mxu0 %v3094
    %4106 = vmatprep.subr.bf16.mxu0 %v3083
    %4107 = vmatpush1.bf16.msra.mxu0 %v3082
    %4108 = vmatprep.subr.bf16.mxu0 %v3071
    %4109 = vmatpush1.bf16.msra.mxu0 %v3070
    %4110 = vmatprep.subr.bf16.mxu0 %v3059
    %4111 = vmatpush1.bf16.msra.mxu0 %v3058
    %4112 = vmatprep.subr.bf16.mxu0 %v3047
    %4113 = vmatpush1.bf16.msra.mxu0 %v3046
    %4114 = vmatprep.subr.bf16.mxu0 %v3035
    %4115 = vmatpush1.bf16.msra.mxu0 %v3034
    %4116 = vmatprep.subr.bf16.mxu0 %v3023
    %4117 = vmatpush1.bf16.msra.mxu0 %v3022
    %4118 = vmatprep.subr.bf16.mxu0 %v3203
    %4119 = vmatpush2.bf16.msra.mxu0 %v3202
    %4120 = vmatprep.subr.bf16.mxu0 %v3191
    %4121 = vmatpush2.bf16.msra.mxu0 %v3190
    %4122 = vmatprep.subr.bf16.mxu0 %v3179
    %4123 = vmatpush2.bf16.msra.mxu0 %v3178
    %4124 = vmatprep.subr.bf16.mxu0 %v3167
    %4125 = vmatpush2.bf16.msra.mxu0 %v3166
    %4126 = vmatprep.subr.bf16.mxu0 %v3155
    %4127 = vmatpush2.bf16.msra.mxu0 %v3154
    %4128 = vmatprep.subr.bf16.mxu0 %v3143
    %4129 = vmatpush2.bf16.msra.mxu0 %v3142
    %4130 = vmatprep.subr.bf16.mxu0 %v3131
    %4131 = vmatpush2.bf16.msra.mxu0 %v3130
    %4132 = vmatprep.subr.bf16.mxu0 %v3119
    %4133 = vmatpush2.bf16.msra.mxu0 %v3118
    %4134 = vmatprep.mubr.bf16.mxu0 %v1857
    %4135 = vmatmul.mubr.bf16.gmra.mxu0 %v1856
    %v4136 = vpop.f32.mrf.mxu0
    %v4137 = vadd.f32 0.0, %v4136
    %v4138 = vpop.f32.mrf.mxu0
    %v4139 = vadd.f32 0.0, %v4138
    %v4140 = vpop.f32.mrf.mxu0
    %v4141 = vadd.f32 0.0, %v4140
    %v4142 = vpop.f32.mrf.mxu0
    %v4143 = vadd.f32 0.0, %v4142
    %4144 = vmatprep.mubr.bf16.mxu0 %v1861
    %4145 = vmatmul.mubr.bf16.gmra.mxu0 %v1860
    %v4146 = vpop.f32.mrf.mxu0
    %v4147 = vadd.f32 0.0, %v4146
    %v4148 = vpop.f32.mrf.mxu0
    %v4149 = vadd.f32 0.0, %v4148
    %v4150 = vpop.f32.mrf.mxu0
    %v4151 = vadd.f32 0.0, %v4150
    %v4152 = vpop.f32.mrf.mxu0
    %v4153 = vadd.f32 0.0, %v4152
    %4154 = vdwg.mxu0
    %4155 = vmatprep.subr.bf16.mxu0 %v3299
    %4156 = vmatpush1.bf16.msra.mxu0 %v3298
    %4157 = vmatprep.subr.bf16.mxu0 %v3287
    %4158 = vmatpush1.bf16.msra.mxu0 %v3286
    %4159 = vmatprep.subr.bf16.mxu0 %v3275
    %4160 = vmatpush1.bf16.msra.mxu0 %v3274
    %4161 = vmatprep.subr.bf16.mxu0 %v3263
    %4162 = vmatpush1.bf16.msra.mxu0 %v3262
    %4163 = vmatprep.subr.bf16.mxu0 %v3251
    %4164 = vmatpush1.bf16.msra.mxu0 %v3250
    %4165 = vmatprep.subr.bf16.mxu0 %v3239
    %4166 = vmatpush1.bf16.msra.mxu0 %v3238
    %4167 = vmatprep.subr.bf16.mxu0 %v3227
    %4168 = vmatpush1.bf16.msra.mxu0 %v3226
    %4169 = vmatprep.subr.bf16.mxu0 %v3215
    %4170 = vmatpush1.bf16.msra.mxu0 %v3214
    %4171 = vmatprep.subr.bf16.mxu0 %v3395
    %4172 = vmatpush2.bf16.msra.mxu0 %v3394
    %4173 = vmatprep.subr.bf16.mxu0 %v3383
    %4174 = vmatpush2.bf16.msra.mxu0 %v3382
    %4175 = vmatprep.subr.bf16.mxu0 %v3371
    %4176 = vmatpush2.bf16.msra.mxu0 %v3370
    %4177 = vmatprep.subr.bf16.mxu0 %v3359
    %4178 = vmatpush2.bf16.msra.mxu0 %v3358
    %4179 = vmatprep.subr.bf16.mxu0 %v3347
    %4180 = vmatpush2.bf16.msra.mxu0 %v3346
    %4181 = vmatprep.subr.bf16.mxu0 %v3335
    %4182 = vmatpush2.bf16.msra.mxu0 %v3334
    %4183 = vmatprep.subr.bf16.mxu0 %v3323
    %4184 = vmatpush2.bf16.msra.mxu0 %v3322
    %4185 = vmatprep.subr.bf16.mxu0 %v3311
    %4186 = vmatpush2.bf16.msra.mxu0 %v3310
    %4187 = vmatprep.mubr.bf16.mxu0 %v1859
    %4188 = vmatmul.mubr.bf16.gmra.mxu0 %v1858
    %v4189 = vpop.f32.mrf.mxu0
    %v4190 = vadd.f32 %v4137, %v4189
    %v4191 = vpop.f32.mrf.mxu0
    %v4192 = vadd.f32 %v4139, %v4191
    %v4193 = vpop.f32.mrf.mxu0
    %v4194 = vadd.f32 %v4141, %v4193
    %v4195 = vpop.f32.mrf.mxu0
    %v4196 = vadd.f32 %v4143, %v4195
    %4197 = vmatprep.mubr.bf16.mxu0 %v1863
    %4198 = vmatmul.mubr.bf16.gmra.mxu0 %v1862
    %v4199 = vpop.f32.mrf.mxu0
    %v4200 = vadd.f32 %v4147, %v4199
    %v4201 = vpop.f32.mrf.mxu0
    %v4202 = vadd.f32 %v4149, %v4201
    %v4203 = vpop.f32.mrf.mxu0
    %v4204 = vadd.f32 %v4151, %v4203
    %v4205 = vpop.f32.mrf.mxu0
    %v4206 = vadd.f32 %v4153, %v4205
    %4207 = vdwg.mxu0
    %4208 = vmatprep.subr.bf16.mxu0 %v3109
    %4209 = vmatpush1.bf16.msra.mxu0 %v3108
    %4210 = vmatprep.subr.bf16.mxu0 %v3097
    %4211 = vmatpush1.bf16.msra.mxu0 %v3096
    %4212 = vmatprep.subr.bf16.mxu0 %v3085
    %4213 = vmatpush1.bf16.msra.mxu0 %v3084
    %4214 = vmatprep.subr.bf16.mxu0 %v3073
    %4215 = vmatpush1.bf16.msra.mxu0 %v3072
    %4216 = vmatprep.subr.bf16.mxu0 %v3061
    %4217 = vmatpush1.bf16.msra.mxu0 %v3060
    %4218 = vmatprep.subr.bf16.mxu0 %v3049
    %4219 = vmatpush1.bf16.msra.mxu0 %v3048
    %4220 = vmatprep.subr.bf16.mxu0 %v3037
    %4221 = vmatpush1.bf16.msra.mxu0 %v3036
    %4222 = vmatprep.subr.bf16.mxu0 %v3025
    %4223 = vmatpush1.bf16.msra.mxu0 %v3024
    %4224 = vmatprep.subr.bf16.mxu0 %v3205
    %4225 = vmatpush2.bf16.msra.mxu0 %v3204
    %4226 = vmatprep.subr.bf16.mxu0 %v3193
    %4227 = vmatpush2.bf16.msra.mxu0 %v3192
    %4228 = vmatprep.subr.bf16.mxu0 %v3181
    %4229 = vmatpush2.bf16.msra.mxu0 %v3180
    %4230 = vmatprep.subr.bf16.mxu0 %v3169
    %4231 = vmatpush2.bf16.msra.mxu0 %v3168
    %4232 = vmatprep.subr.bf16.mxu0 %v3157
    %4233 = vmatpush2.bf16.msra.mxu0 %v3156
    %4234 = vmatprep.subr.bf16.mxu0 %v3145
    %4235 = vmatpush2.bf16.msra.mxu0 %v3144
    %4236 = vmatprep.subr.bf16.mxu0 %v3133
    %4237 = vmatpush2.bf16.msra.mxu0 %v3132
    %4238 = vmatprep.subr.bf16.mxu0 %v3121
    %4239 = vmatpush2.bf16.msra.mxu0 %v3120
    %4240 = vmatprep.mubr.bf16.mxu0 %v1857
    %4241 = vmatmul.mubr.bf16.gmra.mxu0 %v1856
    %v4242 = vpop.f32.mrf.mxu0
    %v4243 = vadd.f32 0.0, %v4242
    %v4244 = vpop.f32.mrf.mxu0
    %v4245 = vadd.f32 0.0, %v4244
    %v4246 = vpop.f32.mrf.mxu0
    %v4247 = vadd.f32 0.0, %v4246
    %v4248 = vpop.f32.mrf.mxu0
    %v4249 = vadd.f32 0.0, %v4248
    %4250 = vmatprep.mubr.bf16.mxu0 %v1861
    %4251 = vmatmul.mubr.bf16.gmra.mxu0 %v1860
    %v4252 = vpop.f32.mrf.mxu0
    %v4253 = vadd.f32 0.0, %v4252
    %v4254 = vpop.f32.mrf.mxu0
    %v4255 = vadd.f32 0.0, %v4254
    %v4256 = vpop.f32.mrf.mxu0
    %v4257 = vadd.f32 0.0, %v4256
    %v4258 = vpop.f32.mrf.mxu0
    %v4259 = vadd.f32 0.0, %v4258
    %4260 = vdwg.mxu0
    %4261 = vmatprep.subr.bf16.mxu0 %v3301
    %4262 = vmatpush1.bf16.msra.mxu0 %v3300
    %4263 = vmatprep.subr.bf16.mxu0 %v3289
    %4264 = vmatpush1.bf16.msra.mxu0 %v3288
    %4265 = vmatprep.subr.bf16.mxu0 %v3277
    %4266 = vmatpush1.bf16.msra.mxu0 %v3276
    %4267 = vmatprep.subr.bf16.mxu0 %v3265
    %4268 = vmatpush1.bf16.msra.mxu0 %v3264
    %4269 = vmatprep.subr.bf16.mxu0 %v3253
    %4270 = vmatpush1.bf16.msra.mxu0 %v3252
    %4271 = vmatprep.subr.bf16.mxu0 %v3241
    %4272 = vmatpush1.bf16.msra.mxu0 %v3240
    %4273 = vmatprep.subr.bf16.mxu0 %v3229
    %4274 = vmatpush1.bf16.msra.mxu0 %v3228
    %4275 = vmatprep.subr.bf16.mxu0 %v3217
    %4276 = vmatpush1.bf16.msra.mxu0 %v3216
    %4277 = vmatprep.subr.bf16.mxu0 %v3397
    %4278 = vmatpush2.bf16.msra.mxu0 %v3396
    %4279 = vmatprep.subr.bf16.mxu0 %v3385
    %4280 = vmatpush2.bf16.msra.mxu0 %v3384
    %4281 = vmatprep.subr.bf16.mxu0 %v3373
    %4282 = vmatpush2.bf16.msra.mxu0 %v3372
    %4283 = vmatprep.subr.bf16.mxu0 %v3361
    %4284 = vmatpush2.bf16.msra.mxu0 %v3360
    %4285 = vmatprep.subr.bf16.mxu0 %v3349
    %4286 = vmatpush2.bf16.msra.mxu0 %v3348
    %4287 = vmatprep.subr.bf16.mxu0 %v3337
    %4288 = vmatpush2.bf16.msra.mxu0 %v3336
    %4289 = vmatprep.subr.bf16.mxu0 %v3325
    %4290 = vmatpush2.bf16.msra.mxu0 %v3324
    %4291 = vmatprep.subr.bf16.mxu0 %v3313
    %4292 = vmatpush2.bf16.msra.mxu0 %v3312
    %4293 = vmatprep.mubr.bf16.mxu0 %v1859
    %4294 = vmatmul.mubr.bf16.gmra.mxu0 %v1858
    %v4295 = vpop.f32.mrf.mxu0
    %v4296 = vadd.f32 %v4243, %v4295
    %v4297 = vpop.f32.mrf.mxu0
    %v4298 = vadd.f32 %v4245, %v4297
    %v4299 = vpop.f32.mrf.mxu0
    %v4300 = vadd.f32 %v4247, %v4299
    %v4301 = vpop.f32.mrf.mxu0
    %v4302 = vadd.f32 %v4249, %v4301
    %4303 = vmatprep.mubr.bf16.mxu0 %v1863
    %4304 = vmatmul.mubr.bf16.gmra.mxu0 %v1862
    %v4305 = vpop.f32.mrf.mxu0
    %v4306 = vadd.f32 %v4253, %v4305
    %v4307 = vpop.f32.mrf.mxu0
    %v4308 = vadd.f32 %v4255, %v4307
    %v4309 = vpop.f32.mrf.mxu0
    %v4310 = vadd.f32 %v4257, %v4309
    %v4311 = vpop.f32.mrf.mxu0
    %v4312 = vadd.f32 %v4259, %v4311
    %4313 = vdwg.mxu0
    %4314 = vmatprep.subr.bf16.mxu0 %v3111
    %4315 = vmatpush1.bf16.msra.mxu0 %v3110
    %4316 = vmatprep.subr.bf16.mxu0 %v3099
    %4317 = vmatpush1.bf16.msra.mxu0 %v3098
    %4318 = vmatprep.subr.bf16.mxu0 %v3087
    %4319 = vmatpush1.bf16.msra.mxu0 %v3086
    %4320 = vmatprep.subr.bf16.mxu0 %v3075
    %4321 = vmatpush1.bf16.msra.mxu0 %v3074
    %4322 = vmatprep.subr.bf16.mxu0 %v3063
    %4323 = vmatpush1.bf16.msra.mxu0 %v3062
    %4324 = vmatprep.subr.bf16.mxu0 %v3051
    %4325 = vmatpush1.bf16.msra.mxu0 %v3050
    %4326 = vmatprep.subr.bf16.mxu0 %v3039
    %4327 = vmatpush1.bf16.msra.mxu0 %v3038
    %4328 = vmatprep.subr.bf16.mxu0 %v3027
    %4329 = vmatpush1.bf16.msra.mxu0 %v3026
    %4330 = vmatprep.subr.bf16.mxu0 %v3207
    %4331 = vmatpush2.bf16.msra.mxu0 %v3206
    %4332 = vmatprep.subr.bf16.mxu0 %v3195
    %4333 = vmatpush2.bf16.msra.mxu0 %v3194
    %4334 = vmatprep.subr.bf16.mxu0 %v3183
    %4335 = vmatpush2.bf16.msra.mxu0 %v3182
    %4336 = vmatprep.subr.bf16.mxu0 %v3171
    %4337 = vmatpush2.bf16.msra.mxu0 %v3170
    %4338 = vmatprep.subr.bf16.mxu0 %v3159
    %4339 = vmatpush2.bf16.msra.mxu0 %v3158
    %4340 = vmatprep.subr.bf16.mxu0 %v3147
    %4341 = vmatpush2.bf16.msra.mxu0 %v3146
    %4342 = vmatprep.subr.bf16.mxu0 %v3135
    %4343 = vmatpush2.bf16.msra.mxu0 %v3134
    %4344 = vmatprep.subr.bf16.mxu0 %v3123
    %4345 = vmatpush2.bf16.msra.mxu0 %v3122
    %4346 = vmatprep.mubr.bf16.mxu0 %v1857
    %4347 = vmatmul.mubr.bf16.gmra.mxu0 %v1856
    %v4348 = vpop.f32.mrf.mxu0
    %v4349 = vadd.f32 0.0, %v4348
    %v4350 = vpop.f32.mrf.mxu0
    %v4351 = vadd.f32 0.0, %v4350
    %v4352 = vpop.f32.mrf.mxu0
    %v4353 = vadd.f32 0.0, %v4352
    %v4354 = vpop.f32.mrf.mxu0
    %v4355 = vadd.f32 0.0, %v4354
    %4356 = vmatprep.mubr.bf16.mxu0 %v1861
    %4357 = vmatmul.mubr.bf16.gmra.mxu0 %v1860
    %v4358 = vpop.f32.mrf.mxu0
    %v4359 = vadd.f32 0.0, %v4358
    %v4360 = vpop.f32.mrf.mxu0
    %v4361 = vadd.f32 0.0, %v4360
    %v4362 = vpop.f32.mrf.mxu0
    %v4363 = vadd.f32 0.0, %v4362
    %v4364 = vpop.f32.mrf.mxu0
    %v4365 = vadd.f32 0.0, %v4364
    %4366 = vdwg.mxu0
    %4367 = vmatprep.subr.bf16.mxu0 %v3303
    %4368 = vmatpush1.bf16.msra.mxu0 %v3302
    %4369 = vmatprep.subr.bf16.mxu0 %v3291
    %4370 = vmatpush1.bf16.msra.mxu0 %v3290
    %4371 = vmatprep.subr.bf16.mxu0 %v3279
    %4372 = vmatpush1.bf16.msra.mxu0 %v3278
    %4373 = vmatprep.subr.bf16.mxu0 %v3267
    %4374 = vmatpush1.bf16.msra.mxu0 %v3266
    %4375 = vmatprep.subr.bf16.mxu0 %v3255
    %4376 = vmatpush1.bf16.msra.mxu0 %v3254
    %4377 = vmatprep.subr.bf16.mxu0 %v3243
    %4378 = vmatpush1.bf16.msra.mxu0 %v3242
    %4379 = vmatprep.subr.bf16.mxu0 %v3231
    %4380 = vmatpush1.bf16.msra.mxu0 %v3230
    %4381 = vmatprep.subr.bf16.mxu0 %v3219
    %4382 = vmatpush1.bf16.msra.mxu0 %v3218
    %4383 = vmatprep.subr.bf16.mxu0 %v3399
    %4384 = vmatpush2.bf16.msra.mxu0 %v3398
    %4385 = vmatprep.subr.bf16.mxu0 %v3387
    %4386 = vmatpush2.bf16.msra.mxu0 %v3386
    %4387 = vmatprep.subr.bf16.mxu0 %v3375
    %4388 = vmatpush2.bf16.msra.mxu0 %v3374
    %4389 = vmatprep.subr.bf16.mxu0 %v3363
    %4390 = vmatpush2.bf16.msra.mxu0 %v3362
    %4391 = vmatprep.subr.bf16.mxu0 %v3351
    %4392 = vmatpush2.bf16.msra.mxu0 %v3350
    %4393 = vmatprep.subr.bf16.mxu0 %v3339
    %4394 = vmatpush2.bf16.msra.mxu0 %v3338
    %4395 = vmatprep.subr.bf16.mxu0 %v3327
    %4396 = vmatpush2.bf16.msra.mxu0 %v3326
    %4397 = vmatprep.subr.bf16.mxu0 %v3315
    %4398 = vmatpush2.bf16.msra.mxu0 %v3314
    %4399 = vmatprep.mubr.bf16.mxu0 %v1859
    %4400 = vmatmul.mubr.bf16.gmra.mxu0 %v1858
    %v4401 = vpop.f32.mrf.mxu0
    %v4402 = vadd.f32 %v4349, %v4401
    %v4403 = vpop.f32.mrf.mxu0
    %v4404 = vadd.f32 %v4351, %v4403
    %v4405 = vpop.f32.mrf.mxu0
    %v4406 = vadd.f32 %v4353, %v4405
    %v4407 = vpop.f32.mrf.mxu0
    %v4408 = vadd.f32 %v4355, %v4407
    %4409 = vmatprep.mubr.bf16.mxu0 %v1863
    %4410 = vmatmul.mubr.bf16.gmra.mxu0 %v1862
    %v4411 = vpop.f32.mrf.mxu0
    %v4412 = vadd.f32 %v4359, %v4411
    %v4413 = vpop.f32.mrf.mxu0
    %v4414 = vadd.f32 %v4361, %v4413
    %v4415 = vpop.f32.mrf.mxu0
    %v4416 = vadd.f32 %v4363, %v4415
    %v4417 = vpop.f32.mrf.mxu0
    %v4418 = vadd.f32 %v4365, %v4417
    %4419 = vdwg.mxu0
    %v4420 = vmul.f32 %v3872, %v3872
    %v4421 = vmul.f32 %v3874, %v3874
    %v4422 = vmul.f32 %v3876, %v3876
    %v4423 = vmul.f32 %v3878, %v3878
    %v4424 = vmul.f32 %v3882, %v3882
    %v4425 = vmul.f32 %v3884, %v3884
    %v4426 = vmul.f32 %v3886, %v3886
    %v4427 = vmul.f32 %v3888, %v3888
    %v4428 = vadd.f32 %v4420, %v4421
    %4429 = vadd.xlane.f32.xlu0 %v4428
    %v4430 = vpop.xlane.xlu0 %4429
    %v4431 = vadd.f32 %v4422, %v4423
    %4432 = vadd.xlane.f32.xlu0 %v4431
    %v4433 = vpop.xlane.xlu0 %4432
    %v4434 = vadd.f32 %v4424, %v4425
    %4435 = vadd.xlane.f32.xlu0 %v4434
    %v4436 = vpop.xlane.xlu0 %4435
    %v4437 = vadd.f32 %v4426, %v4427
    %4438 = vadd.xlane.f32.xlu0 %v4437
    %v4439 = vpop.xlane.xlu0 %4438
    %v4440 = vrcp.pop 256.0
    %v4441 = vmul.f32 %v4430, %v4440
    %v4442 = vmul.f32 %v4433, %v4440
    %v4443 = vmul.f32 %v4436, %v4440
    %v4444 = vmul.f32 %v4439, %v4440
    %v4445 = vadd.f32 %v4441, 1.1920929e-07
    %v4446 = vadd.f32 %v4442, 1.1920929e-07
    %v4447 = vadd.f32 %v4443, 1.1920929e-07
    %v4448 = vadd.f32 %v4444, 1.1920929e-07
    %v4449 = vrsqrt.pop %v4445
    %v4450 = vrsqrt.pop %v4446
    %v4451 = vrsqrt.pop %v4447
    %v4452 = vrsqrt.pop %v4448
    %v4453 = vmul.f32 %v4084, %v4084
    %v4454 = vmul.f32 %v4086, %v4086
    %v4455 = vmul.f32 %v4088, %v4088
    %v4456 = vmul.f32 %v4090, %v4090
    %v4457 = vmul.f32 %v4094, %v4094
    %v4458 = vmul.f32 %v4096, %v4096
    %v4459 = vmul.f32 %v4098, %v4098
    %v4460 = vmul.f32 %v4100, %v4100
    %v4461 = vadd.f32 %v4453, %v4454
    %4462 = vadd.xlane.f32.xlu0 %v4461
    %v4463 = vpop.xlane.xlu0 %4462
    %v4464 = vadd.f32 %v4455, %v4456
    %4465 = vadd.xlane.f32.xlu0 %v4464
    %v4466 = vpop.xlane.xlu0 %4465
    %v4467 = vadd.f32 %v4457, %v4458
    %4468 = vadd.xlane.f32.xlu0 %v4467
    %v4469 = vpop.xlane.xlu0 %4468
    %v4470 = vadd.f32 %v4459, %v4460
    %4471 = vadd.xlane.f32.xlu0 %v4470
    %v4472 = vpop.xlane.xlu0 %4471
    %v4473 = vmul.f32 %v4463, %v4440
    %v4474 = vmul.f32 %v4466, %v4440
    %v4475 = vmul.f32 %v4469, %v4440
    %v4476 = vmul.f32 %v4472, %v4440
    %v4477 = vadd.f32 %v4473, 1.1920929e-07
    %v4478 = vadd.f32 %v4474, 1.1920929e-07
    %v4479 = vadd.f32 %v4475, 1.1920929e-07
    %v4480 = vadd.f32 %v4476, 1.1920929e-07
    %v4481 = vrsqrt.pop %v4477
    %v4482 = vrsqrt.pop %v4478
    %v4483 = vrsqrt.pop %v4479
    %v4484 = vrsqrt.pop %v4480
    %v4485 = vmul.f32 %v4449, 0.0625
    %v4486 = vmul.f32 %v4450, 0.0625
    %v4487 = vmul.f32 %v4451, 0.0625
    %v4488 = vmul.f32 %v4452, 0.0625
    %v4489 = vmul.f32 %v3872, %v4485
    %v4490 = vmul.f32 %v3874, %v4485
    %v4491 = vmul.f32 %v3876, %v4486
    %v4492 = vmul.f32 %v3878, %v4486
    %v4493 = vmul.f32 %v3882, %v4487
    %v4494 = vmul.f32 %v3884, %v4487
    %v4495 = vmul.f32 %v3886, %v4488
    %v4496 = vmul.f32 %v3888, %v4488
    %v4497 = vmul.f32 %v4084, %v4481
    %v4498 = vmul.f32 %v4086, %v4481
    %v4499 = vmul.f32 %v4088, %v4482
    %v4500 = vmul.f32 %v4090, %v4482
    %v4501 = vmul.f32 %v4094, %v4483
    %v4502 = vmul.f32 %v4096, %v4483
    %v4503 = vmul.f32 %v4098, %v4484
    %v4504 = vmul.f32 %v4100, %v4484
    %v4505 = vmul.f32 %v3978, %v3978
    %v4506 = vmul.f32 %v3980, %v3980
    %v4507 = vmul.f32 %v3982, %v3982
    %v4508 = vmul.f32 %v3984, %v3984
    %v4509 = vmul.f32 %v3988, %v3988
    %v4510 = vmul.f32 %v3990, %v3990
    %v4511 = vmul.f32 %v3992, %v3992
    %v4512 = vmul.f32 %v3994, %v3994
    %v4513 = vadd.f32 %v4505, %v4506
    %4514 = vadd.xlane.f32.xlu0 %v4513
    %v4515 = vpop.xlane.xlu0 %4514
    %v4516 = vadd.f32 %v4507, %v4508
    %4517 = vadd.xlane.f32.xlu0 %v4516
    %v4518 = vpop.xlane.xlu0 %4517
    %v4519 = vadd.f32 %v4509, %v4510
    %4520 = vadd.xlane.f32.xlu0 %v4519
    %v4521 = vpop.xlane.xlu0 %4520
    %v4522 = vadd.f32 %v4511, %v4512
    %4523 = vadd.xlane.f32.xlu0 %v4522
    %v4524 = vpop.xlane.xlu0 %4523
    %v4525 = vmul.f32 %v4515, %v4440
    %v4526 = vmul.f32 %v4518, %v4440
    %v4527 = vmul.f32 %v4521, %v4440
    %v4528 = vmul.f32 %v4524, %v4440
    %v4529 = vadd.f32 %v4525, 1.1920929e-07
    %v4530 = vadd.f32 %v4526, 1.1920929e-07
    %v4531 = vadd.f32 %v4527, 1.1920929e-07
    %v4532 = vadd.f32 %v4528, 1.1920929e-07
    %v4533 = vrsqrt.pop %v4529
    %v4534 = vrsqrt.pop %v4530
    %v4535 = vrsqrt.pop %v4531
    %v4536 = vrsqrt.pop %v4532
    %v4537 = vmul.f32 %v4190, %v4190
    %v4538 = vmul.f32 %v4192, %v4192
    %v4539 = vmul.f32 %v4194, %v4194
    %v4540 = vmul.f32 %v4196, %v4196
    %v4541 = vmul.f32 %v4200, %v4200
    %v4542 = vmul.f32 %v4202, %v4202
    %v4543 = vmul.f32 %v4204, %v4204
    %v4544 = vmul.f32 %v4206, %v4206
    %v4545 = vadd.f32 %v4537, %v4538
    %4546 = vadd.xlane.f32.xlu0 %v4545
    %v4547 = vpop.xlane.xlu0 %4546
    %v4548 = vadd.f32 %v4539, %v4540
    %4549 = vadd.xlane.f32.xlu0 %v4548
    %v4550 = vpop.xlane.xlu0 %4549
    %v4551 = vadd.f32 %v4541, %v4542
    %4552 = vadd.xlane.f32.xlu0 %v4551
    %v4553 = vpop.xlane.xlu0 %4552
    %v4554 = vadd.f32 %v4543, %v4544
    %4555 = vadd.xlane.f32.xlu0 %v4554
    %v4556 = vpop.xlane.xlu0 %4555
    %v4557 = vmul.f32 %v4547, %v4440
    %v4558 = vmul.f32 %v4550, %v4440
    %v4559 = vmul.f32 %v4553, %v4440
    %v4560 = vmul.f32 %v4556, %v4440
    %v4561 = vadd.f32 %v4557, 1.1920929e-07
    %v4562 = vadd.f32 %v4558, 1.1920929e-07
    %v4563 = vadd.f32 %v4559, 1.1920929e-07
    %v4564 = vadd.f32 %v4560, 1.1920929e-07
    %v4565 = vrsqrt.pop %v4561
    %v4566 = vrsqrt.pop %v4562
    %v4567 = vrsqrt.pop %v4563
    %v4568 = vrsqrt.pop %v4564
    %v4569 = vmul.f32 %v4533, 0.0625
    %v4570 = vmul.f32 %v4534, 0.0625
    %v4571 = vmul.f32 %v4535, 0.0625
    %v4572 = vmul.f32 %v4536, 0.0625
    %v4573 = vmul.f32 %v3978, %v4569
    %v4574 = vmul.f32 %v3980, %v4569
    %v4575 = vmul.f32 %v3982, %v4570
    %v4576 = vmul.f32 %v3984, %v4570
    %v4577 = vmul.f32 %v3988, %v4571
    %v4578 = vmul.f32 %v3990, %v4571
    %v4579 = vmul.f32 %v3992, %v4572
    %v4580 = vmul.f32 %v3994, %v4572
    %v4581 = vmul.f32 %v4190, %v4565
    %v4582 = vmul.f32 %v4192, %v4565
    %v4583 = vmul.f32 %v4194, %v4566
    %v4584 = vmul.f32 %v4196, %v4566
    %v4585 = vmul.f32 %v4200, %v4567
    %v4586 = vmul.f32 %v4202, %v4567
    %v4587 = vmul.f32 %v4204, %v4568
    %v4588 = vmul.f32 %v4206, %v4568
    %v4589 = vmul.f32 %v4489, %v1752
    %v4590 = vmul.f32 %v4490, %v1753
    %v4591 = vmul.f32 %v4573, %v1754
    %v4592 = vmul.f32 %v4574, %v1755
    %v4593 = vmul.f32 %v4491, %v1756
    %v4594 = vmul.f32 %v4492, %v1757
    %v4595 = vmul.f32 %v4575, %v1758
    %v4596 = vmul.f32 %v4576, %v1759
    %v4597 = vmul.f32 %v4493, %v1760
    %v4598 = vmul.f32 %v4494, %v1761
    %v4599 = vmul.f32 %v4577, %v1762
    %v4600 = vmul.f32 %v4578, %v1763
    %v4601 = vmul.f32 %v4495, %v1764
    %v4602 = vmul.f32 %v4496, %v1765
    %v4603 = vmul.f32 %v4579, %v1766
    %v4604 = vmul.f32 %v4580, %v1767
    %v4605 = vmul.f32 %v4490, %v1776
    %v4606 = vmul.f32 %v4489, %v1777
    %v4607 = vmul.f32 %v4574, %v1778
    %v4608 = vmul.f32 %v4573, %v1779
    %v4609 = vmul.f32 %v4492, %v1780
    %v4610 = vmul.f32 %v4491, %v1781
    %v4611 = vmul.f32 %v4576, %v1782
    %v4612 = vmul.f32 %v4575, %v1783
    %v4613 = vmul.f32 %v4494, %v1784
    %v4614 = vmul.f32 %v4493, %v1785
    %v4615 = vmul.f32 %v4578, %v1786
    %v4616 = vmul.f32 %v4577, %v1787
    %v4617 = vmul.f32 %v4496, %v1788
    %v4618 = vmul.f32 %v4495, %v1789
    %v4619 = vmul.f32 %v4580, %v1790
    %v4620 = vmul.f32 %v4579, %v1791
    %v4621 = vadd.f32 %v4589, %v4605
    %v4622 = vadd.f32 %v4590, %v4606
    %v4623 = vadd.f32 %v4591, %v4607
    %v4624 = vadd.f32 %v4592, %v4608
    %v4625 = vadd.f32 %v4593, %v4609
    %v4626 = vadd.f32 %v4594, %v4610
    %v4627 = vadd.f32 %v4595, %v4611
    %v4628 = vadd.f32 %v4596, %v4612
    %v4629 = vadd.f32 %v4597, %v4613
    %v4630 = vadd.f32 %v4598, %v4614
    %v4631 = vadd.f32 %v4599, %v4615
    %v4632 = vadd.f32 %v4600, %v4616
    %v4633 = vadd.f32 %v4601, %v4617
    %v4634 = vadd.f32 %v4602, %v4618
    %v4635 = vadd.f32 %v4603, %v4619
    %v4636 = vadd.f32 %v4604, %v4620
    %v4637 = vpack.c.bf16 %v4625, %v4621
    %v4638 = vpack.c.bf16 %v4626, %v4622
    %v4639 = vpack.c.bf16 %v4627, %v4623
    %v4640 = vpack.c.bf16 %v4628, %v4624
    %v4641 = vpack.c.bf16 %v4633, %v4629
    %v4642 = vpack.c.bf16 %v4634, %v4630
    %v4643 = vpack.c.bf16 %v4635, %v4631
    %v4644 = vpack.c.bf16 %v4636, %v4632
    %v4645 = vmul.f32 %v4497, %v1752
    %v4646 = vmul.f32 %v4498, %v1753
    %v4647 = vmul.f32 %v4581, %v1754
    %v4648 = vmul.f32 %v4582, %v1755
    %v4649 = vmul.f32 %v4499, %v1756
    %v4650 = vmul.f32 %v4500, %v1757
    %v4651 = vmul.f32 %v4583, %v1758
    %v4652 = vmul.f32 %v4584, %v1759
    %v4653 = vmul.f32 %v4501, %v1760
    %v4654 = vmul.f32 %v4502, %v1761
    %v4655 = vmul.f32 %v4585, %v1762
    %v4656 = vmul.f32 %v4586, %v1763
    %v4657 = vmul.f32 %v4503, %v1764
    %v4658 = vmul.f32 %v4504, %v1765
    %v4659 = vmul.f32 %v4587, %v1766
    %v4660 = vmul.f32 %v4588, %v1767
    %v4661 = vmul.f32 %v4498, %v1776
    %v4662 = vmul.f32 %v4497, %v1777
    %v4663 = vmul.f32 %v4582, %v1778
    %v4664 = vmul.f32 %v4581, %v1779
    %v4665 = vmul.f32 %v4500, %v1780
    %v4666 = vmul.f32 %v4499, %v1781
    %v4667 = vmul.f32 %v4584, %v1782
    %v4668 = vmul.f32 %v4583, %v1783
    %v4669 = vmul.f32 %v4502, %v1784
    %v4670 = vmul.f32 %v4501, %v1785
    %v4671 = vmul.f32 %v4586, %v1786
    %v4672 = vmul.f32 %v4585, %v1787
    %v4673 = vmul.f32 %v4504, %v1788
    %v4674 = vmul.f32 %v4503, %v1789
    %v4675 = vmul.f32 %v4588, %v1790
    %v4676 = vmul.f32 %v4587, %v1791
    %v4677 = vadd.f32 %v4645, %v4661
    %v4678 = vadd.f32 %v4646, %v4662
    %v4679 = vadd.f32 %v4647, %v4663
    %v4680 = vadd.f32 %v4648, %v4664
    %v4681 = vadd.f32 %v4649, %v4665
    %v4682 = vadd.f32 %v4650, %v4666
    %v4683 = vadd.f32 %v4651, %v4667
    %v4684 = vadd.f32 %v4652, %v4668
    %v4685 = vadd.f32 %v4653, %v4669
    %v4686 = vadd.f32 %v4654, %v4670
    %v4687 = vadd.f32 %v4655, %v4671
    %v4688 = vadd.f32 %v4656, %v4672
    %v4689 = vadd.f32 %v4657, %v4673
    %v4690 = vadd.f32 %v4658, %v4674
    %v4691 = vadd.f32 %v4659, %v4675
    %v4692 = vadd.f32 %v4660, %v4676
    %v4693 = vpack.c.bf16 %v4681, %v4677
    %v4694 = vpack.c.bf16 %v4682, %v4678
    %v4695 = vpack.c.bf16 %v4683, %v4679
    %v4696 = vpack.c.bf16 %v4684, %v4680
    %v4697 = vpack.c.bf16 %v4689, %v4685
    %v4698 = vpack.c.bf16 %v4690, %v4686
    %v4699 = vpack.c.bf16 %v4691, %v4687
    %v4700 = vpack.c.bf16 %v4692, %v4688
    %v4701 = vpack.c.bf16 %v4300, %v4296
    %v4702 = vpack.c.bf16 %v4302, %v4298
    %v4703 = vpack.c.bf16 %v4406, %v4402
    %v4704 = vpack.c.bf16 %v4408, %v4404
    %v4705 = vpack.c.bf16 %v4310, %v4306
    %v4706 = vpack.c.bf16 %v4312, %v4308
    %v4707 = vpack.c.bf16 %v4416, %v4412
    %v4708 = vpack.c.bf16 %v4418, %v4414
    %v4709 = vlaneseq
    %v4710 = vshrl.u32 %v4709, 7
    %v4711 = vadd.s32 %v4710, 8
    %v4712 = vlaneseq
    %v4713 = vand.u32 %v4712, 127
    %4714 = vmatprep.subr.bf16.mxu0 0
    %4715 = vmatpush1.bf16.xpose.msra.mxu0 0
    %4716 = vmatprep.subr.bf16.mxu0 0
    %4717 = vmatpush1.bf16.xpose.msra.mxu0 0
    %4718 = vmatprep.subr.bf16.mxu0 0
    %4719 = vmatpush1.bf16.xpose.msra.mxu0 0
    %4720 = vmatprep.subr.bf16.mxu0 0
    %4721 = vmatpush1.bf16.xpose.msra.mxu0 0
    %4722 = vmatprep.subr.bf16.mxu0 0
    %4723 = vmatpush1.bf16.xpose.msra.mxu0 0
    %4724 = vmatprep.subr.bf16.mxu0 0
    %4725 = vmatpush1.bf16.xpose.msra.mxu0 0
    %4726 = vmatprep.subr.bf16.mxu0 0
    %4727 = vmatpush1.bf16.xpose.msra.mxu0 0
    %4728 = vmatprep.subr.bf16.mxu0 %v4694
    %4729 = vmatpush1.bf16.xpose.msra.mxu0 %v4693
    %4730 = vmatprep.subr.bf16.mxu0 0
    %4731 = vmatpush2.bf16.xpose.msra.mxu0 0
    %4732 = vmatprep.subr.bf16.mxu0 0
    %4733 = vmatpush2.bf16.xpose.msra.mxu0 0
    %4734 = vmatprep.subr.bf16.mxu0 0
    %4735 = vmatpush2.bf16.xpose.msra.mxu0 0
    %4736 = vmatprep.subr.bf16.mxu0 0
    %4737 = vmatpush2.bf16.xpose.msra.mxu0 0
    %4738 = vmatprep.subr.bf16.mxu0 0
    %4739 = vmatpush2.bf16.xpose.msra.mxu0 0
    %4740 = vmatprep.subr.bf16.mxu0 0
    %4741 = vmatpush2.bf16.xpose.msra.mxu0 0
    %4742 = vmatprep.subr.bf16.mxu0 0
    %4743 = vmatpush2.bf16.xpose.msra.mxu0 0
    %4744 = vmatprep.subr.bf16.mxu0 0
    %4745 = vmatpush2.bf16.xpose.msra.mxu0 0
    %4746 = vmatprep.mubr.bf16.mxu0 %v4638
    %4747 = vmatmul.mubr.bf16.gmra.mxu0 %v4637
    %v4748 = vpop.f32.mrf.mxu0
    %v4749 = vadd.f32 0.0, %v4748
    %v4750 = vpop.f32.mrf.mxu0
    %v4751 = vpop.f32.mrf.mxu0
    %v4752 = vadd.f32 0.0, %v4751
    %v4753 = vpop.f32.mrf.mxu0
    %4754 = vdwg.mxu0
    %vm4755 = vcmp.ge.s32.totalorder %v4710, %v4713
    %vm4756 = vcmp.ge.s32.totalorder %v4711, %v4713
    %v4757 = vsel %vm4755, %v4749, -inf
    %v4758 = vsel %vm4756, %v4752, -inf
    %vm4759 = vcmask 130048
    %v4760 = vsel %vm4759, %v4757, -inf
    %4761 = vmax.xlane.f32.xlu0 %v4760
    %v4762 = vpop.xlane.xlu0 %4761
    %v4763 = vsel %vm4759, %v4758, -inf
    %4764 = vmax.xlane.f32.xlu0 %v4763
    %v4765 = vpop.xlane.xlu0 %4764
    %v4766 = vsub.f32 %v4757, %v4762
    %v4767 = vsub.f32 %v4758, %v4765
    %v4768 = vmul.f32 %v4766, 1.442695
    %v4769 = vpow.pop %v4768
    %v4770 = vmul.f32 %v4767, 1.442695
    %v4771 = vpow.pop %v4770
    %v4772 = vsub.f32 -inf, %v4762
    %v4773 = vsub.f32 -inf, %v4765
    %v4774 = vmul.f32 %v4772, 1.442695
    %v4775 = vpow.pop %v4774
    %v4776 = vmul.f32 %v4773, 1.442695
    %v4777 = vpow.pop %v4776
    %v4778 = vmul.f32 %v4775, 0.0
    %v4779 = vmul.f32 %v4777, 0.0
    %v4780 = vsel %vm4759, %v4769, 0.0
    %4781 = vadd.xlane.f32.xlu0 %v4780
    %v4782 = vpop.xlane.xlu0 %4781
    %v4783 = vsel %vm4759, %v4771, 0.0
    %4784 = vadd.xlane.f32.xlu0 %v4783
    %v4785 = vpop.xlane.xlu0 %4784
    %v4786 = vadd.f32 %v4778, %v4782
    %v4787 = vadd.f32 %v4779, %v4785
    %v4788 = vpack.c.bf16 %v4771, %v4769
    %v4790 = vsel %vm4759, %v4788, 0
    %4792 = vmatprep.subr.bf16.mxu0 0
    %4793 = vmatpush1.bf16.msra.mxu0 0
    %4794 = vmatprep.subr.bf16.mxu0 0
    %4795 = vmatpush1.bf16.msra.mxu0 0
    %4796 = vmatprep.subr.bf16.mxu0 0
    %4797 = vmatpush1.bf16.msra.mxu0 0
    %4798 = vmatprep.subr.bf16.mxu0 0
    %4799 = vmatpush1.bf16.msra.mxu0 0
    %4800 = vmatprep.subr.bf16.mxu0 0
    %4801 = vmatpush1.bf16.msra.mxu0 0
    %4802 = vmatprep.subr.bf16.mxu0 0
    %4803 = vmatpush1.bf16.msra.mxu0 0
    %4804 = vmatprep.subr.bf16.mxu0 0
    %4805 = vmatpush1.bf16.msra.mxu0 0
    %4806 = vmatprep.subr.bf16.mxu0 %v4702
    %4807 = vmatpush1.bf16.msra.mxu0 %v4701
    %4808 = vmatprep.subr.bf16.mxu0 0
    %4809 = vmatpush2.bf16.msra.mxu0 0
    %4810 = vmatprep.subr.bf16.mxu0 0
    %4811 = vmatpush2.bf16.msra.mxu0 0
    %4812 = vmatprep.subr.bf16.mxu0 0
    %4813 = vmatpush2.bf16.msra.mxu0 0
    %4814 = vmatprep.subr.bf16.mxu0 0
    %4815 = vmatpush2.bf16.msra.mxu0 0
    %4816 = vmatprep.subr.bf16.mxu0 0
    %4817 = vmatpush2.bf16.msra.mxu0 0
    %4818 = vmatprep.subr.bf16.mxu0 0
    %4819 = vmatpush2.bf16.msra.mxu0 0
    %4820 = vmatprep.subr.bf16.mxu0 0
    %4821 = vmatpush2.bf16.msra.mxu0 0
    %4822 = vmatprep.subr.bf16.mxu0 0
    %4823 = vmatpush2.bf16.msra.mxu0 0
    %4824 = vmatprep.mubr.bf16.mxu0 0
    %4825 = vmatmul.mubr.bf16.gmra.mxu0 %v4790
    %v4826 = vpop.f32.mrf.mxu0
    %v4827 = vadd.f32 0.0, %v4826
    %v4828 = vpop.f32.mrf.mxu0
    %v4829 = vadd.f32 0.0, %v4828
    %v4830 = vpop.f32.mrf.mxu0
    %v4831 = vadd.f32 0.0, %v4830
    %v4832 = vpop.f32.mrf.mxu0
    %v4833 = vadd.f32 0.0, %v4832
    %4834 = vdwg.mxu0
    %v4835 = vadd.f32 %v4778, %v4827
    %v4836 = vadd.f32 %v4778, %v4829
    %v4837 = vadd.f32 %v4779, %v4831
    %v4838 = vadd.f32 %v4779, %v4833
    %v4839 = vrcp.pop %v4786
    %v4840 = vmul.f32 %v4835, %v4839
    %v4841 = vmul.f32 %v4836, %v4839
    %v4842 = vrcp.pop %v4787
    %v4843 = vmul.f32 %v4837, %v4842
    %v4844 = vmul.f32 %v4838, %v4842
    %4845 = vmatprep.subr.bf16.mxu0 0
    %4846 = vmatpush1.bf16.xpose.msra.mxu0 0
    %4847 = vmatprep.subr.bf16.mxu0 0
    %4848 = vmatpush1.bf16.xpose.msra.mxu0 0
    %4849 = vmatprep.subr.bf16.mxu0 0
    %4850 = vmatpush1.bf16.xpose.msra.mxu0 0
    %4851 = vmatprep.subr.bf16.mxu0 0
    %4852 = vmatpush1.bf16.xpose.msra.mxu0 0
    %4853 = vmatprep.subr.bf16.mxu0 0
    %4854 = vmatpush1.bf16.xpose.msra.mxu0 0
    %4855 = vmatprep.subr.bf16.mxu0 0
    %4856 = vmatpush1.bf16.xpose.msra.mxu0 0
    %4857 = vmatprep.subr.bf16.mxu0 0
    %4858 = vmatpush1.bf16.xpose.msra.mxu0 0
    %4859 = vmatprep.subr.bf16.mxu0 %v4696
    %4860 = vmatpush1.bf16.xpose.msra.mxu0 %v4695
    %4861 = vmatprep.subr.bf16.mxu0 0
    %4862 = vmatpush2.bf16.xpose.msra.mxu0 0
    %4863 = vmatprep.subr.bf16.mxu0 0
    %4864 = vmatpush2.bf16.xpose.msra.mxu0 0
    %4865 = vmatprep.subr.bf16.mxu0 0
    %4866 = vmatpush2.bf16.xpose.msra.mxu0 0
    %4867 = vmatprep.subr.bf16.mxu0 0
    %4868 = vmatpush2.bf16.xpose.msra.mxu0 0
    %4869 = vmatprep.subr.bf16.mxu0 0
    %4870 = vmatpush2.bf16.xpose.msra.mxu0 0
    %4871 = vmatprep.subr.bf16.mxu0 0
    %4872 = vmatpush2.bf16.xpose.msra.mxu0 0
    %4873 = vmatprep.subr.bf16.mxu0 0
    %4874 = vmatpush2.bf16.xpose.msra.mxu0 0
    %4875 = vmatprep.subr.bf16.mxu0 0
    %4876 = vmatpush2.bf16.xpose.msra.mxu0 0
    %4877 = vmatprep.mubr.bf16.mxu0 %v4640
    %4878 = vmatmul.mubr.bf16.gmra.mxu0 %v4639
    %v4879 = vpop.f32.mrf.mxu0
    %v4880 = vadd.f32 0.0, %v4879
    %v4881 = vpop.f32.mrf.mxu0
    %v4882 = vpop.f32.mrf.mxu0
    %v4883 = vadd.f32 0.0, %v4882
    %v4884 = vpop.f32.mrf.mxu0
    %4885 = vdwg.mxu0
    %v4886 = vsel %vm4755, %v4880, -inf
    %v4887 = vsel %vm4756, %v4883, -inf
    %v4888 = vsel %vm4759, %v4886, -inf
    %4889 = vmax.xlane.f32.xlu0 %v4888
    %v4890 = vpop.xlane.xlu0 %4889
    %v4891 = vsel %vm4759, %v4887, -inf
    %4892 = vmax.xlane.f32.xlu0 %v4891
    %v4893 = vpop.xlane.xlu0 %4892
    %v4894 = vsub.f32 %v4886, %v4890
    %v4895 = vsub.f32 %v4887, %v4893
    %v4896 = vmul.f32 %v4894, 1.442695
    %v4897 = vpow.pop %v4896
    %v4898 = vmul.f32 %v4895, 1.442695
    %v4899 = vpow.pop %v4898
    %v4900 = vsub.f32 -inf, %v4890
    %v4901 = vsub.f32 -inf, %v4893
    %v4902 = vmul.f32 %v4900, 1.442695
    %v4903 = vpow.pop %v4902
    %v4904 = vmul.f32 %v4901, 1.442695
    %v4905 = vpow.pop %v4904
    %v4906 = vmul.f32 %v4903, 0.0
    %v4907 = vmul.f32 %v4905, 0.0
    %v4908 = vsel %vm4759, %v4897, 0.0
    %4909 = vadd.xlane.f32.xlu0 %v4908
    %v4910 = vpop.xlane.xlu0 %4909
    %v4911 = vsel %vm4759, %v4899, 0.0
    %4912 = vadd.xlane.f32.xlu0 %v4911
    %v4913 = vpop.xlane.xlu0 %4912
    %v4914 = vadd.f32 %v4906, %v4910
    %v4915 = vadd.f32 %v4907, %v4913
    %v4916 = vpack.c.bf16 %v4899, %v4897
    %v4918 = vsel %vm4759, %v4916, 0
    %4920 = vmatprep.subr.bf16.mxu0 0
    %4921 = vmatpush1.bf16.msra.mxu0 0
    %4922 = vmatprep.subr.bf16.mxu0 0
    %4923 = vmatpush1.bf16.msra.mxu0 0
    %4924 = vmatprep.subr.bf16.mxu0 0
    %4925 = vmatpush1.bf16.msra.mxu0 0
    %4926 = vmatprep.subr.bf16.mxu0 0
    %4927 = vmatpush1.bf16.msra.mxu0 0
    %4928 = vmatprep.subr.bf16.mxu0 0
    %4929 = vmatpush1.bf16.msra.mxu0 0
    %4930 = vmatprep.subr.bf16.mxu0 0
    %4931 = vmatpush1.bf16.msra.mxu0 0
    %4932 = vmatprep.subr.bf16.mxu0 0
    %4933 = vmatpush1.bf16.msra.mxu0 0
    %4934 = vmatprep.subr.bf16.mxu0 %v4704
    %4935 = vmatpush1.bf16.msra.mxu0 %v4703
    %4936 = vmatprep.subr.bf16.mxu0 0
    %4937 = vmatpush2.bf16.msra.mxu0 0
    %4938 = vmatprep.subr.bf16.mxu0 0
    %4939 = vmatpush2.bf16.msra.mxu0 0
    %4940 = vmatprep.subr.bf16.mxu0 0
    %4941 = vmatpush2.bf16.msra.mxu0 0
    %4942 = vmatprep.subr.bf16.mxu0 0
    %4943 = vmatpush2.bf16.msra.mxu0 0
    %4944 = vmatprep.subr.bf16.mxu0 0
    %4945 = vmatpush2.bf16.msra.mxu0 0
    %4946 = vmatprep.subr.bf16.mxu0 0
    %4947 = vmatpush2.bf16.msra.mxu0 0
    %4948 = vmatprep.subr.bf16.mxu0 0
    %4949 = vmatpush2.bf16.msra.mxu0 0
    %4950 = vmatprep.subr.bf16.mxu0 0
    %4951 = vmatpush2.bf16.msra.mxu0 0
    %4952 = vmatprep.mubr.bf16.mxu0 0
    %4953 = vmatmul.mubr.bf16.gmra.mxu0 %v4918
    %v4954 = vpop.f32.mrf.mxu0
    %v4955 = vadd.f32 0.0, %v4954
    %v4956 = vpop.f32.mrf.mxu0
    %v4957 = vadd.f32 0.0, %v4956
    %v4958 = vpop.f32.mrf.mxu0
    %v4959 = vadd.f32 0.0, %v4958
    %v4960 = vpop.f32.mrf.mxu0
    %v4961 = vadd.f32 0.0, %v4960
    %4962 = vdwg.mxu0
    %v4963 = vadd.f32 %v4906, %v4955
    %v4964 = vadd.f32 %v4906, %v4957
    %v4965 = vadd.f32 %v4907, %v4959
    %v4966 = vadd.f32 %v4907, %v4961
    %v4967 = vrcp.pop %v4914
    %v4968 = vmul.f32 %v4963, %v4967
    %v4969 = vmul.f32 %v4964, %v4967
    %v4970 = vrcp.pop %v4915
    %v4971 = vmul.f32 %v4965, %v4970
    %v4972 = vmul.f32 %v4966, %v4970
    %4973 = vmatprep.subr.bf16.mxu0 0
    %4974 = vmatpush1.bf16.xpose.msra.mxu0 0
    %4975 = vmatprep.subr.bf16.mxu0 0
    %4976 = vmatpush1.bf16.xpose.msra.mxu0 0
    %4977 = vmatprep.subr.bf16.mxu0 0
    %4978 = vmatpush1.bf16.xpose.msra.mxu0 0
    %4979 = vmatprep.subr.bf16.mxu0 0
    %4980 = vmatpush1.bf16.xpose.msra.mxu0 0
    %4981 = vmatprep.subr.bf16.mxu0 0
    %4982 = vmatpush1.bf16.xpose.msra.mxu0 0
    %4983 = vmatprep.subr.bf16.mxu0 0
    %4984 = vmatpush1.bf16.xpose.msra.mxu0 0
    %4985 = vmatprep.subr.bf16.mxu0 0
    %4986 = vmatpush1.bf16.xpose.msra.mxu0 0
    %4987 = vmatprep.subr.bf16.mxu0 %v4698
    %4988 = vmatpush1.bf16.xpose.msra.mxu0 %v4697
    %4989 = vmatprep.subr.bf16.mxu0 0
    %4990 = vmatpush2.bf16.xpose.msra.mxu0 0
    %4991 = vmatprep.subr.bf16.mxu0 0
    %4992 = vmatpush2.bf16.xpose.msra.mxu0 0
    %4993 = vmatprep.subr.bf16.mxu0 0
    %4994 = vmatpush2.bf16.xpose.msra.mxu0 0
    %4995 = vmatprep.subr.bf16.mxu0 0
    %4996 = vmatpush2.bf16.xpose.msra.mxu0 0
    %4997 = vmatprep.subr.bf16.mxu0 0
    %4998 = vmatpush2.bf16.xpose.msra.mxu0 0
    %4999 = vmatprep.subr.bf16.mxu0 0
    %5000 = vmatpush2.bf16.xpose.msra.mxu0 0
    %5001 = vmatprep.subr.bf16.mxu0 0
    %5002 = vmatpush2.bf16.xpose.msra.mxu0 0
    %5003 = vmatprep.subr.bf16.mxu0 0
    %5004 = vmatpush2.bf16.xpose.msra.mxu0 0
    %5005 = vmatprep.mubr.bf16.mxu0 %v4642
    %5006 = vmatmul.mubr.bf16.gmra.mxu0 %v4641
    %v5007 = vpop.f32.mrf.mxu0
    %v5008 = vadd.f32 0.0, %v5007
    %v5009 = vpop.f32.mrf.mxu0
    %v5010 = vpop.f32.mrf.mxu0
    %v5011 = vadd.f32 0.0, %v5010
    %v5012 = vpop.f32.mrf.mxu0
    %5013 = vdwg.mxu0
    %v5014 = vsel %vm4755, %v5008, -inf
    %v5015 = vsel %vm4756, %v5011, -inf
    %v5016 = vsel %vm4759, %v5014, -inf
    %5017 = vmax.xlane.f32.xlu0 %v5016
    %v5018 = vpop.xlane.xlu0 %5017
    %v5019 = vsel %vm4759, %v5015, -inf
    %5020 = vmax.xlane.f32.xlu0 %v5019
    %v5021 = vpop.xlane.xlu0 %5020
    %v5022 = vsub.f32 %v5014, %v5018
    %v5023 = vsub.f32 %v5015, %v5021
    %v5024 = vmul.f32 %v5022, 1.442695
    %v5025 = vpow.pop %v5024
    %v5026 = vmul.f32 %v5023, 1.442695
    %v5027 = vpow.pop %v5026
    %v5028 = vsub.f32 -inf, %v5018
    %v5029 = vsub.f32 -inf, %v5021
    %v5030 = vmul.f32 %v5028, 1.442695
    %v5031 = vpow.pop %v5030
    %v5032 = vmul.f32 %v5029, 1.442695
    %v5033 = vpow.pop %v5032
    %v5034 = vmul.f32 %v5031, 0.0
    %v5035 = vmul.f32 %v5033, 0.0
    %v5036 = vsel %vm4759, %v5025, 0.0
    %5037 = vadd.xlane.f32.xlu0 %v5036
    %v5038 = vpop.xlane.xlu0 %5037
    %v5039 = vsel %vm4759, %v5027, 0.0
    %5040 = vadd.xlane.f32.xlu0 %v5039
    %v5041 = vpop.xlane.xlu0 %5040
    %v5042 = vadd.f32 %v5034, %v5038
    %v5043 = vadd.f32 %v5035, %v5041
    %v5044 = vpack.c.bf16 %v5027, %v5025
    %v5046 = vsel %vm4759, %v5044, 0
    %5048 = vmatprep.subr.bf16.mxu0 0
    %5049 = vmatpush1.bf16.msra.mxu0 0
    %5050 = vmatprep.subr.bf16.mxu0 0
    %5051 = vmatpush1.bf16.msra.mxu0 0
    %5052 = vmatprep.subr.bf16.mxu0 0
    %5053 = vmatpush1.bf16.msra.mxu0 0
    %5054 = vmatprep.subr.bf16.mxu0 0
    %5055 = vmatpush1.bf16.msra.mxu0 0
    %5056 = vmatprep.subr.bf16.mxu0 0
    %5057 = vmatpush1.bf16.msra.mxu0 0
    %5058 = vmatprep.subr.bf16.mxu0 0
    %5059 = vmatpush1.bf16.msra.mxu0 0
    %5060 = vmatprep.subr.bf16.mxu0 0
    %5061 = vmatpush1.bf16.msra.mxu0 0
    %5062 = vmatprep.subr.bf16.mxu0 %v4706
    %5063 = vmatpush1.bf16.msra.mxu0 %v4705
    %5064 = vmatprep.subr.bf16.mxu0 0
    %5065 = vmatpush2.bf16.msra.mxu0 0
    %5066 = vmatprep.subr.bf16.mxu0 0
    %5067 = vmatpush2.bf16.msra.mxu0 0
    %5068 = vmatprep.subr.bf16.mxu0 0
    %5069 = vmatpush2.bf16.msra.mxu0 0
    %5070 = vmatprep.subr.bf16.mxu0 0
    %5071 = vmatpush2.bf16.msra.mxu0 0
    %5072 = vmatprep.subr.bf16.mxu0 0
    %5073 = vmatpush2.bf16.msra.mxu0 0
    %5074 = vmatprep.subr.bf16.mxu0 0
    %5075 = vmatpush2.bf16.msra.mxu0 0
    %5076 = vmatprep.subr.bf16.mxu0 0
    %5077 = vmatpush2.bf16.msra.mxu0 0
    %5078 = vmatprep.subr.bf16.mxu0 0
    %5079 = vmatpush2.bf16.msra.mxu0 0
    %5080 = vmatprep.mubr.bf16.mxu0 0
    %5081 = vmatmul.mubr.bf16.gmra.mxu0 %v5046
    %v5082 = vpop.f32.mrf.mxu0
    %v5083 = vadd.f32 0.0, %v5082
    %v5084 = vpop.f32.mrf.mxu0
    %v5085 = vadd.f32 0.0, %v5084
    %v5086 = vpop.f32.mrf.mxu0
    %v5087 = vadd.f32 0.0, %v5086
    %v5088 = vpop.f32.mrf.mxu0
    %v5089 = vadd.f32 0.0, %v5088
    %5090 = vdwg.mxu0
    %v5091 = vadd.f32 %v5034, %v5083
    %v5092 = vadd.f32 %v5034, %v5085
    %v5093 = vadd.f32 %v5035, %v5087
    %v5094 = vadd.f32 %v5035, %v5089
    %v5095 = vrcp.pop %v5042
    %v5096 = vmul.f32 %v5091, %v5095
    %v5097 = vmul.f32 %v5092, %v5095
    %v5098 = vrcp.pop %v5043
    %v5099 = vmul.f32 %v5093, %v5098
    %v5100 = vmul.f32 %v5094, %v5098
    %5101 = vmatprep.subr.bf16.mxu0 0
    %5102 = vmatpush1.bf16.xpose.msra.mxu0 0
    %5103 = vmatprep.subr.bf16.mxu0 0
    %5104 = vmatpush1.bf16.xpose.msra.mxu0 0
    %5105 = vmatprep.subr.bf16.mxu0 0
    %5106 = vmatpush1.bf16.xpose.msra.mxu0 0
    %5107 = vmatprep.subr.bf16.mxu0 0
    %5108 = vmatpush1.bf16.xpose.msra.mxu0 0
    %5109 = vmatprep.subr.bf16.mxu0 0
    %5110 = vmatpush1.bf16.xpose.msra.mxu0 0
    %5111 = vmatprep.subr.bf16.mxu0 0
    %5112 = vmatpush1.bf16.xpose.msra.mxu0 0
    %5113 = vmatprep.subr.bf16.mxu0 0
    %5114 = vmatpush1.bf16.xpose.msra.mxu0 0
    %5115 = vmatprep.subr.bf16.mxu0 %v4700
    %5116 = vmatpush1.bf16.xpose.msra.mxu0 %v4699
    %5117 = vmatprep.subr.bf16.mxu0 0
    %5118 = vmatpush2.bf16.xpose.msra.mxu0 0
    %5119 = vmatprep.subr.bf16.mxu0 0
    %5120 = vmatpush2.bf16.xpose.msra.mxu0 0
    %5121 = vmatprep.subr.bf16.mxu0 0
    %5122 = vmatpush2.bf16.xpose.msra.mxu0 0
    %5123 = vmatprep.subr.bf16.mxu0 0
    %5124 = vmatpush2.bf16.xpose.msra.mxu0 0
    %5125 = vmatprep.subr.bf16.mxu0 0
    %5126 = vmatpush2.bf16.xpose.msra.mxu0 0
    %5127 = vmatprep.subr.bf16.mxu0 0
    %5128 = vmatpush2.bf16.xpose.msra.mxu0 0
    %5129 = vmatprep.subr.bf16.mxu0 0
    %5130 = vmatpush2.bf16.xpose.msra.mxu0 0
    %5131 = vmatprep.subr.bf16.mxu0 0
    %5132 = vmatpush2.bf16.xpose.msra.mxu0 0
    %5133 = vmatprep.mubr.bf16.mxu0 %v4644
    %5134 = vmatmul.mubr.bf16.gmra.mxu0 %v4643
    %v5135 = vpop.f32.mrf.mxu0
    %v5136 = vadd.f32 0.0, %v5135
    %v5137 = vpop.f32.mrf.mxu0
    %v5138 = vpop.f32.mrf.mxu0
    %v5139 = vadd.f32 0.0, %v5138
    %v5140 = vpop.f32.mrf.mxu0
    %5141 = vdwg.mxu0
    %v5142 = vsel %vm4755, %v5136, -inf
    %v5143 = vsel %vm4756, %v5139, -inf
    %v5144 = vsel %vm4759, %v5142, -inf
    %5145 = vmax.xlane.f32.xlu0 %v5144
    %v5146 = vpop.xlane.xlu0 %5145
    %v5147 = vsel %vm4759, %v5143, -inf
    %5148 = vmax.xlane.f32.xlu0 %v5147
    %v5149 = vpop.xlane.xlu0 %5148
    %v5150 = vsub.f32 %v5142, %v5146
    %v5151 = vsub.f32 %v5143, %v5149
    %v5152 = vmul.f32 %v5150, 1.442695
    %v5153 = vpow.pop %v5152
    %v5154 = vmul.f32 %v5151, 1.442695
    %v5155 = vpow.pop %v5154
    %v5156 = vsub.f32 -inf, %v5146
    %v5157 = vsub.f32 -inf, %v5149
    %v5158 = vmul.f32 %v5156, 1.442695
    %v5159 = vpow.pop %v5158
    %v5160 = vmul.f32 %v5157, 1.442695
    %v5161 = vpow.pop %v5160
    %v5162 = vmul.f32 %v5159, 0.0
    %v5163 = vmul.f32 %v5161, 0.0
    %v5164 = vsel %vm4759, %v5153, 0.0
    %5165 = vadd.xlane.f32.xlu0 %v5164
    %v5166 = vpop.xlane.xlu0 %5165
    %v5167 = vsel %vm4759, %v5155, 0.0
    %5168 = vadd.xlane.f32.xlu0 %v5167
    %v5169 = vpop.xlane.xlu0 %5168
    %v5170 = vadd.f32 %v5162, %v5166
    %v5171 = vadd.f32 %v5163, %v5169
    %v5172 = vpack.c.bf16 %v5155, %v5153
    %v5174 = vsel %vm4759, %v5172, 0
    %5176 = vmatprep.subr.bf16.mxu0 0
    %5177 = vmatpush1.bf16.msra.mxu0 0
    %5178 = vmatprep.subr.bf16.mxu0 0
    %5179 = vmatpush1.bf16.msra.mxu0 0
    %5180 = vmatprep.subr.bf16.mxu0 0
    %5181 = vmatpush1.bf16.msra.mxu0 0
    %5182 = vmatprep.subr.bf16.mxu0 0
    %5183 = vmatpush1.bf16.msra.mxu0 0
    %5184 = vmatprep.subr.bf16.mxu0 0
    %5185 = vmatpush1.bf16.msra.mxu0 0
    %5186 = vmatprep.subr.bf16.mxu0 0
    %5187 = vmatpush1.bf16.msra.mxu0 0
    %5188 = vmatprep.subr.bf16.mxu0 0
    %5189 = vmatpush1.bf16.msra.mxu0 0
    %5190 = vmatprep.subr.bf16.mxu0 %v4708
    %5191 = vmatpush1.bf16.msra.mxu0 %v4707
    %5192 = vmatprep.subr.bf16.mxu0 0
    %5193 = vmatpush2.bf16.msra.mxu0 0
    %5194 = vmatprep.subr.bf16.mxu0 0
    %5195 = vmatpush2.bf16.msra.mxu0 0
    %5196 = vmatprep.subr.bf16.mxu0 0
    %5197 = vmatpush2.bf16.msra.mxu0 0
    %5198 = vmatprep.subr.bf16.mxu0 0
    %5199 = vmatpush2.bf16.msra.mxu0 0
    %5200 = vmatprep.subr.bf16.mxu0 0
    %5201 = vmatpush2.bf16.msra.mxu0 0
    %5202 = vmatprep.subr.bf16.mxu0 0
    %5203 = vmatpush2.bf16.msra.mxu0 0
    %5204 = vmatprep.subr.bf16.mxu0 0
    %5205 = vmatpush2.bf16.msra.mxu0 0
    %5206 = vmatprep.subr.bf16.mxu0 0
    %5207 = vmatpush2.bf16.msra.mxu0 0
    %5208 = vmatprep.mubr.bf16.mxu0 0
    %5209 = vmatmul.mubr.bf16.gmra.mxu0 %v5174
    %v5210 = vpop.f32.mrf.mxu0
    %v5211 = vadd.f32 0.0, %v5210
    %v5212 = vpop.f32.mrf.mxu0
    %v5213 = vadd.f32 0.0, %v5212
    %v5214 = vpop.f32.mrf.mxu0
    %v5215 = vadd.f32 0.0, %v5214
    %v5216 = vpop.f32.mrf.mxu0
    %v5217 = vadd.f32 0.0, %v5216
    %5218 = vdwg.mxu0
    %v5219 = vadd.f32 %v5162, %v5211
    %v5220 = vadd.f32 %v5162, %v5213
    %v5221 = vadd.f32 %v5163, %v5215
    %v5222 = vadd.f32 %v5163, %v5217
    %v5223 = vrcp.pop %v5170
    %v5224 = vmul.f32 %v5219, %v5223
    %v5225 = vmul.f32 %v5220, %v5223
    %v5226 = vrcp.pop %v5171
    %v5227 = vmul.f32 %v5221, %v5226
    %v5228 = vmul.f32 %v5222, %v5226
    %v5229 = vpack.c.bf16 %v4843, %v4840
    %v5230 = vpack.c.bf16 %v4844, %v4841
    %v5231 = vpack.c.bf16 %v4971, %v4968
    %v5232 = vpack.c.bf16 %v4972, %v4969
    %v5233 = vpack.c.bf16 %v5099, %v5096
    %v5234 = vpack.c.bf16 %v5100, %v5097
    %v5235 = vpack.c.bf16 %v5227, %v5224
    %v5236 = vpack.c.bf16 %v5228, %v5225
    %v5365 = vunpack.c.l.b16 %v592
    %v5366 = vunpack.c.h.b16 %v592
    %v5367 = vunpack.c.l.b16 %v593
    %v5368 = vunpack.c.h.b16 %v593
    %v5369 = vunpack.c.l.b16 %v594
    %v5370 = vunpack.c.h.b16 %v594
    %v5371 = vunpack.c.l.b16 %v595
    %v5372 = vunpack.c.h.b16 %v595
    %v5373 = vunpack.c.l.b16 %v596
    %v5374 = vunpack.c.h.b16 %v596
    %v5375 = vunpack.c.l.b16 %v597
    %v5376 = vunpack.c.h.b16 %v597
    %v5377 = vunpack.c.l.b16 %v598
    %v5378 = vunpack.c.h.b16 %v598
    %v5379 = vunpack.c.l.b16 %v599
    %v5380 = vunpack.c.h.b16 %v599
    %v5381 = vunpack.c.l.b16 %v600
    %v5382 = vunpack.c.h.b16 %v600
    %v5383 = vunpack.c.l.b16 %v601
    %v5384 = vunpack.c.h.b16 %v601
    %v5385 = vunpack.c.l.b16 %v602
    %v5386 = vunpack.c.h.b16 %v602
    %v5387 = vunpack.c.l.b16 %v603
    %v5388 = vunpack.c.h.b16 %v603
    %v5389 = vunpack.c.l.b16 %v604
    %v5390 = vunpack.c.h.b16 %v604
    %v5391 = vunpack.c.l.b16 %v605
    %v5392 = vunpack.c.h.b16 %v605
    %v5393 = vunpack.c.l.b16 %v606
    %v5394 = vunpack.c.h.b16 %v606
    %v5395 = vunpack.c.l.b16 %v607
    %v5396 = vunpack.c.h.b16 %v607
    %v5397 = vunpack.c.l.b16 %v608
    %v5398 = vunpack.c.h.b16 %v608
    %v5399 = vunpack.c.l.b16 %v609
    %v5400 = vunpack.c.h.b16 %v609
    %v5401 = vunpack.c.l.b16 %v610
    %v5402 = vunpack.c.h.b16 %v610
    %v5403 = vunpack.c.l.b16 %v611
    %v5404 = vunpack.c.h.b16 %v611
    %v5405 = vunpack.c.l.b16 %v612
    %v5406 = vunpack.c.h.b16 %v612
    %v5407 = vunpack.c.l.b16 %v613
    %v5408 = vunpack.c.h.b16 %v613
    %v5409 = vunpack.c.l.b16 %v614
    %v5410 = vunpack.c.h.b16 %v614
    %v5411 = vunpack.c.l.b16 %v615
    %v5412 = vunpack.c.h.b16 %v615
    %v5413 = vunpack.c.l.b16 %v616
    %v5414 = vunpack.c.h.b16 %v616
    %v5415 = vunpack.c.l.b16 %v617
    %v5416 = vunpack.c.h.b16 %v617
    %v5417 = vunpack.c.l.b16 %v618
    %v5418 = vunpack.c.h.b16 %v618
    %v5419 = vunpack.c.l.b16 %v619
    %v5420 = vunpack.c.h.b16 %v619
    %v5421 = vunpack.c.l.b16 %v620
    %v5422 = vunpack.c.h.b16 %v620
    %v5423 = vunpack.c.l.b16 %v621
    %v5424 = vunpack.c.h.b16 %v621
    %v5425 = vunpack.c.l.b16 %v622
    %v5426 = vunpack.c.h.b16 %v622
    %v5427 = vunpack.c.l.b16 %v623
    %v5428 = vunpack.c.h.b16 %v623
    %v5429 = vunpack.c.l.b16 %v624
    %v5430 = vunpack.c.h.b16 %v624
    %v5431 = vunpack.c.l.b16 %v625
    %v5432 = vunpack.c.h.b16 %v625
    %v5433 = vunpack.c.l.b16 %v626
    %v5434 = vunpack.c.h.b16 %v626
    %v5435 = vunpack.c.l.b16 %v627
    %v5436 = vunpack.c.h.b16 %v627
    %v5437 = vunpack.c.l.b16 %v628
    %v5438 = vunpack.c.h.b16 %v628
    %v5439 = vunpack.c.l.b16 %v629
    %v5440 = vunpack.c.h.b16 %v629
    %v5441 = vunpack.c.l.b16 %v630
    %v5442 = vunpack.c.h.b16 %v630
    %v5443 = vunpack.c.l.b16 %v631
    %v5444 = vunpack.c.h.b16 %v631
    %v5445 = vunpack.c.l.b16 %v632
    %v5446 = vunpack.c.h.b16 %v632
    %v5447 = vunpack.c.l.b16 %v633
    %v5448 = vunpack.c.h.b16 %v633
    %v5449 = vunpack.c.l.b16 %v634
    %v5450 = vunpack.c.h.b16 %v634
    %v5451 = vunpack.c.l.b16 %v635
    %v5452 = vunpack.c.h.b16 %v635
    %v5453 = vunpack.c.l.b16 %v636
    %v5454 = vunpack.c.h.b16 %v636
    %v5455 = vunpack.c.l.b16 %v637
    %v5456 = vunpack.c.h.b16 %v637
    %v5457 = vunpack.c.l.b16 %v638
    %v5458 = vunpack.c.h.b16 %v638
    %v5459 = vunpack.c.l.b16 %v639
    %v5460 = vunpack.c.h.b16 %v639
    %v5461 = vunpack.c.l.b16 %v640
    %v5462 = vunpack.c.h.b16 %v640
    %v5463 = vunpack.c.l.b16 %v641
    %v5464 = vunpack.c.h.b16 %v641
    %v5465 = vunpack.c.l.b16 %v642
    %v5466 = vunpack.c.h.b16 %v642
    %v5467 = vunpack.c.l.b16 %v643
    %v5468 = vunpack.c.h.b16 %v643
    %v5469 = vunpack.c.l.b16 %v644
    %v5470 = vunpack.c.h.b16 %v644
    %v5471 = vunpack.c.l.b16 %v645
    %v5472 = vunpack.c.h.b16 %v645
    %v5473 = vunpack.c.l.b16 %v646
    %v5474 = vunpack.c.h.b16 %v646
    %v5475 = vunpack.c.l.b16 %v647
    %v5476 = vunpack.c.h.b16 %v647
    %v5477 = vunpack.c.l.b16 %v648
    %v5478 = vunpack.c.h.b16 %v648
    %v5479 = vunpack.c.l.b16 %v649
    %v5480 = vunpack.c.h.b16 %v649
    %v5481 = vunpack.c.l.b16 %v650
    %v5482 = vunpack.c.h.b16 %v650
    %v5483 = vunpack.c.l.b16 %v651
    %v5484 = vunpack.c.h.b16 %v651
    %v5485 = vunpack.c.l.b16 %v652
    %v5486 = vunpack.c.h.b16 %v652
    %v5487 = vunpack.c.l.b16 %v653
    %v5488 = vunpack.c.h.b16 %v653
    %v5489 = vunpack.c.l.b16 %v654
    %v5490 = vunpack.c.h.b16 %v654
    %v5491 = vunpack.c.l.b16 %v655
    %v5492 = vunpack.c.h.b16 %v655
    %v5493 = vunpack.c.l.b16 %v656
    %v5494 = vunpack.c.h.b16 %v656
    %v5495 = vunpack.c.l.b16 %v657
    %v5496 = vunpack.c.h.b16 %v657
    %v5497 = vunpack.c.l.b16 %v658
    %v5498 = vunpack.c.h.b16 %v658
    %v5499 = vunpack.c.l.b16 %v659
    %v5500 = vunpack.c.h.b16 %v659
    %v5501 = vunpack.c.l.b16 %v660
    %v5502 = vunpack.c.h.b16 %v660
    %v5503 = vunpack.c.l.b16 %v661
    %v5504 = vunpack.c.h.b16 %v661
    %v5505 = vunpack.c.l.b16 %v662
    %v5506 = vunpack.c.h.b16 %v662
    %v5507 = vunpack.c.l.b16 %v663
    %v5508 = vunpack.c.h.b16 %v663
    %v5509 = vunpack.c.l.b16 %v664
    %v5510 = vunpack.c.h.b16 %v664
    %v5511 = vunpack.c.l.b16 %v665
    %v5512 = vunpack.c.h.b16 %v665
    %v5513 = vunpack.c.l.b16 %v666
    %v5514 = vunpack.c.h.b16 %v666
    %v5515 = vunpack.c.l.b16 %v667
    %v5516 = vunpack.c.h.b16 %v667
    %v5517 = vunpack.c.l.b16 %v668
    %v5518 = vunpack.c.h.b16 %v668
    %v5519 = vunpack.c.l.b16 %v669
    %v5520 = vunpack.c.h.b16 %v669
    %v5521 = vunpack.c.l.b16 %v670
    %v5522 = vunpack.c.h.b16 %v670
    %v5523 = vunpack.c.l.b16 %v671
    %v5524 = vunpack.c.h.b16 %v671
    %v5525 = vunpack.c.l.b16 %v672
    %v5526 = vunpack.c.h.b16 %v672
    %v5527 = vunpack.c.l.b16 %v673
    %v5528 = vunpack.c.h.b16 %v673
    %v5529 = vunpack.c.l.b16 %v674
    %v5530 = vunpack.c.h.b16 %v674
    %v5531 = vunpack.c.l.b16 %v675
    %v5532 = vunpack.c.h.b16 %v675
    %v5533 = vunpack.c.l.b16 %v676
    %v5534 = vunpack.c.h.b16 %v676
    %v5535 = vunpack.c.l.b16 %v677
    %v5536 = vunpack.c.h.b16 %v677
    %v5537 = vunpack.c.l.b16 %v678
    %v5538 = vunpack.c.h.b16 %v678
    %v5539 = vunpack.c.l.b16 %v679
    %v5540 = vunpack.c.h.b16 %v679
    %v5541 = vunpack.c.l.b16 %v680
    %v5542 = vunpack.c.h.b16 %v680
    %v5543 = vunpack.c.l.b16 %v681
    %v5544 = vunpack.c.h.b16 %v681
    %v5545 = vunpack.c.l.b16 %v682
    %v5546 = vunpack.c.h.b16 %v682
    %v5547 = vunpack.c.l.b16 %v683
    %v5548 = vunpack.c.h.b16 %v683
    %v5549 = vunpack.c.l.b16 %v684
    %v5550 = vunpack.c.h.b16 %v684
    %v5551 = vunpack.c.l.b16 %v685
    %v5552 = vunpack.c.h.b16 %v685
    %v5553 = vunpack.c.l.b16 %v686
    %v5554 = vunpack.c.h.b16 %v686
    %v5555 = vunpack.c.l.b16 %v687
    %v5556 = vunpack.c.h.b16 %v687
    %v5557 = vunpack.c.l.b16 %v688
    %v5558 = vunpack.c.h.b16 %v688
    %v5559 = vunpack.c.l.b16 %v689
    %v5560 = vunpack.c.h.b16 %v689
    %v5561 = vunpack.c.l.b16 %v690
    %v5562 = vunpack.c.h.b16 %v690
    %v5563 = vunpack.c.l.b16 %v691
    %v5564 = vunpack.c.h.b16 %v691
    %v5565 = vunpack.c.l.b16 %v692
    %v5566 = vunpack.c.h.b16 %v692
    %v5567 = vunpack.c.l.b16 %v693
    %v5568 = vunpack.c.h.b16 %v693
    %v5569 = vunpack.c.l.b16 %v694
    %v5570 = vunpack.c.h.b16 %v694
    %v5571 = vunpack.c.l.b16 %v695
    %v5572 = vunpack.c.h.b16 %v695
    %v5573 = vunpack.c.l.b16 %v696
    %v5574 = vunpack.c.h.b16 %v696
    %v5575 = vunpack.c.l.b16 %v697
    %v5576 = vunpack.c.h.b16 %v697
    %v5577 = vunpack.c.l.b16 %v698
    %v5578 = vunpack.c.h.b16 %v698
    %v5579 = vunpack.c.l.b16 %v699
    %v5580 = vunpack.c.h.b16 %v699
    %v5581 = vunpack.c.l.b16 %v700
    %v5582 = vunpack.c.h.b16 %v700
    %v5583 = vunpack.c.l.b16 %v701
    %v5584 = vunpack.c.h.b16 %v701
    %v5585 = vunpack.c.l.b16 %v702
    %v5586 = vunpack.c.h.b16 %v702
    %v5587 = vunpack.c.l.b16 %v703
    %v5588 = vunpack.c.h.b16 %v703
    %v5589 = vunpack.c.l.b16 %v704
    %v5590 = vunpack.c.h.b16 %v704
    %v5591 = vunpack.c.l.b16 %v705
    %v5592 = vunpack.c.h.b16 %v705
    %v5593 = vunpack.c.l.b16 %v706
    %v5594 = vunpack.c.h.b16 %v706
    %v5595 = vunpack.c.l.b16 %v707
    %v5596 = vunpack.c.h.b16 %v707
    %v5597 = vunpack.c.l.b16 %v708
    %v5598 = vunpack.c.h.b16 %v708
    %v5599 = vunpack.c.l.b16 %v709
    %v5600 = vunpack.c.h.b16 %v709
    %v5601 = vunpack.c.l.b16 %v710
    %v5602 = vunpack.c.h.b16 %v710
    %v5603 = vunpack.c.l.b16 %v711
    %v5604 = vunpack.c.h.b16 %v711
    %v5605 = vunpack.c.l.b16 %v712
    %v5606 = vunpack.c.h.b16 %v712
    %v5607 = vunpack.c.l.b16 %v713
    %v5608 = vunpack.c.h.b16 %v713
    %v5609 = vunpack.c.l.b16 %v714
    %v5610 = vunpack.c.h.b16 %v714
    %v5611 = vunpack.c.l.b16 %v715
    %v5612 = vunpack.c.h.b16 %v715
    %v5613 = vunpack.c.l.b16 %v716
    %v5614 = vunpack.c.h.b16 %v716
    %v5615 = vunpack.c.l.b16 %v717
    %v5616 = vunpack.c.h.b16 %v717
    %v5617 = vunpack.c.l.b16 %v718
    %v5618 = vunpack.c.h.b16 %v718
    %v5619 = vunpack.c.l.b16 %v719
    %v5620 = vunpack.c.h.b16 %v719
    %v5621 = vpack.c.b16 %v5369, %v5365
    %v5622 = vpack.c.b16 %v5370, %v5366
    %v5623 = vpack.c.b16 %v5371, %v5367
    %v5624 = vpack.c.b16 %v5372, %v5368
    %v5625 = vpack.c.b16 %v5377, %v5373
    %v5626 = vpack.c.b16 %v5378, %v5374
    %v5627 = vpack.c.b16 %v5379, %v5375
    %v5628 = vpack.c.b16 %v5380, %v5376
    %v5629 = vpack.c.b16 %v5385, %v5381
    %v5630 = vpack.c.b16 %v5386, %v5382
    %v5631 = vpack.c.b16 %v5387, %v5383
    %v5632 = vpack.c.b16 %v5388, %v5384
    %v5633 = vpack.c.b16 %v5393, %v5389
    %v5634 = vpack.c.b16 %v5394, %v5390
    %v5635 = vpack.c.b16 %v5395, %v5391
    %v5636 = vpack.c.b16 %v5396, %v5392
    %v5637 = vpack.c.b16 %v5401, %v5397
    %v5638 = vpack.c.b16 %v5402, %v5398
    %v5639 = vpack.c.b16 %v5403, %v5399
    %v5640 = vpack.c.b16 %v5404, %v5400
    %v5641 = vpack.c.b16 %v5409, %v5405
    %v5642 = vpack.c.b16 %v5410, %v5406
    %v5643 = vpack.c.b16 %v5411, %v5407
    %v5644 = vpack.c.b16 %v5412, %v5408
    %v5645 = vpack.c.b16 %v5417, %v5413
    %v5646 = vpack.c.b16 %v5418, %v5414
    %v5647 = vpack.c.b16 %v5419, %v5415
    %v5648 = vpack.c.b16 %v5420, %v5416
    %v5649 = vpack.c.b16 %v5425, %v5421
    %v5650 = vpack.c.b16 %v5426, %v5422
    %v5651 = vpack.c.b16 %v5427, %v5423
    %v5652 = vpack.c.b16 %v5428, %v5424
    %v5653 = vpack.c.b16 %v5433, %v5429
    %v5654 = vpack.c.b16 %v5434, %v5430
    %v5655 = vpack.c.b16 %v5435, %v5431
    %v5656 = vpack.c.b16 %v5436, %v5432
    %v5657 = vpack.c.b16 %v5441, %v5437
    %v5658 = vpack.c.b16 %v5442, %v5438
    %v5659 = vpack.c.b16 %v5443, %v5439
    %v5660 = vpack.c.b16 %v5444, %v5440
    %v5661 = vpack.c.b16 %v5449, %v5445
    %v5662 = vpack.c.b16 %v5450, %v5446
    %v5663 = vpack.c.b16 %v5451, %v5447
    %v5664 = vpack.c.b16 %v5452, %v5448
    %v5665 = vpack.c.b16 %v5457, %v5453
    %v5666 = vpack.c.b16 %v5458, %v5454
    %v5667 = vpack.c.b16 %v5459, %v5455
    %v5668 = vpack.c.b16 %v5460, %v5456
    %v5669 = vpack.c.b16 %v5465, %v5461
    %v5670 = vpack.c.b16 %v5466, %v5462
    %v5671 = vpack.c.b16 %v5467, %v5463
    %v5672 = vpack.c.b16 %v5468, %v5464
    %v5673 = vpack.c.b16 %v5473, %v5469
    %v5674 = vpack.c.b16 %v5474, %v5470
    %v5675 = vpack.c.b16 %v5475, %v5471
    %v5676 = vpack.c.b16 %v5476, %v5472
    %v5677 = vpack.c.b16 %v5481, %v5477
    %v5678 = vpack.c.b16 %v5482, %v5478
    %v5679 = vpack.c.b16 %v5483, %v5479
    %v5680 = vpack.c.b16 %v5484, %v5480
    %v5681 = vpack.c.b16 %v5489, %v5485
    %v5682 = vpack.c.b16 %v5490, %v5486
    %v5683 = vpack.c.b16 %v5491, %v5487
    %v5684 = vpack.c.b16 %v5492, %v5488
    %v5685 = vpack.c.b16 %v5497, %v5493
    %v5686 = vpack.c.b16 %v5498, %v5494
    %v5687 = vpack.c.b16 %v5499, %v5495
    %v5688 = vpack.c.b16 %v5500, %v5496
    %v5689 = vpack.c.b16 %v5505, %v5501
    %v5690 = vpack.c.b16 %v5506, %v5502
    %v5691 = vpack.c.b16 %v5507, %v5503
    %v5692 = vpack.c.b16 %v5508, %v5504
    %v5693 = vpack.c.b16 %v5513, %v5509
    %v5694 = vpack.c.b16 %v5514, %v5510
    %v5695 = vpack.c.b16 %v5515, %v5511
    %v5696 = vpack.c.b16 %v5516, %v5512
    %v5697 = vpack.c.b16 %v5521, %v5517
    %v5698 = vpack.c.b16 %v5522, %v5518
    %v5699 = vpack.c.b16 %v5523, %v5519
    %v5700 = vpack.c.b16 %v5524, %v5520
    %v5701 = vpack.c.b16 %v5529, %v5525
    %v5702 = vpack.c.b16 %v5530, %v5526
    %v5703 = vpack.c.b16 %v5531, %v5527
    %v5704 = vpack.c.b16 %v5532, %v5528
    %v5705 = vpack.c.b16 %v5537, %v5533
    %v5706 = vpack.c.b16 %v5538, %v5534
    %v5707 = vpack.c.b16 %v5539, %v5535
    %v5708 = vpack.c.b16 %v5540, %v5536
    %v5709 = vpack.c.b16 %v5545, %v5541
    %v5710 = vpack.c.b16 %v5546, %v5542
    %v5711 = vpack.c.b16 %v5547, %v5543
    %v5712 = vpack.c.b16 %v5548, %v5544
    %v5713 = vpack.c.b16 %v5553, %v5549
    %v5714 = vpack.c.b16 %v5554, %v5550
    %v5715 = vpack.c.b16 %v5555, %v5551
    %v5716 = vpack.c.b16 %v5556, %v5552
    %v5717 = vpack.c.b16 %v5561, %v5557
    %v5718 = vpack.c.b16 %v5562, %v5558
    %v5719 = vpack.c.b16 %v5563, %v5559
    %v5720 = vpack.c.b16 %v5564, %v5560
    %v5721 = vpack.c.b16 %v5569, %v5565
    %v5722 = vpack.c.b16 %v5570, %v5566
    %v5723 = vpack.c.b16 %v5571, %v5567
    %v5724 = vpack.c.b16 %v5572, %v5568
    %v5725 = vpack.c.b16 %v5577, %v5573
    %v5726 = vpack.c.b16 %v5578, %v5574
    %v5727 = vpack.c.b16 %v5579, %v5575
    %v5728 = vpack.c.b16 %v5580, %v5576
    %v5729 = vpack.c.b16 %v5585, %v5581
    %v5730 = vpack.c.b16 %v5586, %v5582
    %v5731 = vpack.c.b16 %v5587, %v5583
    %v5732 = vpack.c.b16 %v5588, %v5584
    %v5733 = vpack.c.b16 %v5593, %v5589
    %v5734 = vpack.c.b16 %v5594, %v5590
    %v5735 = vpack.c.b16 %v5595, %v5591
    %v5736 = vpack.c.b16 %v5596, %v5592
    %v5737 = vpack.c.b16 %v5601, %v5597
    %v5738 = vpack.c.b16 %v5602, %v5598
    %v5739 = vpack.c.b16 %v5603, %v5599
    %v5740 = vpack.c.b16 %v5604, %v5600
    %v5741 = vpack.c.b16 %v5609, %v5605
    %v5742 = vpack.c.b16 %v5610, %v5606
    %v5743 = vpack.c.b16 %v5611, %v5607
    %v5744 = vpack.c.b16 %v5612, %v5608
    %v5745 = vpack.c.b16 %v5617, %v5613
    %v5746 = vpack.c.b16 %v5618, %v5614
    %v5747 = vpack.c.b16 %v5619, %v5615
    %v5748 = vpack.c.b16 %v5620, %v5616
    %5877 = vmatprep.subr.bf16.mxu0 %v5650
    %5878 = vmatpush1.bf16.msra.mxu0 %v5649
    %5879 = vmatprep.subr.bf16.mxu0 %v5646
    %5880 = vmatpush1.bf16.msra.mxu0 %v5645
    %5881 = vmatprep.subr.bf16.mxu0 %v5642
    %5882 = vmatpush1.bf16.msra.mxu0 %v5641
    %5883 = vmatprep.subr.bf16.mxu0 %v5638
    %5884 = vmatpush1.bf16.msra.mxu0 %v5637
    %5885 = vmatprep.subr.bf16.mxu0 %v5634
    %5886 = vmatpush1.bf16.msra.mxu0 %v5633
    %5887 = vmatprep.subr.bf16.mxu0 %v5630
    %5888 = vmatpush1.bf16.msra.mxu0 %v5629
    %5889 = vmatprep.subr.bf16.mxu0 %v5626
    %5890 = vmatpush1.bf16.msra.mxu0 %v5625
    %5891 = vmatprep.subr.bf16.mxu0 %v5622
    %5892 = vmatpush1.bf16.msra.mxu0 %v5621
    %5893 = vmatprep.subr.bf16.mxu0 %v5682
    %5894 = vmatpush2.bf16.msra.mxu0 %v5681
    %5895 = vmatprep.subr.bf16.mxu0 %v5678
    %5896 = vmatpush2.bf16.msra.mxu0 %v5677
    %5897 = vmatprep.subr.bf16.mxu0 %v5674
    %5898 = vmatpush2.bf16.msra.mxu0 %v5673
    %5899 = vmatprep.subr.bf16.mxu0 %v5670
    %5900 = vmatpush2.bf16.msra.mxu0 %v5669
    %5901 = vmatprep.subr.bf16.mxu0 %v5666
    %5902 = vmatpush2.bf16.msra.mxu0 %v5665
    %5903 = vmatprep.subr.bf16.mxu0 %v5662
    %5904 = vmatpush2.bf16.msra.mxu0 %v5661
    %5905 = vmatprep.subr.bf16.mxu0 %v5658
    %5906 = vmatpush2.bf16.msra.mxu0 %v5657
    %5907 = vmatprep.subr.bf16.mxu0 %v5654
    %5908 = vmatpush2.bf16.msra.mxu0 %v5653
    %5909 = vmatprep.mubr.bf16.mxu0 %v5230
    %5910 = vmatmul.mubr.bf16.gmra.mxu0 %v5229
    %v5911 = vpop.f32.mrf.mxu0
    %v5912 = vadd.f32 0.0, %v5911
    %v5913 = vpop.f32.mrf.mxu0
    %v5914 = vadd.f32 0.0, %v5913
    %v5915 = vpop.f32.mrf.mxu0
    %v5916 = vadd.f32 0.0, %v5915
    %v5917 = vpop.f32.mrf.mxu0
    %v5918 = vadd.f32 0.0, %v5917
    %5919 = vmatprep.mubr.bf16.mxu0 %v5234
    %5920 = vmatmul.mubr.bf16.gmra.mxu0 %v5233
    %v5921 = vpop.f32.mrf.mxu0
    %v5922 = vadd.f32 0.0, %v5921
    %v5923 = vpop.f32.mrf.mxu0
    %v5924 = vadd.f32 0.0, %v5923
    %v5925 = vpop.f32.mrf.mxu0
    %v5926 = vadd.f32 0.0, %v5925
    %v5927 = vpop.f32.mrf.mxu0
    %v5928 = vadd.f32 0.0, %v5927
    %5929 = vdwg.mxu0
    %5930 = vmatprep.subr.bf16.mxu0 %v5714
    %5931 = vmatpush1.bf16.msra.mxu0 %v5713
    %5932 = vmatprep.subr.bf16.mxu0 %v5710
    %5933 = vmatpush1.bf16.msra.mxu0 %v5709
    %5934 = vmatprep.subr.bf16.mxu0 %v5706
    %5935 = vmatpush1.bf16.msra.mxu0 %v5705
    %5936 = vmatprep.subr.bf16.mxu0 %v5702
    %5937 = vmatpush1.bf16.msra.mxu0 %v5701
    %5938 = vmatprep.subr.bf16.mxu0 %v5698
    %5939 = vmatpush1.bf16.msra.mxu0 %v5697
    %5940 = vmatprep.subr.bf16.mxu0 %v5694
    %5941 = vmatpush1.bf16.msra.mxu0 %v5693
    %5942 = vmatprep.subr.bf16.mxu0 %v5690
    %5943 = vmatpush1.bf16.msra.mxu0 %v5689
    %5944 = vmatprep.subr.bf16.mxu0 %v5686
    %5945 = vmatpush1.bf16.msra.mxu0 %v5685
    %5946 = vmatprep.subr.bf16.mxu0 %v5746
    %5947 = vmatpush2.bf16.msra.mxu0 %v5745
    %5948 = vmatprep.subr.bf16.mxu0 %v5742
    %5949 = vmatpush2.bf16.msra.mxu0 %v5741
    %5950 = vmatprep.subr.bf16.mxu0 %v5738
    %5951 = vmatpush2.bf16.msra.mxu0 %v5737
    %5952 = vmatprep.subr.bf16.mxu0 %v5734
    %5953 = vmatpush2.bf16.msra.mxu0 %v5733
    %5954 = vmatprep.subr.bf16.mxu0 %v5730
    %5955 = vmatpush2.bf16.msra.mxu0 %v5729
    %5956 = vmatprep.subr.bf16.mxu0 %v5726
    %5957 = vmatpush2.bf16.msra.mxu0 %v5725
    %5958 = vmatprep.subr.bf16.mxu0 %v5722
    %5959 = vmatpush2.bf16.msra.mxu0 %v5721
    %5960 = vmatprep.subr.bf16.mxu0 %v5718
    %5961 = vmatpush2.bf16.msra.mxu0 %v5717
    %5962 = vmatprep.mubr.bf16.mxu0 %v5232
    %5963 = vmatmul.mubr.bf16.gmra.mxu0 %v5231
    %v5964 = vpop.f32.mrf.mxu0
    %v5965 = vadd.f32 %v5912, %v5964
    %v5966 = vpop.f32.mrf.mxu0
    %v5967 = vadd.f32 %v5914, %v5966
    %v5968 = vpop.f32.mrf.mxu0
    %v5969 = vadd.f32 %v5916, %v5968
    %v5970 = vpop.f32.mrf.mxu0
    %v5971 = vadd.f32 %v5918, %v5970
    %5972 = vmatprep.mubr.bf16.mxu0 %v5236
    %5973 = vmatmul.mubr.bf16.gmra.mxu0 %v5235
    %v5974 = vpop.f32.mrf.mxu0
    %v5975 = vadd.f32 %v5922, %v5974
    %v5976 = vpop.f32.mrf.mxu0
    %v5977 = vadd.f32 %v5924, %v5976
    %v5978 = vpop.f32.mrf.mxu0
    %v5979 = vadd.f32 %v5926, %v5978
    %v5980 = vpop.f32.mrf.mxu0
    %v5981 = vadd.f32 %v5928, %v5980
    %5982 = vdwg.mxu0
    %5983 = vmatprep.subr.bf16.mxu0 %v5652
    %5984 = vmatpush1.bf16.msra.mxu0 %v5651
    %5985 = vmatprep.subr.bf16.mxu0 %v5648
    %5986 = vmatpush1.bf16.msra.mxu0 %v5647
    %5987 = vmatprep.subr.bf16.mxu0 %v5644
    %5988 = vmatpush1.bf16.msra.mxu0 %v5643
    %5989 = vmatprep.subr.bf16.mxu0 %v5640
    %5990 = vmatpush1.bf16.msra.mxu0 %v5639
    %5991 = vmatprep.subr.bf16.mxu0 %v5636
    %5992 = vmatpush1.bf16.msra.mxu0 %v5635
    %5993 = vmatprep.subr.bf16.mxu0 %v5632
    %5994 = vmatpush1.bf16.msra.mxu0 %v5631
    %5995 = vmatprep.subr.bf16.mxu0 %v5628
    %5996 = vmatpush1.bf16.msra.mxu0 %v5627
    %5997 = vmatprep.subr.bf16.mxu0 %v5624
    %5998 = vmatpush1.bf16.msra.mxu0 %v5623
    %5999 = vmatprep.subr.bf16.mxu0 %v5684
    %6000 = vmatpush2.bf16.msra.mxu0 %v5683
    %6001 = vmatprep.subr.bf16.mxu0 %v5680
    %6002 = vmatpush2.bf16.msra.mxu0 %v5679
    %6003 = vmatprep.subr.bf16.mxu0 %v5676
    %6004 = vmatpush2.bf16.msra.mxu0 %v5675
    %6005 = vmatprep.subr.bf16.mxu0 %v5672
    %6006 = vmatpush2.bf16.msra.mxu0 %v5671
    %6007 = vmatprep.subr.bf16.mxu0 %v5668
    %6008 = vmatpush2.bf16.msra.mxu0 %v5667
    %6009 = vmatprep.subr.bf16.mxu0 %v5664
    %6010 = vmatpush2.bf16.msra.mxu0 %v5663
    %6011 = vmatprep.subr.bf16.mxu0 %v5660
    %6012 = vmatpush2.bf16.msra.mxu0 %v5659
    %6013 = vmatprep.subr.bf16.mxu0 %v5656
    %6014 = vmatpush2.bf16.msra.mxu0 %v5655
    %6015 = vmatprep.mubr.bf16.mxu0 %v5230
    %6016 = vmatmul.mubr.bf16.gmra.mxu0 %v5229
    %v6017 = vpop.f32.mrf.mxu0
    %v6018 = vadd.f32 0.0, %v6017
    %v6019 = vpop.f32.mrf.mxu0
    %v6020 = vadd.f32 0.0, %v6019
    %v6021 = vpop.f32.mrf.mxu0
    %v6022 = vadd.f32 0.0, %v6021
    %v6023 = vpop.f32.mrf.mxu0
    %v6024 = vadd.f32 0.0, %v6023
    %6025 = vmatprep.mubr.bf16.mxu0 %v5234
    %6026 = vmatmul.mubr.bf16.gmra.mxu0 %v5233
    %v6027 = vpop.f32.mrf.mxu0
    %v6028 = vadd.f32 0.0, %v6027
    %v6029 = vpop.f32.mrf.mxu0
    %v6030 = vadd.f32 0.0, %v6029
    %v6031 = vpop.f32.mrf.mxu0
    %v6032 = vadd.f32 0.0, %v6031
    %v6033 = vpop.f32.mrf.mxu0
    %v6034 = vadd.f32 0.0, %v6033
    %6035 = vdwg.mxu0
    %6036 = vmatprep.subr.bf16.mxu0 %v5716
    %6037 = vmatpush1.bf16.msra.mxu0 %v5715
    %6038 = vmatprep.subr.bf16.mxu0 %v5712
    %6039 = vmatpush1.bf16.msra.mxu0 %v5711
    %6040 = vmatprep.subr.bf16.mxu0 %v5708
    %6041 = vmatpush1.bf16.msra.mxu0 %v5707
    %6042 = vmatprep.subr.bf16.mxu0 %v5704
    %6043 = vmatpush1.bf16.msra.mxu0 %v5703
    %6044 = vmatprep.subr.bf16.mxu0 %v5700
    %6045 = vmatpush1.bf16.msra.mxu0 %v5699
    %6046 = vmatprep.subr.bf16.mxu0 %v5696
    %6047 = vmatpush1.bf16.msra.mxu0 %v5695
    %6048 = vmatprep.subr.bf16.mxu0 %v5692
    %6049 = vmatpush1.bf16.msra.mxu0 %v5691
    %6050 = vmatprep.subr.bf16.mxu0 %v5688
    %6051 = vmatpush1.bf16.msra.mxu0 %v5687
    %6052 = vmatprep.subr.bf16.mxu0 %v5748
    %6053 = vmatpush2.bf16.msra.mxu0 %v5747
    %6054 = vmatprep.subr.bf16.mxu0 %v5744
    %6055 = vmatpush2.bf16.msra.mxu0 %v5743
    %6056 = vmatprep.subr.bf16.mxu0 %v5740
    %6057 = vmatpush2.bf16.msra.mxu0 %v5739
    %6058 = vmatprep.subr.bf16.mxu0 %v5736
    %6059 = vmatpush2.bf16.msra.mxu0 %v5735
    %6060 = vmatprep.subr.bf16.mxu0 %v5732
    %6061 = vmatpush2.bf16.msra.mxu0 %v5731
    %6062 = vmatprep.subr.bf16.mxu0 %v5728
    %6063 = vmatpush2.bf16.msra.mxu0 %v5727
    %6064 = vmatprep.subr.bf16.mxu0 %v5724
    %6065 = vmatpush2.bf16.msra.mxu0 %v5723
    %6066 = vmatprep.subr.bf16.mxu0 %v5720
    %6067 = vmatpush2.bf16.msra.mxu0 %v5719
    %6068 = vmatprep.mubr.bf16.mxu0 %v5232
    %6069 = vmatmul.mubr.bf16.gmra.mxu0 %v5231
    %v6070 = vpop.f32.mrf.mxu0
    %v6071 = vadd.f32 %v6018, %v6070
    %v6072 = vpop.f32.mrf.mxu0
    %v6073 = vadd.f32 %v6020, %v6072
    %v6074 = vpop.f32.mrf.mxu0
    %v6075 = vadd.f32 %v6022, %v6074
    %v6076 = vpop.f32.mrf.mxu0
    %v6077 = vadd.f32 %v6024, %v6076
    %6078 = vmatprep.mubr.bf16.mxu0 %v5236
    %6079 = vmatmul.mubr.bf16.gmra.mxu0 %v5235
    %v6080 = vpop.f32.mrf.mxu0
    %v6081 = vadd.f32 %v6028, %v6080
    %v6082 = vpop.f32.mrf.mxu0
    %v6083 = vadd.f32 %v6030, %v6082
    %v6084 = vpop.f32.mrf.mxu0
    %v6085 = vadd.f32 %v6032, %v6084
    %v6086 = vpop.f32.mrf.mxu0
    %v6087 = vadd.f32 %v6034, %v6086
    %6088 = vdwg.mxu0
    %v6089 = vadd.f32 %v192, %v5965
    %v6090 = vadd.f32 %v193, %v5967
    %v6091 = vadd.f32 %v194, %v6071
    %v6092 = vadd.f32 %v195, %v6073
    %v6093 = vadd.f32 %v196, %v5969
    %v6094 = vadd.f32 %v197, %v5971
    %v6095 = vadd.f32 %v198, %v6075
    %v6096 = vadd.f32 %v199, %v6077
    %v6097 = vadd.f32 %v200, %v5975
    %v6098 = vadd.f32 %v201, %v5977
    %v6099 = vadd.f32 %v202, %v6081
    %v6100 = vadd.f32 %v203, %v6083
    %v6101 = vadd.f32 %v204, %v5979
    %v6102 = vadd.f32 %v205, %v5981
    %v6103 = vadd.f32 %v206, %v6085
    %v6104 = vadd.f32 %v207, %v6087
    %v6105 = vmul.f32 %v6089, %v6089
    %v6106 = vmul.f32 %v6090, %v6090
    %v6107 = vmul.f32 %v6091, %v6091
    %v6108 = vmul.f32 %v6092, %v6092
    %v6109 = vmul.f32 %v6093, %v6093
    %v6110 = vmul.f32 %v6094, %v6094
    %v6111 = vmul.f32 %v6095, %v6095
    %v6112 = vmul.f32 %v6096, %v6096
    %v6113 = vmul.f32 %v6097, %v6097
    %v6114 = vmul.f32 %v6098, %v6098
    %v6115 = vmul.f32 %v6099, %v6099
    %v6116 = vmul.f32 %v6100, %v6100
    %v6117 = vmul.f32 %v6101, %v6101
    %v6118 = vmul.f32 %v6102, %v6102
    %v6119 = vmul.f32 %v6103, %v6103
    %v6120 = vmul.f32 %v6104, %v6104
    %v6121 = vadd.f32 %v6105, %v6106
    %v6122 = vadd.f32 %v6121, %v6107
    %v6123 = vadd.f32 %v6122, %v6108
    %6124 = vadd.xlane.f32.xlu0 %v6123
    %v6125 = vpop.xlane.xlu0 %6124
    %v6126 = vadd.f32 %v6109, %v6110
    %v6127 = vadd.f32 %v6126, %v6111
    %v6128 = vadd.f32 %v6127, %v6112
    %6129 = vadd.xlane.f32.xlu0 %v6128
    %v6130 = vpop.xlane.xlu0 %6129
    %v6131 = vadd.f32 %v6113, %v6114
    %v6132 = vadd.f32 %v6131, %v6115
    %v6133 = vadd.f32 %v6132, %v6116
    %6134 = vadd.xlane.f32.xlu0 %v6133
    %v6135 = vpop.xlane.xlu0 %6134
    %v6136 = vadd.f32 %v6117, %v6118
    %v6137 = vadd.f32 %v6136, %v6119
    %v6138 = vadd.f32 %v6137, %v6120
    %6139 = vadd.xlane.f32.xlu0 %v6138
    %v6140 = vpop.xlane.xlu0 %6139
    %v6141 = vmul.f32 %v6125, %v179
    %v6142 = vmul.f32 %v6130, %v179
    %v6143 = vmul.f32 %v6135, %v179
    %v6144 = vmul.f32 %v6140, %v179
    %v6145 = vadd.f32 %v6141, 1.1920929e-07
    %v6146 = vadd.f32 %v6142, 1.1920929e-07
    %v6147 = vadd.f32 %v6143, 1.1920929e-07
    %v6148 = vadd.f32 %v6144, 1.1920929e-07
    %v6149 = vrsqrt.pop %v6145
    %v6150 = vrsqrt.pop %v6146
    %v6151 = vrsqrt.pop %v6147
    %v6152 = vrsqrt.pop %v6148
    %v6153 = vmul.f32 %v6089, %v6149
    %v6154 = vmul.f32 %v6090, %v6149
    %v6155 = vmul.f32 %v6091, %v6149
    %v6156 = vmul.f32 %v6092, %v6149
    %v6157 = vmul.f32 %v6093, %v6150
    %v6158 = vmul.f32 %v6094, %v6150
    %v6159 = vmul.f32 %v6095, %v6150
    %v6160 = vmul.f32 %v6096, %v6150
    %v6161 = vmul.f32 %v6097, %v6151
    %v6162 = vmul.f32 %v6098, %v6151
    %v6163 = vmul.f32 %v6099, %v6151
    %v6164 = vmul.f32 %v6100, %v6151
    %v6165 = vmul.f32 %v6101, %v6152
    %v6166 = vmul.f32 %v6102, %v6152
    %v6167 = vmul.f32 %v6103, %v6152
    %v6168 = vmul.f32 %v6104, %v6152
    %v6169 = vpack.c.bf16 %v6157, %v6153
    %v6170 = vpack.c.bf16 %v6158, %v6154
    %v6171 = vpack.c.bf16 %v6159, %v6155
    %v6172 = vpack.c.bf16 %v6160, %v6156
    %v6173 = vpack.c.bf16 %v6165, %v6161
    %v6174 = vpack.c.bf16 %v6166, %v6162
    %v6175 = vpack.c.bf16 %v6167, %v6163
    %v6176 = vpack.c.bf16 %v6168, %v6164
    %v6689 = vunpack.c.l.b16 %v720
    %v6690 = vunpack.c.h.b16 %v720
    %v6691 = vunpack.c.l.b16 %v721
    %v6692 = vunpack.c.h.b16 %v721
    %v6693 = vunpack.c.l.b16 %v722
    %v6694 = vunpack.c.h.b16 %v722
    %v6695 = vunpack.c.l.b16 %v723
    %v6696 = vunpack.c.h.b16 %v723
    %v6697 = vunpack.c.l.b16 %v724
    %v6698 = vunpack.c.h.b16 %v724
    %v6699 = vunpack.c.l.b16 %v725
    %v6700 = vunpack.c.h.b16 %v725
    %v6701 = vunpack.c.l.b16 %v726
    %v6702 = vunpack.c.h.b16 %v726
    %v6703 = vunpack.c.l.b16 %v727
    %v6704 = vunpack.c.h.b16 %v727
    %v6705 = vunpack.c.l.b16 %v728
    %v6706 = vunpack.c.h.b16 %v728
    %v6707 = vunpack.c.l.b16 %v729
    %v6708 = vunpack.c.h.b16 %v729
    %v6709 = vunpack.c.l.b16 %v730
    %v6710 = vunpack.c.h.b16 %v730
    %v6711 = vunpack.c.l.b16 %v731
    %v6712 = vunpack.c.h.b16 %v731
    %v6713 = vunpack.c.l.b16 %v732
    %v6714 = vunpack.c.h.b16 %v732
    %v6715 = vunpack.c.l.b16 %v733
    %v6716 = vunpack.c.h.b16 %v733
    %v6717 = vunpack.c.l.b16 %v734
    %v6718 = vunpack.c.h.b16 %v734
    %v6719 = vunpack.c.l.b16 %v735
    %v6720 = vunpack.c.h.b16 %v735
    %v6721 = vunpack.c.l.b16 %v736
    %v6722 = vunpack.c.h.b16 %v736
    %v6723 = vunpack.c.l.b16 %v737
    %v6724 = vunpack.c.h.b16 %v737
    %v6725 = vunpack.c.l.b16 %v738
    %v6726 = vunpack.c.h.b16 %v738
    %v6727 = vunpack.c.l.b16 %v739
    %v6728 = vunpack.c.h.b16 %v739
    %v6729 = vunpack.c.l.b16 %v740
    %v6730 = vunpack.c.h.b16 %v740
    %v6731 = vunpack.c.l.b16 %v741
    %v6732 = vunpack.c.h.b16 %v741
    %v6733 = vunpack.c.l.b16 %v742
    %v6734 = vunpack.c.h.b16 %v742
    %v6735 = vunpack.c.l.b16 %v743
    %v6736 = vunpack.c.h.b16 %v743
    %v6737 = vunpack.c.l.b16 %v744
    %v6738 = vunpack.c.h.b16 %v744
    %v6739 = vunpack.c.l.b16 %v745
    %v6740 = vunpack.c.h.b16 %v745
    %v6741 = vunpack.c.l.b16 %v746
    %v6742 = vunpack.c.h.b16 %v746
    %v6743 = vunpack.c.l.b16 %v747
    %v6744 = vunpack.c.h.b16 %v747
    %v6745 = vunpack.c.l.b16 %v748
    %v6746 = vunpack.c.h.b16 %v748
    %v6747 = vunpack.c.l.b16 %v749
    %v6748 = vunpack.c.h.b16 %v749
    %v6749 = vunpack.c.l.b16 %v750
    %v6750 = vunpack.c.h.b16 %v750
    %v6751 = vunpack.c.l.b16 %v751
    %v6752 = vunpack.c.h.b16 %v751
    %v6753 = vunpack.c.l.b16 %v752
    %v6754 = vunpack.c.h.b16 %v752
    %v6755 = vunpack.c.l.b16 %v753
    %v6756 = vunpack.c.h.b16 %v753
    %v6757 = vunpack.c.l.b16 %v754
    %v6758 = vunpack.c.h.b16 %v754
    %v6759 = vunpack.c.l.b16 %v755
    %v6760 = vunpack.c.h.b16 %v755
    %v6761 = vunpack.c.l.b16 %v756
    %v6762 = vunpack.c.h.b16 %v756
    %v6763 = vunpack.c.l.b16 %v757
    %v6764 = vunpack.c.h.b16 %v757
    %v6765 = vunpack.c.l.b16 %v758
    %v6766 = vunpack.c.h.b16 %v758
    %v6767 = vunpack.c.l.b16 %v759
    %v6768 = vunpack.c.h.b16 %v759
    %v6769 = vunpack.c.l.b16 %v760
    %v6770 = vunpack.c.h.b16 %v760
    %v6771 = vunpack.c.l.b16 %v761
    %v6772 = vunpack.c.h.b16 %v761
    %v6773 = vunpack.c.l.b16 %v762
    %v6774 = vunpack.c.h.b16 %v762
    %v6775 = vunpack.c.l.b16 %v763
    %v6776 = vunpack.c.h.b16 %v763
    %v6777 = vunpack.c.l.b16 %v764
    %v6778 = vunpack.c.h.b16 %v764
    %v6779 = vunpack.c.l.b16 %v765
    %v6780 = vunpack.c.h.b16 %v765
    %v6781 = vunpack.c.l.b16 %v766
    %v6782 = vunpack.c.h.b16 %v766
    %v6783 = vunpack.c.l.b16 %v767
    %v6784 = vunpack.c.h.b16 %v767
    %v6785 = vunpack.c.l.b16 %v768
    %v6786 = vunpack.c.h.b16 %v768
    %v6787 = vunpack.c.l.b16 %v769
    %v6788 = vunpack.c.h.b16 %v769
    %v6789 = vunpack.c.l.b16 %v770
    %v6790 = vunpack.c.h.b16 %v770
    %v6791 = vunpack.c.l.b16 %v771
    %v6792 = vunpack.c.h.b16 %v771
    %v6793 = vunpack.c.l.b16 %v772
    %v6794 = vunpack.c.h.b16 %v772
    %v6795 = vunpack.c.l.b16 %v773
    %v6796 = vunpack.c.h.b16 %v773
    %v6797 = vunpack.c.l.b16 %v774
    %v6798 = vunpack.c.h.b16 %v774
    %v6799 = vunpack.c.l.b16 %v775
    %v6800 = vunpack.c.h.b16 %v775
    %v6801 = vunpack.c.l.b16 %v776
    %v6802 = vunpack.c.h.b16 %v776
    %v6803 = vunpack.c.l.b16 %v777
    %v6804 = vunpack.c.h.b16 %v777
    %v6805 = vunpack.c.l.b16 %v778
    %v6806 = vunpack.c.h.b16 %v778
    %v6807 = vunpack.c.l.b16 %v779
    %v6808 = vunpack.c.h.b16 %v779
    %v6809 = vunpack.c.l.b16 %v780
    %v6810 = vunpack.c.h.b16 %v780
    %v6811 = vunpack.c.l.b16 %v781
    %v6812 = vunpack.c.h.b16 %v781
    %v6813 = vunpack.c.l.b16 %v782
    %v6814 = vunpack.c.h.b16 %v782
    %v6815 = vunpack.c.l.b16 %v783
    %v6816 = vunpack.c.h.b16 %v783
    %v6817 = vunpack.c.l.b16 %v784
    %v6818 = vunpack.c.h.b16 %v784
    %v6819 = vunpack.c.l.b16 %v785
    %v6820 = vunpack.c.h.b16 %v785
    %v6821 = vunpack.c.l.b16 %v786
    %v6822 = vunpack.c.h.b16 %v786
    %v6823 = vunpack.c.l.b16 %v787
    %v6824 = vunpack.c.h.b16 %v787
    %v6825 = vunpack.c.l.b16 %v788
    %v6826 = vunpack.c.h.b16 %v788
    %v6827 = vunpack.c.l.b16 %v789
    %v6828 = vunpack.c.h.b16 %v789
    %v6829 = vunpack.c.l.b16 %v790
    %v6830 = vunpack.c.h.b16 %v790
    %v6831 = vunpack.c.l.b16 %v791
    %v6832 = vunpack.c.h.b16 %v791
    %v6833 = vunpack.c.l.b16 %v792
    %v6834 = vunpack.c.h.b16 %v792
    %v6835 = vunpack.c.l.b16 %v793
    %v6836 = vunpack.c.h.b16 %v793
    %v6837 = vunpack.c.l.b16 %v794
    %v6838 = vunpack.c.h.b16 %v794
    %v6839 = vunpack.c.l.b16 %v795
    %v6840 = vunpack.c.h.b16 %v795
    %v6841 = vunpack.c.l.b16 %v796
    %v6842 = vunpack.c.h.b16 %v796
    %v6843 = vunpack.c.l.b16 %v797
    %v6844 = vunpack.c.h.b16 %v797
    %v6845 = vunpack.c.l.b16 %v798
    %v6846 = vunpack.c.h.b16 %v798
    %v6847 = vunpack.c.l.b16 %v799
    %v6848 = vunpack.c.h.b16 %v799
    %v6849 = vunpack.c.l.b16 %v800
    %v6850 = vunpack.c.h.b16 %v800
    %v6851 = vunpack.c.l.b16 %v801
    %v6852 = vunpack.c.h.b16 %v801
    %v6853 = vunpack.c.l.b16 %v802
    %v6854 = vunpack.c.h.b16 %v802
    %v6855 = vunpack.c.l.b16 %v803
    %v6856 = vunpack.c.h.b16 %v803
    %v6857 = vunpack.c.l.b16 %v804
    %v6858 = vunpack.c.h.b16 %v804
    %v6859 = vunpack.c.l.b16 %v805
    %v6860 = vunpack.c.h.b16 %v805
    %v6861 = vunpack.c.l.b16 %v806
    %v6862 = vunpack.c.h.b16 %v806
    %v6863 = vunpack.c.l.b16 %v807
    %v6864 = vunpack.c.h.b16 %v807
    %v6865 = vunpack.c.l.b16 %v808
    %v6866 = vunpack.c.h.b16 %v808
    %v6867 = vunpack.c.l.b16 %v809
    %v6868 = vunpack.c.h.b16 %v809
    %v6869 = vunpack.c.l.b16 %v810
    %v6870 = vunpack.c.h.b16 %v810
    %v6871 = vunpack.c.l.b16 %v811
    %v6872 = vunpack.c.h.b16 %v811
    %v6873 = vunpack.c.l.b16 %v812
    %v6874 = vunpack.c.h.b16 %v812
    %v6875 = vunpack.c.l.b16 %v813
    %v6876 = vunpack.c.h.b16 %v813
    %v6877 = vunpack.c.l.b16 %v814
    %v6878 = vunpack.c.h.b16 %v814
    %v6879 = vunpack.c.l.b16 %v815
    %v6880 = vunpack.c.h.b16 %v815
    %v6881 = vunpack.c.l.b16 %v816
    %v6882 = vunpack.c.h.b16 %v816
    %v6883 = vunpack.c.l.b16 %v817
    %v6884 = vunpack.c.h.b16 %v817
    %v6885 = vunpack.c.l.b16 %v818
    %v6886 = vunpack.c.h.b16 %v818
    %v6887 = vunpack.c.l.b16 %v819
    %v6888 = vunpack.c.h.b16 %v819
    %v6889 = vunpack.c.l.b16 %v820
    %v6890 = vunpack.c.h.b16 %v820
    %v6891 = vunpack.c.l.b16 %v821
    %v6892 = vunpack.c.h.b16 %v821
    %v6893 = vunpack.c.l.b16 %v822
    %v6894 = vunpack.c.h.b16 %v822
    %v6895 = vunpack.c.l.b16 %v823
    %v6896 = vunpack.c.h.b16 %v823
    %v6897 = vunpack.c.l.b16 %v824
    %v6898 = vunpack.c.h.b16 %v824
    %v6899 = vunpack.c.l.b16 %v825
    %v6900 = vunpack.c.h.b16 %v825
    %v6901 = vunpack.c.l.b16 %v826
    %v6902 = vunpack.c.h.b16 %v826
    %v6903 = vunpack.c.l.b16 %v827
    %v6904 = vunpack.c.h.b16 %v827
    %v6905 = vunpack.c.l.b16 %v828
    %v6906 = vunpack.c.h.b16 %v828
    %v6907 = vunpack.c.l.b16 %v829
    %v6908 = vunpack.c.h.b16 %v829
    %v6909 = vunpack.c.l.b16 %v830
    %v6910 = vunpack.c.h.b16 %v830
    %v6911 = vunpack.c.l.b16 %v831
    %v6912 = vunpack.c.h.b16 %v831
    %v6913 = vunpack.c.l.b16 %v832
    %v6914 = vunpack.c.h.b16 %v832
    %v6915 = vunpack.c.l.b16 %v833
    %v6916 = vunpack.c.h.b16 %v833
    %v6917 = vunpack.c.l.b16 %v834
    %v6918 = vunpack.c.h.b16 %v834
    %v6919 = vunpack.c.l.b16 %v835
    %v6920 = vunpack.c.h.b16 %v835
    %v6921 = vunpack.c.l.b16 %v836
    %v6922 = vunpack.c.h.b16 %v836
    %v6923 = vunpack.c.l.b16 %v837
    %v6924 = vunpack.c.h.b16 %v837
    %v6925 = vunpack.c.l.b16 %v838
    %v6926 = vunpack.c.h.b16 %v838
    %v6927 = vunpack.c.l.b16 %v839
    %v6928 = vunpack.c.h.b16 %v839
    %v6929 = vunpack.c.l.b16 %v840
    %v6930 = vunpack.c.h.b16 %v840
    %v6931 = vunpack.c.l.b16 %v841
    %v6932 = vunpack.c.h.b16 %v841
    %v6933 = vunpack.c.l.b16 %v842
    %v6934 = vunpack.c.h.b16 %v842
    %v6935 = vunpack.c.l.b16 %v843
    %v6936 = vunpack.c.h.b16 %v843
    %v6937 = vunpack.c.l.b16 %v844
    %v6938 = vunpack.c.h.b16 %v844
    %v6939 = vunpack.c.l.b16 %v845
    %v6940 = vunpack.c.h.b16 %v845
    %v6941 = vunpack.c.l.b16 %v846
    %v6942 = vunpack.c.h.b16 %v846
    %v6943 = vunpack.c.l.b16 %v847
    %v6944 = vunpack.c.h.b16 %v847
    %v6945 = vunpack.c.l.b16 %v848
    %v6946 = vunpack.c.h.b16 %v848
    %v6947 = vunpack.c.l.b16 %v849
    %v6948 = vunpack.c.h.b16 %v849
    %v6949 = vunpack.c.l.b16 %v850
    %v6950 = vunpack.c.h.b16 %v850
    %v6951 = vunpack.c.l.b16 %v851
    %v6952 = vunpack.c.h.b16 %v851
    %v6953 = vunpack.c.l.b16 %v852
    %v6954 = vunpack.c.h.b16 %v852
    %v6955 = vunpack.c.l.b16 %v853
    %v6956 = vunpack.c.h.b16 %v853
    %v6957 = vunpack.c.l.b16 %v854
    %v6958 = vunpack.c.h.b16 %v854
    %v6959 = vunpack.c.l.b16 %v855
    %v6960 = vunpack.c.h.b16 %v855
    %v6961 = vunpack.c.l.b16 %v856
    %v6962 = vunpack.c.h.b16 %v856
    %v6963 = vunpack.c.l.b16 %v857
    %v6964 = vunpack.c.h.b16 %v857
    %v6965 = vunpack.c.l.b16 %v858
    %v6966 = vunpack.c.h.b16 %v858
    %v6967 = vunpack.c.l.b16 %v859
    %v6968 = vunpack.c.h.b16 %v859
    %v6969 = vunpack.c.l.b16 %v860
    %v6970 = vunpack.c.h.b16 %v860
    %v6971 = vunpack.c.l.b16 %v861
    %v6972 = vunpack.c.h.b16 %v861
    %v6973 = vunpack.c.l.b16 %v862
    %v6974 = vunpack.c.h.b16 %v862
    %v6975 = vunpack.c.l.b16 %v863
    %v6976 = vunpack.c.h.b16 %v863
    %v6977 = vunpack.c.l.b16 %v864
    %v6978 = vunpack.c.h.b16 %v864
    %v6979 = vunpack.c.l.b16 %v865
    %v6980 = vunpack.c.h.b16 %v865
    %v6981 = vunpack.c.l.b16 %v866
    %v6982 = vunpack.c.h.b16 %v866
    %v6983 = vunpack.c.l.b16 %v867
    %v6984 = vunpack.c.h.b16 %v867
    %v6985 = vunpack.c.l.b16 %v868
    %v6986 = vunpack.c.h.b16 %v868
    %v6987 = vunpack.c.l.b16 %v869
    %v6988 = vunpack.c.h.b16 %v869
    %v6989 = vunpack.c.l.b16 %v870
    %v6990 = vunpack.c.h.b16 %v870
    %v6991 = vunpack.c.l.b16 %v871
    %v6992 = vunpack.c.h.b16 %v871
    %v6993 = vunpack.c.l.b16 %v872
    %v6994 = vunpack.c.h.b16 %v872
    %v6995 = vunpack.c.l.b16 %v873
    %v6996 = vunpack.c.h.b16 %v873
    %v6997 = vunpack.c.l.b16 %v874
    %v6998 = vunpack.c.h.b16 %v874
    %v6999 = vunpack.c.l.b16 %v875
    %v7000 = vunpack.c.h.b16 %v875
    %v7001 = vunpack.c.l.b16 %v876
    %v7002 = vunpack.c.h.b16 %v876
    %v7003 = vunpack.c.l.b16 %v877
    %v7004 = vunpack.c.h.b16 %v877
    %v7005 = vunpack.c.l.b16 %v878
    %v7006 = vunpack.c.h.b16 %v878
    %v7007 = vunpack.c.l.b16 %v879
    %v7008 = vunpack.c.h.b16 %v879
    %v7009 = vunpack.c.l.b16 %v880
    %v7010 = vunpack.c.h.b16 %v880
    %v7011 = vunpack.c.l.b16 %v881
    %v7012 = vunpack.c.h.b16 %v881
    %v7013 = vunpack.c.l.b16 %v882
    %v7014 = vunpack.c.h.b16 %v882
    %v7015 = vunpack.c.l.b16 %v883
    %v7016 = vunpack.c.h.b16 %v883
    %v7017 = vunpack.c.l.b16 %v884
    %v7018 = vunpack.c.h.b16 %v884
    %v7019 = vunpack.c.l.b16 %v885
    %v7020 = vunpack.c.h.b16 %v885
    %v7021 = vunpack.c.l.b16 %v886
    %v7022 = vunpack.c.h.b16 %v886
    %v7023 = vunpack.c.l.b16 %v887
    %v7024 = vunpack.c.h.b16 %v887
    %v7025 = vunpack.c.l.b16 %v888
    %v7026 = vunpack.c.h.b16 %v888
    %v7027 = vunpack.c.l.b16 %v889
    %v7028 = vunpack.c.h.b16 %v889
    %v7029 = vunpack.c.l.b16 %v890
    %v7030 = vunpack.c.h.b16 %v890
    %v7031 = vunpack.c.l.b16 %v891
    %v7032 = vunpack.c.h.b16 %v891
    %v7033 = vunpack.c.l.b16 %v892
    %v7034 = vunpack.c.h.b16 %v892
    %v7035 = vunpack.c.l.b16 %v893
    %v7036 = vunpack.c.h.b16 %v893
    %v7037 = vunpack.c.l.b16 %v894
    %v7038 = vunpack.c.h.b16 %v894
    %v7039 = vunpack.c.l.b16 %v895
    %v7040 = vunpack.c.h.b16 %v895
    %v7041 = vunpack.c.l.b16 %v896
    %v7042 = vunpack.c.h.b16 %v896
    %v7043 = vunpack.c.l.b16 %v897
    %v7044 = vunpack.c.h.b16 %v897
    %v7045 = vunpack.c.l.b16 %v898
    %v7046 = vunpack.c.h.b16 %v898
    %v7047 = vunpack.c.l.b16 %v899
    %v7048 = vunpack.c.h.b16 %v899
    %v7049 = vunpack.c.l.b16 %v900
    %v7050 = vunpack.c.h.b16 %v900
    %v7051 = vunpack.c.l.b16 %v901
    %v7052 = vunpack.c.h.b16 %v901
    %v7053 = vunpack.c.l.b16 %v902
    %v7054 = vunpack.c.h.b16 %v902
    %v7055 = vunpack.c.l.b16 %v903
    %v7056 = vunpack.c.h.b16 %v903
    %v7057 = vunpack.c.l.b16 %v904
    %v7058 = vunpack.c.h.b16 %v904
    %v7059 = vunpack.c.l.b16 %v905
    %v7060 = vunpack.c.h.b16 %v905
    %v7061 = vunpack.c.l.b16 %v906
    %v7062 = vunpack.c.h.b16 %v906
    %v7063 = vunpack.c.l.b16 %v907
    %v7064 = vunpack.c.h.b16 %v907
    %v7065 = vunpack.c.l.b16 %v908
    %v7066 = vunpack.c.h.b16 %v908
    %v7067 = vunpack.c.l.b16 %v909
    %v7068 = vunpack.c.h.b16 %v909
    %v7069 = vunpack.c.l.b16 %v910
    %v7070 = vunpack.c.h.b16 %v910
    %v7071 = vunpack.c.l.b16 %v911
    %v7072 = vunpack.c.h.b16 %v911
    %v7073 = vunpack.c.l.b16 %v912
    %v7074 = vunpack.c.h.b16 %v912
    %v7075 = vunpack.c.l.b16 %v913
    %v7076 = vunpack.c.h.b16 %v913
    %v7077 = vunpack.c.l.b16 %v914
    %v7078 = vunpack.c.h.b16 %v914
    %v7079 = vunpack.c.l.b16 %v915
    %v7080 = vunpack.c.h.b16 %v915
    %v7081 = vunpack.c.l.b16 %v916
    %v7082 = vunpack.c.h.b16 %v916
    %v7083 = vunpack.c.l.b16 %v917
    %v7084 = vunpack.c.h.b16 %v917
    %v7085 = vunpack.c.l.b16 %v918
    %v7086 = vunpack.c.h.b16 %v918
    %v7087 = vunpack.c.l.b16 %v919
    %v7088 = vunpack.c.h.b16 %v919
    %v7089 = vunpack.c.l.b16 %v920
    %v7090 = vunpack.c.h.b16 %v920
    %v7091 = vunpack.c.l.b16 %v921
    %v7092 = vunpack.c.h.b16 %v921
    %v7093 = vunpack.c.l.b16 %v922
    %v7094 = vunpack.c.h.b16 %v922
    %v7095 = vunpack.c.l.b16 %v923
    %v7096 = vunpack.c.h.b16 %v923
    %v7097 = vunpack.c.l.b16 %v924
    %v7098 = vunpack.c.h.b16 %v924
    %v7099 = vunpack.c.l.b16 %v925
    %v7100 = vunpack.c.h.b16 %v925
    %v7101 = vunpack.c.l.b16 %v926
    %v7102 = vunpack.c.h.b16 %v926
    %v7103 = vunpack.c.l.b16 %v927
    %v7104 = vunpack.c.h.b16 %v927
    %v7105 = vunpack.c.l.b16 %v928
    %v7106 = vunpack.c.h.b16 %v928
    %v7107 = vunpack.c.l.b16 %v929
    %v7108 = vunpack.c.h.b16 %v929
    %v7109 = vunpack.c.l.b16 %v930
    %v7110 = vunpack.c.h.b16 %v930
    %v7111 = vunpack.c.l.b16 %v931
    %v7112 = vunpack.c.h.b16 %v931
    %v7113 = vunpack.c.l.b16 %v932
    %v7114 = vunpack.c.h.b16 %v932
    %v7115 = vunpack.c.l.b16 %v933
    %v7116 = vunpack.c.h.b16 %v933
    %v7117 = vunpack.c.l.b16 %v934
    %v7118 = vunpack.c.h.b16 %v934
    %v7119 = vunpack.c.l.b16 %v935
    %v7120 = vunpack.c.h.b16 %v935
    %v7121 = vunpack.c.l.b16 %v936
    %v7122 = vunpack.c.h.b16 %v936
    %v7123 = vunpack.c.l.b16 %v937
    %v7124 = vunpack.c.h.b16 %v937
    %v7125 = vunpack.c.l.b16 %v938
    %v7126 = vunpack.c.h.b16 %v938
    %v7127 = vunpack.c.l.b16 %v939
    %v7128 = vunpack.c.h.b16 %v939
    %v7129 = vunpack.c.l.b16 %v940
    %v7130 = vunpack.c.h.b16 %v940
    %v7131 = vunpack.c.l.b16 %v941
    %v7132 = vunpack.c.h.b16 %v941
    %v7133 = vunpack.c.l.b16 %v942
    %v7134 = vunpack.c.h.b16 %v942
    %v7135 = vunpack.c.l.b16 %v943
    %v7136 = vunpack.c.h.b16 %v943
    %v7137 = vunpack.c.l.b16 %v944
    %v7138 = vunpack.c.h.b16 %v944
    %v7139 = vunpack.c.l.b16 %v945
    %v7140 = vunpack.c.h.b16 %v945
    %v7141 = vunpack.c.l.b16 %v946
    %v7142 = vunpack.c.h.b16 %v946
    %v7143 = vunpack.c.l.b16 %v947
    %v7144 = vunpack.c.h.b16 %v947
    %v7145 = vunpack.c.l.b16 %v948
    %v7146 = vunpack.c.h.b16 %v948
    %v7147 = vunpack.c.l.b16 %v949
    %v7148 = vunpack.c.h.b16 %v949
    %v7149 = vunpack.c.l.b16 %v950
    %v7150 = vunpack.c.h.b16 %v950
    %v7151 = vunpack.c.l.b16 %v951
    %v7152 = vunpack.c.h.b16 %v951
    %v7153 = vunpack.c.l.b16 %v952
    %v7154 = vunpack.c.h.b16 %v952
    %v7155 = vunpack.c.l.b16 %v953
    %v7156 = vunpack.c.h.b16 %v953
    %v7157 = vunpack.c.l.b16 %v954
    %v7158 = vunpack.c.h.b16 %v954
    %v7159 = vunpack.c.l.b16 %v955
    %v7160 = vunpack.c.h.b16 %v955
    %v7161 = vunpack.c.l.b16 %v956
    %v7162 = vunpack.c.h.b16 %v956
    %v7163 = vunpack.c.l.b16 %v957
    %v7164 = vunpack.c.h.b16 %v957
    %v7165 = vunpack.c.l.b16 %v958
    %v7166 = vunpack.c.h.b16 %v958
    %v7167 = vunpack.c.l.b16 %v959
    %v7168 = vunpack.c.h.b16 %v959
    %v7169 = vunpack.c.l.b16 %v960
    %v7170 = vunpack.c.h.b16 %v960
    %v7171 = vunpack.c.l.b16 %v961
    %v7172 = vunpack.c.h.b16 %v961
    %v7173 = vunpack.c.l.b16 %v962
    %v7174 = vunpack.c.h.b16 %v962
    %v7175 = vunpack.c.l.b16 %v963
    %v7176 = vunpack.c.h.b16 %v963
    %v7177 = vunpack.c.l.b16 %v964
    %v7178 = vunpack.c.h.b16 %v964
    %v7179 = vunpack.c.l.b16 %v965
    %v7180 = vunpack.c.h.b16 %v965
    %v7181 = vunpack.c.l.b16 %v966
    %v7182 = vunpack.c.h.b16 %v966
    %v7183 = vunpack.c.l.b16 %v967
    %v7184 = vunpack.c.h.b16 %v967
    %v7185 = vunpack.c.l.b16 %v968
    %v7186 = vunpack.c.h.b16 %v968
    %v7187 = vunpack.c.l.b16 %v969
    %v7188 = vunpack.c.h.b16 %v969
    %v7189 = vunpack.c.l.b16 %v970
    %v7190 = vunpack.c.h.b16 %v970
    %v7191 = vunpack.c.l.b16 %v971
    %v7192 = vunpack.c.h.b16 %v971
    %v7193 = vunpack.c.l.b16 %v972
    %v7194 = vunpack.c.h.b16 %v972
    %v7195 = vunpack.c.l.b16 %v973
    %v7196 = vunpack.c.h.b16 %v973
    %v7197 = vunpack.c.l.b16 %v974
    %v7198 = vunpack.c.h.b16 %v974
    %v7199 = vunpack.c.l.b16 %v975
    %v7200 = vunpack.c.h.b16 %v975
    %v7201 = vunpack.c.l.b16 %v976
    %v7202 = vunpack.c.h.b16 %v976
    %v7203 = vunpack.c.l.b16 %v977
    %v7204 = vunpack.c.h.b16 %v977
    %v7205 = vunpack.c.l.b16 %v978
    %v7206 = vunpack.c.h.b16 %v978
    %v7207 = vunpack.c.l.b16 %v979
    %v7208 = vunpack.c.h.b16 %v979
    %v7209 = vunpack.c.l.b16 %v980
    %v7210 = vunpack.c.h.b16 %v980
    %v7211 = vunpack.c.l.b16 %v981
    %v7212 = vunpack.c.h.b16 %v981
    %v7213 = vunpack.c.l.b16 %v982
    %v7214 = vunpack.c.h.b16 %v982
    %v7215 = vunpack.c.l.b16 %v983
    %v7216 = vunpack.c.h.b16 %v983
    %v7217 = vunpack.c.l.b16 %v984
    %v7218 = vunpack.c.h.b16 %v984
    %v7219 = vunpack.c.l.b16 %v985
    %v7220 = vunpack.c.h.b16 %v985
    %v7221 = vunpack.c.l.b16 %v986
    %v7222 = vunpack.c.h.b16 %v986
    %v7223 = vunpack.c.l.b16 %v987
    %v7224 = vunpack.c.h.b16 %v987
    %v7225 = vunpack.c.l.b16 %v988
    %v7226 = vunpack.c.h.b16 %v988
    %v7227 = vunpack.c.l.b16 %v989
    %v7228 = vunpack.c.h.b16 %v989
    %v7229 = vunpack.c.l.b16 %v990
    %v7230 = vunpack.c.h.b16 %v990
    %v7231 = vunpack.c.l.b16 %v991
    %v7232 = vunpack.c.h.b16 %v991
    %v7233 = vunpack.c.l.b16 %v992
    %v7234 = vunpack.c.h.b16 %v992
    %v7235 = vunpack.c.l.b16 %v993
    %v7236 = vunpack.c.h.b16 %v993
    %v7237 = vunpack.c.l.b16 %v994
    %v7238 = vunpack.c.h.b16 %v994
    %v7239 = vunpack.c.l.b16 %v995
    %v7240 = vunpack.c.h.b16 %v995
    %v7241 = vunpack.c.l.b16 %v996
    %v7242 = vunpack.c.h.b16 %v996
    %v7243 = vunpack.c.l.b16 %v997
    %v7244 = vunpack.c.h.b16 %v997
    %v7245 = vunpack.c.l.b16 %v998
    %v7246 = vunpack.c.h.b16 %v998
    %v7247 = vunpack.c.l.b16 %v999
    %v7248 = vunpack.c.h.b16 %v999
    %v7249 = vunpack.c.l.b16 %v1000
    %v7250 = vunpack.c.h.b16 %v1000
    %v7251 = vunpack.c.l.b16 %v1001
    %v7252 = vunpack.c.h.b16 %v1001
    %v7253 = vunpack.c.l.b16 %v1002
    %v7254 = vunpack.c.h.b16 %v1002
    %v7255 = vunpack.c.l.b16 %v1003
    %v7256 = vunpack.c.h.b16 %v1003
    %v7257 = vunpack.c.l.b16 %v1004
    %v7258 = vunpack.c.h.b16 %v1004
    %v7259 = vunpack.c.l.b16 %v1005
    %v7260 = vunpack.c.h.b16 %v1005
    %v7261 = vunpack.c.l.b16 %v1006
    %v7262 = vunpack.c.h.b16 %v1006
    %v7263 = vunpack.c.l.b16 %v1007
    %v7264 = vunpack.c.h.b16 %v1007
    %v7265 = vunpack.c.l.b16 %v1008
    %v7266 = vunpack.c.h.b16 %v1008
    %v7267 = vunpack.c.l.b16 %v1009
    %v7268 = vunpack.c.h.b16 %v1009
    %v7269 = vunpack.c.l.b16 %v1010
    %v7270 = vunpack.c.h.b16 %v1010
    %v7271 = vunpack.c.l.b16 %v1011
    %v7272 = vunpack.c.h.b16 %v1011
    %v7273 = vunpack.c.l.b16 %v1012
    %v7274 = vunpack.c.h.b16 %v1012
    %v7275 = vunpack.c.l.b16 %v1013
    %v7276 = vunpack.c.h.b16 %v1013
    %v7277 = vunpack.c.l.b16 %v1014
    %v7278 = vunpack.c.h.b16 %v1014
    %v7279 = vunpack.c.l.b16 %v1015
    %v7280 = vunpack.c.h.b16 %v1015
    %v7281 = vunpack.c.l.b16 %v1016
    %v7282 = vunpack.c.h.b16 %v1016
    %v7283 = vunpack.c.l.b16 %v1017
    %v7284 = vunpack.c.h.b16 %v1017
    %v7285 = vunpack.c.l.b16 %v1018
    %v7286 = vunpack.c.h.b16 %v1018
    %v7287 = vunpack.c.l.b16 %v1019
    %v7288 = vunpack.c.h.b16 %v1019
    %v7289 = vunpack.c.l.b16 %v1020
    %v7290 = vunpack.c.h.b16 %v1020
    %v7291 = vunpack.c.l.b16 %v1021
    %v7292 = vunpack.c.h.b16 %v1021
    %v7293 = vunpack.c.l.b16 %v1022
    %v7294 = vunpack.c.h.b16 %v1022
    %v7295 = vunpack.c.l.b16 %v1023
    %v7296 = vunpack.c.h.b16 %v1023
    %v7297 = vunpack.c.l.b16 %v1024
    %v7298 = vunpack.c.h.b16 %v1024
    %v7299 = vunpack.c.l.b16 %v1025
    %v7300 = vunpack.c.h.b16 %v1025
    %v7301 = vunpack.c.l.b16 %v1026
    %v7302 = vunpack.c.h.b16 %v1026
    %v7303 = vunpack.c.l.b16 %v1027
    %v7304 = vunpack.c.h.b16 %v1027
    %v7305 = vunpack.c.l.b16 %v1028
    %v7306 = vunpack.c.h.b16 %v1028
    %v7307 = vunpack.c.l.b16 %v1029
    %v7308 = vunpack.c.h.b16 %v1029
    %v7309 = vunpack.c.l.b16 %v1030
    %v7310 = vunpack.c.h.b16 %v1030
    %v7311 = vunpack.c.l.b16 %v1031
    %v7312 = vunpack.c.h.b16 %v1031
    %v7313 = vunpack.c.l.b16 %v1032
    %v7314 = vunpack.c.h.b16 %v1032
    %v7315 = vunpack.c.l.b16 %v1033
    %v7316 = vunpack.c.h.b16 %v1033
    %v7317 = vunpack.c.l.b16 %v1034
    %v7318 = vunpack.c.h.b16 %v1034
    %v7319 = vunpack.c.l.b16 %v1035
    %v7320 = vunpack.c.h.b16 %v1035
    %v7321 = vunpack.c.l.b16 %v1036
    %v7322 = vunpack.c.h.b16 %v1036
    %v7323 = vunpack.c.l.b16 %v1037
    %v7324 = vunpack.c.h.b16 %v1037
    %v7325 = vunpack.c.l.b16 %v1038
    %v7326 = vunpack.c.h.b16 %v1038
    %v7327 = vunpack.c.l.b16 %v1039
    %v7328 = vunpack.c.h.b16 %v1039
    %v7329 = vunpack.c.l.b16 %v1040
    %v7330 = vunpack.c.h.b16 %v1040
    %v7331 = vunpack.c.l.b16 %v1041
    %v7332 = vunpack.c.h.b16 %v1041
    %v7333 = vunpack.c.l.b16 %v1042
    %v7334 = vunpack.c.h.b16 %v1042
    %v7335 = vunpack.c.l.b16 %v1043
    %v7336 = vunpack.c.h.b16 %v1043
    %v7337 = vunpack.c.l.b16 %v1044
    %v7338 = vunpack.c.h.b16 %v1044
    %v7339 = vunpack.c.l.b16 %v1045
    %v7340 = vunpack.c.h.b16 %v1045
    %v7341 = vunpack.c.l.b16 %v1046
    %v7342 = vunpack.c.h.b16 %v1046
    %v7343 = vunpack.c.l.b16 %v1047
    %v7344 = vunpack.c.h.b16 %v1047
    %v7345 = vunpack.c.l.b16 %v1048
    %v7346 = vunpack.c.h.b16 %v1048
    %v7347 = vunpack.c.l.b16 %v1049
    %v7348 = vunpack.c.h.b16 %v1049
    %v7349 = vunpack.c.l.b16 %v1050
    %v7350 = vunpack.c.h.b16 %v1050
    %v7351 = vunpack.c.l.b16 %v1051
    %v7352 = vunpack.c.h.b16 %v1051
    %v7353 = vunpack.c.l.b16 %v1052
    %v7354 = vunpack.c.h.b16 %v1052
    %v7355 = vunpack.c.l.b16 %v1053
    %v7356 = vunpack.c.h.b16 %v1053
    %v7357 = vunpack.c.l.b16 %v1054
    %v7358 = vunpack.c.h.b16 %v1054
    %v7359 = vunpack.c.l.b16 %v1055
    %v7360 = vunpack.c.h.b16 %v1055
    %v7361 = vunpack.c.l.b16 %v1056
    %v7362 = vunpack.c.h.b16 %v1056
    %v7363 = vunpack.c.l.b16 %v1057
    %v7364 = vunpack.c.h.b16 %v1057
    %v7365 = vunpack.c.l.b16 %v1058
    %v7366 = vunpack.c.h.b16 %v1058
    %v7367 = vunpack.c.l.b16 %v1059
    %v7368 = vunpack.c.h.b16 %v1059
    %v7369 = vunpack.c.l.b16 %v1060
    %v7370 = vunpack.c.h.b16 %v1060
    %v7371 = vunpack.c.l.b16 %v1061
    %v7372 = vunpack.c.h.b16 %v1061
    %v7373 = vunpack.c.l.b16 %v1062
    %v7374 = vunpack.c.h.b16 %v1062
    %v7375 = vunpack.c.l.b16 %v1063
    %v7376 = vunpack.c.h.b16 %v1063
    %v7377 = vunpack.c.l.b16 %v1064
    %v7378 = vunpack.c.h.b16 %v1064
    %v7379 = vunpack.c.l.b16 %v1065
    %v7380 = vunpack.c.h.b16 %v1065
    %v7381 = vunpack.c.l.b16 %v1066
    %v7382 = vunpack.c.h.b16 %v1066
    %v7383 = vunpack.c.l.b16 %v1067
    %v7384 = vunpack.c.h.b16 %v1067
    %v7385 = vunpack.c.l.b16 %v1068
    %v7386 = vunpack.c.h.b16 %v1068
    %v7387 = vunpack.c.l.b16 %v1069
    %v7388 = vunpack.c.h.b16 %v1069
    %v7389 = vunpack.c.l.b16 %v1070
    %v7390 = vunpack.c.h.b16 %v1070
    %v7391 = vunpack.c.l.b16 %v1071
    %v7392 = vunpack.c.h.b16 %v1071
    %v7393 = vunpack.c.l.b16 %v1072
    %v7394 = vunpack.c.h.b16 %v1072
    %v7395 = vunpack.c.l.b16 %v1073
    %v7396 = vunpack.c.h.b16 %v1073
    %v7397 = vunpack.c.l.b16 %v1074
    %v7398 = vunpack.c.h.b16 %v1074
    %v7399 = vunpack.c.l.b16 %v1075
    %v7400 = vunpack.c.h.b16 %v1075
    %v7401 = vunpack.c.l.b16 %v1076
    %v7402 = vunpack.c.h.b16 %v1076
    %v7403 = vunpack.c.l.b16 %v1077
    %v7404 = vunpack.c.h.b16 %v1077
    %v7405 = vunpack.c.l.b16 %v1078
    %v7406 = vunpack.c.h.b16 %v1078
    %v7407 = vunpack.c.l.b16 %v1079
    %v7408 = vunpack.c.h.b16 %v1079
    %v7409 = vunpack.c.l.b16 %v1080
    %v7410 = vunpack.c.h.b16 %v1080
    %v7411 = vunpack.c.l.b16 %v1081
    %v7412 = vunpack.c.h.b16 %v1081
    %v7413 = vunpack.c.l.b16 %v1082
    %v7414 = vunpack.c.h.b16 %v1082
    %v7415 = vunpack.c.l.b16 %v1083
    %v7416 = vunpack.c.h.b16 %v1083
    %v7417 = vunpack.c.l.b16 %v1084
    %v7418 = vunpack.c.h.b16 %v1084
    %v7419 = vunpack.c.l.b16 %v1085
    %v7420 = vunpack.c.h.b16 %v1085
    %v7421 = vunpack.c.l.b16 %v1086
    %v7422 = vunpack.c.h.b16 %v1086
    %v7423 = vunpack.c.l.b16 %v1087
    %v7424 = vunpack.c.h.b16 %v1087
    %v7425 = vunpack.c.l.b16 %v1088
    %v7426 = vunpack.c.h.b16 %v1088
    %v7427 = vunpack.c.l.b16 %v1089
    %v7428 = vunpack.c.h.b16 %v1089
    %v7429 = vunpack.c.l.b16 %v1090
    %v7430 = vunpack.c.h.b16 %v1090
    %v7431 = vunpack.c.l.b16 %v1091
    %v7432 = vunpack.c.h.b16 %v1091
    %v7433 = vunpack.c.l.b16 %v1092
    %v7434 = vunpack.c.h.b16 %v1092
    %v7435 = vunpack.c.l.b16 %v1093
    %v7436 = vunpack.c.h.b16 %v1093
    %v7437 = vunpack.c.l.b16 %v1094
    %v7438 = vunpack.c.h.b16 %v1094
    %v7439 = vunpack.c.l.b16 %v1095
    %v7440 = vunpack.c.h.b16 %v1095
    %v7441 = vunpack.c.l.b16 %v1096
    %v7442 = vunpack.c.h.b16 %v1096
    %v7443 = vunpack.c.l.b16 %v1097
    %v7444 = vunpack.c.h.b16 %v1097
    %v7445 = vunpack.c.l.b16 %v1098
    %v7446 = vunpack.c.h.b16 %v1098
    %v7447 = vunpack.c.l.b16 %v1099
    %v7448 = vunpack.c.h.b16 %v1099
    %v7449 = vunpack.c.l.b16 %v1100
    %v7450 = vunpack.c.h.b16 %v1100
    %v7451 = vunpack.c.l.b16 %v1101
    %v7452 = vunpack.c.h.b16 %v1101
    %v7453 = vunpack.c.l.b16 %v1102
    %v7454 = vunpack.c.h.b16 %v1102
    %v7455 = vunpack.c.l.b16 %v1103
    %v7456 = vunpack.c.h.b16 %v1103
    %v7457 = vunpack.c.l.b16 %v1104
    %v7458 = vunpack.c.h.b16 %v1104
    %v7459 = vunpack.c.l.b16 %v1105
    %v7460 = vunpack.c.h.b16 %v1105
    %v7461 = vunpack.c.l.b16 %v1106
    %v7462 = vunpack.c.h.b16 %v1106
    %v7463 = vunpack.c.l.b16 %v1107
    %v7464 = vunpack.c.h.b16 %v1107
    %v7465 = vunpack.c.l.b16 %v1108
    %v7466 = vunpack.c.h.b16 %v1108
    %v7467 = vunpack.c.l.b16 %v1109
    %v7468 = vunpack.c.h.b16 %v1109
    %v7469 = vunpack.c.l.b16 %v1110
    %v7470 = vunpack.c.h.b16 %v1110
    %v7471 = vunpack.c.l.b16 %v1111
    %v7472 = vunpack.c.h.b16 %v1111
    %v7473 = vunpack.c.l.b16 %v1112
    %v7474 = vunpack.c.h.b16 %v1112
    %v7475 = vunpack.c.l.b16 %v1113
    %v7476 = vunpack.c.h.b16 %v1113
    %v7477 = vunpack.c.l.b16 %v1114
    %v7478 = vunpack.c.h.b16 %v1114
    %v7479 = vunpack.c.l.b16 %v1115
    %v7480 = vunpack.c.h.b16 %v1115
    %v7481 = vunpack.c.l.b16 %v1116
    %v7482 = vunpack.c.h.b16 %v1116
    %v7483 = vunpack.c.l.b16 %v1117
    %v7484 = vunpack.c.h.b16 %v1117
    %v7485 = vunpack.c.l.b16 %v1118
    %v7486 = vunpack.c.h.b16 %v1118
    %v7487 = vunpack.c.l.b16 %v1119
    %v7488 = vunpack.c.h.b16 %v1119
    %v7489 = vunpack.c.l.b16 %v1120
    %v7490 = vunpack.c.h.b16 %v1120
    %v7491 = vunpack.c.l.b16 %v1121
    %v7492 = vunpack.c.h.b16 %v1121
    %v7493 = vunpack.c.l.b16 %v1122
    %v7494 = vunpack.c.h.b16 %v1122
    %v7495 = vunpack.c.l.b16 %v1123
    %v7496 = vunpack.c.h.b16 %v1123
    %v7497 = vunpack.c.l.b16 %v1124
    %v7498 = vunpack.c.h.b16 %v1124
    %v7499 = vunpack.c.l.b16 %v1125
    %v7500 = vunpack.c.h.b16 %v1125
    %v7501 = vunpack.c.l.b16 %v1126
    %v7502 = vunpack.c.h.b16 %v1126
    %v7503 = vunpack.c.l.b16 %v1127
    %v7504 = vunpack.c.h.b16 %v1127
    %v7505 = vunpack.c.l.b16 %v1128
    %v7506 = vunpack.c.h.b16 %v1128
    %v7507 = vunpack.c.l.b16 %v1129
    %v7508 = vunpack.c.h.b16 %v1129
    %v7509 = vunpack.c.l.b16 %v1130
    %v7510 = vunpack.c.h.b16 %v1130
    %v7511 = vunpack.c.l.b16 %v1131
    %v7512 = vunpack.c.h.b16 %v1131
    %v7513 = vunpack.c.l.b16 %v1132
    %v7514 = vunpack.c.h.b16 %v1132
    %v7515 = vunpack.c.l.b16 %v1133
    %v7516 = vunpack.c.h.b16 %v1133
    %v7517 = vunpack.c.l.b16 %v1134
    %v7518 = vunpack.c.h.b16 %v1134
    %v7519 = vunpack.c.l.b16 %v1135
    %v7520 = vunpack.c.h.b16 %v1135
    %v7521 = vunpack.c.l.b16 %v1136
    %v7522 = vunpack.c.h.b16 %v1136
    %v7523 = vunpack.c.l.b16 %v1137
    %v7524 = vunpack.c.h.b16 %v1137
    %v7525 = vunpack.c.l.b16 %v1138
    %v7526 = vunpack.c.h.b16 %v1138
    %v7527 = vunpack.c.l.b16 %v1139
    %v7528 = vunpack.c.h.b16 %v1139
    %v7529 = vunpack.c.l.b16 %v1140
    %v7530 = vunpack.c.h.b16 %v1140
    %v7531 = vunpack.c.l.b16 %v1141
    %v7532 = vunpack.c.h.b16 %v1141
    %v7533 = vunpack.c.l.b16 %v1142
    %v7534 = vunpack.c.h.b16 %v1142
    %v7535 = vunpack.c.l.b16 %v1143
    %v7536 = vunpack.c.h.b16 %v1143
    %v7537 = vunpack.c.l.b16 %v1144
    %v7538 = vunpack.c.h.b16 %v1144
    %v7539 = vunpack.c.l.b16 %v1145
    %v7540 = vunpack.c.h.b16 %v1145
    %v7541 = vunpack.c.l.b16 %v1146
    %v7542 = vunpack.c.h.b16 %v1146
    %v7543 = vunpack.c.l.b16 %v1147
    %v7544 = vunpack.c.h.b16 %v1147
    %v7545 = vunpack.c.l.b16 %v1148
    %v7546 = vunpack.c.h.b16 %v1148
    %v7547 = vunpack.c.l.b16 %v1149
    %v7548 = vunpack.c.h.b16 %v1149
    %v7549 = vunpack.c.l.b16 %v1150
    %v7550 = vunpack.c.h.b16 %v1150
    %v7551 = vunpack.c.l.b16 %v1151
    %v7552 = vunpack.c.h.b16 %v1151
    %v7553 = vunpack.c.l.b16 %v1152
    %v7554 = vunpack.c.h.b16 %v1152
    %v7555 = vunpack.c.l.b16 %v1153
    %v7556 = vunpack.c.h.b16 %v1153
    %v7557 = vunpack.c.l.b16 %v1154
    %v7558 = vunpack.c.h.b16 %v1154
    %v7559 = vunpack.c.l.b16 %v1155
    %v7560 = vunpack.c.h.b16 %v1155
    %v7561 = vunpack.c.l.b16 %v1156
    %v7562 = vunpack.c.h.b16 %v1156
    %v7563 = vunpack.c.l.b16 %v1157
    %v7564 = vunpack.c.h.b16 %v1157
    %v7565 = vunpack.c.l.b16 %v1158
    %v7566 = vunpack.c.h.b16 %v1158
    %v7567 = vunpack.c.l.b16 %v1159
    %v7568 = vunpack.c.h.b16 %v1159
    %v7569 = vunpack.c.l.b16 %v1160
    %v7570 = vunpack.c.h.b16 %v1160
    %v7571 = vunpack.c.l.b16 %v1161
    %v7572 = vunpack.c.h.b16 %v1161
    %v7573 = vunpack.c.l.b16 %v1162
    %v7574 = vunpack.c.h.b16 %v1162
    %v7575 = vunpack.c.l.b16 %v1163
    %v7576 = vunpack.c.h.b16 %v1163
    %v7577 = vunpack.c.l.b16 %v1164
    %v7578 = vunpack.c.h.b16 %v1164
    %v7579 = vunpack.c.l.b16 %v1165
    %v7580 = vunpack.c.h.b16 %v1165
    %v7581 = vunpack.c.l.b16 %v1166
    %v7582 = vunpack.c.h.b16 %v1166
    %v7583 = vunpack.c.l.b16 %v1167
    %v7584 = vunpack.c.h.b16 %v1167
    %v7585 = vunpack.c.l.b16 %v1168
    %v7586 = vunpack.c.h.b16 %v1168
    %v7587 = vunpack.c.l.b16 %v1169
    %v7588 = vunpack.c.h.b16 %v1169
    %v7589 = vunpack.c.l.b16 %v1170
    %v7590 = vunpack.c.h.b16 %v1170
    %v7591 = vunpack.c.l.b16 %v1171
    %v7592 = vunpack.c.h.b16 %v1171
    %v7593 = vunpack.c.l.b16 %v1172
    %v7594 = vunpack.c.h.b16 %v1172
    %v7595 = vunpack.c.l.b16 %v1173
    %v7596 = vunpack.c.h.b16 %v1173
    %v7597 = vunpack.c.l.b16 %v1174
    %v7598 = vunpack.c.h.b16 %v1174
    %v7599 = vunpack.c.l.b16 %v1175
    %v7600 = vunpack.c.h.b16 %v1175
    %v7601 = vunpack.c.l.b16 %v1176
    %v7602 = vunpack.c.h.b16 %v1176
    %v7603 = vunpack.c.l.b16 %v1177
    %v7604 = vunpack.c.h.b16 %v1177
    %v7605 = vunpack.c.l.b16 %v1178
    %v7606 = vunpack.c.h.b16 %v1178
    %v7607 = vunpack.c.l.b16 %v1179
    %v7608 = vunpack.c.h.b16 %v1179
    %v7609 = vunpack.c.l.b16 %v1180
    %v7610 = vunpack.c.h.b16 %v1180
    %v7611 = vunpack.c.l.b16 %v1181
    %v7612 = vunpack.c.h.b16 %v1181
    %v7613 = vunpack.c.l.b16 %v1182
    %v7614 = vunpack.c.h.b16 %v1182
    %v7615 = vunpack.c.l.b16 %v1183
    %v7616 = vunpack.c.h.b16 %v1183
    %v7617 = vunpack.c.l.b16 %v1184
    %v7618 = vunpack.c.h.b16 %v1184
    %v7619 = vunpack.c.l.b16 %v1185
    %v7620 = vunpack.c.h.b16 %v1185
    %v7621 = vunpack.c.l.b16 %v1186
    %v7622 = vunpack.c.h.b16 %v1186
    %v7623 = vunpack.c.l.b16 %v1187
    %v7624 = vunpack.c.h.b16 %v1187
    %v7625 = vunpack.c.l.b16 %v1188
    %v7626 = vunpack.c.h.b16 %v1188
    %v7627 = vunpack.c.l.b16 %v1189
    %v7628 = vunpack.c.h.b16 %v1189
    %v7629 = vunpack.c.l.b16 %v1190
    %v7630 = vunpack.c.h.b16 %v1190
    %v7631 = vunpack.c.l.b16 %v1191
    %v7632 = vunpack.c.h.b16 %v1191
    %v7633 = vunpack.c.l.b16 %v1192
    %v7634 = vunpack.c.h.b16 %v1192
    %v7635 = vunpack.c.l.b16 %v1193
    %v7636 = vunpack.c.h.b16 %v1193
    %v7637 = vunpack.c.l.b16 %v1194
    %v7638 = vunpack.c.h.b16 %v1194
    %v7639 = vunpack.c.l.b16 %v1195
    %v7640 = vunpack.c.h.b16 %v1195
    %v7641 = vunpack.c.l.b16 %v1196
    %v7642 = vunpack.c.h.b16 %v1196
    %v7643 = vunpack.c.l.b16 %v1197
    %v7644 = vunpack.c.h.b16 %v1197
    %v7645 = vunpack.c.l.b16 %v1198
    %v7646 = vunpack.c.h.b16 %v1198
    %v7647 = vunpack.c.l.b16 %v1199
    %v7648 = vunpack.c.h.b16 %v1199
    %v7649 = vunpack.c.l.b16 %v1200
    %v7650 = vunpack.c.h.b16 %v1200
    %v7651 = vunpack.c.l.b16 %v1201
    %v7652 = vunpack.c.h.b16 %v1201
    %v7653 = vunpack.c.l.b16 %v1202
    %v7654 = vunpack.c.h.b16 %v1202
    %v7655 = vunpack.c.l.b16 %v1203
    %v7656 = vunpack.c.h.b16 %v1203
    %v7657 = vunpack.c.l.b16 %v1204
    %v7658 = vunpack.c.h.b16 %v1204
    %v7659 = vunpack.c.l.b16 %v1205
    %v7660 = vunpack.c.h.b16 %v1205
    %v7661 = vunpack.c.l.b16 %v1206
    %v7662 = vunpack.c.h.b16 %v1206
    %v7663 = vunpack.c.l.b16 %v1207
    %v7664 = vunpack.c.h.b16 %v1207
    %v7665 = vunpack.c.l.b16 %v1208
    %v7666 = vunpack.c.h.b16 %v1208
    %v7667 = vunpack.c.l.b16 %v1209
    %v7668 = vunpack.c.h.b16 %v1209
    %v7669 = vunpack.c.l.b16 %v1210
    %v7670 = vunpack.c.h.b16 %v1210
    %v7671 = vunpack.c.l.b16 %v1211
    %v7672 = vunpack.c.h.b16 %v1211
    %v7673 = vunpack.c.l.b16 %v1212
    %v7674 = vunpack.c.h.b16 %v1212
    %v7675 = vunpack.c.l.b16 %v1213
    %v7676 = vunpack.c.h.b16 %v1213
    %v7677 = vunpack.c.l.b16 %v1214
    %v7678 = vunpack.c.h.b16 %v1214
    %v7679 = vunpack.c.l.b16 %v1215
    %v7680 = vunpack.c.h.b16 %v1215
    %v7681 = vunpack.c.l.b16 %v1216
    %v7682 = vunpack.c.h.b16 %v1216
    %v7683 = vunpack.c.l.b16 %v1217
    %v7684 = vunpack.c.h.b16 %v1217
    %v7685 = vunpack.c.l.b16 %v1218
    %v7686 = vunpack.c.h.b16 %v1218
    %v7687 = vunpack.c.l.b16 %v1219
    %v7688 = vunpack.c.h.b16 %v1219
    %v7689 = vunpack.c.l.b16 %v1220
    %v7690 = vunpack.c.h.b16 %v1220
    %v7691 = vunpack.c.l.b16 %v1221
    %v7692 = vunpack.c.h.b16 %v1221
    %v7693 = vunpack.c.l.b16 %v1222
    %v7694 = vunpack.c.h.b16 %v1222
    %v7695 = vunpack.c.l.b16 %v1223
    %v7696 = vunpack.c.h.b16 %v1223
    %v7697 = vunpack.c.l.b16 %v1224
    %v7698 = vunpack.c.h.b16 %v1224
    %v7699 = vunpack.c.l.b16 %v1225
    %v7700 = vunpack.c.h.b16 %v1225
    %v7701 = vunpack.c.l.b16 %v1226
    %v7702 = vunpack.c.h.b16 %v1226
    %v7703 = vunpack.c.l.b16 %v1227
    %v7704 = vunpack.c.h.b16 %v1227
    %v7705 = vunpack.c.l.b16 %v1228
    %v7706 = vunpack.c.h.b16 %v1228
    %v7707 = vunpack.c.l.b16 %v1229
    %v7708 = vunpack.c.h.b16 %v1229
    %v7709 = vunpack.c.l.b16 %v1230
    %v7710 = vunpack.c.h.b16 %v1230
    %v7711 = vunpack.c.l.b16 %v1231
    %v7712 = vunpack.c.h.b16 %v1231
    %v7713 = vpack.c.b16 %v6705, %v6689
    %v7714 = vpack.c.b16 %v6706, %v6690
    %v7715 = vpack.c.b16 %v6707, %v6691
    %v7716 = vpack.c.b16 %v6708, %v6692
    %v7717 = vpack.c.b16 %v6709, %v6693
    %v7718 = vpack.c.b16 %v6710, %v6694
    %v7719 = vpack.c.b16 %v6711, %v6695
    %v7720 = vpack.c.b16 %v6712, %v6696
    %v7721 = vpack.c.b16 %v6713, %v6697
    %v7722 = vpack.c.b16 %v6714, %v6698
    %v7723 = vpack.c.b16 %v6715, %v6699
    %v7724 = vpack.c.b16 %v6716, %v6700
    %v7725 = vpack.c.b16 %v6717, %v6701
    %v7726 = vpack.c.b16 %v6718, %v6702
    %v7727 = vpack.c.b16 %v6719, %v6703
    %v7728 = vpack.c.b16 %v6720, %v6704
    %v7729 = vpack.c.b16 %v6737, %v6721
    %v7730 = vpack.c.b16 %v6738, %v6722
    %v7731 = vpack.c.b16 %v6739, %v6723
    %v7732 = vpack.c.b16 %v6740, %v6724
    %v7733 = vpack.c.b16 %v6741, %v6725
    %v7734 = vpack.c.b16 %v6742, %v6726
    %v7735 = vpack.c.b16 %v6743, %v6727
    %v7736 = vpack.c.b16 %v6744, %v6728
    %v7737 = vpack.c.b16 %v6745, %v6729
    %v7738 = vpack.c.b16 %v6746, %v6730
    %v7739 = vpack.c.b16 %v6747, %v6731
    %v7740 = vpack.c.b16 %v6748, %v6732
    %v7741 = vpack.c.b16 %v6749, %v6733
    %v7742 = vpack.c.b16 %v6750, %v6734
    %v7743 = vpack.c.b16 %v6751, %v6735
    %v7744 = vpack.c.b16 %v6752, %v6736
    %v7745 = vpack.c.b16 %v6769, %v6753
    %v7746 = vpack.c.b16 %v6770, %v6754
    %v7747 = vpack.c.b16 %v6771, %v6755
    %v7748 = vpack.c.b16 %v6772, %v6756
    %v7749 = vpack.c.b16 %v6773, %v6757
    %v7750 = vpack.c.b16 %v6774, %v6758
    %v7751 = vpack.c.b16 %v6775, %v6759
    %v7752 = vpack.c.b16 %v6776, %v6760
    %v7753 = vpack.c.b16 %v6777, %v6761
    %v7754 = vpack.c.b16 %v6778, %v6762
    %v7755 = vpack.c.b16 %v6779, %v6763
    %v7756 = vpack.c.b16 %v6780, %v6764
    %v7757 = vpack.c.b16 %v6781, %v6765
    %v7758 = vpack.c.b16 %v6782, %v6766
    %v7759 = vpack.c.b16 %v6783, %v6767
    %v7760 = vpack.c.b16 %v6784, %v6768
    %v7761 = vpack.c.b16 %v6801, %v6785
    %v7762 = vpack.c.b16 %v6802, %v6786
    %v7763 = vpack.c.b16 %v6803, %v6787
    %v7764 = vpack.c.b16 %v6804, %v6788
    %v7765 = vpack.c.b16 %v6805, %v6789
    %v7766 = vpack.c.b16 %v6806, %v6790
    %v7767 = vpack.c.b16 %v6807, %v6791
    %v7768 = vpack.c.b16 %v6808, %v6792
    %v7769 = vpack.c.b16 %v6809, %v6793
    %v7770 = vpack.c.b16 %v6810, %v6794
    %v7771 = vpack.c.b16 %v6811, %v6795
    %v7772 = vpack.c.b16 %v6812, %v6796
    %v7773 = vpack.c.b16 %v6813, %v6797
    %v7774 = vpack.c.b16 %v6814, %v6798
    %v7775 = vpack.c.b16 %v6815, %v6799
    %v7776 = vpack.c.b16 %v6816, %v6800
    %v7777 = vpack.c.b16 %v6833, %v6817
    %v7778 = vpack.c.b16 %v6834, %v6818
    %v7779 = vpack.c.b16 %v6835, %v6819
    %v7780 = vpack.c.b16 %v6836, %v6820
    %v7781 = vpack.c.b16 %v6837, %v6821
    %v7782 = vpack.c.b16 %v6838, %v6822
    %v7783 = vpack.c.b16 %v6839, %v6823
    %v7784 = vpack.c.b16 %v6840, %v6824
    %v7785 = vpack.c.b16 %v6841, %v6825
    %v7786 = vpack.c.b16 %v6842, %v6826
    %v7787 = vpack.c.b16 %v6843, %v6827
    %v7788 = vpack.c.b16 %v6844, %v6828
    %v7789 = vpack.c.b16 %v6845, %v6829
    %v7790 = vpack.c.b16 %v6846, %v6830
    %v7791 = vpack.c.b16 %v6847, %v6831
    %v7792 = vpack.c.b16 %v6848, %v6832
    %v7793 = vpack.c.b16 %v6865, %v6849
    %v7794 = vpack.c.b16 %v6866, %v6850
    %v7795 = vpack.c.b16 %v6867, %v6851
    %v7796 = vpack.c.b16 %v6868, %v6852
    %v7797 = vpack.c.b16 %v6869, %v6853
    %v7798 = vpack.c.b16 %v6870, %v6854
    %v7799 = vpack.c.b16 %v6871, %v6855
    %v7800 = vpack.c.b16 %v6872, %v6856
    %v7801 = vpack.c.b16 %v6873, %v6857
    %v7802 = vpack.c.b16 %v6874, %v6858
    %v7803 = vpack.c.b16 %v6875, %v6859
    %v7804 = vpack.c.b16 %v6876, %v6860
    %v7805 = vpack.c.b16 %v6877, %v6861
    %v7806 = vpack.c.b16 %v6878, %v6862
    %v7807 = vpack.c.b16 %v6879, %v6863
    %v7808 = vpack.c.b16 %v6880, %v6864
    %v7809 = vpack.c.b16 %v6897, %v6881
    %v7810 = vpack.c.b16 %v6898, %v6882
    %v7811 = vpack.c.b16 %v6899, %v6883
    %v7812 = vpack.c.b16 %v6900, %v6884
    %v7813 = vpack.c.b16 %v6901, %v6885
    %v7814 = vpack.c.b16 %v6902, %v6886
    %v7815 = vpack.c.b16 %v6903, %v6887
    %v7816 = vpack.c.b16 %v6904, %v6888
    %v7817 = vpack.c.b16 %v6905, %v6889
    %v7818 = vpack.c.b16 %v6906, %v6890
    %v7819 = vpack.c.b16 %v6907, %v6891
    %v7820 = vpack.c.b16 %v6908, %v6892
    %v7821 = vpack.c.b16 %v6909, %v6893
    %v7822 = vpack.c.b16 %v6910, %v6894
    %v7823 = vpack.c.b16 %v6911, %v6895
    %v7824 = vpack.c.b16 %v6912, %v6896
    %v7825 = vpack.c.b16 %v6929, %v6913
    %v7826 = vpack.c.b16 %v6930, %v6914
    %v7827 = vpack.c.b16 %v6931, %v6915
    %v7828 = vpack.c.b16 %v6932, %v6916
    %v7829 = vpack.c.b16 %v6933, %v6917
    %v7830 = vpack.c.b16 %v6934, %v6918
    %v7831 = vpack.c.b16 %v6935, %v6919
    %v7832 = vpack.c.b16 %v6936, %v6920
    %v7833 = vpack.c.b16 %v6937, %v6921
    %v7834 = vpack.c.b16 %v6938, %v6922
    %v7835 = vpack.c.b16 %v6939, %v6923
    %v7836 = vpack.c.b16 %v6940, %v6924
    %v7837 = vpack.c.b16 %v6941, %v6925
    %v7838 = vpack.c.b16 %v6942, %v6926
    %v7839 = vpack.c.b16 %v6943, %v6927
    %v7840 = vpack.c.b16 %v6944, %v6928
    %v7841 = vpack.c.b16 %v6961, %v6945
    %v7842 = vpack.c.b16 %v6962, %v6946
    %v7843 = vpack.c.b16 %v6963, %v6947
    %v7844 = vpack.c.b16 %v6964, %v6948
    %v7845 = vpack.c.b16 %v6965, %v6949
    %v7846 = vpack.c.b16 %v6966, %v6950
    %v7847 = vpack.c.b16 %v6967, %v6951
    %v7848 = vpack.c.b16 %v6968, %v6952
    %v7849 = vpack.c.b16 %v6969, %v6953
    %v7850 = vpack.c.b16 %v6970, %v6954
    %v7851 = vpack.c.b16 %v6971, %v6955
    %v7852 = vpack.c.b16 %v6972, %v6956
    %v7853 = vpack.c.b16 %v6973, %v6957
    %v7854 = vpack.c.b16 %v6974, %v6958
    %v7855 = vpack.c.b16 %v6975, %v6959
    %v7856 = vpack.c.b16 %v6976, %v6960
    %v7857 = vpack.c.b16 %v6993, %v6977
    %v7858 = vpack.c.b16 %v6994, %v6978
    %v7859 = vpack.c.b16 %v6995, %v6979
    %v7860 = vpack.c.b16 %v6996, %v6980
    %v7861 = vpack.c.b16 %v6997, %v6981
    %v7862 = vpack.c.b16 %v6998, %v6982
    %v7863 = vpack.c.b16 %v6999, %v6983
    %v7864 = vpack.c.b16 %v7000, %v6984
    %v7865 = vpack.c.b16 %v7001, %v6985
    %v7866 = vpack.c.b16 %v7002, %v6986
    %v7867 = vpack.c.b16 %v7003, %v6987
    %v7868 = vpack.c.b16 %v7004, %v6988
    %v7869 = vpack.c.b16 %v7005, %v6989
    %v7870 = vpack.c.b16 %v7006, %v6990
    %v7871 = vpack.c.b16 %v7007, %v6991
    %v7872 = vpack.c.b16 %v7008, %v6992
    %v7873 = vpack.c.b16 %v7025, %v7009
    %v7874 = vpack.c.b16 %v7026, %v7010
    %v7875 = vpack.c.b16 %v7027, %v7011
    %v7876 = vpack.c.b16 %v7028, %v7012
    %v7877 = vpack.c.b16 %v7029, %v7013
    %v7878 = vpack.c.b16 %v7030, %v7014
    %v7879 = vpack.c.b16 %v7031, %v7015
    %v7880 = vpack.c.b16 %v7032, %v7016
    %v7881 = vpack.c.b16 %v7033, %v7017
    %v7882 = vpack.c.b16 %v7034, %v7018
    %v7883 = vpack.c.b16 %v7035, %v7019
    %v7884 = vpack.c.b16 %v7036, %v7020
    %v7885 = vpack.c.b16 %v7037, %v7021
    %v7886 = vpack.c.b16 %v7038, %v7022
    %v7887 = vpack.c.b16 %v7039, %v7023
    %v7888 = vpack.c.b16 %v7040, %v7024
    %v7889 = vpack.c.b16 %v7057, %v7041
    %v7890 = vpack.c.b16 %v7058, %v7042
    %v7891 = vpack.c.b16 %v7059, %v7043
    %v7892 = vpack.c.b16 %v7060, %v7044
    %v7893 = vpack.c.b16 %v7061, %v7045
    %v7894 = vpack.c.b16 %v7062, %v7046
    %v7895 = vpack.c.b16 %v7063, %v7047
    %v7896 = vpack.c.b16 %v7064, %v7048
    %v7897 = vpack.c.b16 %v7065, %v7049
    %v7898 = vpack.c.b16 %v7066, %v7050
    %v7899 = vpack.c.b16 %v7067, %v7051
    %v7900 = vpack.c.b16 %v7068, %v7052
    %v7901 = vpack.c.b16 %v7069, %v7053
    %v7902 = vpack.c.b16 %v7070, %v7054
    %v7903 = vpack.c.b16 %v7071, %v7055
    %v7904 = vpack.c.b16 %v7072, %v7056
    %v7905 = vpack.c.b16 %v7089, %v7073
    %v7906 = vpack.c.b16 %v7090, %v7074
    %v7907 = vpack.c.b16 %v7091, %v7075
    %v7908 = vpack.c.b16 %v7092, %v7076
    %v7909 = vpack.c.b16 %v7093, %v7077
    %v7910 = vpack.c.b16 %v7094, %v7078
    %v7911 = vpack.c.b16 %v7095, %v7079
    %v7912 = vpack.c.b16 %v7096, %v7080
    %v7913 = vpack.c.b16 %v7097, %v7081
    %v7914 = vpack.c.b16 %v7098, %v7082
    %v7915 = vpack.c.b16 %v7099, %v7083
    %v7916 = vpack.c.b16 %v7100, %v7084
    %v7917 = vpack.c.b16 %v7101, %v7085
    %v7918 = vpack.c.b16 %v7102, %v7086
    %v7919 = vpack.c.b16 %v7103, %v7087
    %v7920 = vpack.c.b16 %v7104, %v7088
    %v7921 = vpack.c.b16 %v7121, %v7105
    %v7922 = vpack.c.b16 %v7122, %v7106
    %v7923 = vpack.c.b16 %v7123, %v7107
    %v7924 = vpack.c.b16 %v7124, %v7108
    %v7925 = vpack.c.b16 %v7125, %v7109
    %v7926 = vpack.c.b16 %v7126, %v7110
    %v7927 = vpack.c.b16 %v7127, %v7111
    %v7928 = vpack.c.b16 %v7128, %v7112
    %v7929 = vpack.c.b16 %v7129, %v7113
    %v7930 = vpack.c.b16 %v7130, %v7114
    %v7931 = vpack.c.b16 %v7131, %v7115
    %v7932 = vpack.c.b16 %v7132, %v7116
    %v7933 = vpack.c.b16 %v7133, %v7117
    %v7934 = vpack.c.b16 %v7134, %v7118
    %v7935 = vpack.c.b16 %v7135, %v7119
    %v7936 = vpack.c.b16 %v7136, %v7120
    %v7937 = vpack.c.b16 %v7153, %v7137
    %v7938 = vpack.c.b16 %v7154, %v7138
    %v7939 = vpack.c.b16 %v7155, %v7139
    %v7940 = vpack.c.b16 %v7156, %v7140
    %v7941 = vpack.c.b16 %v7157, %v7141
    %v7942 = vpack.c.b16 %v7158, %v7142
    %v7943 = vpack.c.b16 %v7159, %v7143
    %v7944 = vpack.c.b16 %v7160, %v7144
    %v7945 = vpack.c.b16 %v7161, %v7145
    %v7946 = vpack.c.b16 %v7162, %v7146
    %v7947 = vpack.c.b16 %v7163, %v7147
    %v7948 = vpack.c.b16 %v7164, %v7148
    %v7949 = vpack.c.b16 %v7165, %v7149
    %v7950 = vpack.c.b16 %v7166, %v7150
    %v7951 = vpack.c.b16 %v7167, %v7151
    %v7952 = vpack.c.b16 %v7168, %v7152
    %v7953 = vpack.c.b16 %v7185, %v7169
    %v7954 = vpack.c.b16 %v7186, %v7170
    %v7955 = vpack.c.b16 %v7187, %v7171
    %v7956 = vpack.c.b16 %v7188, %v7172
    %v7957 = vpack.c.b16 %v7189, %v7173
    %v7958 = vpack.c.b16 %v7190, %v7174
    %v7959 = vpack.c.b16 %v7191, %v7175
    %v7960 = vpack.c.b16 %v7192, %v7176
    %v7961 = vpack.c.b16 %v7193, %v7177
    %v7962 = vpack.c.b16 %v7194, %v7178
    %v7963 = vpack.c.b16 %v7195, %v7179
    %v7964 = vpack.c.b16 %v7196, %v7180
    %v7965 = vpack.c.b16 %v7197, %v7181
    %v7966 = vpack.c.b16 %v7198, %v7182
    %v7967 = vpack.c.b16 %v7199, %v7183
    %v7968 = vpack.c.b16 %v7200, %v7184
    %v7969 = vpack.c.b16 %v7217, %v7201
    %v7970 = vpack.c.b16 %v7218, %v7202
    %v7971 = vpack.c.b16 %v7219, %v7203
    %v7972 = vpack.c.b16 %v7220, %v7204
    %v7973 = vpack.c.b16 %v7221, %v7205
    %v7974 = vpack.c.b16 %v7222, %v7206
    %v7975 = vpack.c.b16 %v7223, %v7207
    %v7976 = vpack.c.b16 %v7224, %v7208
    %v7977 = vpack.c.b16 %v7225, %v7209
    %v7978 = vpack.c.b16 %v7226, %v7210
    %v7979 = vpack.c.b16 %v7227, %v7211
    %v7980 = vpack.c.b16 %v7228, %v7212
    %v7981 = vpack.c.b16 %v7229, %v7213
    %v7982 = vpack.c.b16 %v7230, %v7214
    %v7983 = vpack.c.b16 %v7231, %v7215
    %v7984 = vpack.c.b16 %v7232, %v7216
    %v7985 = vpack.c.b16 %v7249, %v7233
    %v7986 = vpack.c.b16 %v7250, %v7234
    %v7987 = vpack.c.b16 %v7251, %v7235
    %v7988 = vpack.c.b16 %v7252, %v7236
    %v7989 = vpack.c.b16 %v7253, %v7237
    %v7990 = vpack.c.b16 %v7254, %v7238
    %v7991 = vpack.c.b16 %v7255, %v7239
    %v7992 = vpack.c.b16 %v7256, %v7240
    %v7993 = vpack.c.b16 %v7257, %v7241
    %v7994 = vpack.c.b16 %v7258, %v7242
    %v7995 = vpack.c.b16 %v7259, %v7243
    %v7996 = vpack.c.b16 %v7260, %v7244
    %v7997 = vpack.c.b16 %v7261, %v7245
    %v7998 = vpack.c.b16 %v7262, %v7246
    %v7999 = vpack.c.b16 %v7263, %v7247
    %v8000 = vpack.c.b16 %v7264, %v7248
    %v8001 = vpack.c.b16 %v7281, %v7265
    %v8002 = vpack.c.b16 %v7282, %v7266
    %v8003 = vpack.c.b16 %v7283, %v7267
    %v8004 = vpack.c.b16 %v7284, %v7268
    %v8005 = vpack.c.b16 %v7285, %v7269
    %v8006 = vpack.c.b16 %v7286, %v7270
    %v8007 = vpack.c.b16 %v7287, %v7271
    %v8008 = vpack.c.b16 %v7288, %v7272
    %v8009 = vpack.c.b16 %v7289, %v7273
    %v8010 = vpack.c.b16 %v7290, %v7274
    %v8011 = vpack.c.b16 %v7291, %v7275
    %v8012 = vpack.c.b16 %v7292, %v7276
    %v8013 = vpack.c.b16 %v7293, %v7277
    %v8014 = vpack.c.b16 %v7294, %v7278
    %v8015 = vpack.c.b16 %v7295, %v7279
    %v8016 = vpack.c.b16 %v7296, %v7280
    %v8017 = vpack.c.b16 %v7313, %v7297
    %v8018 = vpack.c.b16 %v7314, %v7298
    %v8019 = vpack.c.b16 %v7315, %v7299
    %v8020 = vpack.c.b16 %v7316, %v7300
    %v8021 = vpack.c.b16 %v7317, %v7301
    %v8022 = vpack.c.b16 %v7318, %v7302
    %v8023 = vpack.c.b16 %v7319, %v7303
    %v8024 = vpack.c.b16 %v7320, %v7304
    %v8025 = vpack.c.b16 %v7321, %v7305
    %v8026 = vpack.c.b16 %v7322, %v7306
    %v8027 = vpack.c.b16 %v7323, %v7307
    %v8028 = vpack.c.b16 %v7324, %v7308
    %v8029 = vpack.c.b16 %v7325, %v7309
    %v8030 = vpack.c.b16 %v7326, %v7310
    %v8031 = vpack.c.b16 %v7327, %v7311
    %v8032 = vpack.c.b16 %v7328, %v7312
    %v8033 = vpack.c.b16 %v7345, %v7329
    %v8034 = vpack.c.b16 %v7346, %v7330
    %v8035 = vpack.c.b16 %v7347, %v7331
    %v8036 = vpack.c.b16 %v7348, %v7332
    %v8037 = vpack.c.b16 %v7349, %v7333
    %v8038 = vpack.c.b16 %v7350, %v7334
    %v8039 = vpack.c.b16 %v7351, %v7335
    %v8040 = vpack.c.b16 %v7352, %v7336
    %v8041 = vpack.c.b16 %v7353, %v7337
    %v8042 = vpack.c.b16 %v7354, %v7338
    %v8043 = vpack.c.b16 %v7355, %v7339
    %v8044 = vpack.c.b16 %v7356, %v7340
    %v8045 = vpack.c.b16 %v7357, %v7341
    %v8046 = vpack.c.b16 %v7358, %v7342
    %v8047 = vpack.c.b16 %v7359, %v7343
    %v8048 = vpack.c.b16 %v7360, %v7344
    %v8049 = vpack.c.b16 %v7377, %v7361
    %v8050 = vpack.c.b16 %v7378, %v7362
    %v8051 = vpack.c.b16 %v7379, %v7363
    %v8052 = vpack.c.b16 %v7380, %v7364
    %v8053 = vpack.c.b16 %v7381, %v7365
    %v8054 = vpack.c.b16 %v7382, %v7366
    %v8055 = vpack.c.b16 %v7383, %v7367
    %v8056 = vpack.c.b16 %v7384, %v7368
    %v8057 = vpack.c.b16 %v7385, %v7369
    %v8058 = vpack.c.b16 %v7386, %v7370
    %v8059 = vpack.c.b16 %v7387, %v7371
    %v8060 = vpack.c.b16 %v7388, %v7372
    %v8061 = vpack.c.b16 %v7389, %v7373
    %v8062 = vpack.c.b16 %v7390, %v7374
    %v8063 = vpack.c.b16 %v7391, %v7375
    %v8064 = vpack.c.b16 %v7392, %v7376
    %v8065 = vpack.c.b16 %v7409, %v7393
    %v8066 = vpack.c.b16 %v7410, %v7394
    %v8067 = vpack.c.b16 %v7411, %v7395
    %v8068 = vpack.c.b16 %v7412, %v7396
    %v8069 = vpack.c.b16 %v7413, %v7397
    %v8070 = vpack.c.b16 %v7414, %v7398
    %v8071 = vpack.c.b16 %v7415, %v7399
    %v8072 = vpack.c.b16 %v7416, %v7400
    %v8073 = vpack.c.b16 %v7417, %v7401
    %v8074 = vpack.c.b16 %v7418, %v7402
    %v8075 = vpack.c.b16 %v7419, %v7403
    %v8076 = vpack.c.b16 %v7420, %v7404
    %v8077 = vpack.c.b16 %v7421, %v7405
    %v8078 = vpack.c.b16 %v7422, %v7406
    %v8079 = vpack.c.b16 %v7423, %v7407
    %v8080 = vpack.c.b16 %v7424, %v7408
    %v8081 = vpack.c.b16 %v7441, %v7425
    %v8082 = vpack.c.b16 %v7442, %v7426
    %v8083 = vpack.c.b16 %v7443, %v7427
    %v8084 = vpack.c.b16 %v7444, %v7428
    %v8085 = vpack.c.b16 %v7445, %v7429
    %v8086 = vpack.c.b16 %v7446, %v7430
    %v8087 = vpack.c.b16 %v7447, %v7431
    %v8088 = vpack.c.b16 %v7448, %v7432
    %v8089 = vpack.c.b16 %v7449, %v7433
    %v8090 = vpack.c.b16 %v7450, %v7434
    %v8091 = vpack.c.b16 %v7451, %v7435
    %v8092 = vpack.c.b16 %v7452, %v7436
    %v8093 = vpack.c.b16 %v7453, %v7437
    %v8094 = vpack.c.b16 %v7454, %v7438
    %v8095 = vpack.c.b16 %v7455, %v7439
    %v8096 = vpack.c.b16 %v7456, %v7440
    %v8097 = vpack.c.b16 %v7473, %v7457
    %v8098 = vpack.c.b16 %v7474, %v7458
    %v8099 = vpack.c.b16 %v7475, %v7459
    %v8100 = vpack.c.b16 %v7476, %v7460
    %v8101 = vpack.c.b16 %v7477, %v7461
    %v8102 = vpack.c.b16 %v7478, %v7462
    %v8103 = vpack.c.b16 %v7479, %v7463
    %v8104 = vpack.c.b16 %v7480, %v7464
    %v8105 = vpack.c.b16 %v7481, %v7465
    %v8106 = vpack.c.b16 %v7482, %v7466
    %v8107 = vpack.c.b16 %v7483, %v7467
    %v8108 = vpack.c.b16 %v7484, %v7468
    %v8109 = vpack.c.b16 %v7485, %v7469
    %v8110 = vpack.c.b16 %v7486, %v7470
    %v8111 = vpack.c.b16 %v7487, %v7471
    %v8112 = vpack.c.b16 %v7488, %v7472
    %v8113 = vpack.c.b16 %v7505, %v7489
    %v8114 = vpack.c.b16 %v7506, %v7490
    %v8115 = vpack.c.b16 %v7507, %v7491
    %v8116 = vpack.c.b16 %v7508, %v7492
    %v8117 = vpack.c.b16 %v7509, %v7493
    %v8118 = vpack.c.b16 %v7510, %v7494
    %v8119 = vpack.c.b16 %v7511, %v7495
    %v8120 = vpack.c.b16 %v7512, %v7496
    %v8121 = vpack.c.b16 %v7513, %v7497
    %v8122 = vpack.c.b16 %v7514, %v7498
    %v8123 = vpack.c.b16 %v7515, %v7499
    %v8124 = vpack.c.b16 %v7516, %v7500
    %v8125 = vpack.c.b16 %v7517, %v7501
    %v8126 = vpack.c.b16 %v7518, %v7502
    %v8127 = vpack.c.b16 %v7519, %v7503
    %v8128 = vpack.c.b16 %v7520, %v7504
    %v8129 = vpack.c.b16 %v7537, %v7521
    %v8130 = vpack.c.b16 %v7538, %v7522
    %v8131 = vpack.c.b16 %v7539, %v7523
    %v8132 = vpack.c.b16 %v7540, %v7524
    %v8133 = vpack.c.b16 %v7541, %v7525
    %v8134 = vpack.c.b16 %v7542, %v7526
    %v8135 = vpack.c.b16 %v7543, %v7527
    %v8136 = vpack.c.b16 %v7544, %v7528
    %v8137 = vpack.c.b16 %v7545, %v7529
    %v8138 = vpack.c.b16 %v7546, %v7530
    %v8139 = vpack.c.b16 %v7547, %v7531
    %v8140 = vpack.c.b16 %v7548, %v7532
    %v8141 = vpack.c.b16 %v7549, %v7533
    %v8142 = vpack.c.b16 %v7550, %v7534
    %v8143 = vpack.c.b16 %v7551, %v7535
    %v8144 = vpack.c.b16 %v7552, %v7536
    %v8145 = vpack.c.b16 %v7569, %v7553
    %v8146 = vpack.c.b16 %v7570, %v7554
    %v8147 = vpack.c.b16 %v7571, %v7555
    %v8148 = vpack.c.b16 %v7572, %v7556
    %v8149 = vpack.c.b16 %v7573, %v7557
    %v8150 = vpack.c.b16 %v7574, %v7558
    %v8151 = vpack.c.b16 %v7575, %v7559
    %v8152 = vpack.c.b16 %v7576, %v7560
    %v8153 = vpack.c.b16 %v7577, %v7561
    %v8154 = vpack.c.b16 %v7578, %v7562
    %v8155 = vpack.c.b16 %v7579, %v7563
    %v8156 = vpack.c.b16 %v7580, %v7564
    %v8157 = vpack.c.b16 %v7581, %v7565
    %v8158 = vpack.c.b16 %v7582, %v7566
    %v8159 = vpack.c.b16 %v7583, %v7567
    %v8160 = vpack.c.b16 %v7584, %v7568
    %v8161 = vpack.c.b16 %v7601, %v7585
    %v8162 = vpack.c.b16 %v7602, %v7586
    %v8163 = vpack.c.b16 %v7603, %v7587
    %v8164 = vpack.c.b16 %v7604, %v7588
    %v8165 = vpack.c.b16 %v7605, %v7589
    %v8166 = vpack.c.b16 %v7606, %v7590
    %v8167 = vpack.c.b16 %v7607, %v7591
    %v8168 = vpack.c.b16 %v7608, %v7592
    %v8169 = vpack.c.b16 %v7609, %v7593
    %v8170 = vpack.c.b16 %v7610, %v7594
    %v8171 = vpack.c.b16 %v7611, %v7595
    %v8172 = vpack.c.b16 %v7612, %v7596
    %v8173 = vpack.c.b16 %v7613, %v7597
    %v8174 = vpack.c.b16 %v7614, %v7598
    %v8175 = vpack.c.b16 %v7615, %v7599
    %v8176 = vpack.c.b16 %v7616, %v7600
    %v8177 = vpack.c.b16 %v7633, %v7617
    %v8178 = vpack.c.b16 %v7634, %v7618
    %v8179 = vpack.c.b16 %v7635, %v7619
    %v8180 = vpack.c.b16 %v7636, %v7620
    %v8181 = vpack.c.b16 %v7637, %v7621
    %v8182 = vpack.c.b16 %v7638, %v7622
    %v8183 = vpack.c.b16 %v7639, %v7623
    %v8184 = vpack.c.b16 %v7640, %v7624
    %v8185 = vpack.c.b16 %v7641, %v7625
    %v8186 = vpack.c.b16 %v7642, %v7626
    %v8187 = vpack.c.b16 %v7643, %v7627
    %v8188 = vpack.c.b16 %v7644, %v7628
    %v8189 = vpack.c.b16 %v7645, %v7629
    %v8190 = vpack.c.b16 %v7646, %v7630
    %v8191 = vpack.c.b16 %v7647, %v7631
    %v8192 = vpack.c.b16 %v7648, %v7632
    %v8193 = vpack.c.b16 %v7665, %v7649
    %v8194 = vpack.c.b16 %v7666, %v7650
    %v8195 = vpack.c.b16 %v7667, %v7651
    %v8196 = vpack.c.b16 %v7668, %v7652
    %v8197 = vpack.c.b16 %v7669, %v7653
    %v8198 = vpack.c.b16 %v7670, %v7654
    %v8199 = vpack.c.b16 %v7671, %v7655
    %v8200 = vpack.c.b16 %v7672, %v7656
    %v8201 = vpack.c.b16 %v7673, %v7657
    %v8202 = vpack.c.b16 %v7674, %v7658
    %v8203 = vpack.c.b16 %v7675, %v7659
    %v8204 = vpack.c.b16 %v7676, %v7660
    %v8205 = vpack.c.b16 %v7677, %v7661
    %v8206 = vpack.c.b16 %v7678, %v7662
    %v8207 = vpack.c.b16 %v7679, %v7663
    %v8208 = vpack.c.b16 %v7680, %v7664
    %v8209 = vpack.c.b16 %v7697, %v7681
    %v8210 = vpack.c.b16 %v7698, %v7682
    %v8211 = vpack.c.b16 %v7699, %v7683
    %v8212 = vpack.c.b16 %v7700, %v7684
    %v8213 = vpack.c.b16 %v7701, %v7685
    %v8214 = vpack.c.b16 %v7702, %v7686
    %v8215 = vpack.c.b16 %v7703, %v7687
    %v8216 = vpack.c.b16 %v7704, %v7688
    %v8217 = vpack.c.b16 %v7705, %v7689
    %v8218 = vpack.c.b16 %v7706, %v7690
    %v8219 = vpack.c.b16 %v7707, %v7691
    %v8220 = vpack.c.b16 %v7708, %v7692
    %v8221 = vpack.c.b16 %v7709, %v7693
    %v8222 = vpack.c.b16 %v7710, %v7694
    %v8223 = vpack.c.b16 %v7711, %v7695
    %v8224 = vpack.c.b16 %v7712, %v7696
    %8737 = vmatprep.subr.bf16.mxu0 %v7826
    %8738 = vmatpush1.bf16.msra.mxu0 %v7825
    %8739 = vmatprep.subr.bf16.mxu0 %v7810
    %8740 = vmatpush1.bf16.msra.mxu0 %v7809
    %8741 = vmatprep.subr.bf16.mxu0 %v7794
    %8742 = vmatpush1.bf16.msra.mxu0 %v7793
    %8743 = vmatprep.subr.bf16.mxu0 %v7778
    %8744 = vmatpush1.bf16.msra.mxu0 %v7777
    %8745 = vmatprep.subr.bf16.mxu0 %v7762
    %8746 = vmatpush1.bf16.msra.mxu0 %v7761
    %8747 = vmatprep.subr.bf16.mxu0 %v7746
    %8748 = vmatpush1.bf16.msra.mxu0 %v7745
    %8749 = vmatprep.subr.bf16.mxu0 %v7730
    %8750 = vmatpush1.bf16.msra.mxu0 %v7729
    %8751 = vmatprep.subr.bf16.mxu0 %v7714
    %8752 = vmatpush1.bf16.msra.mxu0 %v7713
    %8753 = vmatprep.subr.bf16.mxu0 %v7954
    %8754 = vmatpush2.bf16.msra.mxu0 %v7953
    %8755 = vmatprep.subr.bf16.mxu0 %v7938
    %8756 = vmatpush2.bf16.msra.mxu0 %v7937
    %8757 = vmatprep.subr.bf16.mxu0 %v7922
    %8758 = vmatpush2.bf16.msra.mxu0 %v7921
    %8759 = vmatprep.subr.bf16.mxu0 %v7906
    %8760 = vmatpush2.bf16.msra.mxu0 %v7905
    %8761 = vmatprep.subr.bf16.mxu0 %v7890
    %8762 = vmatpush2.bf16.msra.mxu0 %v7889
    %8763 = vmatprep.subr.bf16.mxu0 %v7874
    %8764 = vmatpush2.bf16.msra.mxu0 %v7873
    %8765 = vmatprep.subr.bf16.mxu0 %v7858
    %8766 = vmatpush2.bf16.msra.mxu0 %v7857
    %8767 = vmatprep.subr.bf16.mxu0 %v7842
    %8768 = vmatpush2.bf16.msra.mxu0 %v7841
    %8769 = vmatprep.mubr.bf16.mxu0 %v6170
    %8770 = vmatmul.mubr.bf16.gmra.mxu0 %v6169
    %v8771 = vpop.f32.mrf.mxu0
    %v8772 = vadd.f32 0.0, %v8771
    %v8773 = vpop.f32.mrf.mxu0
    %v8774 = vadd.f32 0.0, %v8773
    %v8775 = vpop.f32.mrf.mxu0
    %v8776 = vadd.f32 0.0, %v8775
    %v8777 = vpop.f32.mrf.mxu0
    %v8778 = vadd.f32 0.0, %v8777
    %8779 = vmatprep.mubr.bf16.mxu0 %v6174
    %8780 = vmatmul.mubr.bf16.gmra.mxu0 %v6173
    %v8781 = vpop.f32.mrf.mxu0
    %v8782 = vadd.f32 0.0, %v8781
    %v8783 = vpop.f32.mrf.mxu0
    %v8784 = vadd.f32 0.0, %v8783
    %v8785 = vpop.f32.mrf.mxu0
    %v8786 = vadd.f32 0.0, %v8785
    %v8787 = vpop.f32.mrf.mxu0
    %v8788 = vadd.f32 0.0, %v8787
    %8789 = vdwg.mxu0
    %8790 = vmatprep.subr.bf16.mxu0 %v8082
    %8791 = vmatpush1.bf16.msra.mxu0 %v8081
    %8792 = vmatprep.subr.bf16.mxu0 %v8066
    %8793 = vmatpush1.bf16.msra.mxu0 %v8065
    %8794 = vmatprep.subr.bf16.mxu0 %v8050
    %8795 = vmatpush1.bf16.msra.mxu0 %v8049
    %8796 = vmatprep.subr.bf16.mxu0 %v8034
    %8797 = vmatpush1.bf16.msra.mxu0 %v8033
    %8798 = vmatprep.subr.bf16.mxu0 %v8018
    %8799 = vmatpush1.bf16.msra.mxu0 %v8017
    %8800 = vmatprep.subr.bf16.mxu0 %v8002
    %8801 = vmatpush1.bf16.msra.mxu0 %v8001
    %8802 = vmatprep.subr.bf16.mxu0 %v7986
    %8803 = vmatpush1.bf16.msra.mxu0 %v7985
    %8804 = vmatprep.subr.bf16.mxu0 %v7970
    %8805 = vmatpush1.bf16.msra.mxu0 %v7969
    %8806 = vmatprep.subr.bf16.mxu0 %v8210
    %8807 = vmatpush2.bf16.msra.mxu0 %v8209
    %8808 = vmatprep.subr.bf16.mxu0 %v8194
    %8809 = vmatpush2.bf16.msra.mxu0 %v8193
    %8810 = vmatprep.subr.bf16.mxu0 %v8178
    %8811 = vmatpush2.bf16.msra.mxu0 %v8177
    %8812 = vmatprep.subr.bf16.mxu0 %v8162
    %8813 = vmatpush2.bf16.msra.mxu0 %v8161
    %8814 = vmatprep.subr.bf16.mxu0 %v8146
    %8815 = vmatpush2.bf16.msra.mxu0 %v8145
    %8816 = vmatprep.subr.bf16.mxu0 %v8130
    %8817 = vmatpush2.bf16.msra.mxu0 %v8129
    %8818 = vmatprep.subr.bf16.mxu0 %v8114
    %8819 = vmatpush2.bf16.msra.mxu0 %v8113
    %8820 = vmatprep.subr.bf16.mxu0 %v8098
    %8821 = vmatpush2.bf16.msra.mxu0 %v8097
    %8822 = vmatprep.mubr.bf16.mxu0 %v6172
    %8823 = vmatmul.mubr.bf16.gmra.mxu0 %v6171
    %v8824 = vpop.f32.mrf.mxu0
    %v8825 = vadd.f32 %v8772, %v8824
    %v8826 = vpop.f32.mrf.mxu0
    %v8827 = vadd.f32 %v8774, %v8826
    %v8828 = vpop.f32.mrf.mxu0
    %v8829 = vadd.f32 %v8776, %v8828
    %v8830 = vpop.f32.mrf.mxu0
    %v8831 = vadd.f32 %v8778, %v8830
    %8832 = vmatprep.mubr.bf16.mxu0 %v6176
    %8833 = vmatmul.mubr.bf16.gmra.mxu0 %v6175
    %v8834 = vpop.f32.mrf.mxu0
    %v8835 = vadd.f32 %v8782, %v8834
    %v8836 = vpop.f32.mrf.mxu0
    %v8837 = vadd.f32 %v8784, %v8836
    %v8838 = vpop.f32.mrf.mxu0
    %v8839 = vadd.f32 %v8786, %v8838
    %v8840 = vpop.f32.mrf.mxu0
    %v8841 = vadd.f32 %v8788, %v8840
    %8842 = vdwg.mxu0
    %8843 = vmatprep.subr.bf16.mxu0 %v7828
    %8844 = vmatpush1.bf16.msra.mxu0 %v7827
    %8845 = vmatprep.subr.bf16.mxu0 %v7812
    %8846 = vmatpush1.bf16.msra.mxu0 %v7811
    %8847 = vmatprep.subr.bf16.mxu0 %v7796
    %8848 = vmatpush1.bf16.msra.mxu0 %v7795
    %8849 = vmatprep.subr.bf16.mxu0 %v7780
    %8850 = vmatpush1.bf16.msra.mxu0 %v7779
    %8851 = vmatprep.subr.bf16.mxu0 %v7764
    %8852 = vmatpush1.bf16.msra.mxu0 %v7763
    %8853 = vmatprep.subr.bf16.mxu0 %v7748
    %8854 = vmatpush1.bf16.msra.mxu0 %v7747
    %8855 = vmatprep.subr.bf16.mxu0 %v7732
    %8856 = vmatpush1.bf16.msra.mxu0 %v7731
    %8857 = vmatprep.subr.bf16.mxu0 %v7716
    %8858 = vmatpush1.bf16.msra.mxu0 %v7715
    %8859 = vmatprep.subr.bf16.mxu0 %v7956
    %8860 = vmatpush2.bf16.msra.mxu0 %v7955
    %8861 = vmatprep.subr.bf16.mxu0 %v7940
    %8862 = vmatpush2.bf16.msra.mxu0 %v7939
    %8863 = vmatprep.subr.bf16.mxu0 %v7924
    %8864 = vmatpush2.bf16.msra.mxu0 %v7923
    %8865 = vmatprep.subr.bf16.mxu0 %v7908
    %8866 = vmatpush2.bf16.msra.mxu0 %v7907
    %8867 = vmatprep.subr.bf16.mxu0 %v7892
    %8868 = vmatpush2.bf16.msra.mxu0 %v7891
    %8869 = vmatprep.subr.bf16.mxu0 %v7876
    %8870 = vmatpush2.bf16.msra.mxu0 %v7875
    %8871 = vmatprep.subr.bf16.mxu0 %v7860
    %8872 = vmatpush2.bf16.msra.mxu0 %v7859
    %8873 = vmatprep.subr.bf16.mxu0 %v7844
    %8874 = vmatpush2.bf16.msra.mxu0 %v7843
    %8875 = vmatprep.mubr.bf16.mxu0 %v6170
    %8876 = vmatmul.mubr.bf16.gmra.mxu0 %v6169
    %v8877 = vpop.f32.mrf.mxu0
    %v8878 = vadd.f32 0.0, %v8877
    %v8879 = vpop.f32.mrf.mxu0
    %v8880 = vadd.f32 0.0, %v8879
    %v8881 = vpop.f32.mrf.mxu0
    %v8882 = vadd.f32 0.0, %v8881
    %v8883 = vpop.f32.mrf.mxu0
    %v8884 = vadd.f32 0.0, %v8883
    %8885 = vmatprep.mubr.bf16.mxu0 %v6174
    %8886 = vmatmul.mubr.bf16.gmra.mxu0 %v6173
    %v8887 = vpop.f32.mrf.mxu0
    %v8888 = vadd.f32 0.0, %v8887
    %v8889 = vpop.f32.mrf.mxu0
    %v8890 = vadd.f32 0.0, %v8889
    %v8891 = vpop.f32.mrf.mxu0
    %v8892 = vadd.f32 0.0, %v8891
    %v8893 = vpop.f32.mrf.mxu0
    %v8894 = vadd.f32 0.0, %v8893
    %8895 = vdwg.mxu0
    %8896 = vmatprep.subr.bf16.mxu0 %v8084
    %8897 = vmatpush1.bf16.msra.mxu0 %v8083
    %8898 = vmatprep.subr.bf16.mxu0 %v8068
    %8899 = vmatpush1.bf16.msra.mxu0 %v8067
    %8900 = vmatprep.subr.bf16.mxu0 %v8052
    %8901 = vmatpush1.bf16.msra.mxu0 %v8051
    %8902 = vmatprep.subr.bf16.mxu0 %v8036
    %8903 = vmatpush1.bf16.msra.mxu0 %v8035
    %8904 = vmatprep.subr.bf16.mxu0 %v8020
    %8905 = vmatpush1.bf16.msra.mxu0 %v8019
    %8906 = vmatprep.subr.bf16.mxu0 %v8004
    %8907 = vmatpush1.bf16.msra.mxu0 %v8003
    %8908 = vmatprep.subr.bf16.mxu0 %v7988
    %8909 = vmatpush1.bf16.msra.mxu0 %v7987
    %8910 = vmatprep.subr.bf16.mxu0 %v7972
    %8911 = vmatpush1.bf16.msra.mxu0 %v7971
    %8912 = vmatprep.subr.bf16.mxu0 %v8212
    %8913 = vmatpush2.bf16.msra.mxu0 %v8211
    %8914 = vmatprep.subr.bf16.mxu0 %v8196
    %8915 = vmatpush2.bf16.msra.mxu0 %v8195
    %8916 = vmatprep.subr.bf16.mxu0 %v8180
    %8917 = vmatpush2.bf16.msra.mxu0 %v8179
    %8918 = vmatprep.subr.bf16.mxu0 %v8164
    %8919 = vmatpush2.bf16.msra.mxu0 %v8163
    %8920 = vmatprep.subr.bf16.mxu0 %v8148
    %8921 = vmatpush2.bf16.msra.mxu0 %v8147
    %8922 = vmatprep.subr.bf16.mxu0 %v8132
    %8923 = vmatpush2.bf16.msra.mxu0 %v8131
    %8924 = vmatprep.subr.bf16.mxu0 %v8116
    %8925 = vmatpush2.bf16.msra.mxu0 %v8115
    %8926 = vmatprep.subr.bf16.mxu0 %v8100
    %8927 = vmatpush2.bf16.msra.mxu0 %v8099
    %8928 = vmatprep.mubr.bf16.mxu0 %v6172
    %8929 = vmatmul.mubr.bf16.gmra.mxu0 %v6171
    %v8930 = vpop.f32.mrf.mxu0
    %v8931 = vadd.f32 %v8878, %v8930
    %v8932 = vpop.f32.mrf.mxu0
    %v8933 = vadd.f32 %v8880, %v8932
    %v8934 = vpop.f32.mrf.mxu0
    %v8935 = vadd.f32 %v8882, %v8934
    %v8936 = vpop.f32.mrf.mxu0
    %v8937 = vadd.f32 %v8884, %v8936
    %8938 = vmatprep.mubr.bf16.mxu0 %v6176
    %8939 = vmatmul.mubr.bf16.gmra.mxu0 %v6175
    %v8940 = vpop.f32.mrf.mxu0
    %v8941 = vadd.f32 %v8888, %v8940
    %v8942 = vpop.f32.mrf.mxu0
    %v8943 = vadd.f32 %v8890, %v8942
    %v8944 = vpop.f32.mrf.mxu0
    %v8945 = vadd.f32 %v8892, %v8944
    %v8946 = vpop.f32.mrf.mxu0
    %v8947 = vadd.f32 %v8894, %v8946
    %8948 = vdwg.mxu0
    %8949 = vmatprep.subr.bf16.mxu0 %v7830
    %8950 = vmatpush1.bf16.msra.mxu0 %v7829
    %8951 = vmatprep.subr.bf16.mxu0 %v7814
    %8952 = vmatpush1.bf16.msra.mxu0 %v7813
    %8953 = vmatprep.subr.bf16.mxu0 %v7798
    %8954 = vmatpush1.bf16.msra.mxu0 %v7797
    %8955 = vmatprep.subr.bf16.mxu0 %v7782
    %8956 = vmatpush1.bf16.msra.mxu0 %v7781
    %8957 = vmatprep.subr.bf16.mxu0 %v7766
    %8958 = vmatpush1.bf16.msra.mxu0 %v7765
    %8959 = vmatprep.subr.bf16.mxu0 %v7750
    %8960 = vmatpush1.bf16.msra.mxu0 %v7749
    %8961 = vmatprep.subr.bf16.mxu0 %v7734
    %8962 = vmatpush1.bf16.msra.mxu0 %v7733
    %8963 = vmatprep.subr.bf16.mxu0 %v7718
    %8964 = vmatpush1.bf16.msra.mxu0 %v7717
    %8965 = vmatprep.subr.bf16.mxu0 %v7958
    %8966 = vmatpush2.bf16.msra.mxu0 %v7957
    %8967 = vmatprep.subr.bf16.mxu0 %v7942
    %8968 = vmatpush2.bf16.msra.mxu0 %v7941
    %8969 = vmatprep.subr.bf16.mxu0 %v7926
    %8970 = vmatpush2.bf16.msra.mxu0 %v7925
    %8971 = vmatprep.subr.bf16.mxu0 %v7910
    %8972 = vmatpush2.bf16.msra.mxu0 %v7909
    %8973 = vmatprep.subr.bf16.mxu0 %v7894
    %8974 = vmatpush2.bf16.msra.mxu0 %v7893
    %8975 = vmatprep.subr.bf16.mxu0 %v7878
    %8976 = vmatpush2.bf16.msra.mxu0 %v7877
    %8977 = vmatprep.subr.bf16.mxu0 %v7862
    %8978 = vmatpush2.bf16.msra.mxu0 %v7861
    %8979 = vmatprep.subr.bf16.mxu0 %v7846
    %8980 = vmatpush2.bf16.msra.mxu0 %v7845
    %8981 = vmatprep.mubr.bf16.mxu0 %v6170
    %8982 = vmatmul.mubr.bf16.gmra.mxu0 %v6169
    %v8983 = vpop.f32.mrf.mxu0
    %v8984 = vadd.f32 0.0, %v8983
    %v8985 = vpop.f32.mrf.mxu0
    %v8986 = vadd.f32 0.0, %v8985
    %v8987 = vpop.f32.mrf.mxu0
    %v8988 = vadd.f32 0.0, %v8987
    %v8989 = vpop.f32.mrf.mxu0
    %v8990 = vadd.f32 0.0, %v8989
    %8991 = vmatprep.mubr.bf16.mxu0 %v6174
    %8992 = vmatmul.mubr.bf16.gmra.mxu0 %v6173
    %v8993 = vpop.f32.mrf.mxu0
    %v8994 = vadd.f32 0.0, %v8993
    %v8995 = vpop.f32.mrf.mxu0
    %v8996 = vadd.f32 0.0, %v8995
    %v8997 = vpop.f32.mrf.mxu0
    %v8998 = vadd.f32 0.0, %v8997
    %v8999 = vpop.f32.mrf.mxu0
    %v9000 = vadd.f32 0.0, %v8999
    %9001 = vdwg.mxu0
    %9002 = vmatprep.subr.bf16.mxu0 %v8086
    %9003 = vmatpush1.bf16.msra.mxu0 %v8085
    %9004 = vmatprep.subr.bf16.mxu0 %v8070
    %9005 = vmatpush1.bf16.msra.mxu0 %v8069
    %9006 = vmatprep.subr.bf16.mxu0 %v8054
    %9007 = vmatpush1.bf16.msra.mxu0 %v8053
    %9008 = vmatprep.subr.bf16.mxu0 %v8038
    %9009 = vmatpush1.bf16.msra.mxu0 %v8037
    %9010 = vmatprep.subr.bf16.mxu0 %v8022
    %9011 = vmatpush1.bf16.msra.mxu0 %v8021
    %9012 = vmatprep.subr.bf16.mxu0 %v8006
    %9013 = vmatpush1.bf16.msra.mxu0 %v8005
    %9014 = vmatprep.subr.bf16.mxu0 %v7990
    %9015 = vmatpush1.bf16.msra.mxu0 %v7989
    %9016 = vmatprep.subr.bf16.mxu0 %v7974
    %9017 = vmatpush1.bf16.msra.mxu0 %v7973
    %9018 = vmatprep.subr.bf16.mxu0 %v8214
    %9019 = vmatpush2.bf16.msra.mxu0 %v8213
    %9020 = vmatprep.subr.bf16.mxu0 %v8198
    %9021 = vmatpush2.bf16.msra.mxu0 %v8197
    %9022 = vmatprep.subr.bf16.mxu0 %v8182
    %9023 = vmatpush2.bf16.msra.mxu0 %v8181
    %9024 = vmatprep.subr.bf16.mxu0 %v8166
    %9025 = vmatpush2.bf16.msra.mxu0 %v8165
    %9026 = vmatprep.subr.bf16.mxu0 %v8150
    %9027 = vmatpush2.bf16.msra.mxu0 %v8149
    %9028 = vmatprep.subr.bf16.mxu0 %v8134
    %9029 = vmatpush2.bf16.msra.mxu0 %v8133
    %9030 = vmatprep.subr.bf16.mxu0 %v8118
    %9031 = vmatpush2.bf16.msra.mxu0 %v8117
    %9032 = vmatprep.subr.bf16.mxu0 %v8102
    %9033 = vmatpush2.bf16.msra.mxu0 %v8101
    %9034 = vmatprep.mubr.bf16.mxu0 %v6172
    %9035 = vmatmul.mubr.bf16.gmra.mxu0 %v6171
    %v9036 = vpop.f32.mrf.mxu0
    %v9037 = vadd.f32 %v8984, %v9036
    %v9038 = vpop.f32.mrf.mxu0
    %v9039 = vadd.f32 %v8986, %v9038
    %v9040 = vpop.f32.mrf.mxu0
    %v9041 = vadd.f32 %v8988, %v9040
    %v9042 = vpop.f32.mrf.mxu0
    %v9043 = vadd.f32 %v8990, %v9042
    %9044 = vmatprep.mubr.bf16.mxu0 %v6176
    %9045 = vmatmul.mubr.bf16.gmra.mxu0 %v6175
    %v9046 = vpop.f32.mrf.mxu0
    %v9047 = vadd.f32 %v8994, %v9046
    %v9048 = vpop.f32.mrf.mxu0
    %v9049 = vadd.f32 %v8996, %v9048
    %v9050 = vpop.f32.mrf.mxu0
    %v9051 = vadd.f32 %v8998, %v9050
    %v9052 = vpop.f32.mrf.mxu0
    %v9053 = vadd.f32 %v9000, %v9052
    %9054 = vdwg.mxu0
    %9055 = vmatprep.subr.bf16.mxu0 %v7832
    %9056 = vmatpush1.bf16.msra.mxu0 %v7831
    %9057 = vmatprep.subr.bf16.mxu0 %v7816
    %9058 = vmatpush1.bf16.msra.mxu0 %v7815
    %9059 = vmatprep.subr.bf16.mxu0 %v7800
    %9060 = vmatpush1.bf16.msra.mxu0 %v7799
    %9061 = vmatprep.subr.bf16.mxu0 %v7784
    %9062 = vmatpush1.bf16.msra.mxu0 %v7783
    %9063 = vmatprep.subr.bf16.mxu0 %v7768
    %9064 = vmatpush1.bf16.msra.mxu0 %v7767
    %9065 = vmatprep.subr.bf16.mxu0 %v7752
    %9066 = vmatpush1.bf16.msra.mxu0 %v7751
    %9067 = vmatprep.subr.bf16.mxu0 %v7736
    %9068 = vmatpush1.bf16.msra.mxu0 %v7735
    %9069 = vmatprep.subr.bf16.mxu0 %v7720
    %9070 = vmatpush1.bf16.msra.mxu0 %v7719
    %9071 = vmatprep.subr.bf16.mxu0 %v7960
    %9072 = vmatpush2.bf16.msra.mxu0 %v7959
    %9073 = vmatprep.subr.bf16.mxu0 %v7944
    %9074 = vmatpush2.bf16.msra.mxu0 %v7943
    %9075 = vmatprep.subr.bf16.mxu0 %v7928
    %9076 = vmatpush2.bf16.msra.mxu0 %v7927
    %9077 = vmatprep.subr.bf16.mxu0 %v7912
    %9078 = vmatpush2.bf16.msra.mxu0 %v7911
    %9079 = vmatprep.subr.bf16.mxu0 %v7896
    %9080 = vmatpush2.bf16.msra.mxu0 %v7895
    %9081 = vmatprep.subr.bf16.mxu0 %v7880
    %9082 = vmatpush2.bf16.msra.mxu0 %v7879
    %9083 = vmatprep.subr.bf16.mxu0 %v7864
    %9084 = vmatpush2.bf16.msra.mxu0 %v7863
    %9085 = vmatprep.subr.bf16.mxu0 %v7848
    %9086 = vmatpush2.bf16.msra.mxu0 %v7847
    %9087 = vmatprep.mubr.bf16.mxu0 %v6170
    %9088 = vmatmul.mubr.bf16.gmra.mxu0 %v6169
    %v9089 = vpop.f32.mrf.mxu0
    %v9090 = vadd.f32 0.0, %v9089
    %v9091 = vpop.f32.mrf.mxu0
    %v9092 = vadd.f32 0.0, %v9091
    %v9093 = vpop.f32.mrf.mxu0
    %v9094 = vadd.f32 0.0, %v9093
    %v9095 = vpop.f32.mrf.mxu0
    %v9096 = vadd.f32 0.0, %v9095
    %9097 = vmatprep.mubr.bf16.mxu0 %v6174
    %9098 = vmatmul.mubr.bf16.gmra.mxu0 %v6173
    %v9099 = vpop.f32.mrf.mxu0
    %v9100 = vadd.f32 0.0, %v9099
    %v9101 = vpop.f32.mrf.mxu0
    %v9102 = vadd.f32 0.0, %v9101
    %v9103 = vpop.f32.mrf.mxu0
    %v9104 = vadd.f32 0.0, %v9103
    %v9105 = vpop.f32.mrf.mxu0
    %v9106 = vadd.f32 0.0, %v9105
    %9107 = vdwg.mxu0
    %9108 = vmatprep.subr.bf16.mxu0 %v8088
    %9109 = vmatpush1.bf16.msra.mxu0 %v8087
    %9110 = vmatprep.subr.bf16.mxu0 %v8072
    %9111 = vmatpush1.bf16.msra.mxu0 %v8071
    %9112 = vmatprep.subr.bf16.mxu0 %v8056
    %9113 = vmatpush1.bf16.msra.mxu0 %v8055
    %9114 = vmatprep.subr.bf16.mxu0 %v8040
    %9115 = vmatpush1.bf16.msra.mxu0 %v8039
    %9116 = vmatprep.subr.bf16.mxu0 %v8024
    %9117 = vmatpush1.bf16.msra.mxu0 %v8023
    %9118 = vmatprep.subr.bf16.mxu0 %v8008
    %9119 = vmatpush1.bf16.msra.mxu0 %v8007
    %9120 = vmatprep.subr.bf16.mxu0 %v7992
    %9121 = vmatpush1.bf16.msra.mxu0 %v7991
    %9122 = vmatprep.subr.bf16.mxu0 %v7976
    %9123 = vmatpush1.bf16.msra.mxu0 %v7975
    %9124 = vmatprep.subr.bf16.mxu0 %v8216
    %9125 = vmatpush2.bf16.msra.mxu0 %v8215
    %9126 = vmatprep.subr.bf16.mxu0 %v8200
    %9127 = vmatpush2.bf16.msra.mxu0 %v8199
    %9128 = vmatprep.subr.bf16.mxu0 %v8184
    %9129 = vmatpush2.bf16.msra.mxu0 %v8183
    %9130 = vmatprep.subr.bf16.mxu0 %v8168
    %9131 = vmatpush2.bf16.msra.mxu0 %v8167
    %9132 = vmatprep.subr.bf16.mxu0 %v8152
    %9133 = vmatpush2.bf16.msra.mxu0 %v8151
    %9134 = vmatprep.subr.bf16.mxu0 %v8136
    %9135 = vmatpush2.bf16.msra.mxu0 %v8135
    %9136 = vmatprep.subr.bf16.mxu0 %v8120
    %9137 = vmatpush2.bf16.msra.mxu0 %v8119
    %9138 = vmatprep.subr.bf16.mxu0 %v8104
    %9139 = vmatpush2.bf16.msra.mxu0 %v8103
    %9140 = vmatprep.mubr.bf16.mxu0 %v6172
    %9141 = vmatmul.mubr.bf16.gmra.mxu0 %v6171
    %v9142 = vpop.f32.mrf.mxu0
    %v9143 = vadd.f32 %v9090, %v9142
    %v9144 = vpop.f32.mrf.mxu0
    %v9145 = vadd.f32 %v9092, %v9144
    %v9146 = vpop.f32.mrf.mxu0
    %v9147 = vadd.f32 %v9094, %v9146
    %v9148 = vpop.f32.mrf.mxu0
    %v9149 = vadd.f32 %v9096, %v9148
    %9150 = vmatprep.mubr.bf16.mxu0 %v6176
    %9151 = vmatmul.mubr.bf16.gmra.mxu0 %v6175
    %v9152 = vpop.f32.mrf.mxu0
    %v9153 = vadd.f32 %v9100, %v9152
    %v9154 = vpop.f32.mrf.mxu0
    %v9155 = vadd.f32 %v9102, %v9154
    %v9156 = vpop.f32.mrf.mxu0
    %v9157 = vadd.f32 %v9104, %v9156
    %v9158 = vpop.f32.mrf.mxu0
    %v9159 = vadd.f32 %v9106, %v9158
    %9160 = vdwg.mxu0
    %9161 = vmatprep.subr.bf16.mxu0 %v7834
    %9162 = vmatpush1.bf16.msra.mxu0 %v7833
    %9163 = vmatprep.subr.bf16.mxu0 %v7818
    %9164 = vmatpush1.bf16.msra.mxu0 %v7817
    %9165 = vmatprep.subr.bf16.mxu0 %v7802
    %9166 = vmatpush1.bf16.msra.mxu0 %v7801
    %9167 = vmatprep.subr.bf16.mxu0 %v7786
    %9168 = vmatpush1.bf16.msra.mxu0 %v7785
    %9169 = vmatprep.subr.bf16.mxu0 %v7770
    %9170 = vmatpush1.bf16.msra.mxu0 %v7769
    %9171 = vmatprep.subr.bf16.mxu0 %v7754
    %9172 = vmatpush1.bf16.msra.mxu0 %v7753
    %9173 = vmatprep.subr.bf16.mxu0 %v7738
    %9174 = vmatpush1.bf16.msra.mxu0 %v7737
    %9175 = vmatprep.subr.bf16.mxu0 %v7722
    %9176 = vmatpush1.bf16.msra.mxu0 %v7721
    %9177 = vmatprep.subr.bf16.mxu0 %v7962
    %9178 = vmatpush2.bf16.msra.mxu0 %v7961
    %9179 = vmatprep.subr.bf16.mxu0 %v7946
    %9180 = vmatpush2.bf16.msra.mxu0 %v7945
    %9181 = vmatprep.subr.bf16.mxu0 %v7930
    %9182 = vmatpush2.bf16.msra.mxu0 %v7929
    %9183 = vmatprep.subr.bf16.mxu0 %v7914
    %9184 = vmatpush2.bf16.msra.mxu0 %v7913
    %9185 = vmatprep.subr.bf16.mxu0 %v7898
    %9186 = vmatpush2.bf16.msra.mxu0 %v7897
    %9187 = vmatprep.subr.bf16.mxu0 %v7882
    %9188 = vmatpush2.bf16.msra.mxu0 %v7881
    %9189 = vmatprep.subr.bf16.mxu0 %v7866
    %9190 = vmatpush2.bf16.msra.mxu0 %v7865
    %9191 = vmatprep.subr.bf16.mxu0 %v7850
    %9192 = vmatpush2.bf16.msra.mxu0 %v7849
    %9193 = vmatprep.mubr.bf16.mxu0 %v6170
    %9194 = vmatmul.mubr.bf16.gmra.mxu0 %v6169
    %v9195 = vpop.f32.mrf.mxu0
    %v9196 = vadd.f32 0.0, %v9195
    %v9197 = vpop.f32.mrf.mxu0
    %v9198 = vadd.f32 0.0, %v9197
    %v9199 = vpop.f32.mrf.mxu0
    %v9200 = vadd.f32 0.0, %v9199
    %v9201 = vpop.f32.mrf.mxu0
    %v9202 = vadd.f32 0.0, %v9201
    %9203 = vmatprep.mubr.bf16.mxu0 %v6174
    %9204 = vmatmul.mubr.bf16.gmra.mxu0 %v6173
    %v9205 = vpop.f32.mrf.mxu0
    %v9206 = vadd.f32 0.0, %v9205
    %v9207 = vpop.f32.mrf.mxu0
    %v9208 = vadd.f32 0.0, %v9207
    %v9209 = vpop.f32.mrf.mxu0
    %v9210 = vadd.f32 0.0, %v9209
    %v9211 = vpop.f32.mrf.mxu0
    %v9212 = vadd.f32 0.0, %v9211
    %9213 = vdwg.mxu0
    %9214 = vmatprep.subr.bf16.mxu0 %v8090
    %9215 = vmatpush1.bf16.msra.mxu0 %v8089
    %9216 = vmatprep.subr.bf16.mxu0 %v8074
    %9217 = vmatpush1.bf16.msra.mxu0 %v8073
    %9218 = vmatprep.subr.bf16.mxu0 %v8058
    %9219 = vmatpush1.bf16.msra.mxu0 %v8057
    %9220 = vmatprep.subr.bf16.mxu0 %v8042
    %9221 = vmatpush1.bf16.msra.mxu0 %v8041
    %9222 = vmatprep.subr.bf16.mxu0 %v8026
    %9223 = vmatpush1.bf16.msra.mxu0 %v8025
    %9224 = vmatprep.subr.bf16.mxu0 %v8010
    %9225 = vmatpush1.bf16.msra.mxu0 %v8009
    %9226 = vmatprep.subr.bf16.mxu0 %v7994
    %9227 = vmatpush1.bf16.msra.mxu0 %v7993
    %9228 = vmatprep.subr.bf16.mxu0 %v7978
    %9229 = vmatpush1.bf16.msra.mxu0 %v7977
    %9230 = vmatprep.subr.bf16.mxu0 %v8218
    %9231 = vmatpush2.bf16.msra.mxu0 %v8217
    %9232 = vmatprep.subr.bf16.mxu0 %v8202
    %9233 = vmatpush2.bf16.msra.mxu0 %v8201
    %9234 = vmatprep.subr.bf16.mxu0 %v8186
    %9235 = vmatpush2.bf16.msra.mxu0 %v8185
    %9236 = vmatprep.subr.bf16.mxu0 %v8170
    %9237 = vmatpush2.bf16.msra.mxu0 %v8169
    %9238 = vmatprep.subr.bf16.mxu0 %v8154
    %9239 = vmatpush2.bf16.msra.mxu0 %v8153
    %9240 = vmatprep.subr.bf16.mxu0 %v8138
    %9241 = vmatpush2.bf16.msra.mxu0 %v8137
    %9242 = vmatprep.subr.bf16.mxu0 %v8122
    %9243 = vmatpush2.bf16.msra.mxu0 %v8121
    %9244 = vmatprep.subr.bf16.mxu0 %v8106
    %9245 = vmatpush2.bf16.msra.mxu0 %v8105
    %9246 = vmatprep.mubr.bf16.mxu0 %v6172
    %9247 = vmatmul.mubr.bf16.gmra.mxu0 %v6171
    %v9248 = vpop.f32.mrf.mxu0
    %v9249 = vadd.f32 %v9196, %v9248
    %v9250 = vpop.f32.mrf.mxu0
    %v9251 = vadd.f32 %v9198, %v9250
    %v9252 = vpop.f32.mrf.mxu0
    %v9253 = vadd.f32 %v9200, %v9252
    %v9254 = vpop.f32.mrf.mxu0
    %v9255 = vadd.f32 %v9202, %v9254
    %9256 = vmatprep.mubr.bf16.mxu0 %v6176
    %9257 = vmatmul.mubr.bf16.gmra.mxu0 %v6175
    %v9258 = vpop.f32.mrf.mxu0
    %v9259 = vadd.f32 %v9206, %v9258
    %v9260 = vpop.f32.mrf.mxu0
    %v9261 = vadd.f32 %v9208, %v9260
    %v9262 = vpop.f32.mrf.mxu0
    %v9263 = vadd.f32 %v9210, %v9262
    %v9264 = vpop.f32.mrf.mxu0
    %v9265 = vadd.f32 %v9212, %v9264
    %9266 = vdwg.mxu0
    %9267 = vmatprep.subr.bf16.mxu0 %v7836
    %9268 = vmatpush1.bf16.msra.mxu0 %v7835
    %9269 = vmatprep.subr.bf16.mxu0 %v7820
    %9270 = vmatpush1.bf16.msra.mxu0 %v7819
    %9271 = vmatprep.subr.bf16.mxu0 %v7804
    %9272 = vmatpush1.bf16.msra.mxu0 %v7803
    %9273 = vmatprep.subr.bf16.mxu0 %v7788
    %9274 = vmatpush1.bf16.msra.mxu0 %v7787
    %9275 = vmatprep.subr.bf16.mxu0 %v7772
    %9276 = vmatpush1.bf16.msra.mxu0 %v7771
    %9277 = vmatprep.subr.bf16.mxu0 %v7756
    %9278 = vmatpush1.bf16.msra.mxu0 %v7755
    %9279 = vmatprep.subr.bf16.mxu0 %v7740
    %9280 = vmatpush1.bf16.msra.mxu0 %v7739
    %9281 = vmatprep.subr.bf16.mxu0 %v7724
    %9282 = vmatpush1.bf16.msra.mxu0 %v7723
    %9283 = vmatprep.subr.bf16.mxu0 %v7964
    %9284 = vmatpush2.bf16.msra.mxu0 %v7963
    %9285 = vmatprep.subr.bf16.mxu0 %v7948
    %9286 = vmatpush2.bf16.msra.mxu0 %v7947
    %9287 = vmatprep.subr.bf16.mxu0 %v7932
    %9288 = vmatpush2.bf16.msra.mxu0 %v7931
    %9289 = vmatprep.subr.bf16.mxu0 %v7916
    %9290 = vmatpush2.bf16.msra.mxu0 %v7915
    %9291 = vmatprep.subr.bf16.mxu0 %v7900
    %9292 = vmatpush2.bf16.msra.mxu0 %v7899
    %9293 = vmatprep.subr.bf16.mxu0 %v7884
    %9294 = vmatpush2.bf16.msra.mxu0 %v7883
    %9295 = vmatprep.subr.bf16.mxu0 %v7868
    %9296 = vmatpush2.bf16.msra.mxu0 %v7867
    %9297 = vmatprep.subr.bf16.mxu0 %v7852
    %9298 = vmatpush2.bf16.msra.mxu0 %v7851
    %9299 = vmatprep.mubr.bf16.mxu0 %v6170
    %9300 = vmatmul.mubr.bf16.gmra.mxu0 %v6169
    %v9301 = vpop.f32.mrf.mxu0
    %v9302 = vadd.f32 0.0, %v9301
    %v9303 = vpop.f32.mrf.mxu0
    %v9304 = vadd.f32 0.0, %v9303
    %v9305 = vpop.f32.mrf.mxu0
    %v9306 = vadd.f32 0.0, %v9305
    %v9307 = vpop.f32.mrf.mxu0
    %v9308 = vadd.f32 0.0, %v9307
    %9309 = vmatprep.mubr.bf16.mxu0 %v6174
    %9310 = vmatmul.mubr.bf16.gmra.mxu0 %v6173
    %v9311 = vpop.f32.mrf.mxu0
    %v9312 = vadd.f32 0.0, %v9311
    %v9313 = vpop.f32.mrf.mxu0
    %v9314 = vadd.f32 0.0, %v9313
    %v9315 = vpop.f32.mrf.mxu0
    %v9316 = vadd.f32 0.0, %v9315
    %v9317 = vpop.f32.mrf.mxu0
    %v9318 = vadd.f32 0.0, %v9317
    %9319 = vdwg.mxu0
    %9320 = vmatprep.subr.bf16.mxu0 %v8092
    %9321 = vmatpush1.bf16.msra.mxu0 %v8091
    %9322 = vmatprep.subr.bf16.mxu0 %v8076
    %9323 = vmatpush1.bf16.msra.mxu0 %v8075
    %9324 = vmatprep.subr.bf16.mxu0 %v8060
    %9325 = vmatpush1.bf16.msra.mxu0 %v8059
    %9326 = vmatprep.subr.bf16.mxu0 %v8044
    %9327 = vmatpush1.bf16.msra.mxu0 %v8043
    %9328 = vmatprep.subr.bf16.mxu0 %v8028
    %9329 = vmatpush1.bf16.msra.mxu0 %v8027
    %9330 = vmatprep.subr.bf16.mxu0 %v8012
    %9331 = vmatpush1.bf16.msra.mxu0 %v8011
    %9332 = vmatprep.subr.bf16.mxu0 %v7996
    %9333 = vmatpush1.bf16.msra.mxu0 %v7995
    %9334 = vmatprep.subr.bf16.mxu0 %v7980
    %9335 = vmatpush1.bf16.msra.mxu0 %v7979
    %9336 = vmatprep.subr.bf16.mxu0 %v8220
    %9337 = vmatpush2.bf16.msra.mxu0 %v8219
    %9338 = vmatprep.subr.bf16.mxu0 %v8204
    %9339 = vmatpush2.bf16.msra.mxu0 %v8203
    %9340 = vmatprep.subr.bf16.mxu0 %v8188
    %9341 = vmatpush2.bf16.msra.mxu0 %v8187
    %9342 = vmatprep.subr.bf16.mxu0 %v8172
    %9343 = vmatpush2.bf16.msra.mxu0 %v8171
    %9344 = vmatprep.subr.bf16.mxu0 %v8156
    %9345 = vmatpush2.bf16.msra.mxu0 %v8155
    %9346 = vmatprep.subr.bf16.mxu0 %v8140
    %9347 = vmatpush2.bf16.msra.mxu0 %v8139
    %9348 = vmatprep.subr.bf16.mxu0 %v8124
    %9349 = vmatpush2.bf16.msra.mxu0 %v8123
    %9350 = vmatprep.subr.bf16.mxu0 %v8108
    %9351 = vmatpush2.bf16.msra.mxu0 %v8107
    %9352 = vmatprep.mubr.bf16.mxu0 %v6172
    %9353 = vmatmul.mubr.bf16.gmra.mxu0 %v6171
    %v9354 = vpop.f32.mrf.mxu0
    %v9355 = vadd.f32 %v9302, %v9354
    %v9356 = vpop.f32.mrf.mxu0
    %v9357 = vadd.f32 %v9304, %v9356
    %v9358 = vpop.f32.mrf.mxu0
    %v9359 = vadd.f32 %v9306, %v9358
    %v9360 = vpop.f32.mrf.mxu0
    %v9361 = vadd.f32 %v9308, %v9360
    %9362 = vmatprep.mubr.bf16.mxu0 %v6176
    %9363 = vmatmul.mubr.bf16.gmra.mxu0 %v6175
    %v9364 = vpop.f32.mrf.mxu0
    %v9365 = vadd.f32 %v9312, %v9364
    %v9366 = vpop.f32.mrf.mxu0
    %v9367 = vadd.f32 %v9314, %v9366
    %v9368 = vpop.f32.mrf.mxu0
    %v9369 = vadd.f32 %v9316, %v9368
    %v9370 = vpop.f32.mrf.mxu0
    %v9371 = vadd.f32 %v9318, %v9370
    %9372 = vdwg.mxu0
    %9373 = vmatprep.subr.bf16.mxu0 %v7838
    %9374 = vmatpush1.bf16.msra.mxu0 %v7837
    %9375 = vmatprep.subr.bf16.mxu0 %v7822
    %9376 = vmatpush1.bf16.msra.mxu0 %v7821
    %9377 = vmatprep.subr.bf16.mxu0 %v7806
    %9378 = vmatpush1.bf16.msra.mxu0 %v7805
    %9379 = vmatprep.subr.bf16.mxu0 %v7790
    %9380 = vmatpush1.bf16.msra.mxu0 %v7789
    %9381 = vmatprep.subr.bf16.mxu0 %v7774
    %9382 = vmatpush1.bf16.msra.mxu0 %v7773
    %9383 = vmatprep.subr.bf16.mxu0 %v7758
    %9384 = vmatpush1.bf16.msra.mxu0 %v7757
    %9385 = vmatprep.subr.bf16.mxu0 %v7742
    %9386 = vmatpush1.bf16.msra.mxu0 %v7741
    %9387 = vmatprep.subr.bf16.mxu0 %v7726
    %9388 = vmatpush1.bf16.msra.mxu0 %v7725
    %9389 = vmatprep.subr.bf16.mxu0 %v7966
    %9390 = vmatpush2.bf16.msra.mxu0 %v7965
    %9391 = vmatprep.subr.bf16.mxu0 %v7950
    %9392 = vmatpush2.bf16.msra.mxu0 %v7949
    %9393 = vmatprep.subr.bf16.mxu0 %v7934
    %9394 = vmatpush2.bf16.msra.mxu0 %v7933
    %9395 = vmatprep.subr.bf16.mxu0 %v7918
    %9396 = vmatpush2.bf16.msra.mxu0 %v7917
    %9397 = vmatprep.subr.bf16.mxu0 %v7902
    %9398 = vmatpush2.bf16.msra.mxu0 %v7901
    %9399 = vmatprep.subr.bf16.mxu0 %v7886
    %9400 = vmatpush2.bf16.msra.mxu0 %v7885
    %9401 = vmatprep.subr.bf16.mxu0 %v7870
    %9402 = vmatpush2.bf16.msra.mxu0 %v7869
    %9403 = vmatprep.subr.bf16.mxu0 %v7854
    %9404 = vmatpush2.bf16.msra.mxu0 %v7853
    %9405 = vmatprep.mubr.bf16.mxu0 %v6170
    %9406 = vmatmul.mubr.bf16.gmra.mxu0 %v6169
    %v9407 = vpop.f32.mrf.mxu0
    %v9408 = vadd.f32 0.0, %v9407
    %v9409 = vpop.f32.mrf.mxu0
    %v9410 = vadd.f32 0.0, %v9409
    %v9411 = vpop.f32.mrf.mxu0
    %v9412 = vadd.f32 0.0, %v9411
    %v9413 = vpop.f32.mrf.mxu0
    %v9414 = vadd.f32 0.0, %v9413
    %9415 = vmatprep.mubr.bf16.mxu0 %v6174
    %9416 = vmatmul.mubr.bf16.gmra.mxu0 %v6173
    %v9417 = vpop.f32.mrf.mxu0
    %v9418 = vadd.f32 0.0, %v9417
    %v9419 = vpop.f32.mrf.mxu0
    %v9420 = vadd.f32 0.0, %v9419
    %v9421 = vpop.f32.mrf.mxu0
    %v9422 = vadd.f32 0.0, %v9421
    %v9423 = vpop.f32.mrf.mxu0
    %v9424 = vadd.f32 0.0, %v9423
    %9425 = vdwg.mxu0
    %9426 = vmatprep.subr.bf16.mxu0 %v8094
    %9427 = vmatpush1.bf16.msra.mxu0 %v8093
    %9428 = vmatprep.subr.bf16.mxu0 %v8078
    %9429 = vmatpush1.bf16.msra.mxu0 %v8077
    %9430 = vmatprep.subr.bf16.mxu0 %v8062
    %9431 = vmatpush1.bf16.msra.mxu0 %v8061
    %9432 = vmatprep.subr.bf16.mxu0 %v8046
    %9433 = vmatpush1.bf16.msra.mxu0 %v8045
    %9434 = vmatprep.subr.bf16.mxu0 %v8030
    %9435 = vmatpush1.bf16.msra.mxu0 %v8029
    %9436 = vmatprep.subr.bf16.mxu0 %v8014
    %9437 = vmatpush1.bf16.msra.mxu0 %v8013
    %9438 = vmatprep.subr.bf16.mxu0 %v7998
    %9439 = vmatpush1.bf16.msra.mxu0 %v7997
    %9440 = vmatprep.subr.bf16.mxu0 %v7982
    %9441 = vmatpush1.bf16.msra.mxu0 %v7981
    %9442 = vmatprep.subr.bf16.mxu0 %v8222
    %9443 = vmatpush2.bf16.msra.mxu0 %v8221
    %9444 = vmatprep.subr.bf16.mxu0 %v8206
    %9445 = vmatpush2.bf16.msra.mxu0 %v8205
    %9446 = vmatprep.subr.bf16.mxu0 %v8190
    %9447 = vmatpush2.bf16.msra.mxu0 %v8189
    %9448 = vmatprep.subr.bf16.mxu0 %v8174
    %9449 = vmatpush2.bf16.msra.mxu0 %v8173
    %9450 = vmatprep.subr.bf16.mxu0 %v8158
    %9451 = vmatpush2.bf16.msra.mxu0 %v8157
    %9452 = vmatprep.subr.bf16.mxu0 %v8142
    %9453 = vmatpush2.bf16.msra.mxu0 %v8141
    %9454 = vmatprep.subr.bf16.mxu0 %v8126
    %9455 = vmatpush2.bf16.msra.mxu0 %v8125
    %9456 = vmatprep.subr.bf16.mxu0 %v8110
    %9457 = vmatpush2.bf16.msra.mxu0 %v8109
    %9458 = vmatprep.mubr.bf16.mxu0 %v6172
    %9459 = vmatmul.mubr.bf16.gmra.mxu0 %v6171
    %v9460 = vpop.f32.mrf.mxu0
    %v9461 = vadd.f32 %v9408, %v9460
    %v9462 = vpop.f32.mrf.mxu0
    %v9463 = vadd.f32 %v9410, %v9462
    %v9464 = vpop.f32.mrf.mxu0
    %v9465 = vadd.f32 %v9412, %v9464
    %v9466 = vpop.f32.mrf.mxu0
    %v9467 = vadd.f32 %v9414, %v9466
    %9468 = vmatprep.mubr.bf16.mxu0 %v6176
    %9469 = vmatmul.mubr.bf16.gmra.mxu0 %v6175
    %v9470 = vpop.f32.mrf.mxu0
    %v9471 = vadd.f32 %v9418, %v9470
    %v9472 = vpop.f32.mrf.mxu0
    %v9473 = vadd.f32 %v9420, %v9472
    %v9474 = vpop.f32.mrf.mxu0
    %v9475 = vadd.f32 %v9422, %v9474
    %v9476 = vpop.f32.mrf.mxu0
    %v9477 = vadd.f32 %v9424, %v9476
    %9478 = vdwg.mxu0
    %9479 = vmatprep.subr.bf16.mxu0 %v7840
    %9480 = vmatpush1.bf16.msra.mxu0 %v7839
    %9481 = vmatprep.subr.bf16.mxu0 %v7824
    %9482 = vmatpush1.bf16.msra.mxu0 %v7823
    %9483 = vmatprep.subr.bf16.mxu0 %v7808
    %9484 = vmatpush1.bf16.msra.mxu0 %v7807
    %9485 = vmatprep.subr.bf16.mxu0 %v7792
    %9486 = vmatpush1.bf16.msra.mxu0 %v7791
    %9487 = vmatprep.subr.bf16.mxu0 %v7776
    %9488 = vmatpush1.bf16.msra.mxu0 %v7775
    %9489 = vmatprep.subr.bf16.mxu0 %v7760
    %9490 = vmatpush1.bf16.msra.mxu0 %v7759
    %9491 = vmatprep.subr.bf16.mxu0 %v7744
    %9492 = vmatpush1.bf16.msra.mxu0 %v7743
    %9493 = vmatprep.subr.bf16.mxu0 %v7728
    %9494 = vmatpush1.bf16.msra.mxu0 %v7727
    %9495 = vmatprep.subr.bf16.mxu0 %v7968
    %9496 = vmatpush2.bf16.msra.mxu0 %v7967
    %9497 = vmatprep.subr.bf16.mxu0 %v7952
    %9498 = vmatpush2.bf16.msra.mxu0 %v7951
    %9499 = vmatprep.subr.bf16.mxu0 %v7936
    %9500 = vmatpush2.bf16.msra.mxu0 %v7935
    %9501 = vmatprep.subr.bf16.mxu0 %v7920
    %9502 = vmatpush2.bf16.msra.mxu0 %v7919
    %9503 = vmatprep.subr.bf16.mxu0 %v7904
    %9504 = vmatpush2.bf16.msra.mxu0 %v7903
    %9505 = vmatprep.subr.bf16.mxu0 %v7888
    %9506 = vmatpush2.bf16.msra.mxu0 %v7887
    %9507 = vmatprep.subr.bf16.mxu0 %v7872
    %9508 = vmatpush2.bf16.msra.mxu0 %v7871
    %9509 = vmatprep.subr.bf16.mxu0 %v7856
    %9510 = vmatpush2.bf16.msra.mxu0 %v7855
    %9511 = vmatprep.mubr.bf16.mxu0 %v6170
    %9512 = vmatmul.mubr.bf16.gmra.mxu0 %v6169
    %v9513 = vpop.f32.mrf.mxu0
    %v9514 = vadd.f32 0.0, %v9513
    %v9515 = vpop.f32.mrf.mxu0
    %v9516 = vadd.f32 0.0, %v9515
    %v9517 = vpop.f32.mrf.mxu0
    %v9518 = vadd.f32 0.0, %v9517
    %v9519 = vpop.f32.mrf.mxu0
    %v9520 = vadd.f32 0.0, %v9519
    %9521 = vmatprep.mubr.bf16.mxu0 %v6174
    %9522 = vmatmul.mubr.bf16.gmra.mxu0 %v6173
    %v9523 = vpop.f32.mrf.mxu0
    %v9524 = vadd.f32 0.0, %v9523
    %v9525 = vpop.f32.mrf.mxu0
    %v9526 = vadd.f32 0.0, %v9525
    %v9527 = vpop.f32.mrf.mxu0
    %v9528 = vadd.f32 0.0, %v9527
    %v9529 = vpop.f32.mrf.mxu0
    %v9530 = vadd.f32 0.0, %v9529
    %9531 = vdwg.mxu0
    %9532 = vmatprep.subr.bf16.mxu0 %v8096
    %9533 = vmatpush1.bf16.msra.mxu0 %v8095
    %9534 = vmatprep.subr.bf16.mxu0 %v8080
    %9535 = vmatpush1.bf16.msra.mxu0 %v8079
    %9536 = vmatprep.subr.bf16.mxu0 %v8064
    %9537 = vmatpush1.bf16.msra.mxu0 %v8063
    %9538 = vmatprep.subr.bf16.mxu0 %v8048
    %9539 = vmatpush1.bf16.msra.mxu0 %v8047
    %9540 = vmatprep.subr.bf16.mxu0 %v8032
    %9541 = vmatpush1.bf16.msra.mxu0 %v8031
    %9542 = vmatprep.subr.bf16.mxu0 %v8016
    %9543 = vmatpush1.bf16.msra.mxu0 %v8015
    %9544 = vmatprep.subr.bf16.mxu0 %v8000
    %9545 = vmatpush1.bf16.msra.mxu0 %v7999
    %9546 = vmatprep.subr.bf16.mxu0 %v7984
    %9547 = vmatpush1.bf16.msra.mxu0 %v7983
    %9548 = vmatprep.subr.bf16.mxu0 %v8224
    %9549 = vmatpush2.bf16.msra.mxu0 %v8223
    %9550 = vmatprep.subr.bf16.mxu0 %v8208
    %9551 = vmatpush2.bf16.msra.mxu0 %v8207
    %9552 = vmatprep.subr.bf16.mxu0 %v8192
    %9553 = vmatpush2.bf16.msra.mxu0 %v8191
    %9554 = vmatprep.subr.bf16.mxu0 %v8176
    %9555 = vmatpush2.bf16.msra.mxu0 %v8175
    %9556 = vmatprep.subr.bf16.mxu0 %v8160
    %9557 = vmatpush2.bf16.msra.mxu0 %v8159
    %9558 = vmatprep.subr.bf16.mxu0 %v8144
    %9559 = vmatpush2.bf16.msra.mxu0 %v8143
    %9560 = vmatprep.subr.bf16.mxu0 %v8128
    %9561 = vmatpush2.bf16.msra.mxu0 %v8127
    %9562 = vmatprep.subr.bf16.mxu0 %v8112
    %9563 = vmatpush2.bf16.msra.mxu0 %v8111
    %9564 = vmatprep.mubr.bf16.mxu0 %v6172
    %9565 = vmatmul.mubr.bf16.gmra.mxu0 %v6171
    %v9566 = vpop.f32.mrf.mxu0
    %v9567 = vadd.f32 %v9514, %v9566
    %v9568 = vpop.f32.mrf.mxu0
    %v9569 = vadd.f32 %v9516, %v9568
    %v9570 = vpop.f32.mrf.mxu0
    %v9571 = vadd.f32 %v9518, %v9570
    %v9572 = vpop.f32.mrf.mxu0
    %v9573 = vadd.f32 %v9520, %v9572
    %9574 = vmatprep.mubr.bf16.mxu0 %v6176
    %9575 = vmatmul.mubr.bf16.gmra.mxu0 %v6175
    %v9576 = vpop.f32.mrf.mxu0
    %v9577 = vadd.f32 %v9524, %v9576
    %v9578 = vpop.f32.mrf.mxu0
    %v9579 = vadd.f32 %v9526, %v9578
    %v9580 = vpop.f32.mrf.mxu0
    %v9581 = vadd.f32 %v9528, %v9580
    %v9582 = vpop.f32.mrf.mxu0
    %v9583 = vadd.f32 %v9530, %v9582
    %9584 = vdwg.mxu0
    %v9585 = vmax.f32 %v8825, 0.0
    %v9586 = vmax.f32 %v8827, 0.0
    %v9587 = vmax.f32 %v8931, 0.0
    %v9588 = vmax.f32 %v8933, 0.0
    %v9589 = vmax.f32 %v9037, 0.0
    %v9590 = vmax.f32 %v9039, 0.0
    %v9591 = vmax.f32 %v9143, 0.0
    %v9592 = vmax.f32 %v9145, 0.0
    %v9593 = vmax.f32 %v9249, 0.0
    %v9594 = vmax.f32 %v9251, 0.0
    %v9595 = vmax.f32 %v9355, 0.0
    %v9596 = vmax.f32 %v9357, 0.0
    %v9597 = vmax.f32 %v9461, 0.0
    %v9598 = vmax.f32 %v9463, 0.0
    %v9599 = vmax.f32 %v9567, 0.0
    %v9600 = vmax.f32 %v9569, 0.0
    %v9601 = vmax.f32 %v8829, 0.0
    %v9602 = vmax.f32 %v8831, 0.0
    %v9603 = vmax.f32 %v8935, 0.0
    %v9604 = vmax.f32 %v8937, 0.0
    %v9605 = vmax.f32 %v9041, 0.0
    %v9606 = vmax.f32 %v9043, 0.0
    %v9607 = vmax.f32 %v9147, 0.0
    %v9608 = vmax.f32 %v9149, 0.0
    %v9609 = vmax.f32 %v9253, 0.0
    %v9610 = vmax.f32 %v9255, 0.0
    %v9611 = vmax.f32 %v9359, 0.0
    %v9612 = vmax.f32 %v9361, 0.0
    %v9613 = vmax.f32 %v9465, 0.0
    %v9614 = vmax.f32 %v9467, 0.0
    %v9615 = vmax.f32 %v9571, 0.0
    %v9616 = vmax.f32 %v9573, 0.0
    %v9617 = vmax.f32 %v8835, 0.0
    %v9618 = vmax.f32 %v8837, 0.0
    %v9619 = vmax.f32 %v8941, 0.0
    %v9620 = vmax.f32 %v8943, 0.0
    %v9621 = vmax.f32 %v9047, 0.0
    %v9622 = vmax.f32 %v9049, 0.0
    %v9623 = vmax.f32 %v9153, 0.0
    %v9624 = vmax.f32 %v9155, 0.0
    %v9625 = vmax.f32 %v9259, 0.0
    %v9626 = vmax.f32 %v9261, 0.0
    %v9627 = vmax.f32 %v9365, 0.0
    %v9628 = vmax.f32 %v9367, 0.0
    %v9629 = vmax.f32 %v9471, 0.0
    %v9630 = vmax.f32 %v9473, 0.0
    %v9631 = vmax.f32 %v9577, 0.0
    %v9632 = vmax.f32 %v9579, 0.0
    %v9633 = vmax.f32 %v8839, 0.0
    %v9634 = vmax.f32 %v8841, 0.0
    %v9635 = vmax.f32 %v8945, 0.0
    %v9636 = vmax.f32 %v8947, 0.0
    %v9637 = vmax.f32 %v9051, 0.0
    %v9638 = vmax.f32 %v9053, 0.0
    %v9639 = vmax.f32 %v9157, 0.0
    %v9640 = vmax.f32 %v9159, 0.0
    %v9641 = vmax.f32 %v9263, 0.0
    %v9642 = vmax.f32 %v9265, 0.0
    %v9643 = vmax.f32 %v9369, 0.0
    %v9644 = vmax.f32 %v9371, 0.0
    %v9645 = vmax.f32 %v9475, 0.0
    %v9646 = vmax.f32 %v9477, 0.0
    %v9647 = vmax.f32 %v9581, 0.0
    %v9648 = vmax.f32 %v9583, 0.0
    %v9649 = vmul.f32 %v9585, %v9585
    %v9650 = vmul.f32 %v9586, %v9586
    %v9651 = vmul.f32 %v9587, %v9587
    %v9652 = vmul.f32 %v9588, %v9588
    %v9653 = vmul.f32 %v9589, %v9589
    %v9654 = vmul.f32 %v9590, %v9590
    %v9655 = vmul.f32 %v9591, %v9591
    %v9656 = vmul.f32 %v9592, %v9592
    %v9657 = vmul.f32 %v9593, %v9593
    %v9658 = vmul.f32 %v9594, %v9594
    %v9659 = vmul.f32 %v9595, %v9595
    %v9660 = vmul.f32 %v9596, %v9596
    %v9661 = vmul.f32 %v9597, %v9597
    %v9662 = vmul.f32 %v9598, %v9598
    %v9663 = vmul.f32 %v9599, %v9599
    %v9664 = vmul.f32 %v9600, %v9600
    %v9665 = vmul.f32 %v9601, %v9601
    %v9666 = vmul.f32 %v9602, %v9602
    %v9667 = vmul.f32 %v9603, %v9603
    %v9668 = vmul.f32 %v9604, %v9604
    %v9669 = vmul.f32 %v9605, %v9605
    %v9670 = vmul.f32 %v9606, %v9606
    %v9671 = vmul.f32 %v9607, %v9607
    %v9672 = vmul.f32 %v9608, %v9608
    %v9673 = vmul.f32 %v9609, %v9609
    %v9674 = vmul.f32 %v9610, %v9610
    %v9675 = vmul.f32 %v9611, %v9611
    %v9676 = vmul.f32 %v9612, %v9612
    %v9677 = vmul.f32 %v9613, %v9613
    %v9678 = vmul.f32 %v9614, %v9614
    %v9679 = vmul.f32 %v9615, %v9615
    %v9680 = vmul.f32 %v9616, %v9616
    %v9681 = vmul.f32 %v9617, %v9617
    %v9682 = vmul.f32 %v9618, %v9618
    %v9683 = vmul.f32 %v9619, %v9619
    %v9684 = vmul.f32 %v9620, %v9620
    %v9685 = vmul.f32 %v9621, %v9621
    %v9686 = vmul.f32 %v9622, %v9622
    %v9687 = vmul.f32 %v9623, %v9623
    %v9688 = vmul.f32 %v9624, %v9624
    %v9689 = vmul.f32 %v9625, %v9625
    %v9690 = vmul.f32 %v9626, %v9626
    %v9691 = vmul.f32 %v9627, %v9627
    %v9692 = vmul.f32 %v9628, %v9628
    %v9693 = vmul.f32 %v9629, %v9629
    %v9694 = vmul.f32 %v9630, %v9630
    %v9695 = vmul.f32 %v9631, %v9631
    %v9696 = vmul.f32 %v9632, %v9632
    %v9697 = vmul.f32 %v9633, %v9633
    %v9698 = vmul.f32 %v9634, %v9634
    %v9699 = vmul.f32 %v9635, %v9635
    %v9700 = vmul.f32 %v9636, %v9636
    %v9701 = vmul.f32 %v9637, %v9637
    %v9702 = vmul.f32 %v9638, %v9638
    %v9703 = vmul.f32 %v9639, %v9639
    %v9704 = vmul.f32 %v9640, %v9640
    %v9705 = vmul.f32 %v9641, %v9641
    %v9706 = vmul.f32 %v9642, %v9642
    %v9707 = vmul.f32 %v9643, %v9643
    %v9708 = vmul.f32 %v9644, %v9644
    %v9709 = vmul.f32 %v9645, %v9645
    %v9710 = vmul.f32 %v9646, %v9646
    %v9711 = vmul.f32 %v9647, %v9647
    %v9712 = vmul.f32 %v9648, %v9648
    %v9713 = vpack.c.bf16 %v9665, %v9649
    %v9714 = vpack.c.bf16 %v9666, %v9650
    %v9715 = vpack.c.bf16 %v9667, %v9651
    %v9716 = vpack.c.bf16 %v9668, %v9652
    %v9717 = vpack.c.bf16 %v9669, %v9653
    %v9718 = vpack.c.bf16 %v9670, %v9654
    %v9719 = vpack.c.bf16 %v9671, %v9655
    %v9720 = vpack.c.bf16 %v9672, %v9656
    %v9721 = vpack.c.bf16 %v9673, %v9657
    %v9722 = vpack.c.bf16 %v9674, %v9658
    %v9723 = vpack.c.bf16 %v9675, %v9659
    %v9724 = vpack.c.bf16 %v9676, %v9660
    %v9725 = vpack.c.bf16 %v9677, %v9661
    %v9726 = vpack.c.bf16 %v9678, %v9662
    %v9727 = vpack.c.bf16 %v9679, %v9663
    %v9728 = vpack.c.bf16 %v9680, %v9664
    %v9729 = vpack.c.bf16 %v9697, %v9681
    %v9730 = vpack.c.bf16 %v9698, %v9682
    %v9731 = vpack.c.bf16 %v9699, %v9683
    %v9732 = vpack.c.bf16 %v9700, %v9684
    %v9733 = vpack.c.bf16 %v9701, %v9685
    %v9734 = vpack.c.bf16 %v9702, %v9686
    %v9735 = vpack.c.bf16 %v9703, %v9687
    %v9736 = vpack.c.bf16 %v9704, %v9688
    %v9737 = vpack.c.bf16 %v9705, %v9689
    %v9738 = vpack.c.bf16 %v9706, %v9690
    %v9739 = vpack.c.bf16 %v9707, %v9691
    %v9740 = vpack.c.bf16 %v9708, %v9692
    %v9741 = vpack.c.bf16 %v9709, %v9693
    %v9742 = vpack.c.bf16 %v9710, %v9694
    %v9743 = vpack.c.bf16 %v9711, %v9695
    %v9744 = vpack.c.bf16 %v9712, %v9696
    %v10257 = vunpack.c.l.b16 %v1232
    %v10258 = vunpack.c.h.b16 %v1232
    %v10259 = vunpack.c.l.b16 %v1233
    %v10260 = vunpack.c.h.b16 %v1233
    %v10261 = vunpack.c.l.b16 %v1234
    %v10262 = vunpack.c.h.b16 %v1234
    %v10263 = vunpack.c.l.b16 %v1235
    %v10264 = vunpack.c.h.b16 %v1235
    %v10265 = vunpack.c.l.b16 %v1236
    %v10266 = vunpack.c.h.b16 %v1236
    %v10267 = vunpack.c.l.b16 %v1237
    %v10268 = vunpack.c.h.b16 %v1237
    %v10269 = vunpack.c.l.b16 %v1238
    %v10270 = vunpack.c.h.b16 %v1238
    %v10271 = vunpack.c.l.b16 %v1239
    %v10272 = vunpack.c.h.b16 %v1239
    %v10273 = vunpack.c.l.b16 %v1240
    %v10274 = vunpack.c.h.b16 %v1240
    %v10275 = vunpack.c.l.b16 %v1241
    %v10276 = vunpack.c.h.b16 %v1241
    %v10277 = vunpack.c.l.b16 %v1242
    %v10278 = vunpack.c.h.b16 %v1242
    %v10279 = vunpack.c.l.b16 %v1243
    %v10280 = vunpack.c.h.b16 %v1243
    %v10281 = vunpack.c.l.b16 %v1244
    %v10282 = vunpack.c.h.b16 %v1244
    %v10283 = vunpack.c.l.b16 %v1245
    %v10284 = vunpack.c.h.b16 %v1245
    %v10285 = vunpack.c.l.b16 %v1246
    %v10286 = vunpack.c.h.b16 %v1246
    %v10287 = vunpack.c.l.b16 %v1247
    %v10288 = vunpack.c.h.b16 %v1247
    %v10289 = vunpack.c.l.b16 %v1248
    %v10290 = vunpack.c.h.b16 %v1248
    %v10291 = vunpack.c.l.b16 %v1249
    %v10292 = vunpack.c.h.b16 %v1249
    %v10293 = vunpack.c.l.b16 %v1250
    %v10294 = vunpack.c.h.b16 %v1250
    %v10295 = vunpack.c.l.b16 %v1251
    %v10296 = vunpack.c.h.b16 %v1251
    %v10297 = vunpack.c.l.b16 %v1252
    %v10298 = vunpack.c.h.b16 %v1252
    %v10299 = vunpack.c.l.b16 %v1253
    %v10300 = vunpack.c.h.b16 %v1253
    %v10301 = vunpack.c.l.b16 %v1254
    %v10302 = vunpack.c.h.b16 %v1254
    %v10303 = vunpack.c.l.b16 %v1255
    %v10304 = vunpack.c.h.b16 %v1255
    %v10305 = vunpack.c.l.b16 %v1256
    %v10306 = vunpack.c.h.b16 %v1256
    %v10307 = vunpack.c.l.b16 %v1257
    %v10308 = vunpack.c.h.b16 %v1257
    %v10309 = vunpack.c.l.b16 %v1258
    %v10310 = vunpack.c.h.b16 %v1258
    %v10311 = vunpack.c.l.b16 %v1259
    %v10312 = vunpack.c.h.b16 %v1259
    %v10313 = vunpack.c.l.b16 %v1260
    %v10314 = vunpack.c.h.b16 %v1260
    %v10315 = vunpack.c.l.b16 %v1261
    %v10316 = vunpack.c.h.b16 %v1261
    %v10317 = vunpack.c.l.b16 %v1262
    %v10318 = vunpack.c.h.b16 %v1262
    %v10319 = vunpack.c.l.b16 %v1263
    %v10320 = vunpack.c.h.b16 %v1263
    %v10321 = vunpack.c.l.b16 %v1264
    %v10322 = vunpack.c.h.b16 %v1264
    %v10323 = vunpack.c.l.b16 %v1265
    %v10324 = vunpack.c.h.b16 %v1265
    %v10325 = vunpack.c.l.b16 %v1266
    %v10326 = vunpack.c.h.b16 %v1266
    %v10327 = vunpack.c.l.b16 %v1267
    %v10328 = vunpack.c.h.b16 %v1267
    %v10329 = vunpack.c.l.b16 %v1268
    %v10330 = vunpack.c.h.b16 %v1268
    %v10331 = vunpack.c.l.b16 %v1269
    %v10332 = vunpack.c.h.b16 %v1269
    %v10333 = vunpack.c.l.b16 %v1270
    %v10334 = vunpack.c.h.b16 %v1270
    %v10335 = vunpack.c.l.b16 %v1271
    %v10336 = vunpack.c.h.b16 %v1271
    %v10337 = vunpack.c.l.b16 %v1272
    %v10338 = vunpack.c.h.b16 %v1272
    %v10339 = vunpack.c.l.b16 %v1273
    %v10340 = vunpack.c.h.b16 %v1273
    %v10341 = vunpack.c.l.b16 %v1274
    %v10342 = vunpack.c.h.b16 %v1274
    %v10343 = vunpack.c.l.b16 %v1275
    %v10344 = vunpack.c.h.b16 %v1275
    %v10345 = vunpack.c.l.b16 %v1276
    %v10346 = vunpack.c.h.b16 %v1276
    %v10347 = vunpack.c.l.b16 %v1277
    %v10348 = vunpack.c.h.b16 %v1277
    %v10349 = vunpack.c.l.b16 %v1278
    %v10350 = vunpack.c.h.b16 %v1278
    %v10351 = vunpack.c.l.b16 %v1279
    %v10352 = vunpack.c.h.b16 %v1279
    %v10353 = vunpack.c.l.b16 %v1280
    %v10354 = vunpack.c.h.b16 %v1280
    %v10355 = vunpack.c.l.b16 %v1281
    %v10356 = vunpack.c.h.b16 %v1281
    %v10357 = vunpack.c.l.b16 %v1282
    %v10358 = vunpack.c.h.b16 %v1282
    %v10359 = vunpack.c.l.b16 %v1283
    %v10360 = vunpack.c.h.b16 %v1283
    %v10361 = vunpack.c.l.b16 %v1284
    %v10362 = vunpack.c.h.b16 %v1284
    %v10363 = vunpack.c.l.b16 %v1285
    %v10364 = vunpack.c.h.b16 %v1285
    %v10365 = vunpack.c.l.b16 %v1286
    %v10366 = vunpack.c.h.b16 %v1286
    %v10367 = vunpack.c.l.b16 %v1287
    %v10368 = vunpack.c.h.b16 %v1287
    %v10369 = vunpack.c.l.b16 %v1288
    %v10370 = vunpack.c.h.b16 %v1288
    %v10371 = vunpack.c.l.b16 %v1289
    %v10372 = vunpack.c.h.b16 %v1289
    %v10373 = vunpack.c.l.b16 %v1290
    %v10374 = vunpack.c.h.b16 %v1290
    %v10375 = vunpack.c.l.b16 %v1291
    %v10376 = vunpack.c.h.b16 %v1291
    %v10377 = vunpack.c.l.b16 %v1292
    %v10378 = vunpack.c.h.b16 %v1292
    %v10379 = vunpack.c.l.b16 %v1293
    %v10380 = vunpack.c.h.b16 %v1293
    %v10381 = vunpack.c.l.b16 %v1294
    %v10382 = vunpack.c.h.b16 %v1294
    %v10383 = vunpack.c.l.b16 %v1295
    %v10384 = vunpack.c.h.b16 %v1295
    %v10385 = vunpack.c.l.b16 %v1296
    %v10386 = vunpack.c.h.b16 %v1296
    %v10387 = vunpack.c.l.b16 %v1297
    %v10388 = vunpack.c.h.b16 %v1297
    %v10389 = vunpack.c.l.b16 %v1298
    %v10390 = vunpack.c.h.b16 %v1298
    %v10391 = vunpack.c.l.b16 %v1299
    %v10392 = vunpack.c.h.b16 %v1299
    %v10393 = vunpack.c.l.b16 %v1300
    %v10394 = vunpack.c.h.b16 %v1300
    %v10395 = vunpack.c.l.b16 %v1301
    %v10396 = vunpack.c.h.b16 %v1301
    %v10397 = vunpack.c.l.b16 %v1302
    %v10398 = vunpack.c.h.b16 %v1302
    %v10399 = vunpack.c.l.b16 %v1303
    %v10400 = vunpack.c.h.b16 %v1303
    %v10401 = vunpack.c.l.b16 %v1304
    %v10402 = vunpack.c.h.b16 %v1304
    %v10403 = vunpack.c.l.b16 %v1305
    %v10404 = vunpack.c.h.b16 %v1305
    %v10405 = vunpack.c.l.b16 %v1306
    %v10406 = vunpack.c.h.b16 %v1306
    %v10407 = vunpack.c.l.b16 %v1307
    %v10408 = vunpack.c.h.b16 %v1307
    %v10409 = vunpack.c.l.b16 %v1308
    %v10410 = vunpack.c.h.b16 %v1308
    %v10411 = vunpack.c.l.b16 %v1309
    %v10412 = vunpack.c.h.b16 %v1309
    %v10413 = vunpack.c.l.b16 %v1310
    %v10414 = vunpack.c.h.b16 %v1310
    %v10415 = vunpack.c.l.b16 %v1311
    %v10416 = vunpack.c.h.b16 %v1311
    %v10417 = vunpack.c.l.b16 %v1312
    %v10418 = vunpack.c.h.b16 %v1312
    %v10419 = vunpack.c.l.b16 %v1313
    %v10420 = vunpack.c.h.b16 %v1313
    %v10421 = vunpack.c.l.b16 %v1314
    %v10422 = vunpack.c.h.b16 %v1314
    %v10423 = vunpack.c.l.b16 %v1315
    %v10424 = vunpack.c.h.b16 %v1315
    %v10425 = vunpack.c.l.b16 %v1316
    %v10426 = vunpack.c.h.b16 %v1316
    %v10427 = vunpack.c.l.b16 %v1317
    %v10428 = vunpack.c.h.b16 %v1317
    %v10429 = vunpack.c.l.b16 %v1318
    %v10430 = vunpack.c.h.b16 %v1318
    %v10431 = vunpack.c.l.b16 %v1319
    %v10432 = vunpack.c.h.b16 %v1319
    %v10433 = vunpack.c.l.b16 %v1320
    %v10434 = vunpack.c.h.b16 %v1320
    %v10435 = vunpack.c.l.b16 %v1321
    %v10436 = vunpack.c.h.b16 %v1321
    %v10437 = vunpack.c.l.b16 %v1322
    %v10438 = vunpack.c.h.b16 %v1322
    %v10439 = vunpack.c.l.b16 %v1323
    %v10440 = vunpack.c.h.b16 %v1323
    %v10441 = vunpack.c.l.b16 %v1324
    %v10442 = vunpack.c.h.b16 %v1324
    %v10443 = vunpack.c.l.b16 %v1325
    %v10444 = vunpack.c.h.b16 %v1325
    %v10445 = vunpack.c.l.b16 %v1326
    %v10446 = vunpack.c.h.b16 %v1326
    %v10447 = vunpack.c.l.b16 %v1327
    %v10448 = vunpack.c.h.b16 %v1327
    %v10449 = vunpack.c.l.b16 %v1328
    %v10450 = vunpack.c.h.b16 %v1328
    %v10451 = vunpack.c.l.b16 %v1329
    %v10452 = vunpack.c.h.b16 %v1329
    %v10453 = vunpack.c.l.b16 %v1330
    %v10454 = vunpack.c.h.b16 %v1330
    %v10455 = vunpack.c.l.b16 %v1331
    %v10456 = vunpack.c.h.b16 %v1331
    %v10457 = vunpack.c.l.b16 %v1332
    %v10458 = vunpack.c.h.b16 %v1332
    %v10459 = vunpack.c.l.b16 %v1333
    %v10460 = vunpack.c.h.b16 %v1333
    %v10461 = vunpack.c.l.b16 %v1334
    %v10462 = vunpack.c.h.b16 %v1334
    %v10463 = vunpack.c.l.b16 %v1335
    %v10464 = vunpack.c.h.b16 %v1335
    %v10465 = vunpack.c.l.b16 %v1336
    %v10466 = vunpack.c.h.b16 %v1336
    %v10467 = vunpack.c.l.b16 %v1337
    %v10468 = vunpack.c.h.b16 %v1337
    %v10469 = vunpack.c.l.b16 %v1338
    %v10470 = vunpack.c.h.b16 %v1338
    %v10471 = vunpack.c.l.b16 %v1339
    %v10472 = vunpack.c.h.b16 %v1339
    %v10473 = vunpack.c.l.b16 %v1340
    %v10474 = vunpack.c.h.b16 %v1340
    %v10475 = vunpack.c.l.b16 %v1341
    %v10476 = vunpack.c.h.b16 %v1341
    %v10477 = vunpack.c.l.b16 %v1342
    %v10478 = vunpack.c.h.b16 %v1342
    %v10479 = vunpack.c.l.b16 %v1343
    %v10480 = vunpack.c.h.b16 %v1343
    %v10481 = vunpack.c.l.b16 %v1344
    %v10482 = vunpack.c.h.b16 %v1344
    %v10483 = vunpack.c.l.b16 %v1345
    %v10484 = vunpack.c.h.b16 %v1345
    %v10485 = vunpack.c.l.b16 %v1346
    %v10486 = vunpack.c.h.b16 %v1346
    %v10487 = vunpack.c.l.b16 %v1347
    %v10488 = vunpack.c.h.b16 %v1347
    %v10489 = vunpack.c.l.b16 %v1348
    %v10490 = vunpack.c.h.b16 %v1348
    %v10491 = vunpack.c.l.b16 %v1349
    %v10492 = vunpack.c.h.b16 %v1349
    %v10493 = vunpack.c.l.b16 %v1350
    %v10494 = vunpack.c.h.b16 %v1350
    %v10495 = vunpack.c.l.b16 %v1351
    %v10496 = vunpack.c.h.b16 %v1351
    %v10497 = vunpack.c.l.b16 %v1352
    %v10498 = vunpack.c.h.b16 %v1352
    %v10499 = vunpack.c.l.b16 %v1353
    %v10500 = vunpack.c.h.b16 %v1353
    %v10501 = vunpack.c.l.b16 %v1354
    %v10502 = vunpack.c.h.b16 %v1354
    %v10503 = vunpack.c.l.b16 %v1355
    %v10504 = vunpack.c.h.b16 %v1355
    %v10505 = vunpack.c.l.b16 %v1356
    %v10506 = vunpack.c.h.b16 %v1356
    %v10507 = vunpack.c.l.b16 %v1357
    %v10508 = vunpack.c.h.b16 %v1357
    %v10509 = vunpack.c.l.b16 %v1358
    %v10510 = vunpack.c.h.b16 %v1358
    %v10511 = vunpack.c.l.b16 %v1359
    %v10512 = vunpack.c.h.b16 %v1359
    %v10513 = vunpack.c.l.b16 %v1360
    %v10514 = vunpack.c.h.b16 %v1360
    %v10515 = vunpack.c.l.b16 %v1361
    %v10516 = vunpack.c.h.b16 %v1361
    %v10517 = vunpack.c.l.b16 %v1362
    %v10518 = vunpack.c.h.b16 %v1362
    %v10519 = vunpack.c.l.b16 %v1363
    %v10520 = vunpack.c.h.b16 %v1363
    %v10521 = vunpack.c.l.b16 %v1364
    %v10522 = vunpack.c.h.b16 %v1364
    %v10523 = vunpack.c.l.b16 %v1365
    %v10524 = vunpack.c.h.b16 %v1365
    %v10525 = vunpack.c.l.b16 %v1366
    %v10526 = vunpack.c.h.b16 %v1366
    %v10527 = vunpack.c.l.b16 %v1367
    %v10528 = vunpack.c.h.b16 %v1367
    %v10529 = vunpack.c.l.b16 %v1368
    %v10530 = vunpack.c.h.b16 %v1368
    %v10531 = vunpack.c.l.b16 %v1369
    %v10532 = vunpack.c.h.b16 %v1369
    %v10533 = vunpack.c.l.b16 %v1370
    %v10534 = vunpack.c.h.b16 %v1370
    %v10535 = vunpack.c.l.b16 %v1371
    %v10536 = vunpack.c.h.b16 %v1371
    %v10537 = vunpack.c.l.b16 %v1372
    %v10538 = vunpack.c.h.b16 %v1372
    %v10539 = vunpack.c.l.b16 %v1373
    %v10540 = vunpack.c.h.b16 %v1373
    %v10541 = vunpack.c.l.b16 %v1374
    %v10542 = vunpack.c.h.b16 %v1374
    %v10543 = vunpack.c.l.b16 %v1375
    %v10544 = vunpack.c.h.b16 %v1375
    %v10545 = vunpack.c.l.b16 %v1376
    %v10546 = vunpack.c.h.b16 %v1376
    %v10547 = vunpack.c.l.b16 %v1377
    %v10548 = vunpack.c.h.b16 %v1377
    %v10549 = vunpack.c.l.b16 %v1378
    %v10550 = vunpack.c.h.b16 %v1378
    %v10551 = vunpack.c.l.b16 %v1379
    %v10552 = vunpack.c.h.b16 %v1379
    %v10553 = vunpack.c.l.b16 %v1380
    %v10554 = vunpack.c.h.b16 %v1380
    %v10555 = vunpack.c.l.b16 %v1381
    %v10556 = vunpack.c.h.b16 %v1381
    %v10557 = vunpack.c.l.b16 %v1382
    %v10558 = vunpack.c.h.b16 %v1382
    %v10559 = vunpack.c.l.b16 %v1383
    %v10560 = vunpack.c.h.b16 %v1383
    %v10561 = vunpack.c.l.b16 %v1384
    %v10562 = vunpack.c.h.b16 %v1384
    %v10563 = vunpack.c.l.b16 %v1385
    %v10564 = vunpack.c.h.b16 %v1385
    %v10565 = vunpack.c.l.b16 %v1386
    %v10566 = vunpack.c.h.b16 %v1386
    %v10567 = vunpack.c.l.b16 %v1387
    %v10568 = vunpack.c.h.b16 %v1387
    %v10569 = vunpack.c.l.b16 %v1388
    %v10570 = vunpack.c.h.b16 %v1388
    %v10571 = vunpack.c.l.b16 %v1389
    %v10572 = vunpack.c.h.b16 %v1389
    %v10573 = vunpack.c.l.b16 %v1390
    %v10574 = vunpack.c.h.b16 %v1390
    %v10575 = vunpack.c.l.b16 %v1391
    %v10576 = vunpack.c.h.b16 %v1391
    %v10577 = vunpack.c.l.b16 %v1392
    %v10578 = vunpack.c.h.b16 %v1392
    %v10579 = vunpack.c.l.b16 %v1393
    %v10580 = vunpack.c.h.b16 %v1393
    %v10581 = vunpack.c.l.b16 %v1394
    %v10582 = vunpack.c.h.b16 %v1394
    %v10583 = vunpack.c.l.b16 %v1395
    %v10584 = vunpack.c.h.b16 %v1395
    %v10585 = vunpack.c.l.b16 %v1396
    %v10586 = vunpack.c.h.b16 %v1396
    %v10587 = vunpack.c.l.b16 %v1397
    %v10588 = vunpack.c.h.b16 %v1397
    %v10589 = vunpack.c.l.b16 %v1398
    %v10590 = vunpack.c.h.b16 %v1398
    %v10591 = vunpack.c.l.b16 %v1399
    %v10592 = vunpack.c.h.b16 %v1399
    %v10593 = vunpack.c.l.b16 %v1400
    %v10594 = vunpack.c.h.b16 %v1400
    %v10595 = vunpack.c.l.b16 %v1401
    %v10596 = vunpack.c.h.b16 %v1401
    %v10597 = vunpack.c.l.b16 %v1402
    %v10598 = vunpack.c.h.b16 %v1402
    %v10599 = vunpack.c.l.b16 %v1403
    %v10600 = vunpack.c.h.b16 %v1403
    %v10601 = vunpack.c.l.b16 %v1404
    %v10602 = vunpack.c.h.b16 %v1404
    %v10603 = vunpack.c.l.b16 %v1405
    %v10604 = vunpack.c.h.b16 %v1405
    %v10605 = vunpack.c.l.b16 %v1406
    %v10606 = vunpack.c.h.b16 %v1406
    %v10607 = vunpack.c.l.b16 %v1407
    %v10608 = vunpack.c.h.b16 %v1407
    %v10609 = vunpack.c.l.b16 %v1408
    %v10610 = vunpack.c.h.b16 %v1408
    %v10611 = vunpack.c.l.b16 %v1409
    %v10612 = vunpack.c.h.b16 %v1409
    %v10613 = vunpack.c.l.b16 %v1410
    %v10614 = vunpack.c.h.b16 %v1410
    %v10615 = vunpack.c.l.b16 %v1411
    %v10616 = vunpack.c.h.b16 %v1411
    %v10617 = vunpack.c.l.b16 %v1412
    %v10618 = vunpack.c.h.b16 %v1412
    %v10619 = vunpack.c.l.b16 %v1413
    %v10620 = vunpack.c.h.b16 %v1413
    %v10621 = vunpack.c.l.b16 %v1414
    %v10622 = vunpack.c.h.b16 %v1414
    %v10623 = vunpack.c.l.b16 %v1415
    %v10624 = vunpack.c.h.b16 %v1415
    %v10625 = vunpack.c.l.b16 %v1416
    %v10626 = vunpack.c.h.b16 %v1416
    %v10627 = vunpack.c.l.b16 %v1417
    %v10628 = vunpack.c.h.b16 %v1417
    %v10629 = vunpack.c.l.b16 %v1418
    %v10630 = vunpack.c.h.b16 %v1418
    %v10631 = vunpack.c.l.b16 %v1419
    %v10632 = vunpack.c.h.b16 %v1419
    %v10633 = vunpack.c.l.b16 %v1420
    %v10634 = vunpack.c.h.b16 %v1420
    %v10635 = vunpack.c.l.b16 %v1421
    %v10636 = vunpack.c.h.b16 %v1421
    %v10637 = vunpack.c.l.b16 %v1422
    %v10638 = vunpack.c.h.b16 %v1422
    %v10639 = vunpack.c.l.b16 %v1423
    %v10640 = vunpack.c.h.b16 %v1423
    %v10641 = vunpack.c.l.b16 %v1424
    %v10642 = vunpack.c.h.b16 %v1424
    %v10643 = vunpack.c.l.b16 %v1425
    %v10644 = vunpack.c.h.b16 %v1425
    %v10645 = vunpack.c.l.b16 %v1426
    %v10646 = vunpack.c.h.b16 %v1426
    %v10647 = vunpack.c.l.b16 %v1427
    %v10648 = vunpack.c.h.b16 %v1427
    %v10649 = vunpack.c.l.b16 %v1428
    %v10650 = vunpack.c.h.b16 %v1428
    %v10651 = vunpack.c.l.b16 %v1429
    %v10652 = vunpack.c.h.b16 %v1429
    %v10653 = vunpack.c.l.b16 %v1430
    %v10654 = vunpack.c.h.b16 %v1430
    %v10655 = vunpack.c.l.b16 %v1431
    %v10656 = vunpack.c.h.b16 %v1431
    %v10657 = vunpack.c.l.b16 %v1432
    %v10658 = vunpack.c.h.b16 %v1432
    %v10659 = vunpack.c.l.b16 %v1433
    %v10660 = vunpack.c.h.b16 %v1433
    %v10661 = vunpack.c.l.b16 %v1434
    %v10662 = vunpack.c.h.b16 %v1434
    %v10663 = vunpack.c.l.b16 %v1435
    %v10664 = vunpack.c.h.b16 %v1435
    %v10665 = vunpack.c.l.b16 %v1436
    %v10666 = vunpack.c.h.b16 %v1436
    %v10667 = vunpack.c.l.b16 %v1437
    %v10668 = vunpack.c.h.b16 %v1437
    %v10669 = vunpack.c.l.b16 %v1438
    %v10670 = vunpack.c.h.b16 %v1438
    %v10671 = vunpack.c.l.b16 %v1439
    %v10672 = vunpack.c.h.b16 %v1439
    %v10673 = vunpack.c.l.b16 %v1440
    %v10674 = vunpack.c.h.b16 %v1440
    %v10675 = vunpack.c.l.b16 %v1441
    %v10676 = vunpack.c.h.b16 %v1441
    %v10677 = vunpack.c.l.b16 %v1442
    %v10678 = vunpack.c.h.b16 %v1442
    %v10679 = vunpack.c.l.b16 %v1443
    %v10680 = vunpack.c.h.b16 %v1443
    %v10681 = vunpack.c.l.b16 %v1444
    %v10682 = vunpack.c.h.b16 %v1444
    %v10683 = vunpack.c.l.b16 %v1445
    %v10684 = vunpack.c.h.b16 %v1445
    %v10685 = vunpack.c.l.b16 %v1446
    %v10686 = vunpack.c.h.b16 %v1446
    %v10687 = vunpack.c.l.b16 %v1447
    %v10688 = vunpack.c.h.b16 %v1447
    %v10689 = vunpack.c.l.b16 %v1448
    %v10690 = vunpack.c.h.b16 %v1448
    %v10691 = vunpack.c.l.b16 %v1449
    %v10692 = vunpack.c.h.b16 %v1449
    %v10693 = vunpack.c.l.b16 %v1450
    %v10694 = vunpack.c.h.b16 %v1450
    %v10695 = vunpack.c.l.b16 %v1451
    %v10696 = vunpack.c.h.b16 %v1451
    %v10697 = vunpack.c.l.b16 %v1452
    %v10698 = vunpack.c.h.b16 %v1452
    %v10699 = vunpack.c.l.b16 %v1453
    %v10700 = vunpack.c.h.b16 %v1453
    %v10701 = vunpack.c.l.b16 %v1454
    %v10702 = vunpack.c.h.b16 %v1454
    %v10703 = vunpack.c.l.b16 %v1455
    %v10704 = vunpack.c.h.b16 %v1455
    %v10705 = vunpack.c.l.b16 %v1456
    %v10706 = vunpack.c.h.b16 %v1456
    %v10707 = vunpack.c.l.b16 %v1457
    %v10708 = vunpack.c.h.b16 %v1457
    %v10709 = vunpack.c.l.b16 %v1458
    %v10710 = vunpack.c.h.b16 %v1458
    %v10711 = vunpack.c.l.b16 %v1459
    %v10712 = vunpack.c.h.b16 %v1459
    %v10713 = vunpack.c.l.b16 %v1460
    %v10714 = vunpack.c.h.b16 %v1460
    %v10715 = vunpack.c.l.b16 %v1461
    %v10716 = vunpack.c.h.b16 %v1461
    %v10717 = vunpack.c.l.b16 %v1462
    %v10718 = vunpack.c.h.b16 %v1462
    %v10719 = vunpack.c.l.b16 %v1463
    %v10720 = vunpack.c.h.b16 %v1463
    %v10721 = vunpack.c.l.b16 %v1464
    %v10722 = vunpack.c.h.b16 %v1464
    %v10723 = vunpack.c.l.b16 %v1465
    %v10724 = vunpack.c.h.b16 %v1465
    %v10725 = vunpack.c.l.b16 %v1466
    %v10726 = vunpack.c.h.b16 %v1466
    %v10727 = vunpack.c.l.b16 %v1467
    %v10728 = vunpack.c.h.b16 %v1467
    %v10729 = vunpack.c.l.b16 %v1468
    %v10730 = vunpack.c.h.b16 %v1468
    %v10731 = vunpack.c.l.b16 %v1469
    %v10732 = vunpack.c.h.b16 %v1469
    %v10733 = vunpack.c.l.b16 %v1470
    %v10734 = vunpack.c.h.b16 %v1470
    %v10735 = vunpack.c.l.b16 %v1471
    %v10736 = vunpack.c.h.b16 %v1471
    %v10737 = vunpack.c.l.b16 %v1472
    %v10738 = vunpack.c.h.b16 %v1472
    %v10739 = vunpack.c.l.b16 %v1473
    %v10740 = vunpack.c.h.b16 %v1473
    %v10741 = vunpack.c.l.b16 %v1474
    %v10742 = vunpack.c.h.b16 %v1474
    %v10743 = vunpack.c.l.b16 %v1475
    %v10744 = vunpack.c.h.b16 %v1475
    %v10745 = vunpack.c.l.b16 %v1476
    %v10746 = vunpack.c.h.b16 %v1476
    %v10747 = vunpack.c.l.b16 %v1477
    %v10748 = vunpack.c.h.b16 %v1477
    %v10749 = vunpack.c.l.b16 %v1478
    %v10750 = vunpack.c.h.b16 %v1478
    %v10751 = vunpack.c.l.b16 %v1479
    %v10752 = vunpack.c.h.b16 %v1479
    %v10753 = vunpack.c.l.b16 %v1480
    %v10754 = vunpack.c.h.b16 %v1480
    %v10755 = vunpack.c.l.b16 %v1481
    %v10756 = vunpack.c.h.b16 %v1481
    %v10757 = vunpack.c.l.b16 %v1482
    %v10758 = vunpack.c.h.b16 %v1482
    %v10759 = vunpack.c.l.b16 %v1483
    %v10760 = vunpack.c.h.b16 %v1483
    %v10761 = vunpack.c.l.b16 %v1484
    %v10762 = vunpack.c.h.b16 %v1484
    %v10763 = vunpack.c.l.b16 %v1485
    %v10764 = vunpack.c.h.b16 %v1485
    %v10765 = vunpack.c.l.b16 %v1486
    %v10766 = vunpack.c.h.b16 %v1486
    %v10767 = vunpack.c.l.b16 %v1487
    %v10768 = vunpack.c.h.b16 %v1487
    %v10769 = vunpack.c.l.b16 %v1488
    %v10770 = vunpack.c.h.b16 %v1488
    %v10771 = vunpack.c.l.b16 %v1489
    %v10772 = vunpack.c.h.b16 %v1489
    %v10773 = vunpack.c.l.b16 %v1490
    %v10774 = vunpack.c.h.b16 %v1490
    %v10775 = vunpack.c.l.b16 %v1491
    %v10776 = vunpack.c.h.b16 %v1491
    %v10777 = vunpack.c.l.b16 %v1492
    %v10778 = vunpack.c.h.b16 %v1492
    %v10779 = vunpack.c.l.b16 %v1493
    %v10780 = vunpack.c.h.b16 %v1493
    %v10781 = vunpack.c.l.b16 %v1494
    %v10782 = vunpack.c.h.b16 %v1494
    %v10783 = vunpack.c.l.b16 %v1495
    %v10784 = vunpack.c.h.b16 %v1495
    %v10785 = vunpack.c.l.b16 %v1496
    %v10786 = vunpack.c.h.b16 %v1496
    %v10787 = vunpack.c.l.b16 %v1497
    %v10788 = vunpack.c.h.b16 %v1497
    %v10789 = vunpack.c.l.b16 %v1498
    %v10790 = vunpack.c.h.b16 %v1498
    %v10791 = vunpack.c.l.b16 %v1499
    %v10792 = vunpack.c.h.b16 %v1499
    %v10793 = vunpack.c.l.b16 %v1500
    %v10794 = vunpack.c.h.b16 %v1500
    %v10795 = vunpack.c.l.b16 %v1501
    %v10796 = vunpack.c.h.b16 %v1501
    %v10797 = vunpack.c.l.b16 %v1502
    %v10798 = vunpack.c.h.b16 %v1502
    %v10799 = vunpack.c.l.b16 %v1503
    %v10800 = vunpack.c.h.b16 %v1503
    %v10801 = vunpack.c.l.b16 %v1504
    %v10802 = vunpack.c.h.b16 %v1504
    %v10803 = vunpack.c.l.b16 %v1505
    %v10804 = vunpack.c.h.b16 %v1505
    %v10805 = vunpack.c.l.b16 %v1506
    %v10806 = vunpack.c.h.b16 %v1506
    %v10807 = vunpack.c.l.b16 %v1507
    %v10808 = vunpack.c.h.b16 %v1507
    %v10809 = vunpack.c.l.b16 %v1508
    %v10810 = vunpack.c.h.b16 %v1508
    %v10811 = vunpack.c.l.b16 %v1509
    %v10812 = vunpack.c.h.b16 %v1509
    %v10813 = vunpack.c.l.b16 %v1510
    %v10814 = vunpack.c.h.b16 %v1510
    %v10815 = vunpack.c.l.b16 %v1511
    %v10816 = vunpack.c.h.b16 %v1511
    %v10817 = vunpack.c.l.b16 %v1512
    %v10818 = vunpack.c.h.b16 %v1512
    %v10819 = vunpack.c.l.b16 %v1513
    %v10820 = vunpack.c.h.b16 %v1513
    %v10821 = vunpack.c.l.b16 %v1514
    %v10822 = vunpack.c.h.b16 %v1514
    %v10823 = vunpack.c.l.b16 %v1515
    %v10824 = vunpack.c.h.b16 %v1515
    %v10825 = vunpack.c.l.b16 %v1516
    %v10826 = vunpack.c.h.b16 %v1516
    %v10827 = vunpack.c.l.b16 %v1517
    %v10828 = vunpack.c.h.b16 %v1517
    %v10829 = vunpack.c.l.b16 %v1518
    %v10830 = vunpack.c.h.b16 %v1518
    %v10831 = vunpack.c.l.b16 %v1519
    %v10832 = vunpack.c.h.b16 %v1519
    %v10833 = vunpack.c.l.b16 %v1520
    %v10834 = vunpack.c.h.b16 %v1520
    %v10835 = vunpack.c.l.b16 %v1521
    %v10836 = vunpack.c.h.b16 %v1521
    %v10837 = vunpack.c.l.b16 %v1522
    %v10838 = vunpack.c.h.b16 %v1522
    %v10839 = vunpack.c.l.b16 %v1523
    %v10840 = vunpack.c.h.b16 %v1523
    %v10841 = vunpack.c.l.b16 %v1524
    %v10842 = vunpack.c.h.b16 %v1524
    %v10843 = vunpack.c.l.b16 %v1525
    %v10844 = vunpack.c.h.b16 %v1525
    %v10845 = vunpack.c.l.b16 %v1526
    %v10846 = vunpack.c.h.b16 %v1526
    %v10847 = vunpack.c.l.b16 %v1527
    %v10848 = vunpack.c.h.b16 %v1527
    %v10849 = vunpack.c.l.b16 %v1528
    %v10850 = vunpack.c.h.b16 %v1528
    %v10851 = vunpack.c.l.b16 %v1529
    %v10852 = vunpack.c.h.b16 %v1529
    %v10853 = vunpack.c.l.b16 %v1530
    %v10854 = vunpack.c.h.b16 %v1530
    %v10855 = vunpack.c.l.b16 %v1531
    %v10856 = vunpack.c.h.b16 %v1531
    %v10857 = vunpack.c.l.b16 %v1532
    %v10858 = vunpack.c.h.b16 %v1532
    %v10859 = vunpack.c.l.b16 %v1533
    %v10860 = vunpack.c.h.b16 %v1533
    %v10861 = vunpack.c.l.b16 %v1534
    %v10862 = vunpack.c.h.b16 %v1534
    %v10863 = vunpack.c.l.b16 %v1535
    %v10864 = vunpack.c.h.b16 %v1535
    %v10865 = vunpack.c.l.b16 %v1536
    %v10866 = vunpack.c.h.b16 %v1536
    %v10867 = vunpack.c.l.b16 %v1537
    %v10868 = vunpack.c.h.b16 %v1537
    %v10869 = vunpack.c.l.b16 %v1538
    %v10870 = vunpack.c.h.b16 %v1538
    %v10871 = vunpack.c.l.b16 %v1539
    %v10872 = vunpack.c.h.b16 %v1539
    %v10873 = vunpack.c.l.b16 %v1540
    %v10874 = vunpack.c.h.b16 %v1540
    %v10875 = vunpack.c.l.b16 %v1541
    %v10876 = vunpack.c.h.b16 %v1541
    %v10877 = vunpack.c.l.b16 %v1542
    %v10878 = vunpack.c.h.b16 %v1542
    %v10879 = vunpack.c.l.b16 %v1543
    %v10880 = vunpack.c.h.b16 %v1543
    %v10881 = vunpack.c.l.b16 %v1544
    %v10882 = vunpack.c.h.b16 %v1544
    %v10883 = vunpack.c.l.b16 %v1545
    %v10884 = vunpack.c.h.b16 %v1545
    %v10885 = vunpack.c.l.b16 %v1546
    %v10886 = vunpack.c.h.b16 %v1546
    %v10887 = vunpack.c.l.b16 %v1547
    %v10888 = vunpack.c.h.b16 %v1547
    %v10889 = vunpack.c.l.b16 %v1548
    %v10890 = vunpack.c.h.b16 %v1548
    %v10891 = vunpack.c.l.b16 %v1549
    %v10892 = vunpack.c.h.b16 %v1549
    %v10893 = vunpack.c.l.b16 %v1550
    %v10894 = vunpack.c.h.b16 %v1550
    %v10895 = vunpack.c.l.b16 %v1551
    %v10896 = vunpack.c.h.b16 %v1551
    %v10897 = vunpack.c.l.b16 %v1552
    %v10898 = vunpack.c.h.b16 %v1552
    %v10899 = vunpack.c.l.b16 %v1553
    %v10900 = vunpack.c.h.b16 %v1553
    %v10901 = vunpack.c.l.b16 %v1554
    %v10902 = vunpack.c.h.b16 %v1554
    %v10903 = vunpack.c.l.b16 %v1555
    %v10904 = vunpack.c.h.b16 %v1555
    %v10905 = vunpack.c.l.b16 %v1556
    %v10906 = vunpack.c.h.b16 %v1556
    %v10907 = vunpack.c.l.b16 %v1557
    %v10908 = vunpack.c.h.b16 %v1557
    %v10909 = vunpack.c.l.b16 %v1558
    %v10910 = vunpack.c.h.b16 %v1558
    %v10911 = vunpack.c.l.b16 %v1559
    %v10912 = vunpack.c.h.b16 %v1559
    %v10913 = vunpack.c.l.b16 %v1560
    %v10914 = vunpack.c.h.b16 %v1560
    %v10915 = vunpack.c.l.b16 %v1561
    %v10916 = vunpack.c.h.b16 %v1561
    %v10917 = vunpack.c.l.b16 %v1562
    %v10918 = vunpack.c.h.b16 %v1562
    %v10919 = vunpack.c.l.b16 %v1563
    %v10920 = vunpack.c.h.b16 %v1563
    %v10921 = vunpack.c.l.b16 %v1564
    %v10922 = vunpack.c.h.b16 %v1564
    %v10923 = vunpack.c.l.b16 %v1565
    %v10924 = vunpack.c.h.b16 %v1565
    %v10925 = vunpack.c.l.b16 %v1566
    %v10926 = vunpack.c.h.b16 %v1566
    %v10927 = vunpack.c.l.b16 %v1567
    %v10928 = vunpack.c.h.b16 %v1567
    %v10929 = vunpack.c.l.b16 %v1568
    %v10930 = vunpack.c.h.b16 %v1568
    %v10931 = vunpack.c.l.b16 %v1569
    %v10932 = vunpack.c.h.b16 %v1569
    %v10933 = vunpack.c.l.b16 %v1570
    %v10934 = vunpack.c.h.b16 %v1570
    %v10935 = vunpack.c.l.b16 %v1571
    %v10936 = vunpack.c.h.b16 %v1571
    %v10937 = vunpack.c.l.b16 %v1572
    %v10938 = vunpack.c.h.b16 %v1572
    %v10939 = vunpack.c.l.b16 %v1573
    %v10940 = vunpack.c.h.b16 %v1573
    %v10941 = vunpack.c.l.b16 %v1574
    %v10942 = vunpack.c.h.b16 %v1574
    %v10943 = vunpack.c.l.b16 %v1575
    %v10944 = vunpack.c.h.b16 %v1575
    %v10945 = vunpack.c.l.b16 %v1576
    %v10946 = vunpack.c.h.b16 %v1576
    %v10947 = vunpack.c.l.b16 %v1577
    %v10948 = vunpack.c.h.b16 %v1577
    %v10949 = vunpack.c.l.b16 %v1578
    %v10950 = vunpack.c.h.b16 %v1578
    %v10951 = vunpack.c.l.b16 %v1579
    %v10952 = vunpack.c.h.b16 %v1579
    %v10953 = vunpack.c.l.b16 %v1580
    %v10954 = vunpack.c.h.b16 %v1580
    %v10955 = vunpack.c.l.b16 %v1581
    %v10956 = vunpack.c.h.b16 %v1581
    %v10957 = vunpack.c.l.b16 %v1582
    %v10958 = vunpack.c.h.b16 %v1582
    %v10959 = vunpack.c.l.b16 %v1583
    %v10960 = vunpack.c.h.b16 %v1583
    %v10961 = vunpack.c.l.b16 %v1584
    %v10962 = vunpack.c.h.b16 %v1584
    %v10963 = vunpack.c.l.b16 %v1585
    %v10964 = vunpack.c.h.b16 %v1585
    %v10965 = vunpack.c.l.b16 %v1586
    %v10966 = vunpack.c.h.b16 %v1586
    %v10967 = vunpack.c.l.b16 %v1587
    %v10968 = vunpack.c.h.b16 %v1587
    %v10969 = vunpack.c.l.b16 %v1588
    %v10970 = vunpack.c.h.b16 %v1588
    %v10971 = vunpack.c.l.b16 %v1589
    %v10972 = vunpack.c.h.b16 %v1589
    %v10973 = vunpack.c.l.b16 %v1590
    %v10974 = vunpack.c.h.b16 %v1590
    %v10975 = vunpack.c.l.b16 %v1591
    %v10976 = vunpack.c.h.b16 %v1591
    %v10977 = vunpack.c.l.b16 %v1592
    %v10978 = vunpack.c.h.b16 %v1592
    %v10979 = vunpack.c.l.b16 %v1593
    %v10980 = vunpack.c.h.b16 %v1593
    %v10981 = vunpack.c.l.b16 %v1594
    %v10982 = vunpack.c.h.b16 %v1594
    %v10983 = vunpack.c.l.b16 %v1595
    %v10984 = vunpack.c.h.b16 %v1595
    %v10985 = vunpack.c.l.b16 %v1596
    %v10986 = vunpack.c.h.b16 %v1596
    %v10987 = vunpack.c.l.b16 %v1597
    %v10988 = vunpack.c.h.b16 %v1597
    %v10989 = vunpack.c.l.b16 %v1598
    %v10990 = vunpack.c.h.b16 %v1598
    %v10991 = vunpack.c.l.b16 %v1599
    %v10992 = vunpack.c.h.b16 %v1599
    %v10993 = vunpack.c.l.b16 %v1600
    %v10994 = vunpack.c.h.b16 %v1600
    %v10995 = vunpack.c.l.b16 %v1601
    %v10996 = vunpack.c.h.b16 %v1601
    %v10997 = vunpack.c.l.b16 %v1602
    %v10998 = vunpack.c.h.b16 %v1602
    %v10999 = vunpack.c.l.b16 %v1603
    %v11000 = vunpack.c.h.b16 %v1603
    %v11001 = vunpack.c.l.b16 %v1604
    %v11002 = vunpack.c.h.b16 %v1604
    %v11003 = vunpack.c.l.b16 %v1605
    %v11004 = vunpack.c.h.b16 %v1605
    %v11005 = vunpack.c.l.b16 %v1606
    %v11006 = vunpack.c.h.b16 %v1606
    %v11007 = vunpack.c.l.b16 %v1607
    %v11008 = vunpack.c.h.b16 %v1607
    %v11009 = vunpack.c.l.b16 %v1608
    %v11010 = vunpack.c.h.b16 %v1608
    %v11011 = vunpack.c.l.b16 %v1609
    %v11012 = vunpack.c.h.b16 %v1609
    %v11013 = vunpack.c.l.b16 %v1610
    %v11014 = vunpack.c.h.b16 %v1610
    %v11015 = vunpack.c.l.b16 %v1611
    %v11016 = vunpack.c.h.b16 %v1611
    %v11017 = vunpack.c.l.b16 %v1612
    %v11018 = vunpack.c.h.b16 %v1612
    %v11019 = vunpack.c.l.b16 %v1613
    %v11020 = vunpack.c.h.b16 %v1613
    %v11021 = vunpack.c.l.b16 %v1614
    %v11022 = vunpack.c.h.b16 %v1614
    %v11023 = vunpack.c.l.b16 %v1615
    %v11024 = vunpack.c.h.b16 %v1615
    %v11025 = vunpack.c.l.b16 %v1616
    %v11026 = vunpack.c.h.b16 %v1616
    %v11027 = vunpack.c.l.b16 %v1617
    %v11028 = vunpack.c.h.b16 %v1617
    %v11029 = vunpack.c.l.b16 %v1618
    %v11030 = vunpack.c.h.b16 %v1618
    %v11031 = vunpack.c.l.b16 %v1619
    %v11032 = vunpack.c.h.b16 %v1619
    %v11033 = vunpack.c.l.b16 %v1620
    %v11034 = vunpack.c.h.b16 %v1620
    %v11035 = vunpack.c.l.b16 %v1621
    %v11036 = vunpack.c.h.b16 %v1621
    %v11037 = vunpack.c.l.b16 %v1622
    %v11038 = vunpack.c.h.b16 %v1622
    %v11039 = vunpack.c.l.b16 %v1623
    %v11040 = vunpack.c.h.b16 %v1623
    %v11041 = vunpack.c.l.b16 %v1624
    %v11042 = vunpack.c.h.b16 %v1624
    %v11043 = vunpack.c.l.b16 %v1625
    %v11044 = vunpack.c.h.b16 %v1625
    %v11045 = vunpack.c.l.b16 %v1626
    %v11046 = vunpack.c.h.b16 %v1626
    %v11047 = vunpack.c.l.b16 %v1627
    %v11048 = vunpack.c.h.b16 %v1627
    %v11049 = vunpack.c.l.b16 %v1628
    %v11050 = vunpack.c.h.b16 %v1628
    %v11051 = vunpack.c.l.b16 %v1629
    %v11052 = vunpack.c.h.b16 %v1629
    %v11053 = vunpack.c.l.b16 %v1630
    %v11054 = vunpack.c.h.b16 %v1630
    %v11055 = vunpack.c.l.b16 %v1631
    %v11056 = vunpack.c.h.b16 %v1631
    %v11057 = vunpack.c.l.b16 %v1632
    %v11058 = vunpack.c.h.b16 %v1632
    %v11059 = vunpack.c.l.b16 %v1633
    %v11060 = vunpack.c.h.b16 %v1633
    %v11061 = vunpack.c.l.b16 %v1634
    %v11062 = vunpack.c.h.b16 %v1634
    %v11063 = vunpack.c.l.b16 %v1635
    %v11064 = vunpack.c.h.b16 %v1635
    %v11065 = vunpack.c.l.b16 %v1636
    %v11066 = vunpack.c.h.b16 %v1636
    %v11067 = vunpack.c.l.b16 %v1637
    %v11068 = vunpack.c.h.b16 %v1637
    %v11069 = vunpack.c.l.b16 %v1638
    %v11070 = vunpack.c.h.b16 %v1638
    %v11071 = vunpack.c.l.b16 %v1639
    %v11072 = vunpack.c.h.b16 %v1639
    %v11073 = vunpack.c.l.b16 %v1640
    %v11074 = vunpack.c.h.b16 %v1640
    %v11075 = vunpack.c.l.b16 %v1641
    %v11076 = vunpack.c.h.b16 %v1641
    %v11077 = vunpack.c.l.b16 %v1642
    %v11078 = vunpack.c.h.b16 %v1642
    %v11079 = vunpack.c.l.b16 %v1643
    %v11080 = vunpack.c.h.b16 %v1643
    %v11081 = vunpack.c.l.b16 %v1644
    %v11082 = vunpack.c.h.b16 %v1644
    %v11083 = vunpack.c.l.b16 %v1645
    %v11084 = vunpack.c.h.b16 %v1645
    %v11085 = vunpack.c.l.b16 %v1646
    %v11086 = vunpack.c.h.b16 %v1646
    %v11087 = vunpack.c.l.b16 %v1647
    %v11088 = vunpack.c.h.b16 %v1647
    %v11089 = vunpack.c.l.b16 %v1648
    %v11090 = vunpack.c.h.b16 %v1648
    %v11091 = vunpack.c.l.b16 %v1649
    %v11092 = vunpack.c.h.b16 %v1649
    %v11093 = vunpack.c.l.b16 %v1650
    %v11094 = vunpack.c.h.b16 %v1650
    %v11095 = vunpack.c.l.b16 %v1651
    %v11096 = vunpack.c.h.b16 %v1651
    %v11097 = vunpack.c.l.b16 %v1652
    %v11098 = vunpack.c.h.b16 %v1652
    %v11099 = vunpack.c.l.b16 %v1653
    %v11100 = vunpack.c.h.b16 %v1653
    %v11101 = vunpack.c.l.b16 %v1654
    %v11102 = vunpack.c.h.b16 %v1654
    %v11103 = vunpack.c.l.b16 %v1655
    %v11104 = vunpack.c.h.b16 %v1655
    %v11105 = vunpack.c.l.b16 %v1656
    %v11106 = vunpack.c.h.b16 %v1656
    %v11107 = vunpack.c.l.b16 %v1657
    %v11108 = vunpack.c.h.b16 %v1657
    %v11109 = vunpack.c.l.b16 %v1658
    %v11110 = vunpack.c.h.b16 %v1658
    %v11111 = vunpack.c.l.b16 %v1659
    %v11112 = vunpack.c.h.b16 %v1659
    %v11113 = vunpack.c.l.b16 %v1660
    %v11114 = vunpack.c.h.b16 %v1660
    %v11115 = vunpack.c.l.b16 %v1661
    %v11116 = vunpack.c.h.b16 %v1661
    %v11117 = vunpack.c.l.b16 %v1662
    %v11118 = vunpack.c.h.b16 %v1662
    %v11119 = vunpack.c.l.b16 %v1663
    %v11120 = vunpack.c.h.b16 %v1663
    %v11121 = vunpack.c.l.b16 %v1664
    %v11122 = vunpack.c.h.b16 %v1664
    %v11123 = vunpack.c.l.b16 %v1665
    %v11124 = vunpack.c.h.b16 %v1665
    %v11125 = vunpack.c.l.b16 %v1666
    %v11126 = vunpack.c.h.b16 %v1666
    %v11127 = vunpack.c.l.b16 %v1667
    %v11128 = vunpack.c.h.b16 %v1667
    %v11129 = vunpack.c.l.b16 %v1668
    %v11130 = vunpack.c.h.b16 %v1668
    %v11131 = vunpack.c.l.b16 %v1669
    %v11132 = vunpack.c.h.b16 %v1669
    %v11133 = vunpack.c.l.b16 %v1670
    %v11134 = vunpack.c.h.b16 %v1670
    %v11135 = vunpack.c.l.b16 %v1671
    %v11136 = vunpack.c.h.b16 %v1671
    %v11137 = vunpack.c.l.b16 %v1672
    %v11138 = vunpack.c.h.b16 %v1672
    %v11139 = vunpack.c.l.b16 %v1673
    %v11140 = vunpack.c.h.b16 %v1673
    %v11141 = vunpack.c.l.b16 %v1674
    %v11142 = vunpack.c.h.b16 %v1674
    %v11143 = vunpack.c.l.b16 %v1675
    %v11144 = vunpack.c.h.b16 %v1675
    %v11145 = vunpack.c.l.b16 %v1676
    %v11146 = vunpack.c.h.b16 %v1676
    %v11147 = vunpack.c.l.b16 %v1677
    %v11148 = vunpack.c.h.b16 %v1677
    %v11149 = vunpack.c.l.b16 %v1678
    %v11150 = vunpack.c.h.b16 %v1678
    %v11151 = vunpack.c.l.b16 %v1679
    %v11152 = vunpack.c.h.b16 %v1679
    %v11153 = vunpack.c.l.b16 %v1680
    %v11154 = vunpack.c.h.b16 %v1680
    %v11155 = vunpack.c.l.b16 %v1681
    %v11156 = vunpack.c.h.b16 %v1681
    %v11157 = vunpack.c.l.b16 %v1682
    %v11158 = vunpack.c.h.b16 %v1682
    %v11159 = vunpack.c.l.b16 %v1683
    %v11160 = vunpack.c.h.b16 %v1683
    %v11161 = vunpack.c.l.b16 %v1684
    %v11162 = vunpack.c.h.b16 %v1684
    %v11163 = vunpack.c.l.b16 %v1685
    %v11164 = vunpack.c.h.b16 %v1685
    %v11165 = vunpack.c.l.b16 %v1686
    %v11166 = vunpack.c.h.b16 %v1686
    %v11167 = vunpack.c.l.b16 %v1687
    %v11168 = vunpack.c.h.b16 %v1687
    %v11169 = vunpack.c.l.b16 %v1688
    %v11170 = vunpack.c.h.b16 %v1688
    %v11171 = vunpack.c.l.b16 %v1689
    %v11172 = vunpack.c.h.b16 %v1689
    %v11173 = vunpack.c.l.b16 %v1690
    %v11174 = vunpack.c.h.b16 %v1690
    %v11175 = vunpack.c.l.b16 %v1691
    %v11176 = vunpack.c.h.b16 %v1691
    %v11177 = vunpack.c.l.b16 %v1692
    %v11178 = vunpack.c.h.b16 %v1692
    %v11179 = vunpack.c.l.b16 %v1693
    %v11180 = vunpack.c.h.b16 %v1693
    %v11181 = vunpack.c.l.b16 %v1694
    %v11182 = vunpack.c.h.b16 %v1694
    %v11183 = vunpack.c.l.b16 %v1695
    %v11184 = vunpack.c.h.b16 %v1695
    %v11185 = vunpack.c.l.b16 %v1696
    %v11186 = vunpack.c.h.b16 %v1696
    %v11187 = vunpack.c.l.b16 %v1697
    %v11188 = vunpack.c.h.b16 %v1697
    %v11189 = vunpack.c.l.b16 %v1698
    %v11190 = vunpack.c.h.b16 %v1698
    %v11191 = vunpack.c.l.b16 %v1699
    %v11192 = vunpack.c.h.b16 %v1699
    %v11193 = vunpack.c.l.b16 %v1700
    %v11194 = vunpack.c.h.b16 %v1700
    %v11195 = vunpack.c.l.b16 %v1701
    %v11196 = vunpack.c.h.b16 %v1701
    %v11197 = vunpack.c.l.b16 %v1702
    %v11198 = vunpack.c.h.b16 %v1702
    %v11199 = vunpack.c.l.b16 %v1703
    %v11200 = vunpack.c.h.b16 %v1703
    %v11201 = vunpack.c.l.b16 %v1704
    %v11202 = vunpack.c.h.b16 %v1704
    %v11203 = vunpack.c.l.b16 %v1705
    %v11204 = vunpack.c.h.b16 %v1705
    %v11205 = vunpack.c.l.b16 %v1706
    %v11206 = vunpack.c.h.b16 %v1706
    %v11207 = vunpack.c.l.b16 %v1707
    %v11208 = vunpack.c.h.b16 %v1707
    %v11209 = vunpack.c.l.b16 %v1708
    %v11210 = vunpack.c.h.b16 %v1708
    %v11211 = vunpack.c.l.b16 %v1709
    %v11212 = vunpack.c.h.b16 %v1709
    %v11213 = vunpack.c.l.b16 %v1710
    %v11214 = vunpack.c.h.b16 %v1710
    %v11215 = vunpack.c.l.b16 %v1711
    %v11216 = vunpack.c.h.b16 %v1711
    %v11217 = vunpack.c.l.b16 %v1712
    %v11218 = vunpack.c.h.b16 %v1712
    %v11219 = vunpack.c.l.b16 %v1713
    %v11220 = vunpack.c.h.b16 %v1713
    %v11221 = vunpack.c.l.b16 %v1714
    %v11222 = vunpack.c.h.b16 %v1714
    %v11223 = vunpack.c.l.b16 %v1715
    %v11224 = vunpack.c.h.b16 %v1715
    %v11225 = vunpack.c.l.b16 %v1716
    %v11226 = vunpack.c.h.b16 %v1716
    %v11227 = vunpack.c.l.b16 %v1717
    %v11228 = vunpack.c.h.b16 %v1717
    %v11229 = vunpack.c.l.b16 %v1718
    %v11230 = vunpack.c.h.b16 %v1718
    %v11231 = vunpack.c.l.b16 %v1719
    %v11232 = vunpack.c.h.b16 %v1719
    %v11233 = vunpack.c.l.b16 %v1720
    %v11234 = vunpack.c.h.b16 %v1720
    %v11235 = vunpack.c.l.b16 %v1721
    %v11236 = vunpack.c.h.b16 %v1721
    %v11237 = vunpack.c.l.b16 %v1722
    %v11238 = vunpack.c.h.b16 %v1722
    %v11239 = vunpack.c.l.b16 %v1723
    %v11240 = vunpack.c.h.b16 %v1723
    %v11241 = vunpack.c.l.b16 %v1724
    %v11242 = vunpack.c.h.b16 %v1724
    %v11243 = vunpack.c.l.b16 %v1725
    %v11244 = vunpack.c.h.b16 %v1725
    %v11245 = vunpack.c.l.b16 %v1726
    %v11246 = vunpack.c.h.b16 %v1726
    %v11247 = vunpack.c.l.b16 %v1727
    %v11248 = vunpack.c.h.b16 %v1727
    %v11249 = vunpack.c.l.b16 %v1728
    %v11250 = vunpack.c.h.b16 %v1728
    %v11251 = vunpack.c.l.b16 %v1729
    %v11252 = vunpack.c.h.b16 %v1729
    %v11253 = vunpack.c.l.b16 %v1730
    %v11254 = vunpack.c.h.b16 %v1730
    %v11255 = vunpack.c.l.b16 %v1731
    %v11256 = vunpack.c.h.b16 %v1731
    %v11257 = vunpack.c.l.b16 %v1732
    %v11258 = vunpack.c.h.b16 %v1732
    %v11259 = vunpack.c.l.b16 %v1733
    %v11260 = vunpack.c.h.b16 %v1733
    %v11261 = vunpack.c.l.b16 %v1734
    %v11262 = vunpack.c.h.b16 %v1734
    %v11263 = vunpack.c.l.b16 %v1735
    %v11264 = vunpack.c.h.b16 %v1735
    %v11265 = vunpack.c.l.b16 %v1736
    %v11266 = vunpack.c.h.b16 %v1736
    %v11267 = vunpack.c.l.b16 %v1737
    %v11268 = vunpack.c.h.b16 %v1737
    %v11269 = vunpack.c.l.b16 %v1738
    %v11270 = vunpack.c.h.b16 %v1738
    %v11271 = vunpack.c.l.b16 %v1739
    %v11272 = vunpack.c.h.b16 %v1739
    %v11273 = vunpack.c.l.b16 %v1740
    %v11274 = vunpack.c.h.b16 %v1740
    %v11275 = vunpack.c.l.b16 %v1741
    %v11276 = vunpack.c.h.b16 %v1741
    %v11277 = vunpack.c.l.b16 %v1742
    %v11278 = vunpack.c.h.b16 %v1742
    %v11279 = vunpack.c.l.b16 %v1743
    %v11280 = vunpack.c.h.b16 %v1743
    %v11281 = vpack.c.b16 %v10261, %v10257
    %v11282 = vpack.c.b16 %v10262, %v10258
    %v11283 = vpack.c.b16 %v10263, %v10259
    %v11284 = vpack.c.b16 %v10264, %v10260
    %v11285 = vpack.c.b16 %v10269, %v10265
    %v11286 = vpack.c.b16 %v10270, %v10266
    %v11287 = vpack.c.b16 %v10271, %v10267
    %v11288 = vpack.c.b16 %v10272, %v10268
    %v11289 = vpack.c.b16 %v10277, %v10273
    %v11290 = vpack.c.b16 %v10278, %v10274
    %v11291 = vpack.c.b16 %v10279, %v10275
    %v11292 = vpack.c.b16 %v10280, %v10276
    %v11293 = vpack.c.b16 %v10285, %v10281
    %v11294 = vpack.c.b16 %v10286, %v10282
    %v11295 = vpack.c.b16 %v10287, %v10283
    %v11296 = vpack.c.b16 %v10288, %v10284
    %v11297 = vpack.c.b16 %v10293, %v10289
    %v11298 = vpack.c.b16 %v10294, %v10290
    %v11299 = vpack.c.b16 %v10295, %v10291
    %v11300 = vpack.c.b16 %v10296, %v10292
    %v11301 = vpack.c.b16 %v10301, %v10297
    %v11302 = vpack.c.b16 %v10302, %v10298
    %v11303 = vpack.c.b16 %v10303, %v10299
    %v11304 = vpack.c.b16 %v10304, %v10300
    %v11305 = vpack.c.b16 %v10309, %v10305
    %v11306 = vpack.c.b16 %v10310, %v10306
    %v11307 = vpack.c.b16 %v10311, %v10307
    %v11308 = vpack.c.b16 %v10312, %v10308
    %v11309 = vpack.c.b16 %v10317, %v10313
    %v11310 = vpack.c.b16 %v10318, %v10314
    %v11311 = vpack.c.b16 %v10319, %v10315
    %v11312 = vpack.c.b16 %v10320, %v10316
    %v11313 = vpack.c.b16 %v10325, %v10321
    %v11314 = vpack.c.b16 %v10326, %v10322
    %v11315 = vpack.c.b16 %v10327, %v10323
    %v11316 = vpack.c.b16 %v10328, %v10324
    %v11317 = vpack.c.b16 %v10333, %v10329
    %v11318 = vpack.c.b16 %v10334, %v10330
    %v11319 = vpack.c.b16 %v10335, %v10331
    %v11320 = vpack.c.b16 %v10336, %v10332
    %v11321 = vpack.c.b16 %v10341, %v10337
    %v11322 = vpack.c.b16 %v10342, %v10338
    %v11323 = vpack.c.b16 %v10343, %v10339
    %v11324 = vpack.c.b16 %v10344, %v10340
    %v11325 = vpack.c.b16 %v10349, %v10345
    %v11326 = vpack.c.b16 %v10350, %v10346
    %v11327 = vpack.c.b16 %v10351, %v10347
    %v11328 = vpack.c.b16 %v10352, %v10348
    %v11329 = vpack.c.b16 %v10357, %v10353
    %v11330 = vpack.c.b16 %v10358, %v10354
    %v11331 = vpack.c.b16 %v10359, %v10355
    %v11332 = vpack.c.b16 %v10360, %v10356
    %v11333 = vpack.c.b16 %v10365, %v10361
    %v11334 = vpack.c.b16 %v10366, %v10362
    %v11335 = vpack.c.b16 %v10367, %v10363
    %v11336 = vpack.c.b16 %v10368, %v10364
    %v11337 = vpack.c.b16 %v10373, %v10369
    %v11338 = vpack.c.b16 %v10374, %v10370
    %v11339 = vpack.c.b16 %v10375, %v10371
    %v11340 = vpack.c.b16 %v10376, %v10372
    %v11341 = vpack.c.b16 %v10381, %v10377
    %v11342 = vpack.c.b16 %v10382, %v10378
    %v11343 = vpack.c.b16 %v10383, %v10379
    %v11344 = vpack.c.b16 %v10384, %v10380
    %v11345 = vpack.c.b16 %v10389, %v10385
    %v11346 = vpack.c.b16 %v10390, %v10386
    %v11347 = vpack.c.b16 %v10391, %v10387
    %v11348 = vpack.c.b16 %v10392, %v10388
    %v11349 = vpack.c.b16 %v10397, %v10393
    %v11350 = vpack.c.b16 %v10398, %v10394
    %v11351 = vpack.c.b16 %v10399, %v10395
    %v11352 = vpack.c.b16 %v10400, %v10396
    %v11353 = vpack.c.b16 %v10405, %v10401
    %v11354 = vpack.c.b16 %v10406, %v10402
    %v11355 = vpack.c.b16 %v10407, %v10403
    %v11356 = vpack.c.b16 %v10408, %v10404
    %v11357 = vpack.c.b16 %v10413, %v10409
    %v11358 = vpack.c.b16 %v10414, %v10410
    %v11359 = vpack.c.b16 %v10415, %v10411
    %v11360 = vpack.c.b16 %v10416, %v10412
    %v11361 = vpack.c.b16 %v10421, %v10417
    %v11362 = vpack.c.b16 %v10422, %v10418
    %v11363 = vpack.c.b16 %v10423, %v10419
    %v11364 = vpack.c.b16 %v10424, %v10420
    %v11365 = vpack.c.b16 %v10429, %v10425
    %v11366 = vpack.c.b16 %v10430, %v10426
    %v11367 = vpack.c.b16 %v10431, %v10427
    %v11368 = vpack.c.b16 %v10432, %v10428
    %v11369 = vpack.c.b16 %v10437, %v10433
    %v11370 = vpack.c.b16 %v10438, %v10434
    %v11371 = vpack.c.b16 %v10439, %v10435
    %v11372 = vpack.c.b16 %v10440, %v10436
    %v11373 = vpack.c.b16 %v10445, %v10441
    %v11374 = vpack.c.b16 %v10446, %v10442
    %v11375 = vpack.c.b16 %v10447, %v10443
    %v11376 = vpack.c.b16 %v10448, %v10444
    %v11377 = vpack.c.b16 %v10453, %v10449
    %v11378 = vpack.c.b16 %v10454, %v10450
    %v11379 = vpack.c.b16 %v10455, %v10451
    %v11380 = vpack.c.b16 %v10456, %v10452
    %v11381 = vpack.c.b16 %v10461, %v10457
    %v11382 = vpack.c.b16 %v10462, %v10458
    %v11383 = vpack.c.b16 %v10463, %v10459
    %v11384 = vpack.c.b16 %v10464, %v10460
    %v11385 = vpack.c.b16 %v10469, %v10465
    %v11386 = vpack.c.b16 %v10470, %v10466
    %v11387 = vpack.c.b16 %v10471, %v10467
    %v11388 = vpack.c.b16 %v10472, %v10468
    %v11389 = vpack.c.b16 %v10477, %v10473
    %v11390 = vpack.c.b16 %v10478, %v10474
    %v11391 = vpack.c.b16 %v10479, %v10475
    %v11392 = vpack.c.b16 %v10480, %v10476
    %v11393 = vpack.c.b16 %v10485, %v10481
    %v11394 = vpack.c.b16 %v10486, %v10482
    %v11395 = vpack.c.b16 %v10487, %v10483
    %v11396 = vpack.c.b16 %v10488, %v10484
    %v11397 = vpack.c.b16 %v10493, %v10489
    %v11398 = vpack.c.b16 %v10494, %v10490
    %v11399 = vpack.c.b16 %v10495, %v10491
    %v11400 = vpack.c.b16 %v10496, %v10492
    %v11401 = vpack.c.b16 %v10501, %v10497
    %v11402 = vpack.c.b16 %v10502, %v10498
    %v11403 = vpack.c.b16 %v10503, %v10499
    %v11404 = vpack.c.b16 %v10504, %v10500
    %v11405 = vpack.c.b16 %v10509, %v10505
    %v11406 = vpack.c.b16 %v10510, %v10506
    %v11407 = vpack.c.b16 %v10511, %v10507
    %v11408 = vpack.c.b16 %v10512, %v10508
    %v11409 = vpack.c.b16 %v10517, %v10513
    %v11410 = vpack.c.b16 %v10518, %v10514
    %v11411 = vpack.c.b16 %v10519, %v10515
    %v11412 = vpack.c.b16 %v10520, %v10516
    %v11413 = vpack.c.b16 %v10525, %v10521
    %v11414 = vpack.c.b16 %v10526, %v10522
    %v11415 = vpack.c.b16 %v10527, %v10523
    %v11416 = vpack.c.b16 %v10528, %v10524
    %v11417 = vpack.c.b16 %v10533, %v10529
    %v11418 = vpack.c.b16 %v10534, %v10530
    %v11419 = vpack.c.b16 %v10535, %v10531
    %v11420 = vpack.c.b16 %v10536, %v10532
    %v11421 = vpack.c.b16 %v10541, %v10537
    %v11422 = vpack.c.b16 %v10542, %v10538
    %v11423 = vpack.c.b16 %v10543, %v10539
    %v11424 = vpack.c.b16 %v10544, %v10540
    %v11425 = vpack.c.b16 %v10549, %v10545
    %v11426 = vpack.c.b16 %v10550, %v10546
    %v11427 = vpack.c.b16 %v10551, %v10547
    %v11428 = vpack.c.b16 %v10552, %v10548
    %v11429 = vpack.c.b16 %v10557, %v10553
    %v11430 = vpack.c.b16 %v10558, %v10554
    %v11431 = vpack.c.b16 %v10559, %v10555
    %v11432 = vpack.c.b16 %v10560, %v10556
    %v11433 = vpack.c.b16 %v10565, %v10561
    %v11434 = vpack.c.b16 %v10566, %v10562
    %v11435 = vpack.c.b16 %v10567, %v10563
    %v11436 = vpack.c.b16 %v10568, %v10564
    %v11437 = vpack.c.b16 %v10573, %v10569
    %v11438 = vpack.c.b16 %v10574, %v10570
    %v11439 = vpack.c.b16 %v10575, %v10571
    %v11440 = vpack.c.b16 %v10576, %v10572
    %v11441 = vpack.c.b16 %v10581, %v10577
    %v11442 = vpack.c.b16 %v10582, %v10578
    %v11443 = vpack.c.b16 %v10583, %v10579
    %v11444 = vpack.c.b16 %v10584, %v10580
    %v11445 = vpack.c.b16 %v10589, %v10585
    %v11446 = vpack.c.b16 %v10590, %v10586
    %v11447 = vpack.c.b16 %v10591, %v10587
    %v11448 = vpack.c.b16 %v10592, %v10588
    %v11449 = vpack.c.b16 %v10597, %v10593
    %v11450 = vpack.c.b16 %v10598, %v10594
    %v11451 = vpack.c.b16 %v10599, %v10595
    %v11452 = vpack.c.b16 %v10600, %v10596
    %v11453 = vpack.c.b16 %v10605, %v10601
    %v11454 = vpack.c.b16 %v10606, %v10602
    %v11455 = vpack.c.b16 %v10607, %v10603
    %v11456 = vpack.c.b16 %v10608, %v10604
    %v11457 = vpack.c.b16 %v10613, %v10609
    %v11458 = vpack.c.b16 %v10614, %v10610
    %v11459 = vpack.c.b16 %v10615, %v10611
    %v11460 = vpack.c.b16 %v10616, %v10612
    %v11461 = vpack.c.b16 %v10621, %v10617
    %v11462 = vpack.c.b16 %v10622, %v10618
    %v11463 = vpack.c.b16 %v10623, %v10619
    %v11464 = vpack.c.b16 %v10624, %v10620
    %v11465 = vpack.c.b16 %v10629, %v10625
    %v11466 = vpack.c.b16 %v10630, %v10626
    %v11467 = vpack.c.b16 %v10631, %v10627
    %v11468 = vpack.c.b16 %v10632, %v10628
    %v11469 = vpack.c.b16 %v10637, %v10633
    %v11470 = vpack.c.b16 %v10638, %v10634
    %v11471 = vpack.c.b16 %v10639, %v10635
    %v11472 = vpack.c.b16 %v10640, %v10636
    %v11473 = vpack.c.b16 %v10645, %v10641
    %v11474 = vpack.c.b16 %v10646, %v10642
    %v11475 = vpack.c.b16 %v10647, %v10643
    %v11476 = vpack.c.b16 %v10648, %v10644
    %v11477 = vpack.c.b16 %v10653, %v10649
    %v11478 = vpack.c.b16 %v10654, %v10650
    %v11479 = vpack.c.b16 %v10655, %v10651
    %v11480 = vpack.c.b16 %v10656, %v10652
    %v11481 = vpack.c.b16 %v10661, %v10657
    %v11482 = vpack.c.b16 %v10662, %v10658
    %v11483 = vpack.c.b16 %v10663, %v10659
    %v11484 = vpack.c.b16 %v10664, %v10660
    %v11485 = vpack.c.b16 %v10669, %v10665
    %v11486 = vpack.c.b16 %v10670, %v10666
    %v11487 = vpack.c.b16 %v10671, %v10667
    %v11488 = vpack.c.b16 %v10672, %v10668
    %v11489 = vpack.c.b16 %v10677, %v10673
    %v11490 = vpack.c.b16 %v10678, %v10674
    %v11491 = vpack.c.b16 %v10679, %v10675
    %v11492 = vpack.c.b16 %v10680, %v10676
    %v11493 = vpack.c.b16 %v10685, %v10681
    %v11494 = vpack.c.b16 %v10686, %v10682
    %v11495 = vpack.c.b16 %v10687, %v10683
    %v11496 = vpack.c.b16 %v10688, %v10684
    %v11497 = vpack.c.b16 %v10693, %v10689
    %v11498 = vpack.c.b16 %v10694, %v10690
    %v11499 = vpack.c.b16 %v10695, %v10691
    %v11500 = vpack.c.b16 %v10696, %v10692
    %v11501 = vpack.c.b16 %v10701, %v10697
    %v11502 = vpack.c.b16 %v10702, %v10698
    %v11503 = vpack.c.b16 %v10703, %v10699
    %v11504 = vpack.c.b16 %v10704, %v10700
    %v11505 = vpack.c.b16 %v10709, %v10705
    %v11506 = vpack.c.b16 %v10710, %v10706
    %v11507 = vpack.c.b16 %v10711, %v10707
    %v11508 = vpack.c.b16 %v10712, %v10708
    %v11509 = vpack.c.b16 %v10717, %v10713
    %v11510 = vpack.c.b16 %v10718, %v10714
    %v11511 = vpack.c.b16 %v10719, %v10715
    %v11512 = vpack.c.b16 %v10720, %v10716
    %v11513 = vpack.c.b16 %v10725, %v10721
    %v11514 = vpack.c.b16 %v10726, %v10722
    %v11515 = vpack.c.b16 %v10727, %v10723
    %v11516 = vpack.c.b16 %v10728, %v10724
    %v11517 = vpack.c.b16 %v10733, %v10729
    %v11518 = vpack.c.b16 %v10734, %v10730
    %v11519 = vpack.c.b16 %v10735, %v10731
    %v11520 = vpack.c.b16 %v10736, %v10732
    %v11521 = vpack.c.b16 %v10741, %v10737
    %v11522 = vpack.c.b16 %v10742, %v10738
    %v11523 = vpack.c.b16 %v10743, %v10739
    %v11524 = vpack.c.b16 %v10744, %v10740
    %v11525 = vpack.c.b16 %v10749, %v10745
    %v11526 = vpack.c.b16 %v10750, %v10746
    %v11527 = vpack.c.b16 %v10751, %v10747
    %v11528 = vpack.c.b16 %v10752, %v10748
    %v11529 = vpack.c.b16 %v10757, %v10753
    %v11530 = vpack.c.b16 %v10758, %v10754
    %v11531 = vpack.c.b16 %v10759, %v10755
    %v11532 = vpack.c.b16 %v10760, %v10756
    %v11533 = vpack.c.b16 %v10765, %v10761
    %v11534 = vpack.c.b16 %v10766, %v10762
    %v11535 = vpack.c.b16 %v10767, %v10763
    %v11536 = vpack.c.b16 %v10768, %v10764
    %v11537 = vpack.c.b16 %v10773, %v10769
    %v11538 = vpack.c.b16 %v10774, %v10770
    %v11539 = vpack.c.b16 %v10775, %v10771
    %v11540 = vpack.c.b16 %v10776, %v10772
    %v11541 = vpack.c.b16 %v10781, %v10777
    %v11542 = vpack.c.b16 %v10782, %v10778
    %v11543 = vpack.c.b16 %v10783, %v10779
    %v11544 = vpack.c.b16 %v10784, %v10780
    %v11545 = vpack.c.b16 %v10789, %v10785
    %v11546 = vpack.c.b16 %v10790, %v10786
    %v11547 = vpack.c.b16 %v10791, %v10787
    %v11548 = vpack.c.b16 %v10792, %v10788
    %v11549 = vpack.c.b16 %v10797, %v10793
    %v11550 = vpack.c.b16 %v10798, %v10794
    %v11551 = vpack.c.b16 %v10799, %v10795
    %v11552 = vpack.c.b16 %v10800, %v10796
    %v11553 = vpack.c.b16 %v10805, %v10801
    %v11554 = vpack.c.b16 %v10806, %v10802
    %v11555 = vpack.c.b16 %v10807, %v10803
    %v11556 = vpack.c.b16 %v10808, %v10804
    %v11557 = vpack.c.b16 %v10813, %v10809
    %v11558 = vpack.c.b16 %v10814, %v10810
    %v11559 = vpack.c.b16 %v10815, %v10811
    %v11560 = vpack.c.b16 %v10816, %v10812
    %v11561 = vpack.c.b16 %v10821, %v10817
    %v11562 = vpack.c.b16 %v10822, %v10818
    %v11563 = vpack.c.b16 %v10823, %v10819
    %v11564 = vpack.c.b16 %v10824, %v10820
    %v11565 = vpack.c.b16 %v10829, %v10825
    %v11566 = vpack.c.b16 %v10830, %v10826
    %v11567 = vpack.c.b16 %v10831, %v10827
    %v11568 = vpack.c.b16 %v10832, %v10828
    %v11569 = vpack.c.b16 %v10837, %v10833
    %v11570 = vpack.c.b16 %v10838, %v10834
    %v11571 = vpack.c.b16 %v10839, %v10835
    %v11572 = vpack.c.b16 %v10840, %v10836
    %v11573 = vpack.c.b16 %v10845, %v10841
    %v11574 = vpack.c.b16 %v10846, %v10842
    %v11575 = vpack.c.b16 %v10847, %v10843
    %v11576 = vpack.c.b16 %v10848, %v10844
    %v11577 = vpack.c.b16 %v10853, %v10849
    %v11578 = vpack.c.b16 %v10854, %v10850
    %v11579 = vpack.c.b16 %v10855, %v10851
    %v11580 = vpack.c.b16 %v10856, %v10852
    %v11581 = vpack.c.b16 %v10861, %v10857
    %v11582 = vpack.c.b16 %v10862, %v10858
    %v11583 = vpack.c.b16 %v10863, %v10859
    %v11584 = vpack.c.b16 %v10864, %v10860
    %v11585 = vpack.c.b16 %v10869, %v10865
    %v11586 = vpack.c.b16 %v10870, %v10866
    %v11587 = vpack.c.b16 %v10871, %v10867
    %v11588 = vpack.c.b16 %v10872, %v10868
    %v11589 = vpack.c.b16 %v10877, %v10873
    %v11590 = vpack.c.b16 %v10878, %v10874
    %v11591 = vpack.c.b16 %v10879, %v10875
    %v11592 = vpack.c.b16 %v10880, %v10876
    %v11593 = vpack.c.b16 %v10885, %v10881
    %v11594 = vpack.c.b16 %v10886, %v10882
    %v11595 = vpack.c.b16 %v10887, %v10883
    %v11596 = vpack.c.b16 %v10888, %v10884
    %v11597 = vpack.c.b16 %v10893, %v10889
    %v11598 = vpack.c.b16 %v10894, %v10890
    %v11599 = vpack.c.b16 %v10895, %v10891
    %v11600 = vpack.c.b16 %v10896, %v10892
    %v11601 = vpack.c.b16 %v10901, %v10897
    %v11602 = vpack.c.b16 %v10902, %v10898
    %v11603 = vpack.c.b16 %v10903, %v10899
    %v11604 = vpack.c.b16 %v10904, %v10900
    %v11605 = vpack.c.b16 %v10909, %v10905
    %v11606 = vpack.c.b16 %v10910, %v10906
    %v11607 = vpack.c.b16 %v10911, %v10907
    %v11608 = vpack.c.b16 %v10912, %v10908
    %v11609 = vpack.c.b16 %v10917, %v10913
    %v11610 = vpack.c.b16 %v10918, %v10914
    %v11611 = vpack.c.b16 %v10919, %v10915
    %v11612 = vpack.c.b16 %v10920, %v10916
    %v11613 = vpack.c.b16 %v10925, %v10921
    %v11614 = vpack.c.b16 %v10926, %v10922
    %v11615 = vpack.c.b16 %v10927, %v10923
    %v11616 = vpack.c.b16 %v10928, %v10924
    %v11617 = vpack.c.b16 %v10933, %v10929
    %v11618 = vpack.c.b16 %v10934, %v10930
    %v11619 = vpack.c.b16 %v10935, %v10931
    %v11620 = vpack.c.b16 %v10936, %v10932
    %v11621 = vpack.c.b16 %v10941, %v10937
    %v11622 = vpack.c.b16 %v10942, %v10938
    %v11623 = vpack.c.b16 %v10943, %v10939
    %v11624 = vpack.c.b16 %v10944, %v10940
    %v11625 = vpack.c.b16 %v10949, %v10945
    %v11626 = vpack.c.b16 %v10950, %v10946
    %v11627 = vpack.c.b16 %v10951, %v10947
    %v11628 = vpack.c.b16 %v10952, %v10948
    %v11629 = vpack.c.b16 %v10957, %v10953
    %v11630 = vpack.c.b16 %v10958, %v10954
    %v11631 = vpack.c.b16 %v10959, %v10955
    %v11632 = vpack.c.b16 %v10960, %v10956
    %v11633 = vpack.c.b16 %v10965, %v10961
    %v11634 = vpack.c.b16 %v10966, %v10962
    %v11635 = vpack.c.b16 %v10967, %v10963
    %v11636 = vpack.c.b16 %v10968, %v10964
    %v11637 = vpack.c.b16 %v10973, %v10969
    %v11638 = vpack.c.b16 %v10974, %v10970
    %v11639 = vpack.c.b16 %v10975, %v10971
    %v11640 = vpack.c.b16 %v10976, %v10972
    %v11641 = vpack.c.b16 %v10981, %v10977
    %v11642 = vpack.c.b16 %v10982, %v10978
    %v11643 = vpack.c.b16 %v10983, %v10979
    %v11644 = vpack.c.b16 %v10984, %v10980
    %v11645 = vpack.c.b16 %v10989, %v10985
    %v11646 = vpack.c.b16 %v10990, %v10986
    %v11647 = vpack.c.b16 %v10991, %v10987
    %v11648 = vpack.c.b16 %v10992, %v10988
    %v11649 = vpack.c.b16 %v10997, %v10993
    %v11650 = vpack.c.b16 %v10998, %v10994
    %v11651 = vpack.c.b16 %v10999, %v10995
    %v11652 = vpack.c.b16 %v11000, %v10996
    %v11653 = vpack.c.b16 %v11005, %v11001
    %v11654 = vpack.c.b16 %v11006, %v11002
    %v11655 = vpack.c.b16 %v11007, %v11003
    %v11656 = vpack.c.b16 %v11008, %v11004
    %v11657 = vpack.c.b16 %v11013, %v11009
    %v11658 = vpack.c.b16 %v11014, %v11010
    %v11659 = vpack.c.b16 %v11015, %v11011
    %v11660 = vpack.c.b16 %v11016, %v11012
    %v11661 = vpack.c.b16 %v11021, %v11017
    %v11662 = vpack.c.b16 %v11022, %v11018
    %v11663 = vpack.c.b16 %v11023, %v11019
    %v11664 = vpack.c.b16 %v11024, %v11020
    %v11665 = vpack.c.b16 %v11029, %v11025
    %v11666 = vpack.c.b16 %v11030, %v11026
    %v11667 = vpack.c.b16 %v11031, %v11027
    %v11668 = vpack.c.b16 %v11032, %v11028
    %v11669 = vpack.c.b16 %v11037, %v11033
    %v11670 = vpack.c.b16 %v11038, %v11034
    %v11671 = vpack.c.b16 %v11039, %v11035
    %v11672 = vpack.c.b16 %v11040, %v11036
    %v11673 = vpack.c.b16 %v11045, %v11041
    %v11674 = vpack.c.b16 %v11046, %v11042
    %v11675 = vpack.c.b16 %v11047, %v11043
    %v11676 = vpack.c.b16 %v11048, %v11044
    %v11677 = vpack.c.b16 %v11053, %v11049
    %v11678 = vpack.c.b16 %v11054, %v11050
    %v11679 = vpack.c.b16 %v11055, %v11051
    %v11680 = vpack.c.b16 %v11056, %v11052
    %v11681 = vpack.c.b16 %v11061, %v11057
    %v11682 = vpack.c.b16 %v11062, %v11058
    %v11683 = vpack.c.b16 %v11063, %v11059
    %v11684 = vpack.c.b16 %v11064, %v11060
    %v11685 = vpack.c.b16 %v11069, %v11065
    %v11686 = vpack.c.b16 %v11070, %v11066
    %v11687 = vpack.c.b16 %v11071, %v11067
    %v11688 = vpack.c.b16 %v11072, %v11068
    %v11689 = vpack.c.b16 %v11077, %v11073
    %v11690 = vpack.c.b16 %v11078, %v11074
    %v11691 = vpack.c.b16 %v11079, %v11075
    %v11692 = vpack.c.b16 %v11080, %v11076
    %v11693 = vpack.c.b16 %v11085, %v11081
    %v11694 = vpack.c.b16 %v11086, %v11082
    %v11695 = vpack.c.b16 %v11087, %v11083
    %v11696 = vpack.c.b16 %v11088, %v11084
    %v11697 = vpack.c.b16 %v11093, %v11089
    %v11698 = vpack.c.b16 %v11094, %v11090
    %v11699 = vpack.c.b16 %v11095, %v11091
    %v11700 = vpack.c.b16 %v11096, %v11092
    %v11701 = vpack.c.b16 %v11101, %v11097
    %v11702 = vpack.c.b16 %v11102, %v11098
    %v11703 = vpack.c.b16 %v11103, %v11099
    %v11704 = vpack.c.b16 %v11104, %v11100
    %v11705 = vpack.c.b16 %v11109, %v11105
    %v11706 = vpack.c.b16 %v11110, %v11106
    %v11707 = vpack.c.b16 %v11111, %v11107
    %v11708 = vpack.c.b16 %v11112, %v11108
    %v11709 = vpack.c.b16 %v11117, %v11113
    %v11710 = vpack.c.b16 %v11118, %v11114
    %v11711 = vpack.c.b16 %v11119, %v11115
    %v11712 = vpack.c.b16 %v11120, %v11116
    %v11713 = vpack.c.b16 %v11125, %v11121
    %v11714 = vpack.c.b16 %v11126, %v11122
    %v11715 = vpack.c.b16 %v11127, %v11123
    %v11716 = vpack.c.b16 %v11128, %v11124
    %v11717 = vpack.c.b16 %v11133, %v11129
    %v11718 = vpack.c.b16 %v11134, %v11130
    %v11719 = vpack.c.b16 %v11135, %v11131
    %v11720 = vpack.c.b16 %v11136, %v11132
    %v11721 = vpack.c.b16 %v11141, %v11137
    %v11722 = vpack.c.b16 %v11142, %v11138
    %v11723 = vpack.c.b16 %v11143, %v11139
    %v11724 = vpack.c.b16 %v11144, %v11140
    %v11725 = vpack.c.b16 %v11149, %v11145
    %v11726 = vpack.c.b16 %v11150, %v11146
    %v11727 = vpack.c.b16 %v11151, %v11147
    %v11728 = vpack.c.b16 %v11152, %v11148
    %v11729 = vpack.c.b16 %v11157, %v11153
    %v11730 = vpack.c.b16 %v11158, %v11154
    %v11731 = vpack.c.b16 %v11159, %v11155
    %v11732 = vpack.c.b16 %v11160, %v11156
    %v11733 = vpack.c.b16 %v11165, %v11161
    %v11734 = vpack.c.b16 %v11166, %v11162
    %v11735 = vpack.c.b16 %v11167, %v11163
    %v11736 = vpack.c.b16 %v11168, %v11164
    %v11737 = vpack.c.b16 %v11173, %v11169
    %v11738 = vpack.c.b16 %v11174, %v11170
    %v11739 = vpack.c.b16 %v11175, %v11171
    %v11740 = vpack.c.b16 %v11176, %v11172
    %v11741 = vpack.c.b16 %v11181, %v11177
    %v11742 = vpack.c.b16 %v11182, %v11178
    %v11743 = vpack.c.b16 %v11183, %v11179
    %v11744 = vpack.c.b16 %v11184, %v11180
    %v11745 = vpack.c.b16 %v11189, %v11185
    %v11746 = vpack.c.b16 %v11190, %v11186
    %v11747 = vpack.c.b16 %v11191, %v11187
    %v11748 = vpack.c.b16 %v11192, %v11188
    %v11749 = vpack.c.b16 %v11197, %v11193
    %v11750 = vpack.c.b16 %v11198, %v11194
    %v11751 = vpack.c.b16 %v11199, %v11195
    %v11752 = vpack.c.b16 %v11200, %v11196
    %v11753 = vpack.c.b16 %v11205, %v11201
    %v11754 = vpack.c.b16 %v11206, %v11202
    %v11755 = vpack.c.b16 %v11207, %v11203
    %v11756 = vpack.c.b16 %v11208, %v11204
    %v11757 = vpack.c.b16 %v11213, %v11209
    %v11758 = vpack.c.b16 %v11214, %v11210
    %v11759 = vpack.c.b16 %v11215, %v11211
    %v11760 = vpack.c.b16 %v11216, %v11212
    %v11761 = vpack.c.b16 %v11221, %v11217
    %v11762 = vpack.c.b16 %v11222, %v11218
    %v11763 = vpack.c.b16 %v11223, %v11219
    %v11764 = vpack.c.b16 %v11224, %v11220
    %v11765 = vpack.c.b16 %v11229, %v11225
    %v11766 = vpack.c.b16 %v11230, %v11226
    %v11767 = vpack.c.b16 %v11231, %v11227
    %v11768 = vpack.c.b16 %v11232, %v11228
    %v11769 = vpack.c.b16 %v11237, %v11233
    %v11770 = vpack.c.b16 %v11238, %v11234
    %v11771 = vpack.c.b16 %v11239, %v11235
    %v11772 = vpack.c.b16 %v11240, %v11236
    %v11773 = vpack.c.b16 %v11245, %v11241
    %v11774 = vpack.c.b16 %v11246, %v11242
    %v11775 = vpack.c.b16 %v11247, %v11243
    %v11776 = vpack.c.b16 %v11248, %v11244
    %v11777 = vpack.c.b16 %v11253, %v11249
    %v11778 = vpack.c.b16 %v11254, %v11250
    %v11779 = vpack.c.b16 %v11255, %v11251
    %v11780 = vpack.c.b16 %v11256, %v11252
    %v11781 = vpack.c.b16 %v11261, %v11257
    %v11782 = vpack.c.b16 %v11262, %v11258
    %v11783 = vpack.c.b16 %v11263, %v11259
    %v11784 = vpack.c.b16 %v11264, %v11260
    %v11785 = vpack.c.b16 %v11269, %v11265
    %v11786 = vpack.c.b16 %v11270, %v11266
    %v11787 = vpack.c.b16 %v11271, %v11267
    %v11788 = vpack.c.b16 %v11272, %v11268
    %v11789 = vpack.c.b16 %v11277, %v11273
    %v11790 = vpack.c.b16 %v11278, %v11274
    %v11791 = vpack.c.b16 %v11279, %v11275
    %v11792 = vpack.c.b16 %v11280, %v11276
    %12305 = vmatprep.subr.bf16.mxu0 %v11310
    %12306 = vmatpush1.bf16.msra.mxu0 %v11309
    %12307 = vmatprep.subr.bf16.mxu0 %v11306
    %12308 = vmatpush1.bf16.msra.mxu0 %v11305
    %12309 = vmatprep.subr.bf16.mxu0 %v11302
    %12310 = vmatpush1.bf16.msra.mxu0 %v11301
    %12311 = vmatprep.subr.bf16.mxu0 %v11298
    %12312 = vmatpush1.bf16.msra.mxu0 %v11297
    %12313 = vmatprep.subr.bf16.mxu0 %v11294
    %12314 = vmatpush1.bf16.msra.mxu0 %v11293
    %12315 = vmatprep.subr.bf16.mxu0 %v11290
    %12316 = vmatpush1.bf16.msra.mxu0 %v11289
    %12317 = vmatprep.subr.bf16.mxu0 %v11286
    %12318 = vmatpush1.bf16.msra.mxu0 %v11285
    %12319 = vmatprep.subr.bf16.mxu0 %v11282
    %12320 = vmatpush1.bf16.msra.mxu0 %v11281
    %12321 = vmatprep.subr.bf16.mxu0 %v11342
    %12322 = vmatpush2.bf16.msra.mxu0 %v11341
    %12323 = vmatprep.subr.bf16.mxu0 %v11338
    %12324 = vmatpush2.bf16.msra.mxu0 %v11337
    %12325 = vmatprep.subr.bf16.mxu0 %v11334
    %12326 = vmatpush2.bf16.msra.mxu0 %v11333
    %12327 = vmatprep.subr.bf16.mxu0 %v11330
    %12328 = vmatpush2.bf16.msra.mxu0 %v11329
    %12329 = vmatprep.subr.bf16.mxu0 %v11326
    %12330 = vmatpush2.bf16.msra.mxu0 %v11325
    %12331 = vmatprep.subr.bf16.mxu0 %v11322
    %12332 = vmatpush2.bf16.msra.mxu0 %v11321
    %12333 = vmatprep.subr.bf16.mxu0 %v11318
    %12334 = vmatpush2.bf16.msra.mxu0 %v11317
    %12335 = vmatprep.subr.bf16.mxu0 %v11314
    %12336 = vmatpush2.bf16.msra.mxu0 %v11313
    %12337 = vmatprep.mubr.bf16.mxu0 %v9714
    %12338 = vmatmul.mubr.bf16.gmra.mxu0 %v9713
    %v12339 = vpop.f32.mrf.mxu0
    %v12340 = vadd.f32 0.0, %v12339
    %v12341 = vpop.f32.mrf.mxu0
    %v12342 = vadd.f32 0.0, %v12341
    %v12343 = vpop.f32.mrf.mxu0
    %v12344 = vadd.f32 0.0, %v12343
    %v12345 = vpop.f32.mrf.mxu0
    %v12346 = vadd.f32 0.0, %v12345
    %12347 = vmatprep.mubr.bf16.mxu0 %v9730
    %12348 = vmatmul.mubr.bf16.gmra.mxu0 %v9729
    %v12349 = vpop.f32.mrf.mxu0
    %v12350 = vadd.f32 0.0, %v12349
    %v12351 = vpop.f32.mrf.mxu0
    %v12352 = vadd.f32 0.0, %v12351
    %v12353 = vpop.f32.mrf.mxu0
    %v12354 = vadd.f32 0.0, %v12353
    %v12355 = vpop.f32.mrf.mxu0
    %v12356 = vadd.f32 0.0, %v12355
    %12357 = vdwg.mxu0
    %12358 = vmatprep.subr.bf16.mxu0 %v11374
    %12359 = vmatpush1.bf16.msra.mxu0 %v11373
    %12360 = vmatprep.subr.bf16.mxu0 %v11370
    %12361 = vmatpush1.bf16.msra.mxu0 %v11369
    %12362 = vmatprep.subr.bf16.mxu0 %v11366
    %12363 = vmatpush1.bf16.msra.mxu0 %v11365
    %12364 = vmatprep.subr.bf16.mxu0 %v11362
    %12365 = vmatpush1.bf16.msra.mxu0 %v11361
    %12366 = vmatprep.subr.bf16.mxu0 %v11358
    %12367 = vmatpush1.bf16.msra.mxu0 %v11357
    %12368 = vmatprep.subr.bf16.mxu0 %v11354
    %12369 = vmatpush1.bf16.msra.mxu0 %v11353
    %12370 = vmatprep.subr.bf16.mxu0 %v11350
    %12371 = vmatpush1.bf16.msra.mxu0 %v11349
    %12372 = vmatprep.subr.bf16.mxu0 %v11346
    %12373 = vmatpush1.bf16.msra.mxu0 %v11345
    %12374 = vmatprep.subr.bf16.mxu0 %v11406
    %12375 = vmatpush2.bf16.msra.mxu0 %v11405
    %12376 = vmatprep.subr.bf16.mxu0 %v11402
    %12377 = vmatpush2.bf16.msra.mxu0 %v11401
    %12378 = vmatprep.subr.bf16.mxu0 %v11398
    %12379 = vmatpush2.bf16.msra.mxu0 %v11397
    %12380 = vmatprep.subr.bf16.mxu0 %v11394
    %12381 = vmatpush2.bf16.msra.mxu0 %v11393
    %12382 = vmatprep.subr.bf16.mxu0 %v11390
    %12383 = vmatpush2.bf16.msra.mxu0 %v11389
    %12384 = vmatprep.subr.bf16.mxu0 %v11386
    %12385 = vmatpush2.bf16.msra.mxu0 %v11385
    %12386 = vmatprep.subr.bf16.mxu0 %v11382
    %12387 = vmatpush2.bf16.msra.mxu0 %v11381
    %12388 = vmatprep.subr.bf16.mxu0 %v11378
    %12389 = vmatpush2.bf16.msra.mxu0 %v11377
    %12390 = vmatprep.mubr.bf16.mxu0 %v9716
    %12391 = vmatmul.mubr.bf16.gmra.mxu0 %v9715
    %v12392 = vpop.f32.mrf.mxu0
    %v12393 = vadd.f32 %v12340, %v12392
    %v12394 = vpop.f32.mrf.mxu0
    %v12395 = vadd.f32 %v12342, %v12394
    %v12396 = vpop.f32.mrf.mxu0
    %v12397 = vadd.f32 %v12344, %v12396
    %v12398 = vpop.f32.mrf.mxu0
    %v12399 = vadd.f32 %v12346, %v12398
    %12400 = vmatprep.mubr.bf16.mxu0 %v9732
    %12401 = vmatmul.mubr.bf16.gmra.mxu0 %v9731
    %v12402 = vpop.f32.mrf.mxu0
    %v12403 = vadd.f32 %v12350, %v12402
    %v12404 = vpop.f32.mrf.mxu0
    %v12405 = vadd.f32 %v12352, %v12404
    %v12406 = vpop.f32.mrf.mxu0
    %v12407 = vadd.f32 %v12354, %v12406
    %v12408 = vpop.f32.mrf.mxu0
    %v12409 = vadd.f32 %v12356, %v12408
    %12410 = vdwg.mxu0
    %12411 = vmatprep.subr.bf16.mxu0 %v11438
    %12412 = vmatpush1.bf16.msra.mxu0 %v11437
    %12413 = vmatprep.subr.bf16.mxu0 %v11434
    %12414 = vmatpush1.bf16.msra.mxu0 %v11433
    %12415 = vmatprep.subr.bf16.mxu0 %v11430
    %12416 = vmatpush1.bf16.msra.mxu0 %v11429
    %12417 = vmatprep.subr.bf16.mxu0 %v11426
    %12418 = vmatpush1.bf16.msra.mxu0 %v11425
    %12419 = vmatprep.subr.bf16.mxu0 %v11422
    %12420 = vmatpush1.bf16.msra.mxu0 %v11421
    %12421 = vmatprep.subr.bf16.mxu0 %v11418
    %12422 = vmatpush1.bf16.msra.mxu0 %v11417
    %12423 = vmatprep.subr.bf16.mxu0 %v11414
    %12424 = vmatpush1.bf16.msra.mxu0 %v11413
    %12425 = vmatprep.subr.bf16.mxu0 %v11410
    %12426 = vmatpush1.bf16.msra.mxu0 %v11409
    %12427 = vmatprep.subr.bf16.mxu0 %v11470
    %12428 = vmatpush2.bf16.msra.mxu0 %v11469
    %12429 = vmatprep.subr.bf16.mxu0 %v11466
    %12430 = vmatpush2.bf16.msra.mxu0 %v11465
    %12431 = vmatprep.subr.bf16.mxu0 %v11462
    %12432 = vmatpush2.bf16.msra.mxu0 %v11461
    %12433 = vmatprep.subr.bf16.mxu0 %v11458
    %12434 = vmatpush2.bf16.msra.mxu0 %v11457
    %12435 = vmatprep.subr.bf16.mxu0 %v11454
    %12436 = vmatpush2.bf16.msra.mxu0 %v11453
    %12437 = vmatprep.subr.bf16.mxu0 %v11450
    %12438 = vmatpush2.bf16.msra.mxu0 %v11449
    %12439 = vmatprep.subr.bf16.mxu0 %v11446
    %12440 = vmatpush2.bf16.msra.mxu0 %v11445
    %12441 = vmatprep.subr.bf16.mxu0 %v11442
    %12442 = vmatpush2.bf16.msra.mxu0 %v11441
    %12443 = vmatprep.mubr.bf16.mxu0 %v9718
    %12444 = vmatmul.mubr.bf16.gmra.mxu0 %v9717
    %v12445 = vpop.f32.mrf.mxu0
    %v12446 = vadd.f32 %v12393, %v12445
    %v12447 = vpop.f32.mrf.mxu0
    %v12448 = vadd.f32 %v12395, %v12447
    %v12449 = vpop.f32.mrf.mxu0
    %v12450 = vadd.f32 %v12397, %v12449
    %v12451 = vpop.f32.mrf.mxu0
    %v12452 = vadd.f32 %v12399, %v12451
    %12453 = vmatprep.mubr.bf16.mxu0 %v9734
    %12454 = vmatmul.mubr.bf16.gmra.mxu0 %v9733
    %v12455 = vpop.f32.mrf.mxu0
    %v12456 = vadd.f32 %v12403, %v12455
    %v12457 = vpop.f32.mrf.mxu0
    %v12458 = vadd.f32 %v12405, %v12457
    %v12459 = vpop.f32.mrf.mxu0
    %v12460 = vadd.f32 %v12407, %v12459
    %v12461 = vpop.f32.mrf.mxu0
    %v12462 = vadd.f32 %v12409, %v12461
    %12463 = vdwg.mxu0
    %12464 = vmatprep.subr.bf16.mxu0 %v11502
    %12465 = vmatpush1.bf16.msra.mxu0 %v11501
    %12466 = vmatprep.subr.bf16.mxu0 %v11498
    %12467 = vmatpush1.bf16.msra.mxu0 %v11497
    %12468 = vmatprep.subr.bf16.mxu0 %v11494
    %12469 = vmatpush1.bf16.msra.mxu0 %v11493
    %12470 = vmatprep.subr.bf16.mxu0 %v11490
    %12471 = vmatpush1.bf16.msra.mxu0 %v11489
    %12472 = vmatprep.subr.bf16.mxu0 %v11486
    %12473 = vmatpush1.bf16.msra.mxu0 %v11485
    %12474 = vmatprep.subr.bf16.mxu0 %v11482
    %12475 = vmatpush1.bf16.msra.mxu0 %v11481
    %12476 = vmatprep.subr.bf16.mxu0 %v11478
    %12477 = vmatpush1.bf16.msra.mxu0 %v11477
    %12478 = vmatprep.subr.bf16.mxu0 %v11474
    %12479 = vmatpush1.bf16.msra.mxu0 %v11473
    %12480 = vmatprep.subr.bf16.mxu0 %v11534
    %12481 = vmatpush2.bf16.msra.mxu0 %v11533
    %12482 = vmatprep.subr.bf16.mxu0 %v11530
    %12483 = vmatpush2.bf16.msra.mxu0 %v11529
    %12484 = vmatprep.subr.bf16.mxu0 %v11526
    %12485 = vmatpush2.bf16.msra.mxu0 %v11525
    %12486 = vmatprep.subr.bf16.mxu0 %v11522
    %12487 = vmatpush2.bf16.msra.mxu0 %v11521
    %12488 = vmatprep.subr.bf16.mxu0 %v11518
    %12489 = vmatpush2.bf16.msra.mxu0 %v11517
    %12490 = vmatprep.subr.bf16.mxu0 %v11514
    %12491 = vmatpush2.bf16.msra.mxu0 %v11513
    %12492 = vmatprep.subr.bf16.mxu0 %v11510
    %12493 = vmatpush2.bf16.msra.mxu0 %v11509
    %12494 = vmatprep.subr.bf16.mxu0 %v11506
    %12495 = vmatpush2.bf16.msra.mxu0 %v11505
    %12496 = vmatprep.mubr.bf16.mxu0 %v9720
    %12497 = vmatmul.mubr.bf16.gmra.mxu0 %v9719
    %v12498 = vpop.f32.mrf.mxu0
    %v12499 = vadd.f32 %v12446, %v12498
    %v12500 = vpop.f32.mrf.mxu0
    %v12501 = vadd.f32 %v12448, %v12500
    %v12502 = vpop.f32.mrf.mxu0
    %v12503 = vadd.f32 %v12450, %v12502
    %v12504 = vpop.f32.mrf.mxu0
    %v12505 = vadd.f32 %v12452, %v12504
    %12506 = vmatprep.mubr.bf16.mxu0 %v9736
    %12507 = vmatmul.mubr.bf16.gmra.mxu0 %v9735
    %v12508 = vpop.f32.mrf.mxu0
    %v12509 = vadd.f32 %v12456, %v12508
    %v12510 = vpop.f32.mrf.mxu0
    %v12511 = vadd.f32 %v12458, %v12510
    %v12512 = vpop.f32.mrf.mxu0
    %v12513 = vadd.f32 %v12460, %v12512
    %v12514 = vpop.f32.mrf.mxu0
    %v12515 = vadd.f32 %v12462, %v12514
    %12516 = vdwg.mxu0
    %12517 = vmatprep.subr.bf16.mxu0 %v11566
    %12518 = vmatpush1.bf16.msra.mxu0 %v11565
    %12519 = vmatprep.subr.bf16.mxu0 %v11562
    %12520 = vmatpush1.bf16.msra.mxu0 %v11561
    %12521 = vmatprep.subr.bf16.mxu0 %v11558
    %12522 = vmatpush1.bf16.msra.mxu0 %v11557
    %12523 = vmatprep.subr.bf16.mxu0 %v11554
    %12524 = vmatpush1.bf16.msra.mxu0 %v11553
    %12525 = vmatprep.subr.bf16.mxu0 %v11550
    %12526 = vmatpush1.bf16.msra.mxu0 %v11549
    %12527 = vmatprep.subr.bf16.mxu0 %v11546
    %12528 = vmatpush1.bf16.msra.mxu0 %v11545
    %12529 = vmatprep.subr.bf16.mxu0 %v11542
    %12530 = vmatpush1.bf16.msra.mxu0 %v11541
    %12531 = vmatprep.subr.bf16.mxu0 %v11538
    %12532 = vmatpush1.bf16.msra.mxu0 %v11537
    %12533 = vmatprep.subr.bf16.mxu0 %v11598
    %12534 = vmatpush2.bf16.msra.mxu0 %v11597
    %12535 = vmatprep.subr.bf16.mxu0 %v11594
    %12536 = vmatpush2.bf16.msra.mxu0 %v11593
    %12537 = vmatprep.subr.bf16.mxu0 %v11590
    %12538 = vmatpush2.bf16.msra.mxu0 %v11589
    %12539 = vmatprep.subr.bf16.mxu0 %v11586
    %12540 = vmatpush2.bf16.msra.mxu0 %v11585
    %12541 = vmatprep.subr.bf16.mxu0 %v11582
    %12542 = vmatpush2.bf16.msra.mxu0 %v11581
    %12543 = vmatprep.subr.bf16.mxu0 %v11578
    %12544 = vmatpush2.bf16.msra.mxu0 %v11577
    %12545 = vmatprep.subr.bf16.mxu0 %v11574
    %12546 = vmatpush2.bf16.msra.mxu0 %v11573
    %12547 = vmatprep.subr.bf16.mxu0 %v11570
    %12548 = vmatpush2.bf16.msra.mxu0 %v11569
    %12549 = vmatprep.mubr.bf16.mxu0 %v9722
    %12550 = vmatmul.mubr.bf16.gmra.mxu0 %v9721
    %v12551 = vpop.f32.mrf.mxu0
    %v12552 = vadd.f32 %v12499, %v12551
    %v12553 = vpop.f32.mrf.mxu0
    %v12554 = vadd.f32 %v12501, %v12553
    %v12555 = vpop.f32.mrf.mxu0
    %v12556 = vadd.f32 %v12503, %v12555
    %v12557 = vpop.f32.mrf.mxu0
    %v12558 = vadd.f32 %v12505, %v12557
    %12559 = vmatprep.mubr.bf16.mxu0 %v9738
    %12560 = vmatmul.mubr.bf16.gmra.mxu0 %v9737
    %v12561 = vpop.f32.mrf.mxu0
    %v12562 = vadd.f32 %v12509, %v12561
    %v12563 = vpop.f32.mrf.mxu0
    %v12564 = vadd.f32 %v12511, %v12563
    %v12565 = vpop.f32.mrf.mxu0
    %v12566 = vadd.f32 %v12513, %v12565
    %v12567 = vpop.f32.mrf.mxu0
    %v12568 = vadd.f32 %v12515, %v12567
    %12569 = vdwg.mxu0
    %12570 = vmatprep.subr.bf16.mxu0 %v11630
    %12571 = vmatpush1.bf16.msra.mxu0 %v11629
    %12572 = vmatprep.subr.bf16.mxu0 %v11626
    %12573 = vmatpush1.bf16.msra.mxu0 %v11625
    %12574 = vmatprep.subr.bf16.mxu0 %v11622
    %12575 = vmatpush1.bf16.msra.mxu0 %v11621
    %12576 = vmatprep.subr.bf16.mxu0 %v11618
    %12577 = vmatpush1.bf16.msra.mxu0 %v11617
    %12578 = vmatprep.subr.bf16.mxu0 %v11614
    %12579 = vmatpush1.bf16.msra.mxu0 %v11613
    %12580 = vmatprep.subr.bf16.mxu0 %v11610
    %12581 = vmatpush1.bf16.msra.mxu0 %v11609
    %12582 = vmatprep.subr.bf16.mxu0 %v11606
    %12583 = vmatpush1.bf16.msra.mxu0 %v11605
    %12584 = vmatprep.subr.bf16.mxu0 %v11602
    %12585 = vmatpush1.bf16.msra.mxu0 %v11601
    %12586 = vmatprep.subr.bf16.mxu0 %v11662
    %12587 = vmatpush2.bf16.msra.mxu0 %v11661
    %12588 = vmatprep.subr.bf16.mxu0 %v11658
    %12589 = vmatpush2.bf16.msra.mxu0 %v11657
    %12590 = vmatprep.subr.bf16.mxu0 %v11654
    %12591 = vmatpush2.bf16.msra.mxu0 %v11653
    %12592 = vmatprep.subr.bf16.mxu0 %v11650
    %12593 = vmatpush2.bf16.msra.mxu0 %v11649
    %12594 = vmatprep.subr.bf16.mxu0 %v11646
    %12595 = vmatpush2.bf16.msra.mxu0 %v11645
    %12596 = vmatprep.subr.bf16.mxu0 %v11642
    %12597 = vmatpush2.bf16.msra.mxu0 %v11641
    %12598 = vmatprep.subr.bf16.mxu0 %v11638
    %12599 = vmatpush2.bf16.msra.mxu0 %v11637
    %12600 = vmatprep.subr.bf16.mxu0 %v11634
    %12601 = vmatpush2.bf16.msra.mxu0 %v11633
    %12602 = vmatprep.mubr.bf16.mxu0 %v9724
    %12603 = vmatmul.mubr.bf16.gmra.mxu0 %v9723
    %v12604 = vpop.f32.mrf.mxu0
    %v12605 = vadd.f32 %v12552, %v12604
    %v12606 = vpop.f32.mrf.mxu0
    %v12607 = vadd.f32 %v12554, %v12606
    %v12608 = vpop.f32.mrf.mxu0
    %v12609 = vadd.f32 %v12556, %v12608
    %v12610 = vpop.f32.mrf.mxu0
    %v12611 = vadd.f32 %v12558, %v12610
    %12612 = vmatprep.mubr.bf16.mxu0 %v9740
    %12613 = vmatmul.mubr.bf16.gmra.mxu0 %v9739
    %v12614 = vpop.f32.mrf.mxu0
    %v12615 = vadd.f32 %v12562, %v12614
    %v12616 = vpop.f32.mrf.mxu0
    %v12617 = vadd.f32 %v12564, %v12616
    %v12618 = vpop.f32.mrf.mxu0
    %v12619 = vadd.f32 %v12566, %v12618
    %v12620 = vpop.f32.mrf.mxu0
    %v12621 = vadd.f32 %v12568, %v12620
    %12622 = vdwg.mxu0
    %12623 = vmatprep.subr.bf16.mxu0 %v11694
    %12624 = vmatpush1.bf16.msra.mxu0 %v11693
    %12625 = vmatprep.subr.bf16.mxu0 %v11690
    %12626 = vmatpush1.bf16.msra.mxu0 %v11689
    %12627 = vmatprep.subr.bf16.mxu0 %v11686
    %12628 = vmatpush1.bf16.msra.mxu0 %v11685
    %12629 = vmatprep.subr.bf16.mxu0 %v11682
    %12630 = vmatpush1.bf16.msra.mxu0 %v11681
    %12631 = vmatprep.subr.bf16.mxu0 %v11678
    %12632 = vmatpush1.bf16.msra.mxu0 %v11677
    %12633 = vmatprep.subr.bf16.mxu0 %v11674
    %12634 = vmatpush1.bf16.msra.mxu0 %v11673
    %12635 = vmatprep.subr.bf16.mxu0 %v11670
    %12636 = vmatpush1.bf16.msra.mxu0 %v11669
    %12637 = vmatprep.subr.bf16.mxu0 %v11666
    %12638 = vmatpush1.bf16.msra.mxu0 %v11665
    %12639 = vmatprep.subr.bf16.mxu0 %v11726
    %12640 = vmatpush2.bf16.msra.mxu0 %v11725
    %12641 = vmatprep.subr.bf16.mxu0 %v11722
    %12642 = vmatpush2.bf16.msra.mxu0 %v11721
    %12643 = vmatprep.subr.bf16.mxu0 %v11718
    %12644 = vmatpush2.bf16.msra.mxu0 %v11717
    %12645 = vmatprep.subr.bf16.mxu0 %v11714
    %12646 = vmatpush2.bf16.msra.mxu0 %v11713
    %12647 = vmatprep.subr.bf16.mxu0 %v11710
    %12648 = vmatpush2.bf16.msra.mxu0 %v11709
    %12649 = vmatprep.subr.bf16.mxu0 %v11706
    %12650 = vmatpush2.bf16.msra.mxu0 %v11705
    %12651 = vmatprep.subr.bf16.mxu0 %v11702
    %12652 = vmatpush2.bf16.msra.mxu0 %v11701
    %12653 = vmatprep.subr.bf16.mxu0 %v11698
    %12654 = vmatpush2.bf16.msra.mxu0 %v11697
    %12655 = vmatprep.mubr.bf16.mxu0 %v9726
    %12656 = vmatmul.mubr.bf16.gmra.mxu0 %v9725
    %v12657 = vpop.f32.mrf.mxu0
    %v12658 = vadd.f32 %v12605, %v12657
    %v12659 = vpop.f32.mrf.mxu0
    %v12660 = vadd.f32 %v12607, %v12659
    %v12661 = vpop.f32.mrf.mxu0
    %v12662 = vadd.f32 %v12609, %v12661
    %v12663 = vpop.f32.mrf.mxu0
    %v12664 = vadd.f32 %v12611, %v12663
    %12665 = vmatprep.mubr.bf16.mxu0 %v9742
    %12666 = vmatmul.mubr.bf16.gmra.mxu0 %v9741
    %v12667 = vpop.f32.mrf.mxu0
    %v12668 = vadd.f32 %v12615, %v12667
    %v12669 = vpop.f32.mrf.mxu0
    %v12670 = vadd.f32 %v12617, %v12669
    %v12671 = vpop.f32.mrf.mxu0
    %v12672 = vadd.f32 %v12619, %v12671
    %v12673 = vpop.f32.mrf.mxu0
    %v12674 = vadd.f32 %v12621, %v12673
    %12675 = vdwg.mxu0
    %12676 = vmatprep.subr.bf16.mxu0 %v11758
    %12677 = vmatpush1.bf16.msra.mxu0 %v11757
    %12678 = vmatprep.subr.bf16.mxu0 %v11754
    %12679 = vmatpush1.bf16.msra.mxu0 %v11753
    %12680 = vmatprep.subr.bf16.mxu0 %v11750
    %12681 = vmatpush1.bf16.msra.mxu0 %v11749
    %12682 = vmatprep.subr.bf16.mxu0 %v11746
    %12683 = vmatpush1.bf16.msra.mxu0 %v11745
    %12684 = vmatprep.subr.bf16.mxu0 %v11742
    %12685 = vmatpush1.bf16.msra.mxu0 %v11741
    %12686 = vmatprep.subr.bf16.mxu0 %v11738
    %12687 = vmatpush1.bf16.msra.mxu0 %v11737
    %12688 = vmatprep.subr.bf16.mxu0 %v11734
    %12689 = vmatpush1.bf16.msra.mxu0 %v11733
    %12690 = vmatprep.subr.bf16.mxu0 %v11730
    %12691 = vmatpush1.bf16.msra.mxu0 %v11729
    %12692 = vmatprep.subr.bf16.mxu0 %v11790
    %12693 = vmatpush2.bf16.msra.mxu0 %v11789
    %12694 = vmatprep.subr.bf16.mxu0 %v11786
    %12695 = vmatpush2.bf16.msra.mxu0 %v11785
    %12696 = vmatprep.subr.bf16.mxu0 %v11782
    %12697 = vmatpush2.bf16.msra.mxu0 %v11781
    %12698 = vmatprep.subr.bf16.mxu0 %v11778
    %12699 = vmatpush2.bf16.msra.mxu0 %v11777
    %12700 = vmatprep.subr.bf16.mxu0 %v11774
    %12701 = vmatpush2.bf16.msra.mxu0 %v11773
    %12702 = vmatprep.subr.bf16.mxu0 %v11770
    %12703 = vmatpush2.bf16.msra.mxu0 %v11769
    %12704 = vmatprep.subr.bf16.mxu0 %v11766
    %12705 = vmatpush2.bf16.msra.mxu0 %v11765
    %12706 = vmatprep.subr.bf16.mxu0 %v11762
    %12707 = vmatpush2.bf16.msra.mxu0 %v11761
    %12708 = vmatprep.mubr.bf16.mxu0 %v9728
    %12709 = vmatmul.mubr.bf16.gmra.mxu0 %v9727
    %v12710 = vpop.f32.mrf.mxu0
    %v12711 = vadd.f32 %v12658, %v12710
    %v12712 = vpop.f32.mrf.mxu0
    %v12713 = vadd.f32 %v12660, %v12712
    %v12714 = vpop.f32.mrf.mxu0
    %v12715 = vadd.f32 %v12662, %v12714
    %v12716 = vpop.f32.mrf.mxu0
    %v12717 = vadd.f32 %v12664, %v12716
    %12718 = vmatprep.mubr.bf16.mxu0 %v9744
    %12719 = vmatmul.mubr.bf16.gmra.mxu0 %v9743
    %v12720 = vpop.f32.mrf.mxu0
    %v12721 = vadd.f32 %v12668, %v12720
    %v12722 = vpop.f32.mrf.mxu0
    %v12723 = vadd.f32 %v12670, %v12722
    %v12724 = vpop.f32.mrf.mxu0
    %v12725 = vadd.f32 %v12672, %v12724
    %v12726 = vpop.f32.mrf.mxu0
    %v12727 = vadd.f32 %v12674, %v12726
    %12728 = vdwg.mxu0
    %12729 = vmatprep.subr.bf16.mxu0 %v11312
    %12730 = vmatpush1.bf16.msra.mxu0 %v11311
    %12731 = vmatprep.subr.bf16.mxu0 %v11308
    %12732 = vmatpush1.bf16.msra.mxu0 %v11307
    %12733 = vmatprep.subr.bf16.mxu0 %v11304
    %12734 = vmatpush1.bf16.msra.mxu0 %v11303
    %12735 = vmatprep.subr.bf16.mxu0 %v11300
    %12736 = vmatpush1.bf16.msra.mxu0 %v11299
    %12737 = vmatprep.subr.bf16.mxu0 %v11296
    %12738 = vmatpush1.bf16.msra.mxu0 %v11295
    %12739 = vmatprep.subr.bf16.mxu0 %v11292
    %12740 = vmatpush1.bf16.msra.mxu0 %v11291
    %12741 = vmatprep.subr.bf16.mxu0 %v11288
    %12742 = vmatpush1.bf16.msra.mxu0 %v11287
    %12743 = vmatprep.subr.bf16.mxu0 %v11284
    %12744 = vmatpush1.bf16.msra.mxu0 %v11283
    %12745 = vmatprep.subr.bf16.mxu0 %v11344
    %12746 = vmatpush2.bf16.msra.mxu0 %v11343
    %12747 = vmatprep.subr.bf16.mxu0 %v11340
    %12748 = vmatpush2.bf16.msra.mxu0 %v11339
    %12749 = vmatprep.subr.bf16.mxu0 %v11336
    %12750 = vmatpush2.bf16.msra.mxu0 %v11335
    %12751 = vmatprep.subr.bf16.mxu0 %v11332
    %12752 = vmatpush2.bf16.msra.mxu0 %v11331
    %12753 = vmatprep.subr.bf16.mxu0 %v11328
    %12754 = vmatpush2.bf16.msra.mxu0 %v11327
    %12755 = vmatprep.subr.bf16.mxu0 %v11324
    %12756 = vmatpush2.bf16.msra.mxu0 %v11323
    %12757 = vmatprep.subr.bf16.mxu0 %v11320
    %12758 = vmatpush2.bf16.msra.mxu0 %v11319
    %12759 = vmatprep.subr.bf16.mxu0 %v11316
    %12760 = vmatpush2.bf16.msra.mxu0 %v11315
    %12761 = vmatprep.mubr.bf16.mxu0 %v9714
    %12762 = vmatmul.mubr.bf16.gmra.mxu0 %v9713
    %v12763 = vpop.f32.mrf.mxu0
    %v12764 = vadd.f32 0.0, %v12763
    %v12765 = vpop.f32.mrf.mxu0
    %v12766 = vadd.f32 0.0, %v12765
    %v12767 = vpop.f32.mrf.mxu0
    %v12768 = vadd.f32 0.0, %v12767
    %v12769 = vpop.f32.mrf.mxu0
    %v12770 = vadd.f32 0.0, %v12769
    %12771 = vmatprep.mubr.bf16.mxu0 %v9730
    %12772 = vmatmul.mubr.bf16.gmra.mxu0 %v9729
    %v12773 = vpop.f32.mrf.mxu0
    %v12774 = vadd.f32 0.0, %v12773
    %v12775 = vpop.f32.mrf.mxu0
    %v12776 = vadd.f32 0.0, %v12775
    %v12777 = vpop.f32.mrf.mxu0
    %v12778 = vadd.f32 0.0, %v12777
    %v12779 = vpop.f32.mrf.mxu0
    %v12780 = vadd.f32 0.0, %v12779
    %12781 = vdwg.mxu0
    %12782 = vmatprep.subr.bf16.mxu0 %v11376
    %12783 = vmatpush1.bf16.msra.mxu0 %v11375
    %12784 = vmatprep.subr.bf16.mxu0 %v11372
    %12785 = vmatpush1.bf16.msra.mxu0 %v11371
    %12786 = vmatprep.subr.bf16.mxu0 %v11368
    %12787 = vmatpush1.bf16.msra.mxu0 %v11367
    %12788 = vmatprep.subr.bf16.mxu0 %v11364
    %12789 = vmatpush1.bf16.msra.mxu0 %v11363
    %12790 = vmatprep.subr.bf16.mxu0 %v11360
    %12791 = vmatpush1.bf16.msra.mxu0 %v11359
    %12792 = vmatprep.subr.bf16.mxu0 %v11356
    %12793 = vmatpush1.bf16.msra.mxu0 %v11355
    %12794 = vmatprep.subr.bf16.mxu0 %v11352
    %12795 = vmatpush1.bf16.msra.mxu0 %v11351
    %12796 = vmatprep.subr.bf16.mxu0 %v11348
    %12797 = vmatpush1.bf16.msra.mxu0 %v11347
    %12798 = vmatprep.subr.bf16.mxu0 %v11408
    %12799 = vmatpush2.bf16.msra.mxu0 %v11407
    %12800 = vmatprep.subr.bf16.mxu0 %v11404
    %12801 = vmatpush2.bf16.msra.mxu0 %v11403
    %12802 = vmatprep.subr.bf16.mxu0 %v11400
    %12803 = vmatpush2.bf16.msra.mxu0 %v11399
    %12804 = vmatprep.subr.bf16.mxu0 %v11396
    %12805 = vmatpush2.bf16.msra.mxu0 %v11395
    %12806 = vmatprep.subr.bf16.mxu0 %v11392
    %12807 = vmatpush2.bf16.msra.mxu0 %v11391
    %12808 = vmatprep.subr.bf16.mxu0 %v11388
    %12809 = vmatpush2.bf16.msra.mxu0 %v11387
    %12810 = vmatprep.subr.bf16.mxu0 %v11384
    %12811 = vmatpush2.bf16.msra.mxu0 %v11383
    %12812 = vmatprep.subr.bf16.mxu0 %v11380
    %12813 = vmatpush2.bf16.msra.mxu0 %v11379
    %12814 = vmatprep.mubr.bf16.mxu0 %v9716
    %12815 = vmatmul.mubr.bf16.gmra.mxu0 %v9715
    %v12816 = vpop.f32.mrf.mxu0
    %v12817 = vadd.f32 %v12764, %v12816
    %v12818 = vpop.f32.mrf.mxu0
    %v12819 = vadd.f32 %v12766, %v12818
    %v12820 = vpop.f32.mrf.mxu0
    %v12821 = vadd.f32 %v12768, %v12820
    %v12822 = vpop.f32.mrf.mxu0
    %v12823 = vadd.f32 %v12770, %v12822
    %12824 = vmatprep.mubr.bf16.mxu0 %v9732
    %12825 = vmatmul.mubr.bf16.gmra.mxu0 %v9731
    %v12826 = vpop.f32.mrf.mxu0
    %v12827 = vadd.f32 %v12774, %v12826
    %v12828 = vpop.f32.mrf.mxu0
    %v12829 = vadd.f32 %v12776, %v12828
    %v12830 = vpop.f32.mrf.mxu0
    %v12831 = vadd.f32 %v12778, %v12830
    %v12832 = vpop.f32.mrf.mxu0
    %v12833 = vadd.f32 %v12780, %v12832
    %12834 = vdwg.mxu0
    %12835 = vmatprep.subr.bf16.mxu0 %v11440
    %12836 = vmatpush1.bf16.msra.mxu0 %v11439
    %12837 = vmatprep.subr.bf16.mxu0 %v11436
    %12838 = vmatpush1.bf16.msra.mxu0 %v11435
    %12839 = vmatprep.subr.bf16.mxu0 %v11432
    %12840 = vmatpush1.bf16.msra.mxu0 %v11431
    %12841 = vmatprep.subr.bf16.mxu0 %v11428
    %12842 = vmatpush1.bf16.msra.mxu0 %v11427
    %12843 = vmatprep.subr.bf16.mxu0 %v11424
    %12844 = vmatpush1.bf16.msra.mxu0 %v11423
    %12845 = vmatprep.subr.bf16.mxu0 %v11420
    %12846 = vmatpush1.bf16.msra.mxu0 %v11419
    %12847 = vmatprep.subr.bf16.mxu0 %v11416
    %12848 = vmatpush1.bf16.msra.mxu0 %v11415
    %12849 = vmatprep.subr.bf16.mxu0 %v11412
    %12850 = vmatpush1.bf16.msra.mxu0 %v11411
    %12851 = vmatprep.subr.bf16.mxu0 %v11472
    %12852 = vmatpush2.bf16.msra.mxu0 %v11471
    %12853 = vmatprep.subr.bf16.mxu0 %v11468
    %12854 = vmatpush2.bf16.msra.mxu0 %v11467
    %12855 = vmatprep.subr.bf16.mxu0 %v11464
    %12856 = vmatpush2.bf16.msra.mxu0 %v11463
    %12857 = vmatprep.subr.bf16.mxu0 %v11460
    %12858 = vmatpush2.bf16.msra.mxu0 %v11459
    %12859 = vmatprep.subr.bf16.mxu0 %v11456
    %12860 = vmatpush2.bf16.msra.mxu0 %v11455
    %12861 = vmatprep.subr.bf16.mxu0 %v11452
    %12862 = vmatpush2.bf16.msra.mxu0 %v11451
    %12863 = vmatprep.subr.bf16.mxu0 %v11448
    %12864 = vmatpush2.bf16.msra.mxu0 %v11447
    %12865 = vmatprep.subr.bf16.mxu0 %v11444
    %12866 = vmatpush2.bf16.msra.mxu0 %v11443
    %12867 = vmatprep.mubr.bf16.mxu0 %v9718
    %12868 = vmatmul.mubr.bf16.gmra.mxu0 %v9717
    %v12869 = vpop.f32.mrf.mxu0
    %v12870 = vadd.f32 %v12817, %v12869
    %v12871 = vpop.f32.mrf.mxu0
    %v12872 = vadd.f32 %v12819, %v12871
    %v12873 = vpop.f32.mrf.mxu0
    %v12874 = vadd.f32 %v12821, %v12873
    %v12875 = vpop.f32.mrf.mxu0
    %v12876 = vadd.f32 %v12823, %v12875
    %12877 = vmatprep.mubr.bf16.mxu0 %v9734
    %12878 = vmatmul.mubr.bf16.gmra.mxu0 %v9733
    %v12879 = vpop.f32.mrf.mxu0
    %v12880 = vadd.f32 %v12827, %v12879
    %v12881 = vpop.f32.mrf.mxu0
    %v12882 = vadd.f32 %v12829, %v12881
    %v12883 = vpop.f32.mrf.mxu0
    %v12884 = vadd.f32 %v12831, %v12883
    %v12885 = vpop.f32.mrf.mxu0
    %v12886 = vadd.f32 %v12833, %v12885
    %12887 = vdwg.mxu0
    %12888 = vmatprep.subr.bf16.mxu0 %v11504
    %12889 = vmatpush1.bf16.msra.mxu0 %v11503
    %12890 = vmatprep.subr.bf16.mxu0 %v11500
    %12891 = vmatpush1.bf16.msra.mxu0 %v11499
    %12892 = vmatprep.subr.bf16.mxu0 %v11496
    %12893 = vmatpush1.bf16.msra.mxu0 %v11495
    %12894 = vmatprep.subr.bf16.mxu0 %v11492
    %12895 = vmatpush1.bf16.msra.mxu0 %v11491
    %12896 = vmatprep.subr.bf16.mxu0 %v11488
    %12897 = vmatpush1.bf16.msra.mxu0 %v11487
    %12898 = vmatprep.subr.bf16.mxu0 %v11484
    %12899 = vmatpush1.bf16.msra.mxu0 %v11483
    %12900 = vmatprep.subr.bf16.mxu0 %v11480
    %12901 = vmatpush1.bf16.msra.mxu0 %v11479
    %12902 = vmatprep.subr.bf16.mxu0 %v11476
    %12903 = vmatpush1.bf16.msra.mxu0 %v11475
    %12904 = vmatprep.subr.bf16.mxu0 %v11536
    %12905 = vmatpush2.bf16.msra.mxu0 %v11535
    %12906 = vmatprep.subr.bf16.mxu0 %v11532
    %12907 = vmatpush2.bf16.msra.mxu0 %v11531
    %12908 = vmatprep.subr.bf16.mxu0 %v11528
    %12909 = vmatpush2.bf16.msra.mxu0 %v11527
    %12910 = vmatprep.subr.bf16.mxu0 %v11524
    %12911 = vmatpush2.bf16.msra.mxu0 %v11523
    %12912 = vmatprep.subr.bf16.mxu0 %v11520
    %12913 = vmatpush2.bf16.msra.mxu0 %v11519
    %12914 = vmatprep.subr.bf16.mxu0 %v11516
    %12915 = vmatpush2.bf16.msra.mxu0 %v11515
    %12916 = vmatprep.subr.bf16.mxu0 %v11512
    %12917 = vmatpush2.bf16.msra.mxu0 %v11511
    %12918 = vmatprep.subr.bf16.mxu0 %v11508
    %12919 = vmatpush2.bf16.msra.mxu0 %v11507
    %12920 = vmatprep.mubr.bf16.mxu0 %v9720
    %12921 = vmatmul.mubr.bf16.gmra.mxu0 %v9719
    %v12922 = vpop.f32.mrf.mxu0
    %v12923 = vadd.f32 %v12870, %v12922
    %v12924 = vpop.f32.mrf.mxu0
    %v12925 = vadd.f32 %v12872, %v12924
    %v12926 = vpop.f32.mrf.mxu0
    %v12927 = vadd.f32 %v12874, %v12926
    %v12928 = vpop.f32.mrf.mxu0
    %v12929 = vadd.f32 %v12876, %v12928
    %12930 = vmatprep.mubr.bf16.mxu0 %v9736
    %12931 = vmatmul.mubr.bf16.gmra.mxu0 %v9735
    %v12932 = vpop.f32.mrf.mxu0
    %v12933 = vadd.f32 %v12880, %v12932
    %v12934 = vpop.f32.mrf.mxu0
    %v12935 = vadd.f32 %v12882, %v12934
    %v12936 = vpop.f32.mrf.mxu0
    %v12937 = vadd.f32 %v12884, %v12936
    %v12938 = vpop.f32.mrf.mxu0
    %v12939 = vadd.f32 %v12886, %v12938
    %12940 = vdwg.mxu0
    %12941 = vmatprep.subr.bf16.mxu0 %v11568
    %12942 = vmatpush1.bf16.msra.mxu0 %v11567
    %12943 = vmatprep.subr.bf16.mxu0 %v11564
    %12944 = vmatpush1.bf16.msra.mxu0 %v11563
    %12945 = vmatprep.subr.bf16.mxu0 %v11560
    %12946 = vmatpush1.bf16.msra.mxu0 %v11559
    %12947 = vmatprep.subr.bf16.mxu0 %v11556
    %12948 = vmatpush1.bf16.msra.mxu0 %v11555
    %12949 = vmatprep.subr.bf16.mxu0 %v11552
    %12950 = vmatpush1.bf16.msra.mxu0 %v11551
    %12951 = vmatprep.subr.bf16.mxu0 %v11548
    %12952 = vmatpush1.bf16.msra.mxu0 %v11547
    %12953 = vmatprep.subr.bf16.mxu0 %v11544
    %12954 = vmatpush1.bf16.msra.mxu0 %v11543
    %12955 = vmatprep.subr.bf16.mxu0 %v11540
    %12956 = vmatpush1.bf16.msra.mxu0 %v11539
    %12957 = vmatprep.subr.bf16.mxu0 %v11600
    %12958 = vmatpush2.bf16.msra.mxu0 %v11599
    %12959 = vmatprep.subr.bf16.mxu0 %v11596
    %12960 = vmatpush2.bf16.msra.mxu0 %v11595
    %12961 = vmatprep.subr.bf16.mxu0 %v11592
    %12962 = vmatpush2.bf16.msra.mxu0 %v11591
    %12963 = vmatprep.subr.bf16.mxu0 %v11588
    %12964 = vmatpush2.bf16.msra.mxu0 %v11587
    %12965 = vmatprep.subr.bf16.mxu0 %v11584
    %12966 = vmatpush2.bf16.msra.mxu0 %v11583
    %12967 = vmatprep.subr.bf16.mxu0 %v11580
    %12968 = vmatpush2.bf16.msra.mxu0 %v11579
    %12969 = vmatprep.subr.bf16.mxu0 %v11576
    %12970 = vmatpush2.bf16.msra.mxu0 %v11575
    %12971 = vmatprep.subr.bf16.mxu0 %v11572
    %12972 = vmatpush2.bf16.msra.mxu0 %v11571
    %12973 = vmatprep.mubr.bf16.mxu0 %v9722
    %12974 = vmatmul.mubr.bf16.gmra.mxu0 %v9721
    %v12975 = vpop.f32.mrf.mxu0
    %v12976 = vadd.f32 %v12923, %v12975
    %v12977 = vpop.f32.mrf.mxu0
    %v12978 = vadd.f32 %v12925, %v12977
    %v12979 = vpop.f32.mrf.mxu0
    %v12980 = vadd.f32 %v12927, %v12979
    %v12981 = vpop.f32.mrf.mxu0
    %v12982 = vadd.f32 %v12929, %v12981
    %12983 = vmatprep.mubr.bf16.mxu0 %v9738
    %12984 = vmatmul.mubr.bf16.gmra.mxu0 %v9737
    %v12985 = vpop.f32.mrf.mxu0
    %v12986 = vadd.f32 %v12933, %v12985
    %v12987 = vpop.f32.mrf.mxu0
    %v12988 = vadd.f32 %v12935, %v12987
    %v12989 = vpop.f32.mrf.mxu0
    %v12990 = vadd.f32 %v12937, %v12989
    %v12991 = vpop.f32.mrf.mxu0
    %v12992 = vadd.f32 %v12939, %v12991
    %12993 = vdwg.mxu0
    %12994 = vmatprep.subr.bf16.mxu0 %v11632
    %12995 = vmatpush1.bf16.msra.mxu0 %v11631
    %12996 = vmatprep.subr.bf16.mxu0 %v11628
    %12997 = vmatpush1.bf16.msra.mxu0 %v11627
    %12998 = vmatprep.subr.bf16.mxu0 %v11624
    %12999 = vmatpush1.bf16.msra.mxu0 %v11623
    %13000 = vmatprep.subr.bf16.mxu0 %v11620
    %13001 = vmatpush1.bf16.msra.mxu0 %v11619
    %13002 = vmatprep.subr.bf16.mxu0 %v11616
    %13003 = vmatpush1.bf16.msra.mxu0 %v11615
    %13004 = vmatprep.subr.bf16.mxu0 %v11612
    %13005 = vmatpush1.bf16.msra.mxu0 %v11611
    %13006 = vmatprep.subr.bf16.mxu0 %v11608
    %13007 = vmatpush1.bf16.msra.mxu0 %v11607
    %13008 = vmatprep.subr.bf16.mxu0 %v11604
    %13009 = vmatpush1.bf16.msra.mxu0 %v11603
    %13010 = vmatprep.subr.bf16.mxu0 %v11664
    %13011 = vmatpush2.bf16.msra.mxu0 %v11663
    %13012 = vmatprep.subr.bf16.mxu0 %v11660
    %13013 = vmatpush2.bf16.msra.mxu0 %v11659
    %13014 = vmatprep.subr.bf16.mxu0 %v11656
    %13015 = vmatpush2.bf16.msra.mxu0 %v11655
    %13016 = vmatprep.subr.bf16.mxu0 %v11652
    %13017 = vmatpush2.bf16.msra.mxu0 %v11651
    %13018 = vmatprep.subr.bf16.mxu0 %v11648
    %13019 = vmatpush2.bf16.msra.mxu0 %v11647
    %13020 = vmatprep.subr.bf16.mxu0 %v11644
    %13021 = vmatpush2.bf16.msra.mxu0 %v11643
    %13022 = vmatprep.subr.bf16.mxu0 %v11640
    %13023 = vmatpush2.bf16.msra.mxu0 %v11639
    %13024 = vmatprep.subr.bf16.mxu0 %v11636
    %13025 = vmatpush2.bf16.msra.mxu0 %v11635
    %13026 = vmatprep.mubr.bf16.mxu0 %v9724
    %13027 = vmatmul.mubr.bf16.gmra.mxu0 %v9723
    %v13028 = vpop.f32.mrf.mxu0
    %v13029 = vadd.f32 %v12976, %v13028
    %v13030 = vpop.f32.mrf.mxu0
    %v13031 = vadd.f32 %v12978, %v13030
    %v13032 = vpop.f32.mrf.mxu0
    %v13033 = vadd.f32 %v12980, %v13032
    %v13034 = vpop.f32.mrf.mxu0
    %v13035 = vadd.f32 %v12982, %v13034
    %13036 = vmatprep.mubr.bf16.mxu0 %v9740
    %13037 = vmatmul.mubr.bf16.gmra.mxu0 %v9739
    %v13038 = vpop.f32.mrf.mxu0
    %v13039 = vadd.f32 %v12986, %v13038
    %v13040 = vpop.f32.mrf.mxu0
    %v13041 = vadd.f32 %v12988, %v13040
    %v13042 = vpop.f32.mrf.mxu0
    %v13043 = vadd.f32 %v12990, %v13042
    %v13044 = vpop.f32.mrf.mxu0
    %v13045 = vadd.f32 %v12992, %v13044
    %13046 = vdwg.mxu0
    %13047 = vmatprep.subr.bf16.mxu0 %v11696
    %13048 = vmatpush1.bf16.msra.mxu0 %v11695
    %13049 = vmatprep.subr.bf16.mxu0 %v11692
    %13050 = vmatpush1.bf16.msra.mxu0 %v11691
    %13051 = vmatprep.subr.bf16.mxu0 %v11688
    %13052 = vmatpush1.bf16.msra.mxu0 %v11687
    %13053 = vmatprep.subr.bf16.mxu0 %v11684
    %13054 = vmatpush1.bf16.msra.mxu0 %v11683
    %13055 = vmatprep.subr.bf16.mxu0 %v11680
    %13056 = vmatpush1.bf16.msra.mxu0 %v11679
    %13057 = vmatprep.subr.bf16.mxu0 %v11676
    %13058 = vmatpush1.bf16.msra.mxu0 %v11675
    %13059 = vmatprep.subr.bf16.mxu0 %v11672
    %13060 = vmatpush1.bf16.msra.mxu0 %v11671
    %13061 = vmatprep.subr.bf16.mxu0 %v11668
    %13062 = vmatpush1.bf16.msra.mxu0 %v11667
    %13063 = vmatprep.subr.bf16.mxu0 %v11728
    %13064 = vmatpush2.bf16.msra.mxu0 %v11727
    %13065 = vmatprep.subr.bf16.mxu0 %v11724
    %13066 = vmatpush2.bf16.msra.mxu0 %v11723
    %13067 = vmatprep.subr.bf16.mxu0 %v11720
    %13068 = vmatpush2.bf16.msra.mxu0 %v11719
    %13069 = vmatprep.subr.bf16.mxu0 %v11716
    %13070 = vmatpush2.bf16.msra.mxu0 %v11715
    %13071 = vmatprep.subr.bf16.mxu0 %v11712
    %13072 = vmatpush2.bf16.msra.mxu0 %v11711
    %13073 = vmatprep.subr.bf16.mxu0 %v11708
    %13074 = vmatpush2.bf16.msra.mxu0 %v11707
    %13075 = vmatprep.subr.bf16.mxu0 %v11704
    %13076 = vmatpush2.bf16.msra.mxu0 %v11703
    %13077 = vmatprep.subr.bf16.mxu0 %v11700
    %13078 = vmatpush2.bf16.msra.mxu0 %v11699
    %13079 = vmatprep.mubr.bf16.mxu0 %v9726
    %13080 = vmatmul.mubr.bf16.gmra.mxu0 %v9725
    %v13081 = vpop.f32.mrf.mxu0
    %v13082 = vadd.f32 %v13029, %v13081
    %v13083 = vpop.f32.mrf.mxu0
    %v13084 = vadd.f32 %v13031, %v13083
    %v13085 = vpop.f32.mrf.mxu0
    %v13086 = vadd.f32 %v13033, %v13085
    %v13087 = vpop.f32.mrf.mxu0
    %v13088 = vadd.f32 %v13035, %v13087
    %13089 = vmatprep.mubr.bf16.mxu0 %v9742
    %13090 = vmatmul.mubr.bf16.gmra.mxu0 %v9741
    %v13091 = vpop.f32.mrf.mxu0
    %v13092 = vadd.f32 %v13039, %v13091
    %v13093 = vpop.f32.mrf.mxu0
    %v13094 = vadd.f32 %v13041, %v13093
    %v13095 = vpop.f32.mrf.mxu0
    %v13096 = vadd.f32 %v13043, %v13095
    %v13097 = vpop.f32.mrf.mxu0
    %v13098 = vadd.f32 %v13045, %v13097
    %13099 = vdwg.mxu0
    %13100 = vmatprep.subr.bf16.mxu0 %v11760
    %13101 = vmatpush1.bf16.msra.mxu0 %v11759
    %13102 = vmatprep.subr.bf16.mxu0 %v11756
    %13103 = vmatpush1.bf16.msra.mxu0 %v11755
    %13104 = vmatprep.subr.bf16.mxu0 %v11752
    %13105 = vmatpush1.bf16.msra.mxu0 %v11751
    %13106 = vmatprep.subr.bf16.mxu0 %v11748
    %13107 = vmatpush1.bf16.msra.mxu0 %v11747
    %13108 = vmatprep.subr.bf16.mxu0 %v11744
    %13109 = vmatpush1.bf16.msra.mxu0 %v11743
    %13110 = vmatprep.subr.bf16.mxu0 %v11740
    %13111 = vmatpush1.bf16.msra.mxu0 %v11739
    %13112 = vmatprep.subr.bf16.mxu0 %v11736
    %13113 = vmatpush1.bf16.msra.mxu0 %v11735
    %13114 = vmatprep.subr.bf16.mxu0 %v11732
    %13115 = vmatpush1.bf16.msra.mxu0 %v11731
    %13116 = vmatprep.subr.bf16.mxu0 %v11792
    %13117 = vmatpush2.bf16.msra.mxu0 %v11791
    %13118 = vmatprep.subr.bf16.mxu0 %v11788
    %13119 = vmatpush2.bf16.msra.mxu0 %v11787
    %13120 = vmatprep.subr.bf16.mxu0 %v11784
    %13121 = vmatpush2.bf16.msra.mxu0 %v11783
    %13122 = vmatprep.subr.bf16.mxu0 %v11780
    %13123 = vmatpush2.bf16.msra.mxu0 %v11779
    %13124 = vmatprep.subr.bf16.mxu0 %v11776
    %13125 = vmatpush2.bf16.msra.mxu0 %v11775
    %13126 = vmatprep.subr.bf16.mxu0 %v11772
    %13127 = vmatpush2.bf16.msra.mxu0 %v11771
    %13128 = vmatprep.subr.bf16.mxu0 %v11768
    %13129 = vmatpush2.bf16.msra.mxu0 %v11767
    %13130 = vmatprep.subr.bf16.mxu0 %v11764
    %13131 = vmatpush2.bf16.msra.mxu0 %v11763
    %13132 = vmatprep.mubr.bf16.mxu0 %v9728
    %13133 = vmatmul.mubr.bf16.gmra.mxu0 %v9727
    %v13134 = vpop.f32.mrf.mxu0
    %v13135 = vadd.f32 %v13082, %v13134
    %v13136 = vpop.f32.mrf.mxu0
    %v13137 = vadd.f32 %v13084, %v13136
    %v13138 = vpop.f32.mrf.mxu0
    %v13139 = vadd.f32 %v13086, %v13138
    %v13140 = vpop.f32.mrf.mxu0
    %v13141 = vadd.f32 %v13088, %v13140
    %13142 = vmatprep.mubr.bf16.mxu0 %v9744
    %13143 = vmatmul.mubr.bf16.gmra.mxu0 %v9743
    %v13144 = vpop.f32.mrf.mxu0
    %v13145 = vadd.f32 %v13092, %v13144
    %v13146 = vpop.f32.mrf.mxu0
    %v13147 = vadd.f32 %v13094, %v13146
    %v13148 = vpop.f32.mrf.mxu0
    %v13149 = vadd.f32 %v13096, %v13148
    %v13150 = vpop.f32.mrf.mxu0
    %v13151 = vadd.f32 %v13098, %v13150
    %13152 = vdwg.mxu0
    %v13153 = vadd.f32 %v6089, %v12711
    %v13154 = vadd.f32 %v6090, %v12713
    %v13155 = vadd.f32 %v6091, %v13135
    %v13156 = vadd.f32 %v6092, %v13137
    %v13157 = vadd.f32 %v6093, %v12715
    %v13158 = vadd.f32 %v6094, %v12717
    %v13159 = vadd.f32 %v6095, %v13139
    %v13160 = vadd.f32 %v6096, %v13141
    %v13161 = vadd.f32 %v6097, %v12721
    %v13162 = vadd.f32 %v6098, %v12723
    %v13163 = vadd.f32 %v6099, %v13145
    %v13164 = vadd.f32 %v6100, %v13147
    %v13165 = vadd.f32 %v6101, %v12725
    %v13166 = vadd.f32 %v6102, %v12727
    %v13167 = vadd.f32 %v6103, %v13149
    %v13168 = vadd.f32 %v6104, %v13151
    %v13169 = vpack.c.bf16 %v13157, %v13153
    %v13170 = vpack.c.bf16 %v13158, %v13154
    %v13171 = vpack.c.bf16 %v13159, %v13155
    %v13172 = vpack.c.bf16 %v13160, %v13156
    %v13173 = vpack.c.bf16 %v13165, %v13161
    %v13174 = vpack.c.bf16 %v13166, %v13162
    %v13175 = vpack.c.bf16 %v13167, %v13163
    %v13176 = vpack.c.bf16 %v13168, %v13164
    %v13185 = vunpack.c.l.b16 %v13169
    %v13186 = vunpack.c.l.b16 %v13170
    %v13187 = vunpack.c.l.b16 %v13171
    %v13188 = vunpack.c.l.b16 %v13172
    %v13189 = vunpack.c.h.b16 %v13169
    %v13190 = vunpack.c.h.b16 %v13170
    %v13191 = vunpack.c.h.b16 %v13171
    %v13192 = vunpack.c.h.b16 %v13172
    %v13193 = vunpack.c.l.b16 %v13173
    %v13194 = vunpack.c.l.b16 %v13174
    %v13195 = vunpack.c.l.b16 %v13175
    %v13196 = vunpack.c.l.b16 %v13176
    %v13197 = vunpack.c.h.b16 %v13173
    %v13198 = vunpack.c.h.b16 %v13174
    %v13199 = vunpack.c.h.b16 %v13175
    %v13200 = vunpack.c.h.b16 %v13176
    %v13201 = vpack.c.b16 %v13186, %v13185
    %v13202 = vpack.c.b16 %v13188, %v13187
    %v13203 = vpack.c.b16 %v13190, %v13189
    %v13204 = vpack.c.b16 %v13192, %v13191
    %v13205 = vpack.c.b16 %v13194, %v13193
    %v13206 = vpack.c.b16 %v13196, %v13195
    %v13207 = vpack.c.b16 %v13198, %v13197
    %v13208 = vpack.c.b16 %v13200, %v13199
    %13217 = vst [vmem:[#allocation14] sm:$0xff] %v13201
    %13218 = vst [vmem:[#allocation14 + $0x8] sm:$0xff] %v13202
    %13219 = vst [vmem:[#allocation14 + $0x10] sm:$0xff] %v13203
    %13220 = vst [vmem:[#allocation14 + $0x18] sm:$0xff] %v13204
    %13221 = vst [vmem:[#allocation14 + $0x20] sm:$0xff] %v13205
    %13222 = vst [vmem:[#allocation14 + $0x28] sm:$0xff] %v13206
    %13223 = vst [vmem:[#allocation14 + $0x30] sm:$0xff] %v13207
    %13224 = vst [vmem:[#allocation14 + $0x38] sm:$0xff] %v13208
    %v13225 = vpack.c.bf16 %v196, %v192
    %v13226 = vpack.c.bf16 %v197, %v193
    %v13227 = vpack.c.bf16 %v198, %v194
    %v13228 = vpack.c.bf16 %v199, %v195
    %v13229 = vpack.c.bf16 %v204, %v200
    %v13230 = vpack.c.bf16 %v205, %v201
    %v13231 = vpack.c.bf16 %v206, %v202
    %v13232 = vpack.c.bf16 %v207, %v203
    %v13241 = vunpack.c.l.b16 %v13225
    %v13242 = vunpack.c.l.b16 %v13226
    %v13243 = vunpack.c.l.b16 %v13227
    %v13244 = vunpack.c.l.b16 %v13228
    %v13245 = vunpack.c.h.b16 %v13225
    %v13246 = vunpack.c.h.b16 %v13226
    %v13247 = vunpack.c.h.b16 %v13227
    %v13248 = vunpack.c.h.b16 %v13228
    %v13249 = vunpack.c.l.b16 %v13229
    %v13250 = vunpack.c.l.b16 %v13230
    %v13251 = vunpack.c.l.b16 %v13231
    %v13252 = vunpack.c.l.b16 %v13232
    %v13253 = vunpack.c.h.b16 %v13229
    %v13254 = vunpack.c.h.b16 %v13230
    %v13255 = vunpack.c.h.b16 %v13231
    %v13256 = vunpack.c.h.b16 %v13232
    %v13257 = vpack.c.b16 %v13242, %v13241
    %v13258 = vpack.c.b16 %v13244, %v13243
    %v13259 = vpack.c.b16 %v13246, %v13245
    %v13260 = vpack.c.b16 %v13248, %v13247
    %v13261 = vpack.c.b16 %v13250, %v13249
    %v13262 = vpack.c.b16 %v13252, %v13251
    %v13263 = vpack.c.b16 %v13254, %v13253
    %v13264 = vpack.c.b16 %v13256, %v13255
    %13273 = vst [vmem:[#allocation15] sm:$0xff] %v13257
    %13274 = vst [vmem:[#allocation15 + $0x8] sm:$0xff] %v13258
    %13275 = vst [vmem:[#allocation15 + $0x10] sm:$0xff] %v13259
    %13276 = vst [vmem:[#allocation15 + $0x18] sm:$0xff] %v13260
    %13277 = vst [vmem:[#allocation15 + $0x20] sm:$0xff] %v13261
    %13278 = vst [vmem:[#allocation15 + $0x28] sm:$0xff] %v13262
    %13279 = vst [vmem:[#allocation15 + $0x30] sm:$0xff] %v13263
    %13280 = vst [vmem:[#allocation15 + $0x38] sm:$0xff] %v13264
    %v13289 = vunpack.c.l.b16 %v4701
    %v13290 = vunpack.c.l.b16 %v4702
    %v13291 = vunpack.c.l.b16 %v4703
    %v13292 = vunpack.c.l.b16 %v4704
    %v13293 = vunpack.c.h.b16 %v4701
    %v13294 = vunpack.c.h.b16 %v4702
    %v13295 = vunpack.c.h.b16 %v4703
    %v13296 = vunpack.c.h.b16 %v4704
    %v13297 = vunpack.c.l.b16 %v4705
    %v13298 = vunpack.c.l.b16 %v4706
    %v13299 = vunpack.c.l.b16 %v4707
    %v13300 = vunpack.c.l.b16 %v4708
    %v13301 = vunpack.c.h.b16 %v4705
    %v13302 = vunpack.c.h.b16 %v4706
    %v13303 = vunpack.c.h.b16 %v4707
    %v13304 = vunpack.c.h.b16 %v4708
    %v13305 = vpack.c.b16 %v13290, %v13289
    %v13306 = vpack.c.b16 %v13292, %v13291
    %v13307 = vpack.c.b16 %v13294, %v13293
    %v13308 = vpack.c.b16 %v13296, %v13295
    %v13309 = vpack.c.b16 %v13298, %v13297
    %v13310 = vpack.c.b16 %v13300, %v13299
    %v13311 = vpack.c.b16 %v13302, %v13301
    %v13312 = vpack.c.b16 %v13304, %v13303
    %13321 = vst [vmem:[#allocation17] sm:$0xff] %v13305
    %13322 = vst [vmem:[#allocation17 + $0x8] sm:$0xff] %v13306
    %13323 = vst [vmem:[#allocation17 + $0x10] sm:$0xff] %v13307
    %13324 = vst [vmem:[#allocation17 + $0x18] sm:$0xff] %v13308
    %13325 = vst [vmem:[#allocation17 + $0x20] sm:$0xff] %v13309
    %13326 = vst [vmem:[#allocation17 + $0x28] sm:$0xff] %v13310
    %13327 = vst [vmem:[#allocation17 + $0x30] sm:$0xff] %v13311
    %13328 = vst [vmem:[#allocation17 + $0x38] sm:$0xff] %v13312
    // Predicated region
    $region58: #{tpu_custom_call.1} parent=1 // pred_check
      _
    $region59: #{tpu_custom_call.1} parent=1 // pred_check_branch
      %13330 = sbr.rel (0) target = $region61
    $region60: #{tpu_custom_call.1} parent=1 // pred_region
      %s13332 = ssub.s32 1024, 1024
      %13333 = vsyncadd [#allocation4], %s13332
      %s13334 = sshll.u32 [#allocation14], 4
      %s13335 = int_to_ptr.vmem [resolvable:$true] %s13334
      %13340 = dma.vmem_to_hbm [thread:$0]  %s13335, 1024, %s7, [#allocation4], 256, 256, 16
    $region61: #{tpu_custom_call.1} parent=1 // pred_fallthru
      _
    // Predicated region
    $region62: #{tpu_custom_call.1} parent=1 // pred_check
      _
    $region63: #{tpu_custom_call.1} parent=1 // pred_check_branch
      %13342 = sbr.rel (0) target = $region65
    $region64: #{tpu_custom_call.1} parent=1 // pred_region
      %s13344 = ssub.s32 1024, 1024
      %13345 = vsyncadd [#allocation16], %s13344
      %s13346 = sshll.u32 [#allocation15], 4
      %s13347 = int_to_ptr.vmem [resolvable:$true] %s13346
      %13352 = dma.vmem_to_hbm [thread:$0]  %s13347, 1024, %s8, [#allocation16], 256, 256, 16
    $region65: #{tpu_custom_call.1} parent=1 // pred_fallthru
      _
    // Predicated region
    $region66: #{tpu_custom_call.1} parent=1 // pred_check
      _
    $region67: #{tpu_custom_call.1} parent=1 // pred_check_branch
      %13354 = sbr.rel (0) target = $region69
    $region68: #{tpu_custom_call.1} parent=1 // pred_region
      %s13356 = ssub.s32 1024, 1024
      %13357 = vsyncadd [#allocation16], %s13356
      %s13358 = sshll.u32 [#allocation17], 4
      %s13359 = int_to_ptr.vmem [resolvable:$true] %s13358
      %13364 = dma.vmem_to_hbm [thread:$0]  %s13359, 1024, %s9, [#allocation16], 256, 256, 16
    $region69: #{tpu_custom_call.1} parent=1 // pred_fallthru
      _
    // Predicated region
    $region70: #{tpu_custom_call.1} parent=1 // pred_check
      _
    $region71: #{tpu_custom_call.1} parent=1 // pred_check_branch
      %13366 = sbr.rel (0) target = $region73
    $region72: #{tpu_custom_call.1} parent=1 // pred_region
      %13367 = dma.done [#allocation4], 1024
    $region73: #{tpu_custom_call.1} parent=1 // pred_fallthru
      _
    // Predicated region
    $region74: #{tpu_custom_call.1} parent=1 // pred_check
      _
    $region75: #{tpu_custom_call.1} parent=1 // pred_check_branch
      %13369 = sbr.rel (0) target = $region77
    $region76: #{tpu_custom_call.1} parent=1 // pred_region
      %13370 = dma.done [#allocation16], 1024
    $region77: #{tpu_custom_call.1} parent=1 // pred_fallthru
      _
    // Predicated region
    $region78: #{tpu_custom_call.1} parent=1 // pred_check
      _
    $region79: #{tpu_custom_call.1} parent=1 // pred_check_branch
      %13372 = sbr.rel (0) target = $region81
    $region80: #{tpu_custom_call.1} parent=1 // pred_region
      %13373 = dma.done [#allocation16], 1024
    $region81: #{tpu_custom_call.1} parent=1 // pred_fallthru
      _
    %13374 = vsyncpa [#allocation3], 1
    %13375 = vsyncpa [#allocation6], 1
    %13376 = vsyncpa [#allocation9], 1
    %13377 = vsyncpa [#allocation12], 1
    %13378 = vsyncpa [#allocation4], 1
    %13379 = vsyncpa [#allocation16], 1

</llo_original>
